<compile_context>
chip_gen: v7x
topology: tpu7x:2x2x1
jax: 0.10.0
libtpu: 0.0.40
codegen_flags: <defaults>
</compile_context>

<pallas_src>
import numpy as np

import jax
import jax.numpy as jnp
from jax.experimental import pallas as pl
from jax.experimental.pallas import tpu as pltpu


# ---------------------------------------------------------------------------
# Fused forward kernel: all branches + head in one body, intermediates in VMEM.
# Per grid step i: one batch sample (eyes ref carries that sample's L and R eye).
# ---------------------------------------------------------------------------

def _fused_kernel(eyes_ref, face_ref, grid_ref,
                  we1_ref, be1_ref, we2_ref, be2_ref,
                  wf1_ref, bf1_ref, wf2_ref, bf2_ref,
                  wg1_ref, bg1_ref, wg2_ref, bg2_ref,
                  wefc_ref, befc_ref, wffc_ref, bffc_ref, wgfc_ref, bgfc_ref,
                  wfc1_ref, bfc1_ref, wfc2_ref, bfc2_ref, wout_ref, bout_ref,
                  o_ref):

    def dot(x, w):
        return jnp.dot(x, w, preferred_element_type=jnp.float32)

    def cnn_branch(x, w1_ref, b1_ref, w2_ref, b2_ref):
        # Two conv(+BN+ReLU) layers, each pre-expanded into a single dense matmul,
        # followed by AdaptiveConcatPool2d(1). Returns (max, avg), each (M, 16).
        h = jnp.maximum(dot(x, w1_ref[...]) + b1_ref[...], 0.0)   # (M, 8*8*8 = 512)
        h = jnp.maximum(dot(h, w2_ref[...]) + b2_ref[...], 0.0)   # (M, 4*4*16 = 256)
        # h columns are ordered (spatial-major, channel-minor): 16 chunks of 16 ch.
        mx = h[:, 0:16]
        sm = h[:, 0:16]
        for p in range(1, 16):
            c = h[:, p * 16:(p + 1) * 16]
            mx = jnp.maximum(mx, c)
            sm = sm + c
        return mx, sm * (1.0 / 16.0)

    def fc(parts, b_ref, relu):
        # cat(x_0,...,x_k) @ W + b  ==  sum_i x_i @ W[rows_i] + b   (no concats)
        y = b_ref[...]
        for x, w in parts:
            y = y + dot(x, w)
        return jnp.maximum(y, 0.0) if relu else y

    # ---- eye branch: both eyes share weights, batched as 2 rows ------------
    emx, eav = cnn_branch(eyes_ref[0], we1_ref, be1_ref, we2_ref, be2_ref)  # (2,16)
    xe = fc([(emx[0:1], wefc_ref[0:16, :]), (eav[0:1], wefc_ref[16:32, :]),
             (emx[1:2], wefc_ref[32:48, :]), (eav[1:2], wefc_ref[48:64, :])],
            befc_ref, relu=True)                                            # (1,256)

    # ---- face branch --------------------------------------------------------
    fmx, fav = cnn_branch(face_ref[0], wf1_ref, bf1_ref, wf2_ref, bf2_ref)  # (1,16)
    xf = fc([(fmx, wffc_ref[0:16, :]), (fav, wffc_ref[16:32, :])],
            bffc_ref, relu=True)                                            # (1,256)

    # ---- face-grid branch ---------------------------------------------------
    gmx, gav = cnn_branch(grid_ref[0], wg1_ref, bg1_ref, wg2_ref, bg2_ref)  # (1,16)
    xg = fc([(gmx, wgfc_ref[0:16, :]), (gav, wgfc_ref[16:32, :])],
            bgfc_ref, relu=True)                                            # (1,64)

    # ---- head ----------------------------------------------------------------
    h1 = fc([(xf, wfc1_ref[0:256, :]), (xg, wfc1_ref[256:320, :])],
            bfc1_ref, relu=True)                                            # (1,128)
    h2 = fc([(xe, wfc2_ref[0:256, :]), (h1, wfc2_ref[256:384, :])],
            bfc2_ref, relu=True)                                            # (1,128)
    y = fc([(h2, wout_ref[...])], bout_ref, relu=False)                     # (1,2)

    o_ref[0] = y.astype(o_ref.dtype)


# ---------------------------------------------------------------------------
# Parameter construction (deterministic, synthetic) + host-side conv expansion
# ---------------------------------------------------------------------------

def _make_conv_raw(key, ni, nf):
    k1, k2, k3, k4, k5 = jax.random.split(key, 5)
    w = 0.1 * jax.random.normal(k1, (3, 3, ni, nf), jnp.float32)
    gamma = 1.0 + 0.1 * jax.random.normal(k2, (nf,), jnp.float32)
    beta = 0.1 * jax.random.normal(k3, (nf,), jnp.float32)
    mean = 0.1 * jax.random.normal(k4, (nf,), jnp.float32)
    var = 1.0 + 0.1 * jnp.abs(jax.random.normal(k5, (nf,), jnp.float32))
    scale = gamma / jnp.sqrt(var + 1e-5)
    shift = beta - mean * scale
    return w, scale, shift


def _expand_conv(w, scale, shift, H, W):
    """Fold BN into a 3x3/stride-2/pad-1 conv and expand it to a single dense
    (H*W*Cin, Ho*Wo*Cout) matmul acting on row-major NHWC-flattened inputs."""
    assert H % 2 == 0 and W % 2 == 0, "stride-2 phase mapping needs even H, W"
    w = np.asarray(w, np.float32) * np.asarray(scale, np.float32)[None, None, None, :]
    shift = np.asarray(shift, np.float32)
    _, _, Cin, Cout = w.shape
    Ho, Wo = H // 2, W // 2
    Wb = np.zeros((H * W * Cin, Ho * Wo * Cout), np.float32)
    for kh in range(3):
        for kw in range(3):
            for ho in range(Ho):
                h = 2 * ho + kh - 1
                if h < 0 or h >= H:
                    continue
                for wo in range(Wo):
                    ww = 2 * wo + kw - 1
                    if ww < 0 or ww >= W:
                        continue
                    q0 = (h * W + ww) * Cin
                    p0 = (ho * Wo + wo) * Cout
                    Wb[q0:q0 + Cin, p0:p0 + Cout] += w[kh, kw]
    bias = np.tile(shift, Ho * Wo)[None, :]          # (1, Ho*Wo*Cout), shift per channel
    return jnp.asarray(Wb), jnp.asarray(bias)


def make_linear_params(key, ni, no):
    k1, k2 = jax.random.split(key)
    w = jax.random.normal(k1, (ni, no), jnp.float32) / jnp.sqrt(float(ni))
    b = 0.1 * jax.random.normal(k2, (1, no), jnp.float32)
    return w, b


def make_static_model_params(key):
    keys = jax.random.split(key, 12)

    def conv_pair(kA, kB, cin):
        w1, s1, sh1 = _make_conv_raw(kA, cin, 8)
        w2, s2, sh2 = _make_conv_raw(kB, 8, 16)
        W1, b1 = _expand_conv(w1, s1, sh1, 16, 16)   # (16*16*cin, 8*8*8)
        W2, b2 = _expand_conv(w2, s2, sh2, 8, 8)     # (8*8*8,     4*4*16)
        return W1, b1, W2, b2

    return dict(
        eye_conv=conv_pair(keys[0], keys[1], 3),
        eye_fc=make_linear_params(keys[2], 64, 256),
        face_conv=conv_pair(keys[3], keys[4], 3),
        face_fc=make_linear_params(keys[5], 32, 256),
        grid_conv=conv_pair(keys[6], keys[7], 1),
        grid_fc=make_linear_params(keys[8], 32, 64),
        fc1=make_linear_params(keys[9], 256 + 64, 128),
        fc2=make_linear_params(keys[10], 256 + 128, 128),
        out=make_linear_params(keys[11], 128, 2),
    )


# ---------------------------------------------------------------------------
# Forward pass: single pallas_call, grid over batch (parallel axis for v7x)
# ---------------------------------------------------------------------------

def static_model_forward(params, xf, xl, xr, xg):
    N, H, W, _ = xf.shape
    assert H % 2 == 0 and W % 2 == 0

    # Row-major NHWC flattens are free views in XLA.
    eyes_in = jnp.stack([xl.reshape(N, -1), xr.reshape(N, -1)], axis=1)  # (N, 2, 768)
    face_in = xf.reshape(N, 1, -1)                                        # (N, 1, 768)
    grid_in = xg.reshape(N, 1, -1)                                        # (N, 1, 256)

    weights = (*params["eye_conv"], *params["face_conv"], *params["grid_conv"],
               *params["eye_fc"], *params["face_fc"], *params["grid_fc"],
               *params["fc1"], *params["fc2"], *params["out"])

    def batched_spec(a):
        nd = a.ndim
        return pl.BlockSpec((1,) + a.shape[1:],
                            lambda i, nd=nd: (i,) + (0,) * (nd - 1))

    def const_spec(a):
        nd = a.ndim
        return pl.BlockSpec(a.shape, lambda i, nd=nd: (0,) * nd)

    in_specs = ([batched_spec(eyes_in), batched_spec(face_in), batched_spec(grid_in)]
                + [const_spec(w) for w in weights])

    out = pl.pallas_call(
        _fused_kernel,
        out_shape=jax.ShapeDtypeStruct((N, 1, 2), jnp.float32),
        grid=(N,),
        in_specs=in_specs,
        out_specs=pl.BlockSpec((1, 1, 2), lambda i: (i, 0, 0)),
        compiler_params=pltpu.CompilerParams(
            dimension_semantics=("parallel",),
            vmem_limit_bytes=32 * 1024 * 1024),
    )(eyes_in, face_in, grid_in, *weights)
    return out.reshape(N, 2)


# ---------------------------------------------------------------------------
# Main
# ---------------------------------------------------------------------------

if __name__ == "__main__":
    key = jax.random.PRNGKey(0)
    kp, kf, kl, kr, kg = jax.random.split(key, 5)

    params = make_static_model_params(kp)

    B, H, W = 2, 16, 16
    xf = jax.random.normal(kf, (B, H, W, 3), jnp.float32)  # face      (NHWC)
    xl = jax.random.normal(kl, (B, H, W, 3), jnp.float32)  # left eye  (NHWC)
    xr = jax.random.normal(kr, (B, H, W, 3), jnp.float32)  # right eye (NHWC)
    xg = jax.random.normal(kg, (B, H, W, 1), jnp.float32)  # face grid (NHWC)

    out = jax.jit(static_model_forward)(params, xf, xl, xr, xg)
    out = jax.block_until_ready(out)

    assert out.shape == (B, 2), out.shape
    assert bool(jnp.all(jnp.isfinite(out)))
    print("KERNEL_OK")
</pallas_src>

<mosaic_0001>
module attributes {stable_mosaic.version = 11 : i64} {
  func.func @_fused_kernel(%arg0: i32, %arg1: memref<1x2x768xf32, #tpu.memory_space<vmem>>, %arg2: memref<1x1x768xf32, #tpu.memory_space<vmem>>, %arg3: memref<1x1x256xf32, #tpu.memory_space<vmem>>, %arg4: memref<768x512xf32, #tpu.memory_space<vmem>>, %arg5: memref<1x512xf32, #tpu.memory_space<vmem>>, %arg6: memref<512x256xf32, #tpu.memory_space<vmem>>, %arg7: memref<1x256xf32, #tpu.memory_space<vmem>>, %arg8: memref<768x512xf32, #tpu.memory_space<vmem>>, %arg9: memref<1x512xf32, #tpu.memory_space<vmem>>, %arg10: memref<512x256xf32, #tpu.memory_space<vmem>>, %arg11: memref<1x256xf32, #tpu.memory_space<vmem>>, %arg12: memref<256x512xf32, #tpu.memory_space<vmem>>, %arg13: memref<1x512xf32, #tpu.memory_space<vmem>>, %arg14: memref<512x256xf32, #tpu.memory_space<vmem>>, %arg15: memref<1x256xf32, #tpu.memory_space<vmem>>, %arg16: memref<64x256xf32, #tpu.memory_space<vmem>>, %arg17: memref<1x256xf32, #tpu.memory_space<vmem>>, %arg18: memref<32x256xf32, #tpu.memory_space<vmem>>, %arg19: memref<1x256xf32, #tpu.memory_space<vmem>>, %arg20: memref<32x64xf32, #tpu.memory_space<vmem>>, %arg21: memref<1x64xf32, #tpu.memory_space<vmem>>, %arg22: memref<320x128xf32, #tpu.memory_space<vmem>>, %arg23: memref<1x128xf32, #tpu.memory_space<vmem>>, %arg24: memref<384x128xf32, #tpu.memory_space<vmem>>, %arg25: memref<1x128xf32, #tpu.memory_space<vmem>>, %arg26: memref<128x2xf32, #tpu.memory_space<vmem>>, %arg27: memref<1x2xf32, #tpu.memory_space<vmem>>, %arg28: memref<1x1x2xf32, #tpu.memory_space<vmem>>) attributes {dimension_semantics = [#tpu.dimension_semantics<parallel>], iteration_bounds = array<i64: 2>, scalar_prefetch = 0 : i64, scratch_operands = 0 : i64, tpu.core_type = #tpu.core_type<tc>, window_params = [{transform_indices = @transform_0, window_bounds = array<i64: 1, 2, 768>}, {transform_indices = @transform_1, window_bounds = array<i64: 1, 1, 768>}, {transform_indices = @transform_2, window_bounds = array<i64: 1, 1, 256>}, {pipeline_mode = #tpu.pipeline_mode<synchronous>, transform_indices = @transform_3, window_bounds = array<i64: 768, 512>}, {pipeline_mode = #tpu.pipeline_mode<synchronous>, transform_indices = @transform_4, window_bounds = array<i64: 1, 512>}, {pipeline_mode = #tpu.pipeline_mode<synchronous>, transform_indices = @transform_5, window_bounds = array<i64: 512, 256>}, {pipeline_mode = #tpu.pipeline_mode<synchronous>, transform_indices = @transform_6, window_bounds = array<i64: 1, 256>}, {pipeline_mode = #tpu.pipeline_mode<synchronous>, transform_indices = @transform_7, window_bounds = array<i64: 768, 512>}, {pipeline_mode = #tpu.pipeline_mode<synchronous>, transform_indices = @transform_8, window_bounds = array<i64: 1, 512>}, {pipeline_mode = #tpu.pipeline_mode<synchronous>, transform_indices = @transform_9, window_bounds = array<i64: 512, 256>}, {pipeline_mode = #tpu.pipeline_mode<synchronous>, transform_indices = @transform_10, window_bounds = array<i64: 1, 256>}, {pipeline_mode = #tpu.pipeline_mode<synchronous>, transform_indices = @transform_11, window_bounds = array<i64: 256, 512>}, {pipeline_mode = #tpu.pipeline_mode<synchronous>, transform_indices = @transform_12, window_bounds = array<i64: 1, 512>}, {pipeline_mode = #tpu.pipeline_mode<synchronous>, transform_indices = @transform_13, window_bounds = array<i64: 512, 256>}, {pipeline_mode = #tpu.pipeline_mode<synchronous>, transform_indices = @transform_14, window_bounds = array<i64: 1, 256>}, {pipeline_mode = #tpu.pipeline_mode<synchronous>, transform_indices = @transform_15, window_bounds = array<i64: 64, 256>}, {pipeline_mode = #tpu.pipeline_mode<synchronous>, transform_indices = @transform_16, window_bounds = array<i64: 1, 256>}, {pipeline_mode = #tpu.pipeline_mode<synchronous>, transform_indices = @transform_17, window_bounds = array<i64: 32, 256>}, {pipeline_mode = #tpu.pipeline_mode<synchronous>, transform_indices = @transform_18, window_bounds = array<i64: 1, 256>}, {pipeline_mode = #tpu.pipeline_mode<synchronous>, transform_indices = @transform_19, window_bounds = array<i64: 32, 64>}, {pipeline_mode = #tpu.pipeline_mode<synchronous>, transform_indices = @transform_20, window_bounds = array<i64: 1, 64>}, {pipeline_mode = #tpu.pipeline_mode<synchronous>, transform_indices = @transform_21, window_bounds = array<i64: 320, 128>}, {pipeline_mode = #tpu.pipeline_mode<synchronous>, transform_indices = @transform_22, window_bounds = array<i64: 1, 128>}, {pipeline_mode = #tpu.pipeline_mode<synchronous>, transform_indices = @transform_23, window_bounds = array<i64: 384, 128>}, {pipeline_mode = #tpu.pipeline_mode<synchronous>, transform_indices = @transform_24, window_bounds = array<i64: 1, 128>}, {pipeline_mode = #tpu.pipeline_mode<synchronous>, transform_indices = @transform_25, window_bounds = array<i64: 128, 2>}, {pipeline_mode = #tpu.pipeline_mode<synchronous>, transform_indices = @transform_26, window_bounds = array<i64: 1, 2>}, {transform_indices = @transform_27, window_bounds = array<i64: 1, 1, 2>}]} {
    %c0 = arith.constant 0 : index
    %c0_0 = arith.constant 0 : index
    %c0_1 = arith.constant 0 : index
    %0 = vector.load %arg1[%c0, %c0_0, %c0_1] : memref<1x2x768xf32, #tpu.memory_space<vmem>>, vector<1x2x768xf32>
    %1 = vector.shape_cast %0 : vector<1x2x768xf32> to vector<2x768xf32>
    %c0_2 = arith.constant 0 : index
    %c0_3 = arith.constant 0 : index
    %2 = vector.load %arg4[%c0_2, %c0_3] : memref<768x512xf32, #tpu.memory_space<vmem>>, vector<768x512xf32>
    %cst = arith.constant dense<0.000000e+00> : vector<2x512xf32>
    %3 = tpu.matmul %1, %2, %cst {dimension_numbers = #tpu.dot_dimension_numbers<[1], [0], [0], [1], [0, 0, 1, 1], [], []>} : vector<2x768xf32>, vector<768x512xf32>, vector<2x512xf32> -> vector<2x512xf32>
    %c0_4 = arith.constant 0 : index
    %c0_5 = arith.constant 0 : index
    %4 = vector.load %arg5[%c0_4, %c0_5] : memref<1x512xf32, #tpu.memory_space<vmem>>, vector<1x512xf32>
    %5 = vector.broadcast %4 : vector<1x512xf32> to vector<2x512xf32>
    %6 = arith.addf %3, %5 : vector<2x512xf32>
    %cst_6 = arith.constant 0.000000e+00 : f32
    %7 = vector.broadcast %cst_6 : f32 to vector<2x512xf32>
    %8 = arith.maximumf %6, %7 : vector<2x512xf32>
    %c0_7 = arith.constant 0 : index
    %c0_8 = arith.constant 0 : index
    %9 = vector.load %arg6[%c0_7, %c0_8] : memref<512x256xf32, #tpu.memory_space<vmem>>, vector<512x256xf32>
    %cst_9 = arith.constant dense<0.000000e+00> : vector<2x256xf32>
    %10 = tpu.matmul %8, %9, %cst_9 {dimension_numbers = #tpu.dot_dimension_numbers<[1], [0], [0], [1], [0, 0, 1, 1], [], []>} : vector<2x512xf32>, vector<512x256xf32>, vector<2x256xf32> -> vector<2x256xf32>
    %c0_10 = arith.constant 0 : index
    %c0_11 = arith.constant 0 : index
    %11 = vector.load %arg7[%c0_10, %c0_11] : memref<1x256xf32, #tpu.memory_space<vmem>>, vector<1x256xf32>
    %12 = vector.broadcast %11 : vector<1x256xf32> to vector<2x256xf32>
    %13 = arith.addf %10, %12 : vector<2x256xf32>
    %cst_12 = arith.constant 0.000000e+00 : f32
    %14 = vector.broadcast %cst_12 : f32 to vector<2x256xf32>
    %15 = arith.maximumf %13, %14 : vector<2x256xf32>
    %16 = vector.extract_strided_slice %15 {offsets = [0, 0], sizes = [2, 16], strides = [1, 1]} : vector<2x256xf32> to vector<2x16xf32>
    %17 = vector.extract_strided_slice %15 {offsets = [0, 0], sizes = [2, 16], strides = [1, 1]} : vector<2x256xf32> to vector<2x16xf32>
    %18 = vector.extract_strided_slice %15 {offsets = [0, 16], sizes = [2, 16], strides = [1, 1]} : vector<2x256xf32> to vector<2x16xf32>
    %19 = arith.maximumf %16, %18 : vector<2x16xf32>
    %20 = arith.addf %17, %18 : vector<2x16xf32>
    %21 = vector.extract_strided_slice %15 {offsets = [0, 32], sizes = [2, 16], strides = [1, 1]} : vector<2x256xf32> to vector<2x16xf32>
    %22 = arith.maximumf %19, %21 : vector<2x16xf32>
    %23 = arith.addf %20, %21 : vector<2x16xf32>
    %24 = vector.extract_strided_slice %15 {offsets = [0, 48], sizes = [2, 16], strides = [1, 1]} : vector<2x256xf32> to vector<2x16xf32>
    %25 = arith.maximumf %22, %24 : vector<2x16xf32>
    %26 = arith.addf %23, %24 : vector<2x16xf32>
    %27 = vector.extract_strided_slice %15 {offsets = [0, 64], sizes = [2, 16], strides = [1, 1]} : vector<2x256xf32> to vector<2x16xf32>
    %28 = arith.maximumf %25, %27 : vector<2x16xf32>
    %29 = arith.addf %26, %27 : vector<2x16xf32>
    %30 = vector.extract_strided_slice %15 {offsets = [0, 80], sizes = [2, 16], strides = [1, 1]} : vector<2x256xf32> to vector<2x16xf32>
    %31 = arith.maximumf %28, %30 : vector<2x16xf32>
    %32 = arith.addf %29, %30 : vector<2x16xf32>
    %33 = vector.extract_strided_slice %15 {offsets = [0, 96], sizes = [2, 16], strides = [1, 1]} : vector<2x256xf32> to vector<2x16xf32>
    %34 = arith.maximumf %31, %33 : vector<2x16xf32>
    %35 = arith.addf %32, %33 : vector<2x16xf32>
    %36 = vector.extract_strided_slice %15 {offsets = [0, 112], sizes = [2, 16], strides = [1, 1]} : vector<2x256xf32> to vector<2x16xf32>
    %37 = arith.maximumf %34, %36 : vector<2x16xf32>
    %38 = arith.addf %35, %36 : vector<2x16xf32>
    %39 = vector.extract_strided_slice %15 {offsets = [0, 128], sizes = [2, 16], strides = [1, 1]} : vector<2x256xf32> to vector<2x16xf32>
    %40 = arith.maximumf %37, %39 : vector<2x16xf32>
    %41 = arith.addf %38, %39 : vector<2x16xf32>
    %42 = vector.extract_strided_slice %15 {offsets = [0, 144], sizes = [2, 16], strides = [1, 1]} : vector<2x256xf32> to vector<2x16xf32>
    %43 = arith.maximumf %40, %42 : vector<2x16xf32>
    %44 = arith.addf %41, %42 : vector<2x16xf32>
    %45 = vector.extract_strided_slice %15 {offsets = [0, 160], sizes = [2, 16], strides = [1, 1]} : vector<2x256xf32> to vector<2x16xf32>
    %46 = arith.maximumf %43, %45 : vector<2x16xf32>
    %47 = arith.addf %44, %45 : vector<2x16xf32>
    %48 = vector.extract_strided_slice %15 {offsets = [0, 176], sizes = [2, 16], strides = [1, 1]} : vector<2x256xf32> to vector<2x16xf32>
    %49 = arith.maximumf %46, %48 : vector<2x16xf32>
    %50 = arith.addf %47, %48 : vector<2x16xf32>
    %51 = vector.extract_strided_slice %15 {offsets = [0, 192], sizes = [2, 16], strides = [1, 1]} : vector<2x256xf32> to vector<2x16xf32>
    %52 = arith.maximumf %49, %51 : vector<2x16xf32>
    %53 = arith.addf %50, %51 : vector<2x16xf32>
    %54 = vector.extract_strided_slice %15 {offsets = [0, 208], sizes = [2, 16], strides = [1, 1]} : vector<2x256xf32> to vector<2x16xf32>
    %55 = arith.maximumf %52, %54 : vector<2x16xf32>
    %56 = arith.addf %53, %54 : vector<2x16xf32>
    %57 = vector.extract_strided_slice %15 {offsets = [0, 224], sizes = [2, 16], strides = [1, 1]} : vector<2x256xf32> to vector<2x16xf32>
    %58 = arith.maximumf %55, %57 : vector<2x16xf32>
    %59 = arith.addf %56, %57 : vector<2x16xf32>
    %60 = vector.extract_strided_slice %15 {offsets = [0, 240], sizes = [2, 16], strides = [1, 1]} : vector<2x256xf32> to vector<2x16xf32>
    %61 = arith.maximumf %58, %60 : vector<2x16xf32>
    %62 = arith.addf %59, %60 : vector<2x16xf32>
    %cst_13 = arith.constant 6.250000e-02 : f32
    %63 = vector.broadcast %cst_13 : f32 to vector<2x16xf32>
    %64 = arith.mulf %62, %63 : vector<2x16xf32>
    %65 = vector.extract_strided_slice %61 {offsets = [0, 0], sizes = [1, 16], strides = [1, 1]} : vector<2x16xf32> to vector<1x16xf32>
    %c0_14 = arith.constant 0 : index
    %c0_15 = arith.constant 0 : index
    %66 = vector.load %arg16[%c0_14, %c0_15] : memref<64x256xf32, #tpu.memory_space<vmem>>, vector<16x256xf32>
    %67 = vector.extract_strided_slice %64 {offsets = [0, 0], sizes = [1, 16], strides = [1, 1]} : vector<2x16xf32> to vector<1x16xf32>
    %c16 = arith.constant 16 : index
    %c0_16 = arith.constant 0 : index
    %68 = vector.load %arg16[%c16, %c0_16] : memref<64x256xf32, #tpu.memory_space<vmem>>, vector<16x256xf32>
    %69 = vector.extract_strided_slice %61 {offsets = [1, 0], sizes = [1, 16], strides = [1, 1]} : vector<2x16xf32> to vector<1x16xf32>
    %c32 = arith.constant 32 : index
    %c0_17 = arith.constant 0 : index
    %70 = vector.load %arg16[%c32, %c0_17] : memref<64x256xf32, #tpu.memory_space<vmem>>, vector<16x256xf32>
    %71 = vector.extract_strided_slice %64 {offsets = [1, 0], sizes = [1, 16], strides = [1, 1]} : vector<2x16xf32> to vector<1x16xf32>
    %c48 = arith.constant 48 : index
    %c0_18 = arith.constant 0 : index
    %72 = vector.load %arg16[%c48, %c0_18] : memref<64x256xf32, #tpu.memory_space<vmem>>, vector<16x256xf32>
    %c0_19 = arith.constant 0 : index
    %c0_20 = arith.constant 0 : index
    %73 = vector.load %arg17[%c0_19, %c0_20] : memref<1x256xf32, #tpu.memory_space<vmem>>, vector<1x256xf32>
    %cst_21 = arith.constant dense<0.000000e+00> : vector<1x256xf32>
    %74 = tpu.matmul %65, %66, %cst_21 {dimension_numbers = #tpu.dot_dimension_numbers<[1], [0], [0], [1], [0, 0, 1, 1], [], []>} : vector<1x16xf32>, vector<16x256xf32>, vector<1x256xf32> -> vector<1x256xf32>
    %75 = arith.addf %73, %74 : vector<1x256xf32>
    %cst_22 = arith.constant dense<0.000000e+00> : vector<1x256xf32>
    %76 = tpu.matmul %67, %68, %cst_22 {dimension_numbers = #tpu.dot_dimension_numbers<[1], [0], [0], [1], [0, 0, 1, 1], [], []>} : vector<1x16xf32>, vector<16x256xf32>, vector<1x256xf32> -> vector<1x256xf32>
    %77 = arith.addf %75, %76 : vector<1x256xf32>
    %cst_23 = arith.constant dense<0.000000e+00> : vector<1x256xf32>
    %78 = tpu.matmul %69, %70, %cst_23 {dimension_numbers = #tpu.dot_dimension_numbers<[1], [0], [0], [1], [0, 0, 1, 1], [], []>} : vector<1x16xf32>, vector<16x256xf32>, vector<1x256xf32> -> vector<1x256xf32>
    %79 = arith.addf %77, %78 : vector<1x256xf32>
    %cst_24 = arith.constant dense<0.000000e+00> : vector<1x256xf32>
    %80 = tpu.matmul %71, %72, %cst_24 {dimension_numbers = #tpu.dot_dimension_numbers<[1], [0], [0], [1], [0, 0, 1, 1], [], []>} : vector<1x16xf32>, vector<16x256xf32>, vector<1x256xf32> -> vector<1x256xf32>
    %81 = arith.addf %79, %80 : vector<1x256xf32>
    %cst_25 = arith.constant 0.000000e+00 : f32
    %82 = vector.broadcast %cst_25 : f32 to vector<1x256xf32>
    %83 = arith.maximumf %81, %82 : vector<1x256xf32>
    %c0_26 = arith.constant 0 : index
    %c0_27 = arith.constant 0 : index
    %c0_28 = arith.constant 0 : index
    %84 = vector.load %arg2[%c0_26, %c0_27, %c0_28] : memref<1x1x768xf32, #tpu.memory_space<vmem>>, vector<1x1x768xf32>
    %85 = vector.shape_cast %84 : vector<1x1x768xf32> to vector<1x768xf32>
    %c0_29 = arith.constant 0 : index
    %c0_30 = arith.constant 0 : index
    %86 = vector.load %arg8[%c0_29, %c0_30] : memref<768x512xf32, #tpu.memory_space<vmem>>, vector<768x512xf32>
    %cst_31 = arith.constant dense<0.000000e+00> : vector<1x512xf32>
    %87 = tpu.matmul %85, %86, %cst_31 {dimension_numbers = #tpu.dot_dimension_numbers<[1], [0], [0], [1], [0, 0, 1, 1], [], []>} : vector<1x768xf32>, vector<768x512xf32>, vector<1x512xf32> -> vector<1x512xf32>
    %c0_32 = arith.constant 0 : index
    %c0_33 = arith.constant 0 : index
    %88 = vector.load %arg9[%c0_32, %c0_33] : memref<1x512xf32, #tpu.memory_space<vmem>>, vector<1x512xf32>
    %89 = arith.addf %87, %88 : vector<1x512xf32>
    %cst_34 = arith.constant 0.000000e+00 : f32
    %90 = vector.broadcast %cst_34 : f32 to vector<1x512xf32>
    %91 = arith.maximumf %89, %90 : vector<1x512xf32>
    %c0_35 = arith.constant 0 : index
    %c0_36 = arith.constant 0 : index
    %92 = vector.load %arg10[%c0_35, %c0_36] : memref<512x256xf32, #tpu.memory_space<vmem>>, vector<512x256xf32>
    %cst_37 = arith.constant dense<0.000000e+00> : vector<1x256xf32>
    %93 = tpu.matmul %91, %92, %cst_37 {dimension_numbers = #tpu.dot_dimension_numbers<[1], [0], [0], [1], [0, 0, 1, 1], [], []>} : vector<1x512xf32>, vector<512x256xf32>, vector<1x256xf32> -> vector<1x256xf32>
    %c0_38 = arith.constant 0 : index
    %c0_39 = arith.constant 0 : index
    %94 = vector.load %arg11[%c0_38, %c0_39] : memref<1x256xf32, #tpu.memory_space<vmem>>, vector<1x256xf32>
    %95 = arith.addf %93, %94 : vector<1x256xf32>
    %cst_40 = arith.constant 0.000000e+00 : f32
    %96 = vector.broadcast %cst_40 : f32 to vector<1x256xf32>
    %97 = arith.maximumf %95, %96 : vector<1x256xf32>
    %98 = vector.extract_strided_slice %97 {offsets = [0, 0], sizes = [1, 16], strides = [1, 1]} : vector<1x256xf32> to vector<1x16xf32>
    %99 = vector.extract_strided_slice %97 {offsets = [0, 0], sizes = [1, 16], strides = [1, 1]} : vector<1x256xf32> to vector<1x16xf32>
    %100 = vector.extract_strided_slice %97 {offsets = [0, 16], sizes = [1, 16], strides = [1, 1]} : vector<1x256xf32> to vector<1x16xf32>
    %101 = arith.maximumf %98, %100 : vector<1x16xf32>
    %102 = arith.addf %99, %100 : vector<1x16xf32>
    %103 = vector.extract_strided_slice %97 {offsets = [0, 32], sizes = [1, 16], strides = [1, 1]} : vector<1x256xf32> to vector<1x16xf32>
    %104 = arith.maximumf %101, %103 : vector<1x16xf32>
    %105 = arith.addf %102, %103 : vector<1x16xf32>
    %106 = vector.extract_strided_slice %97 {offsets = [0, 48], sizes = [1, 16], strides = [1, 1]} : vector<1x256xf32> to vector<1x16xf32>
    %107 = arith.maximumf %104, %106 : vector<1x16xf32>
    %108 = arith.addf %105, %106 : vector<1x16xf32>
    %109 = vector.extract_strided_slice %97 {offsets = [0, 64], sizes = [1, 16], strides = [1, 1]} : vector<1x256xf32> to vector<1x16xf32>
    %110 = arith.maximumf %107, %109 : vector<1x16xf32>
    %111 = arith.addf %108, %109 : vector<1x16xf32>
    %112 = vector.extract_strided_slice %97 {offsets = [0, 80], sizes = [1, 16], strides = [1, 1]} : vector<1x256xf32> to vector<1x16xf32>
    %113 = arith.maximumf %110, %112 : vector<1x16xf32>
    %114 = arith.addf %111, %112 : vector<1x16xf32>
    %115 = vector.extract_strided_slice %97 {offsets = [0, 96], sizes = [1, 16], strides = [1, 1]} : vector<1x256xf32> to vector<1x16xf32>
    %116 = arith.maximumf %113, %115 : vector<1x16xf32>
    %117 = arith.addf %114, %115 : vector<1x16xf32>
    %118 = vector.extract_strided_slice %97 {offsets = [0, 112], sizes = [1, 16], strides = [1, 1]} : vector<1x256xf32> to vector<1x16xf32>
    %119 = arith.maximumf %116, %118 : vector<1x16xf32>
    %120 = arith.addf %117, %118 : vector<1x16xf32>
    %121 = vector.extract_strided_slice %97 {offsets = [0, 128], sizes = [1, 16], strides = [1, 1]} : vector<1x256xf32> to vector<1x16xf32>
    %122 = arith.maximumf %119, %121 : vector<1x16xf32>
    %123 = arith.addf %120, %121 : vector<1x16xf32>
    %124 = vector.extract_strided_slice %97 {offsets = [0, 144], sizes = [1, 16], strides = [1, 1]} : vector<1x256xf32> to vector<1x16xf32>
    %125 = arith.maximumf %122, %124 : vector<1x16xf32>
    %126 = arith.addf %123, %124 : vector<1x16xf32>
    %127 = vector.extract_strided_slice %97 {offsets = [0, 160], sizes = [1, 16], strides = [1, 1]} : vector<1x256xf32> to vector<1x16xf32>
    %128 = arith.maximumf %125, %127 : vector<1x16xf32>
    %129 = arith.addf %126, %127 : vector<1x16xf32>
    %130 = vector.extract_strided_slice %97 {offsets = [0, 176], sizes = [1, 16], strides = [1, 1]} : vector<1x256xf32> to vector<1x16xf32>
    %131 = arith.maximumf %128, %130 : vector<1x16xf32>
    %132 = arith.addf %129, %130 : vector<1x16xf32>
    %133 = vector.extract_strided_slice %97 {offsets = [0, 192], sizes = [1, 16], strides = [1, 1]} : vector<1x256xf32> to vector<1x16xf32>
    %134 = arith.maximumf %131, %133 : vector<1x16xf32>
    %135 = arith.addf %132, %133 : vector<1x16xf32>
    %136 = vector.extract_strided_slice %97 {offsets = [0, 208], sizes = [1, 16], strides = [1, 1]} : vector<1x256xf32> to vector<1x16xf32>
    %137 = arith.maximumf %134, %136 : vector<1x16xf32>
    %138 = arith.addf %135, %136 : vector<1x16xf32>
    %139 = vector.extract_strided_slice %97 {offsets = [0, 224], sizes = [1, 16], strides = [1, 1]} : vector<1x256xf32> to vector<1x16xf32>
    %140 = arith.maximumf %137, %139 : vector<1x16xf32>
    %141 = arith.addf %138, %139 : vector<1x16xf32>
    %142 = vector.extract_strided_slice %97 {offsets = [0, 240], sizes = [1, 16], strides = [1, 1]} : vector<1x256xf32> to vector<1x16xf32>
    %143 = arith.maximumf %140, %142 : vector<1x16xf32>
    %144 = arith.addf %141, %142 : vector<1x16xf32>
    %cst_41 = arith.constant 6.250000e-02 : f32
    %145 = vector.broadcast %cst_41 : f32 to vector<1x16xf32>
    %146 = arith.mulf %144, %145 : vector<1x16xf32>
    %c0_42 = arith.constant 0 : index
    %c0_43 = arith.constant 0 : index
    %147 = vector.load %arg18[%c0_42, %c0_43] : memref<32x256xf32, #tpu.memory_space<vmem>>, vector<16x256xf32>
    %c16_44 = arith.constant 16 : index
    %c0_45 = arith.constant 0 : index
    %148 = vector.load %arg18[%c16_44, %c0_45] : memref<32x256xf32, #tpu.memory_space<vmem>>, vector<16x256xf32>
    %c0_46 = arith.constant 0 : index
    %c0_47 = arith.constant 0 : index
    %149 = vector.load %arg19[%c0_46, %c0_47] : memref<1x256xf32, #tpu.memory_space<vmem>>, vector<1x256xf32>
    %cst_48 = arith.constant dense<0.000000e+00> : vector<1x256xf32>
    %150 = tpu.matmul %143, %147, %cst_48 {dimension_numbers = #tpu.dot_dimension_numbers<[1], [0], [0], [1], [0, 0, 1, 1], [], []>} : vector<1x16xf32>, vector<16x256xf32>, vector<1x256xf32> -> vector<1x256xf32>
    %151 = arith.addf %149, %150 : vector<1x256xf32>
    %cst_49 = arith.constant dense<0.000000e+00> : vector<1x256xf32>
    %152 = tpu.matmul %146, %148, %cst_49 {dimension_numbers = #tpu.dot_dimension_numbers<[1], [0], [0], [1], [0, 0, 1, 1], [], []>} : vector<1x16xf32>, vector<16x256xf32>, vector<1x256xf32> -> vector<1x256xf32>
    %153 = arith.addf %151, %152 : vector<1x256xf32>
    %cst_50 = arith.constant 0.000000e+00 : f32
    %154 = vector.broadcast %cst_50 : f32 to vector<1x256xf32>
    %155 = arith.maximumf %153, %154 : vector<1x256xf32>
    %c0_51 = arith.constant 0 : index
    %c0_52 = arith.constant 0 : index
    %c0_53 = arith.constant 0 : index
    %156 = vector.load %arg3[%c0_51, %c0_52, %c0_53] : memref<1x1x256xf32, #tpu.memory_space<vmem>>, vector<1x1x256xf32>
    %157 = vector.shape_cast %156 : vector<1x1x256xf32> to vector<1x256xf32>
    %c0_54 = arith.constant 0 : index
    %c0_55 = arith.constant 0 : index
    %158 = vector.load %arg12[%c0_54, %c0_55] : memref<256x512xf32, #tpu.memory_space<vmem>>, vector<256x512xf32>
    %cst_56 = arith.constant dense<0.000000e+00> : vector<1x512xf32>
    %159 = tpu.matmul %157, %158, %cst_56 {dimension_numbers = #tpu.dot_dimension_numbers<[1], [0], [0], [1], [0, 0, 1, 1], [], []>} : vector<1x256xf32>, vector<256x512xf32>, vector<1x512xf32> -> vector<1x512xf32>
    %c0_57 = arith.constant 0 : index
    %c0_58 = arith.constant 0 : index
    %160 = vector.load %arg13[%c0_57, %c0_58] : memref<1x512xf32, #tpu.memory_space<vmem>>, vector<1x512xf32>
    %161 = arith.addf %159, %160 : vector<1x512xf32>
    %cst_59 = arith.constant 0.000000e+00 : f32
    %162 = vector.broadcast %cst_59 : f32 to vector<1x512xf32>
    %163 = arith.maximumf %161, %162 : vector<1x512xf32>
    %c0_60 = arith.constant 0 : index
    %c0_61 = arith.constant 0 : index
    %164 = vector.load %arg14[%c0_60, %c0_61] : memref<512x256xf32, #tpu.memory_space<vmem>>, vector<512x256xf32>
    %cst_62 = arith.constant dense<0.000000e+00> : vector<1x256xf32>
    %165 = tpu.matmul %163, %164, %cst_62 {dimension_numbers = #tpu.dot_dimension_numbers<[1], [0], [0], [1], [0, 0, 1, 1], [], []>} : vector<1x512xf32>, vector<512x256xf32>, vector<1x256xf32> -> vector<1x256xf32>
    %c0_63 = arith.constant 0 : index
    %c0_64 = arith.constant 0 : index
    %166 = vector.load %arg15[%c0_63, %c0_64] : memref<1x256xf32, #tpu.memory_space<vmem>>, vector<1x256xf32>
    %167 = arith.addf %165, %166 : vector<1x256xf32>
    %cst_65 = arith.constant 0.000000e+00 : f32
    %168 = vector.broadcast %cst_65 : f32 to vector<1x256xf32>
    %169 = arith.maximumf %167, %168 : vector<1x256xf32>
    %170 = vector.extract_strided_slice %169 {offsets = [0, 0], sizes = [1, 16], strides = [1, 1]} : vector<1x256xf32> to vector<1x16xf32>
    %171 = vector.extract_strided_slice %169 {offsets = [0, 0], sizes = [1, 16], strides = [1, 1]} : vector<1x256xf32> to vector<1x16xf32>
    %172 = vector.extract_strided_slice %169 {offsets = [0, 16], sizes = [1, 16], strides = [1, 1]} : vector<1x256xf32> to vector<1x16xf32>
    %173 = arith.maximumf %170, %172 : vector<1x16xf32>
    %174 = arith.addf %171, %172 : vector<1x16xf32>
    %175 = vector.extract_strided_slice %169 {offsets = [0, 32], sizes = [1, 16], strides = [1, 1]} : vector<1x256xf32> to vector<1x16xf32>
    %176 = arith.maximumf %173, %175 : vector<1x16xf32>
    %177 = arith.addf %174, %175 : vector<1x16xf32>
    %178 = vector.extract_strided_slice %169 {offsets = [0, 48], sizes = [1, 16], strides = [1, 1]} : vector<1x256xf32> to vector<1x16xf32>
    %179 = arith.maximumf %176, %178 : vector<1x16xf32>
    %180 = arith.addf %177, %178 : vector<1x16xf32>
    %181 = vector.extract_strided_slice %169 {offsets = [0, 64], sizes = [1, 16], strides = [1, 1]} : vector<1x256xf32> to vector<1x16xf32>
    %182 = arith.maximumf %179, %181 : vector<1x16xf32>
    %183 = arith.addf %180, %181 : vector<1x16xf32>
    %184 = vector.extract_strided_slice %169 {offsets = [0, 80], sizes = [1, 16], strides = [1, 1]} : vector<1x256xf32> to vector<1x16xf32>
    %185 = arith.maximumf %182, %184 : vector<1x16xf32>
    %186 = arith.addf %183, %184 : vector<1x16xf32>
    %187 = vector.extract_strided_slice %169 {offsets = [0, 96], sizes = [1, 16], strides = [1, 1]} : vector<1x256xf32> to vector<1x16xf32>
    %188 = arith.maximumf %185, %187 : vector<1x16xf32>
    %189 = arith.addf %186, %187 : vector<1x16xf32>
    %190 = vector.extract_strided_slice %169 {offsets = [0, 112], sizes = [1, 16], strides = [1, 1]} : vector<1x256xf32> to vector<1x16xf32>
    %191 = arith.maximumf %188, %190 : vector<1x16xf32>
    %192 = arith.addf %189, %190 : vector<1x16xf32>
    %193 = vector.extract_strided_slice %169 {offsets = [0, 128], sizes = [1, 16], strides = [1, 1]} : vector<1x256xf32> to vector<1x16xf32>
    %194 = arith.maximumf %191, %193 : vector<1x16xf32>
    %195 = arith.addf %192, %193 : vector<1x16xf32>
    %196 = vector.extract_strided_slice %169 {offsets = [0, 144], sizes = [1, 16], strides = [1, 1]} : vector<1x256xf32> to vector<1x16xf32>
    %197 = arith.maximumf %194, %196 : vector<1x16xf32>
    %198 = arith.addf %195, %196 : vector<1x16xf32>
    %199 = vector.extract_strided_slice %169 {offsets = [0, 160], sizes = [1, 16], strides = [1, 1]} : vector<1x256xf32> to vector<1x16xf32>
    %200 = arith.maximumf %197, %199 : vector<1x16xf32>
    %201 = arith.addf %198, %199 : vector<1x16xf32>
    %202 = vector.extract_strided_slice %169 {offsets = [0, 176], sizes = [1, 16], strides = [1, 1]} : vector<1x256xf32> to vector<1x16xf32>
    %203 = arith.maximumf %200, %202 : vector<1x16xf32>
    %204 = arith.addf %201, %202 : vector<1x16xf32>
    %205 = vector.extract_strided_slice %169 {offsets = [0, 192], sizes = [1, 16], strides = [1, 1]} : vector<1x256xf32> to vector<1x16xf32>
    %206 = arith.maximumf %203, %205 : vector<1x16xf32>
    %207 = arith.addf %204, %205 : vector<1x16xf32>
    %208 = vector.extract_strided_slice %169 {offsets = [0, 208], sizes = [1, 16], strides = [1, 1]} : vector<1x256xf32> to vector<1x16xf32>
    %209 = arith.maximumf %206, %208 : vector<1x16xf32>
    %210 = arith.addf %207, %208 : vector<1x16xf32>
    %211 = vector.extract_strided_slice %169 {offsets = [0, 224], sizes = [1, 16], strides = [1, 1]} : vector<1x256xf32> to vector<1x16xf32>
    %212 = arith.maximumf %209, %211 : vector<1x16xf32>
    %213 = arith.addf %210, %211 : vector<1x16xf32>
    %214 = vector.extract_strided_slice %169 {offsets = [0, 240], sizes = [1, 16], strides = [1, 1]} : vector<1x256xf32> to vector<1x16xf32>
    %215 = arith.maximumf %212, %214 : vector<1x16xf32>
    %216 = arith.addf %213, %214 : vector<1x16xf32>
    %cst_66 = arith.constant 6.250000e-02 : f32
    %217 = vector.broadcast %cst_66 : f32 to vector<1x16xf32>
    %218 = arith.mulf %216, %217 : vector<1x16xf32>
    %c0_67 = arith.constant 0 : index
    %c0_68 = arith.constant 0 : index
    %219 = vector.load %arg20[%c0_67, %c0_68] : memref<32x64xf32, #tpu.memory_space<vmem>>, vector<16x64xf32>
    %c16_69 = arith.constant 16 : index
    %c0_70 = arith.constant 0 : index
    %220 = vector.load %arg20[%c16_69, %c0_70] : memref<32x64xf32, #tpu.memory_space<vmem>>, vector<16x64xf32>
    %c0_71 = arith.constant 0 : index
    %c0_72 = arith.constant 0 : index
    %221 = vector.load %arg21[%c0_71, %c0_72] : memref<1x64xf32, #tpu.memory_space<vmem>>, vector<1x64xf32>
    %cst_73 = arith.constant dense<0.000000e+00> : vector<1x64xf32>
    %222 = tpu.matmul %215, %219, %cst_73 {dimension_numbers = #tpu.dot_dimension_numbers<[1], [0], [0], [1], [0, 0, 1, 1], [], []>} : vector<1x16xf32>, vector<16x64xf32>, vector<1x64xf32> -> vector<1x64xf32>
    %223 = arith.addf %221, %222 : vector<1x64xf32>
    %cst_74 = arith.constant dense<0.000000e+00> : vector<1x64xf32>
    %224 = tpu.matmul %218, %220, %cst_74 {dimension_numbers = #tpu.dot_dimension_numbers<[1], [0], [0], [1], [0, 0, 1, 1], [], []>} : vector<1x16xf32>, vector<16x64xf32>, vector<1x64xf32> -> vector<1x64xf32>
    %225 = arith.addf %223, %224 : vector<1x64xf32>
    %cst_75 = arith.constant 0.000000e+00 : f32
    %226 = vector.broadcast %cst_75 : f32 to vector<1x64xf32>
    %227 = arith.maximumf %225, %226 : vector<1x64xf32>
    %c0_76 = arith.constant 0 : index
    %c0_77 = arith.constant 0 : index
    %228 = vector.load %arg22[%c0_76, %c0_77] : memref<320x128xf32, #tpu.memory_space<vmem>>, vector<256x128xf32>
    %c256 = arith.constant 256 : index
    %c0_78 = arith.constant 0 : index
    %229 = vector.load %arg22[%c256, %c0_78] : memref<320x128xf32, #tpu.memory_space<vmem>>, vector<64x128xf32>
    %c0_79 = arith.constant 0 : index
    %c0_80 = arith.constant 0 : index
    %230 = vector.load %arg23[%c0_79, %c0_80] : memref<1x128xf32, #tpu.memory_space<vmem>>, vector<1x128xf32>
    %cst_81 = arith.constant dense<0.000000e+00> : vector<1x128xf32>
    %231 = tpu.matmul %155, %228, %cst_81 {dimension_numbers = #tpu.dot_dimension_numbers<[1], [0], [0], [1], [0, 0, 1, 1], [], []>} : vector<1x256xf32>, vector<256x128xf32>, vector<1x128xf32> -> vector<1x128xf32>
    %232 = arith.addf %230, %231 : vector<1x128xf32>
    %cst_82 = arith.constant dense<0.000000e+00> : vector<1x128xf32>
    %233 = tpu.matmul %227, %229, %cst_82 {dimension_numbers = #tpu.dot_dimension_numbers<[1], [0], [0], [1], [0, 0, 1, 1], [], []>} : vector<1x64xf32>, vector<64x128xf32>, vector<1x128xf32> -> vector<1x128xf32>
    %234 = arith.addf %232, %233 : vector<1x128xf32>
    %cst_83 = arith.constant 0.000000e+00 : f32
    %235 = vector.broadcast %cst_83 : f32 to vector<1x128xf32>
    %236 = arith.maximumf %234, %235 : vector<1x128xf32>
    %c0_84 = arith.constant 0 : index
    %c0_85 = arith.constant 0 : index
    %237 = vector.load %arg24[%c0_84, %c0_85] : memref<384x128xf32, #tpu.memory_space<vmem>>, vector<256x128xf32>
    %c256_86 = arith.constant 256 : index
    %c0_87 = arith.constant 0 : index
    %238 = vector.load %arg24[%c256_86, %c0_87] : memref<384x128xf32, #tpu.memory_space<vmem>>, vector<128x128xf32>
    %c0_88 = arith.constant 0 : index
    %c0_89 = arith.constant 0 : index
    %239 = vector.load %arg25[%c0_88, %c0_89] : memref<1x128xf32, #tpu.memory_space<vmem>>, vector<1x128xf32>
    %cst_90 = arith.constant dense<0.000000e+00> : vector<1x128xf32>
    %240 = tpu.matmul %83, %237, %cst_90 {dimension_numbers = #tpu.dot_dimension_numbers<[1], [0], [0], [1], [0, 0, 1, 1], [], []>} : vector<1x256xf32>, vector<256x128xf32>, vector<1x128xf32> -> vector<1x128xf32>
    %241 = arith.addf %239, %240 : vector<1x128xf32>
    %cst_91 = arith.constant dense<0.000000e+00> : vector<1x128xf32>
    %242 = tpu.matmul %236, %238, %cst_91 {dimension_numbers = #tpu.dot_dimension_numbers<[1], [0], [0], [1], [0, 0, 1, 1], [], []>} : vector<1x128xf32>, vector<128x128xf32>, vector<1x128xf32> -> vector<1x128xf32>
    %243 = arith.addf %241, %242 : vector<1x128xf32>
    %cst_92 = arith.constant 0.000000e+00 : f32
    %244 = vector.broadcast %cst_92 : f32 to vector<1x128xf32>
    %245 = arith.maximumf %243, %244 : vector<1x128xf32>
    %c0_93 = arith.constant 0 : index
    %c0_94 = arith.constant 0 : index
    %246 = vector.load %arg26[%c0_93, %c0_94] : memref<128x2xf32, #tpu.memory_space<vmem>>, vector<128x2xf32>
    %c0_95 = arith.constant 0 : index
    %c0_96 = arith.constant 0 : index
    %247 = vector.load %arg27[%c0_95, %c0_96] : memref<1x2xf32, #tpu.memory_space<vmem>>, vector<1x2xf32>
    %cst_97 = arith.constant dense<0.000000e+00> : vector<1x2xf32>
    %248 = tpu.matmul %245, %246, %cst_97 {dimension_numbers = #tpu.dot_dimension_numbers<[1], [0], [0], [1], [0, 0, 1, 1], [], []>} : vector<1x128xf32>, vector<128x2xf32>, vector<1x2xf32> -> vector<1x2xf32>
    %249 = arith.addf %247, %248 : vector<1x2xf32>
    %c0_98 = arith.constant 0 : index
    %c0_99 = arith.constant 0 : index
    %c0_100 = arith.constant 0 : index
    %250 = vector.load %arg28[%c0_98, %c0_99, %c0_100] : memref<1x1x2xf32, #tpu.memory_space<vmem>>, vector<1x1x2xf32>
    %251 = vector.shape_cast %250 : vector<1x1x2xf32> to vector<1x2xf32>
    %252 = vector.shape_cast %249 : vector<1x2xf32> to vector<1x1x2xf32>
    tpu.vector_store %arg28[%c0_98, %c0_99, %c0_100], %252 {strides = array<i32>} : memref<1x1x2xf32, #tpu.memory_space<vmem>>, vector<1x1x2xf32>,
    return
  }
  func.func @transform_0(%arg0: i32) -> (i32, i32, i32) {
    %c0_i32 = arith.constant 0 : i32
    %c0_i32_0 = arith.constant 0 : i32
    %c0_i32_1 = arith.constant 0 : i32
    return %arg0, %c0_i32, %c0_i32_0 : i32, i32, i32
  }
  func.func @transform_1(%arg0: i32) -> (i32, i32, i32) {
    %c0_i32 = arith.constant 0 : i32
    %c0_i32_0 = arith.constant 0 : i32
    %c0_i32_1 = arith.constant 0 : i32
    return %arg0, %c0_i32, %c0_i32_0 : i32, i32, i32
  }
  func.func @transform_2(%arg0: i32) -> (i32, i32, i32) {
    %c0_i32 = arith.constant 0 : i32
    %c0_i32_0 = arith.constant 0 : i32
    %c0_i32_1 = arith.constant 0 : i32
    return %arg0, %c0_i32, %c0_i32_0 : i32, i32, i32
  }
  func.func @transform_3(%arg0: i32) -> (i32, i32) {
    %c0_i32 = arith.constant 0 : i32
    %c0_i32_0 = arith.constant 0 : i32
    %c0_i32_1 = arith.constant 0 : i32
    return %c0_i32, %c0_i32_0 : i32, i32
  }
  func.func @transform_4(%arg0: i32) -> (i32, i32) {
    %c0_i32 = arith.constant 0 : i32
    %c0_i32_0 = arith.constant 0 : i32
    %c0_i32_1 = arith.constant 0 : i32
    return %c0_i32, %c0_i32_0 : i32, i32
  }
  func.func @transform_5(%arg0: i32) -> (i32, i32) {
    %c0_i32 = arith.constant 0 : i32
    %c0_i32_0 = arith.constant 0 : i32
    %c0_i32_1 = arith.constant 0 : i32
    return %c0_i32, %c0_i32_0 : i32, i32
  }
  func.func @transform_6(%arg0: i32) -> (i32, i32) {
    %c0_i32 = arith.constant 0 : i32
    %c0_i32_0 = arith.constant 0 : i32
    %c0_i32_1 = arith.constant 0 : i32
    return %c0_i32, %c0_i32_0 : i32, i32
  }
  func.func @transform_7(%arg0: i32) -> (i32, i32) {
    %c0_i32 = arith.constant 0 : i32
    %c0_i32_0 = arith.constant 0 : i32
    %c0_i32_1 = arith.constant 0 : i32
    return %c0_i32, %c0_i32_0 : i32, i32
  }
  func.func @transform_8(%arg0: i32) -> (i32, i32) {
    %c0_i32 = arith.constant 0 : i32
    %c0_i32_0 = arith.constant 0 : i32
    %c0_i32_1 = arith.constant 0 : i32
    return %c0_i32, %c0_i32_0 : i32, i32
  }
  func.func @transform_9(%arg0: i32) -> (i32, i32) {
    %c0_i32 = arith.constant 0 : i32
    %c0_i32_0 = arith.constant 0 : i32
    %c0_i32_1 = arith.constant 0 : i32
    return %c0_i32, %c0_i32_0 : i32, i32
  }
  func.func @transform_10(%arg0: i32) -> (i32, i32) {
    %c0_i32 = arith.constant 0 : i32
    %c0_i32_0 = arith.constant 0 : i32
    %c0_i32_1 = arith.constant 0 : i32
    return %c0_i32, %c0_i32_0 : i32, i32
  }
  func.func @transform_11(%arg0: i32) -> (i32, i32) {
    %c0_i32 = arith.constant 0 : i32
    %c0_i32_0 = arith.constant 0 : i32
    %c0_i32_1 = arith.constant 0 : i32
    return %c0_i32, %c0_i32_0 : i32, i32
  }
  func.func @transform_12(%arg0: i32) -> (i32, i32) {
    %c0_i32 = arith.constant 0 : i32
    %c0_i32_0 = arith.constant 0 : i32
    %c0_i32_1 = arith.constant 0 : i32
    return %c0_i32, %c0_i32_0 : i32, i32
  }
  func.func @transform_13(%arg0: i32) -> (i32, i32) {
    %c0_i32 = arith.constant 0 : i32
    %c0_i32_0 = arith.constant 0 : i32
    %c0_i32_1 = arith.constant 0 : i32
    return %c0_i32, %c0_i32_0 : i32, i32
  }
  func.func @transform_14(%arg0: i32) -> (i32, i32) {
    %c0_i32 = arith.constant 0 : i32
    %c0_i32_0 = arith.constant 0 : i32
    %c0_i32_1 = arith.constant 0 : i32
    return %c0_i32, %c0_i32_0 : i32, i32
  }
  func.func @transform_15(%arg0: i32) -> (i32, i32) {
    %c0_i32 = arith.constant 0 : i32
    %c0_i32_0 = arith.constant 0 : i32
    %c0_i32_1 = arith.constant 0 : i32
    return %c0_i32, %c0_i32_0 : i32, i32
  }
  func.func @transform_16(%arg0: i32) -> (i32, i32) {
    %c0_i32 = arith.constant 0 : i32
    %c0_i32_0 = arith.constant 0 : i32
    %c0_i32_1 = arith.constant 0 : i32
    return %c0_i32, %c0_i32_0 : i32, i32
  }
  func.func @transform_17(%arg0: i32) -> (i32, i32) {
    %c0_i32 = arith.constant 0 : i32
    %c0_i32_0 = arith.constant 0 : i32
    %c0_i32_1 = arith.constant 0 : i32
    return %c0_i32, %c0_i32_0 : i32, i32
  }
  func.func @transform_18(%arg0: i32) -> (i32, i32) {
    %c0_i32 = arith.constant 0 : i32
    %c0_i32_0 = arith.constant 0 : i32
    %c0_i32_1 = arith.constant 0 : i32
    return %c0_i32, %c0_i32_0 : i32, i32
  }
  func.func @transform_19(%arg0: i32) -> (i32, i32) {
    %c0_i32 = arith.constant 0 : i32
    %c0_i32_0 = arith.constant 0 : i32
    %c0_i32_1 = arith.constant 0 : i32
    return %c0_i32, %c0_i32_0 : i32, i32
  }
  func.func @transform_20(%arg0: i32) -> (i32, i32) {
    %c0_i32 = arith.constant 0 : i32
    %c0_i32_0 = arith.constant 0 : i32
    %c0_i32_1 = arith.constant 0 : i32
    return %c0_i32, %c0_i32_0 : i32, i32
  }
  func.func @transform_21(%arg0: i32) -> (i32, i32) {
    %c0_i32 = arith.constant 0 : i32
    %c0_i32_0 = arith.constant 0 : i32
    %c0_i32_1 = arith.constant 0 : i32
    return %c0_i32, %c0_i32_0 : i32, i32
  }
  func.func @transform_22(%arg0: i32) -> (i32, i32) {
    %c0_i32 = arith.constant 0 : i32
    %c0_i32_0 = arith.constant 0 : i32
    %c0_i32_1 = arith.constant 0 : i32
    return %c0_i32, %c0_i32_0 : i32, i32
  }
  func.func @transform_23(%arg0: i32) -> (i32, i32) {
    %c0_i32 = arith.constant 0 : i32
    %c0_i32_0 = arith.constant 0 : i32
    %c0_i32_1 = arith.constant 0 : i32
    return %c0_i32, %c0_i32_0 : i32, i32
  }
  func.func @transform_24(%arg0: i32) -> (i32, i32) {
    %c0_i32 = arith.constant 0 : i32
    %c0_i32_0 = arith.constant 0 : i32
    %c0_i32_1 = arith.constant 0 : i32
    return %c0_i32, %c0_i32_0 : i32, i32
  }
  func.func @transform_25(%arg0: i32) -> (i32, i32) {
    %c0_i32 = arith.constant 0 : i32
    %c0_i32_0 = arith.constant 0 : i32
    %c0_i32_1 = arith.constant 0 : i32
    return %c0_i32, %c0_i32_0 : i32, i32
  }
  func.func @transform_26(%arg0: i32) -> (i32, i32) {
    %c0_i32 = arith.constant 0 : i32
    %c0_i32_0 = arith.constant 0 : i32
    %c0_i32_1 = arith.constant 0 : i32
    return %c0_i32, %c0_i32_0 : i32, i32
  }
  func.func @transform_27(%arg0: i32) -> (i32, i32, i32) {
    %c0_i32 = arith.constant 0 : i32
    %c0_i32_0 = arith.constant 0 : i32
    %c0_i32_1 = arith.constant 0 : i32
    return %arg0, %c0_i32, %c0_i32_0 : i32, i32, i32
  }
}

</mosaic_0001>

<llo_original>
// kernel: static_model_forward.1
$region0: #{static_model_forward.1}
  #allocation0 [shape = 'u32[]', space=smem, size = 0x4, offset = 0x4, fixed_abs, tag = 'smem constant byte address 0x4 - core index']
  #allocation1 [shape = 'u32[144,128]{1,0:T(1,128)}', space=vmem, size = 0x12000, scoped, tag = 'internal scratch']
  %s0 = inlined_call_operand.vmem [shape: f32[2,2,768], index: 0, kind: input, shape index: {}]
  %s1 = inlined_call_operand.vmem [shape: f32[2,1,768], index: 1, kind: input, shape index: {}]
  %s2 = inlined_call_operand.vmem [shape: f32[2,1,256], index: 2, kind: input, shape index: {}]
  %s3 = inlined_call_operand.vmem [shape: f32[768,512], index: 3, kind: input, shape index: {}]
  %s4 = inlined_call_operand.vmem [shape: f32[1,512], index: 4, kind: input, shape index: {}]
  %s5 = inlined_call_operand.hbm [shape: f32[512,256], index: 5, kind: input, shape index: {}]
  %s6 = inlined_call_operand.vmem [shape: f32[1,256], index: 6, kind: input, shape index: {}]
  %s7 = inlined_call_operand.hbm [shape: f32[768,512], index: 7, kind: input, shape index: {}]
  %s8 = inlined_call_operand.vmem [shape: f32[1,512], index: 8, kind: input, shape index: {}]
  %s9 = inlined_call_operand.hbm [shape: f32[512,256], index: 9, kind: input, shape index: {}]
  %s10 = inlined_call_operand.vmem [shape: f32[1,256], index: 10, kind: input, shape index: {}]
  %s11 = inlined_call_operand.hbm [shape: f32[256,512], index: 11, kind: input, shape index: {}]
  %s12 = inlined_call_operand.vmem [shape: f32[1,512], index: 12, kind: input, shape index: {}]
  %s13 = inlined_call_operand.hbm [shape: f32[512,256], index: 13, kind: input, shape index: {}]
  %s14 = inlined_call_operand.vmem [shape: f32[1,256], index: 14, kind: input, shape index: {}]
  %s15 = inlined_call_operand.vmem [shape: f32[64,256], index: 15, kind: input, shape index: {}]
  %s16 = inlined_call_operand.vmem [shape: f32[1,256], index: 16, kind: input, shape index: {}]
  %s17 = inlined_call_operand.vmem [shape: f32[32,256], index: 17, kind: input, shape index: {}]
  %s18 = inlined_call_operand.vmem [shape: f32[1,256], index: 18, kind: input, shape index: {}]
  %s19 = inlined_call_operand.vmem [shape: f32[32,64], index: 19, kind: input, shape index: {}]
  %s20 = inlined_call_operand.vmem [shape: f32[1,64], index: 20, kind: input, shape index: {}]
  %s21 = inlined_call_operand.hbm [shape: f32[320,128], index: 21, kind: input, shape index: {}]
  %s22 = inlined_call_operand.vmem [shape: f32[1,128], index: 22, kind: input, shape index: {}]
  %s23 = inlined_call_operand.vmem [shape: f32[384,128], index: 23, kind: input, shape index: {}]
  %s24 = inlined_call_operand.vmem [shape: f32[1,128], index: 24, kind: input, shape index: {}]
  %s25 = inlined_call_operand.vmem [shape: f32[128,2], index: 25, kind: input, shape index: {}]
  %s26 = inlined_call_operand.vmem [shape: f32[1,2], index: 26, kind: input, shape index: {}]
  %s27 = inlined_call_operand.hbm [shape: f32[2,1,2], index: 27, kind: output, shape index: {}]
  %s28 = sld [smem:[#allocation0]]
  $region165: #{static_model_forward.1} parent=0
    _
  %s30 = ssub.s32 1, %s28
  %s31 = scalar_select 0, %s30, %s28
  $region1: #{static_model_forward.1} parent=0
    #allocation2 [shape = 'u8[524288]{0}', space=vmem, size = 0x80000, scoped, tag = 'input window, operand 5, single buffered']
    #allocation3 [shape = 's32[2]{0}', space=sflag, size = 0x8, scoped, tag = 'scoped memory for static_model_forward.1']
    #allocation4 [shape = 's32[2]{0}', space=sflag, size = 0x8, scoped, tag = 'scoped memory for static_model_forward.1']
    #allocation5 [shape = 'u8[1572864]{0}', space=vmem, size = 0x180000, scoped, tag = 'input window, operand 7, single buffered']
    #allocation6 [shape = 's32[1]{0}', space=sflag, size = 0x4, scoped, tag = 'scoped memory for static_model_forward.1']
    #allocation7 [shape = 'u8[524288]{0}', space=vmem, size = 0x80000, scoped, tag = 'input window, operand 9, single buffered']
    #allocation8 [shape = 'u8[524288]{0}', space=vmem, size = 0x80000, scoped, tag = 'input window, operand 11, single buffered']
    #allocation9 [shape = 's32[1]{0}', space=sflag, size = 0x4, scoped, tag = 'scoped memory for static_model_forward.1']
    #allocation10 [shape = 'u8[524288]{0}', space=vmem, size = 0x80000, scoped, tag = 'input window, operand 13, single buffered']
    #allocation11 [shape = 'u8[163840]{0}', space=vmem, size = 0x28000, scoped, tag = 'input window, operand 21, single buffered']
    #allocation12 [shape = 's32[1]{0}', space=sflag, size = 0x4, scoped, tag = 'scoped memory for static_model_forward.1']
    #allocation13 [shape = 'u8[1024]{0}', space=vmem, size = 0x400, scoped, tag = 'output window, operand 0']
    %32 = vsyncpa [#allocation3], 0
    %33 = vsyncpa [#allocation6], 0
    %34 = vsyncpa [#allocation9], 0
    %35 = vsyncpa [#allocation12], 0
    %36 = vsyncpa [#allocation4], 0
    %s37 = scalar_lea.sflag [#allocation4], 1
    %38 = vsyncpa %s37, 0
    loop: start=0, step=1, limit=4
    $region2: #{static_model_forward.1} parent=1 // loop_pre_header
      _
    $region3: #{static_model_forward.1} parent=1 // loop_header
      %s40 = sphi 0, %s44
      %p41 = scmp.ge.s32.totalorder %s40, 4
      %s50 = sphi 0, %s52
      %s53 = sphi 0, %s50
      %s54 = sphi 0, %s53
      %s70 = sphi 0, %s54
      %s76 = sphi 0, %s78
      %s79 = sphi 0, %s76
      %s80 = sphi 0, %s79
      %s96 = sphi 0, %s80
      %s102 = sphi 0, %s104
      %s105 = sphi 0, %s102
      %s106 = sphi 0, %s105
      %s122 = sphi 0, %s106
      %s126 = sphi 0, %s126
      %s128 = sphi 0, %s126
      %s129 = sphi 0, %s128
      %s143 = sphi 0, %s129
      %s147 = sphi 0, %s147
      %s149 = sphi 0, %s147
      %s150 = sphi 0, %s149
      %s164 = sphi 0, %s150
      %s168 = sphi 0, %s168
      %s170 = sphi 0, %s168
      %s171 = sphi 0, %s170
      %s185 = sphi 0, %s171
      %s189 = sphi 0, %s189
      %s191 = sphi 0, %s189
      %s192 = sphi 0, %s191
      %s206 = sphi 0, %s192
      %s210 = sphi 0, %s210
      %s212 = sphi 0, %s210
      %s213 = sphi 0, %s212
      %s227 = sphi 0, %s213
      %s231 = sphi 0, %s231
      %s233 = sphi 0, %s231
      %s234 = sphi 0, %s233
      %s248 = sphi 0, %s234
      %s252 = sphi 0, %s252
      %s254 = sphi 0, %s252
      %s255 = sphi 0, %s254
      %s269 = sphi 0, %s255
      %s273 = sphi 0, %s273
      %s275 = sphi 0, %s273
      %s276 = sphi 0, %s275
      %s290 = sphi 0, %s276
      %s294 = sphi 0, %s294
      %s296 = sphi 0, %s294
      %s297 = sphi 0, %s296
      %s311 = sphi 0, %s297
      %s315 = sphi 0, %s315
      %s317 = sphi 0, %s315
      %s318 = sphi 0, %s317
      %s332 = sphi 0, %s318
      %s336 = sphi 0, %s336
      %s338 = sphi 0, %s336
      %s339 = sphi 0, %s338
      %s353 = sphi 0, %s339
      %s357 = sphi 0, %s357
      %s359 = sphi 0, %s357
      %s360 = sphi 0, %s359
      %s374 = sphi 0, %s360
      %s378 = sphi 0, %s378
      %s380 = sphi 0, %s378
      %s381 = sphi 0, %s380
      %s395 = sphi 0, %s381
      %s399 = sphi 0, %s399
      %s401 = sphi 0, %s399
      %s402 = sphi 0, %s401
      %s416 = sphi 0, %s402
      %s420 = sphi 0, %s420
      %s422 = sphi 0, %s420
      %s423 = sphi 0, %s422
      %s437 = sphi 0, %s423
      %s441 = sphi 0, %s441
      %s443 = sphi 0, %s441
      %s444 = sphi 0, %s443
      %s458 = sphi 0, %s444
      %s462 = sphi 0, %s462
      %s464 = sphi 0, %s462
      %s465 = sphi 0, %s464
      %s479 = sphi 0, %s465
      %s483 = sphi 0, %s483
      %s485 = sphi 0, %s483
      %s486 = sphi 0, %s485
      %s500 = sphi 0, %s486
      %s504 = sphi 0, %s504
      %s506 = sphi 0, %s504
      %s507 = sphi 0, %s506
      %s521 = sphi 0, %s507
      %s525 = sphi 0, %s525
      %s527 = sphi 0, %s525
      %s528 = sphi 0, %s527
      %s542 = sphi 0, %s528
      %s546 = sphi 0, %s546
      %s548 = sphi 0, %s546
      %s549 = sphi 0, %s548
      %s563 = sphi 0, %s549
      %s567 = sphi 0, %s567
      %s569 = sphi 0, %s567
      %s570 = sphi 0, %s569
      %s584 = sphi 0, %s570
      %s588 = sphi 0, %s588
      %s590 = sphi 0, %s588
      %s591 = sphi 0, %s590
      %s605 = sphi 0, %s591
      %s609 = sphi 0, %s609
      %s611 = sphi 0, %s609
      %s612 = sphi 0, %s611
      %s626 = sphi 0, %s612
      %s632 = sphi 0, %s634
      %s635 = sphi 0, %s632
      %s636 = sphi 0, %s635
      %s652 = sphi 0, %s636
    $region4: #{static_model_forward.1} parent=1 // loop_header_branch
      %43 = sbr.rel (%p41) target = $region8
    $region5: #{static_model_forward.1} parent=1 // loop_body
      %s45 = ssub.s32 %s40, 1
      %s46 = ssub.s32 %s40, 2
      %s47 = sadd.s32 %s40, 1
      %s48 = ssub.s32 %s40, %s47
      %p49 = scmp.eq.s32.totalorder %s48, 0
      %s51 = sadd.s32 %s50, 1
      %s52 = scalar_select %p49, %s50, %s51
      %p55 = pneg %p49
      %p56 = scmp.eq.s32.totalorder %s40, 1
      %p57 = por %p55, %p56
      %p58 = scmp.ne.s32.totalorder %s50, %s53
      %p59 = scmp.eq.s32.totalorder %s40, 0
      %p60 = por %p58, %p59
      %p61 = scmp.ne.s32.totalorder %s50, %s53
      %p62 = scmp.eq.s32.totalorder %s45, 1
      %p63 = por %p61, %p62
      %p64 = scmp.ne.s32.totalorder %s53, %s54
      %p65 = scmp.eq.s32.totalorder %s45, 0
      %p66 = por %p64, %p65
      %p67 = scmp.ne.s32.totalorder %s53, %s54
      %p68 = scmp.eq.s32.totalorder %s46, 1
      %p69 = por %p67, %p68
      %p71 = scmp.ne.s32.totalorder %s54, %s70
      %p72 = scmp.eq.s32.totalorder %s46, 0
      %p73 = por %p71, %p72
      %s74 = ssub.s32 %s40, %s47
      %p75 = scmp.eq.s32.totalorder %s74, 0
      %s77 = sadd.s32 %s76, 1
      %s78 = scalar_select %p75, %s76, %s77
      %p81 = pneg %p75
      %p82 = scmp.eq.s32.totalorder %s40, 1
      %p83 = por %p81, %p82
      %p84 = scmp.ne.s32.totalorder %s76, %s79
      %p85 = scmp.eq.s32.totalorder %s40, 0
      %p86 = por %p84, %p85
      %p87 = scmp.ne.s32.totalorder %s76, %s79
      %p88 = scmp.eq.s32.totalorder %s45, 1
      %p89 = por %p87, %p88
      %p90 = scmp.ne.s32.totalorder %s79, %s80
      %p91 = scmp.eq.s32.totalorder %s45, 0
      %p92 = por %p90, %p91
      %p93 = scmp.ne.s32.totalorder %s79, %s80
      %p94 = scmp.eq.s32.totalorder %s46, 1
      %p95 = por %p93, %p94
      %p97 = scmp.ne.s32.totalorder %s80, %s96
      %p98 = scmp.eq.s32.totalorder %s46, 0
      %p99 = por %p97, %p98
      %s100 = ssub.s32 %s40, %s47
      %p101 = scmp.eq.s32.totalorder %s100, 0
      %s103 = sadd.s32 %s102, 1
      %s104 = scalar_select %p101, %s102, %s103
      %p107 = pneg %p101
      %p108 = scmp.eq.s32.totalorder %s40, 1
      %p109 = por %p107, %p108
      %p110 = scmp.ne.s32.totalorder %s102, %s105
      %p111 = scmp.eq.s32.totalorder %s40, 0
      %p112 = por %p110, %p111
      %p113 = scmp.ne.s32.totalorder %s102, %s105
      %p114 = scmp.eq.s32.totalorder %s45, 1
      %p115 = por %p113, %p114
      %p116 = scmp.ne.s32.totalorder %s105, %s106
      %p117 = scmp.eq.s32.totalorder %s45, 0
      %p118 = por %p116, %p117
      %p119 = scmp.ne.s32.totalorder %s105, %s106
      %p120 = scmp.eq.s32.totalorder %s46, 1
      %p121 = por %p119, %p120
      %p123 = scmp.ne.s32.totalorder %s106, %s122
      %p124 = scmp.eq.s32.totalorder %s46, 0
      %p125 = por %p123, %p124
      %s127 = sadd.s32 %s126, 1
      %p130 = scmp.eq.s32.totalorder %s40, 1
      %p131 = scmp.ne.s32.totalorder %s126, %s128
      %p132 = scmp.eq.s32.totalorder %s40, 0
      %p133 = por %p131, %p132
      %p134 = scmp.ne.s32.totalorder %s126, %s128
      %p135 = scmp.eq.s32.totalorder %s45, 1
      %p136 = por %p134, %p135
      %p137 = scmp.ne.s32.totalorder %s128, %s129
      %p138 = scmp.eq.s32.totalorder %s45, 0
      %p139 = por %p137, %p138
      %p140 = scmp.ne.s32.totalorder %s128, %s129
      %p141 = scmp.eq.s32.totalorder %s46, 1
      %p142 = por %p140, %p141
      %p144 = scmp.ne.s32.totalorder %s129, %s143
      %p145 = scmp.eq.s32.totalorder %s46, 0
      %p146 = por %p144, %p145
      %s148 = sadd.s32 %s147, 1
      %p151 = scmp.eq.s32.totalorder %s40, 1
      %p152 = scmp.ne.s32.totalorder %s147, %s149
      %p153 = scmp.eq.s32.totalorder %s40, 0
      %p154 = por %p152, %p153
      %p155 = scmp.ne.s32.totalorder %s147, %s149
      %p156 = scmp.eq.s32.totalorder %s45, 1
      %p157 = por %p155, %p156
      %p158 = scmp.ne.s32.totalorder %s149, %s150
      %p159 = scmp.eq.s32.totalorder %s45, 0
      %p160 = por %p158, %p159
      %p161 = scmp.ne.s32.totalorder %s149, %s150
      %p162 = scmp.eq.s32.totalorder %s46, 1
      %p163 = por %p161, %p162
      %p165 = scmp.ne.s32.totalorder %s150, %s164
      %p166 = scmp.eq.s32.totalorder %s46, 0
      %p167 = por %p165, %p166
      %s169 = sadd.s32 %s168, 1
      %p172 = scmp.eq.s32.totalorder %s40, 1
      %p173 = scmp.ne.s32.totalorder %s168, %s170
      %p174 = scmp.eq.s32.totalorder %s40, 0
      %p175 = por %p173, %p174
      %p176 = scmp.ne.s32.totalorder %s168, %s170
      %p177 = scmp.eq.s32.totalorder %s45, 1
      %p178 = por %p176, %p177
      %p179 = scmp.ne.s32.totalorder %s170, %s171
      %p180 = scmp.eq.s32.totalorder %s45, 0
      %p181 = por %p179, %p180
      %p182 = scmp.ne.s32.totalorder %s170, %s171
      %p183 = scmp.eq.s32.totalorder %s46, 1
      %p184 = por %p182, %p183
      %p186 = scmp.ne.s32.totalorder %s171, %s185
      %p187 = scmp.eq.s32.totalorder %s46, 0
      %p188 = por %p186, %p187
      %s190 = sadd.s32 %s189, 1
      %p193 = scmp.eq.s32.totalorder %s40, 1
      %p194 = scmp.ne.s32.totalorder %s189, %s191
      %p195 = scmp.eq.s32.totalorder %s40, 0
      %p196 = por %p194, %p195
      %p197 = scmp.ne.s32.totalorder %s189, %s191
      %p198 = scmp.eq.s32.totalorder %s45, 1
      %p199 = por %p197, %p198
      %p200 = scmp.ne.s32.totalorder %s191, %s192
      %p201 = scmp.eq.s32.totalorder %s45, 0
      %p202 = por %p200, %p201
      %p203 = scmp.ne.s32.totalorder %s191, %s192
      %p204 = scmp.eq.s32.totalorder %s46, 1
      %p205 = por %p203, %p204
      %p207 = scmp.ne.s32.totalorder %s192, %s206
      %p208 = scmp.eq.s32.totalorder %s46, 0
      %p209 = por %p207, %p208
      %s211 = sadd.s32 %s210, 1
      %p214 = scmp.eq.s32.totalorder %s40, 1
      %p215 = scmp.ne.s32.totalorder %s210, %s212
      %p216 = scmp.eq.s32.totalorder %s40, 0
      %p217 = por %p215, %p216
      %p218 = scmp.ne.s32.totalorder %s210, %s212
      %p219 = scmp.eq.s32.totalorder %s45, 1
      %p220 = por %p218, %p219
      %p221 = scmp.ne.s32.totalorder %s212, %s213
      %p222 = scmp.eq.s32.totalorder %s45, 0
      %p223 = por %p221, %p222
      %p224 = scmp.ne.s32.totalorder %s212, %s213
      %p225 = scmp.eq.s32.totalorder %s46, 1
      %p226 = por %p224, %p225
      %p228 = scmp.ne.s32.totalorder %s213, %s227
      %p229 = scmp.eq.s32.totalorder %s46, 0
      %p230 = por %p228, %p229
      %s232 = sadd.s32 %s231, 1
      %p235 = scmp.eq.s32.totalorder %s40, 1
      %p236 = scmp.ne.s32.totalorder %s231, %s233
      %p237 = scmp.eq.s32.totalorder %s40, 0
      %p238 = por %p236, %p237
      %p239 = scmp.ne.s32.totalorder %s231, %s233
      %p240 = scmp.eq.s32.totalorder %s45, 1
      %p241 = por %p239, %p240
      %p242 = scmp.ne.s32.totalorder %s233, %s234
      %p243 = scmp.eq.s32.totalorder %s45, 0
      %p244 = por %p242, %p243
      %p245 = scmp.ne.s32.totalorder %s233, %s234
      %p246 = scmp.eq.s32.totalorder %s46, 1
      %p247 = por %p245, %p246
      %p249 = scmp.ne.s32.totalorder %s234, %s248
      %p250 = scmp.eq.s32.totalorder %s46, 0
      %p251 = por %p249, %p250
      %s253 = sadd.s32 %s252, 1
      %p256 = scmp.eq.s32.totalorder %s40, 1
      %p257 = scmp.ne.s32.totalorder %s252, %s254
      %p258 = scmp.eq.s32.totalorder %s40, 0
      %p259 = por %p257, %p258
      %p260 = scmp.ne.s32.totalorder %s252, %s254
      %p261 = scmp.eq.s32.totalorder %s45, 1
      %p262 = por %p260, %p261
      %p263 = scmp.ne.s32.totalorder %s254, %s255
      %p264 = scmp.eq.s32.totalorder %s45, 0
      %p265 = por %p263, %p264
      %p266 = scmp.ne.s32.totalorder %s254, %s255
      %p267 = scmp.eq.s32.totalorder %s46, 1
      %p268 = por %p266, %p267
      %p270 = scmp.ne.s32.totalorder %s255, %s269
      %p271 = scmp.eq.s32.totalorder %s46, 0
      %p272 = por %p270, %p271
      %s274 = sadd.s32 %s273, 1
      %p277 = scmp.eq.s32.totalorder %s40, 1
      %p278 = scmp.ne.s32.totalorder %s273, %s275
      %p279 = scmp.eq.s32.totalorder %s40, 0
      %p280 = por %p278, %p279
      %p281 = scmp.ne.s32.totalorder %s273, %s275
      %p282 = scmp.eq.s32.totalorder %s45, 1
      %p283 = por %p281, %p282
      %p284 = scmp.ne.s32.totalorder %s275, %s276
      %p285 = scmp.eq.s32.totalorder %s45, 0
      %p286 = por %p284, %p285
      %p287 = scmp.ne.s32.totalorder %s275, %s276
      %p288 = scmp.eq.s32.totalorder %s46, 1
      %p289 = por %p287, %p288
      %p291 = scmp.ne.s32.totalorder %s276, %s290
      %p292 = scmp.eq.s32.totalorder %s46, 0
      %p293 = por %p291, %p292
      %s295 = sadd.s32 %s294, 1
      %p298 = scmp.eq.s32.totalorder %s40, 1
      %p299 = scmp.ne.s32.totalorder %s294, %s296
      %p300 = scmp.eq.s32.totalorder %s40, 0
      %p301 = por %p299, %p300
      %p302 = scmp.ne.s32.totalorder %s294, %s296
      %p303 = scmp.eq.s32.totalorder %s45, 1
      %p304 = por %p302, %p303
      %p305 = scmp.ne.s32.totalorder %s296, %s297
      %p306 = scmp.eq.s32.totalorder %s45, 0
      %p307 = por %p305, %p306
      %p308 = scmp.ne.s32.totalorder %s296, %s297
      %p309 = scmp.eq.s32.totalorder %s46, 1
      %p310 = por %p308, %p309
      %p312 = scmp.ne.s32.totalorder %s297, %s311
      %p313 = scmp.eq.s32.totalorder %s46, 0
      %p314 = por %p312, %p313
      %s316 = sadd.s32 %s315, 1
      %p319 = scmp.eq.s32.totalorder %s40, 1
      %p320 = scmp.ne.s32.totalorder %s315, %s317
      %p321 = scmp.eq.s32.totalorder %s40, 0
      %p322 = por %p320, %p321
      %p323 = scmp.ne.s32.totalorder %s315, %s317
      %p324 = scmp.eq.s32.totalorder %s45, 1
      %p325 = por %p323, %p324
      %p326 = scmp.ne.s32.totalorder %s317, %s318
      %p327 = scmp.eq.s32.totalorder %s45, 0
      %p328 = por %p326, %p327
      %p329 = scmp.ne.s32.totalorder %s317, %s318
      %p330 = scmp.eq.s32.totalorder %s46, 1
      %p331 = por %p329, %p330
      %p333 = scmp.ne.s32.totalorder %s318, %s332
      %p334 = scmp.eq.s32.totalorder %s46, 0
      %p335 = por %p333, %p334
      %s337 = sadd.s32 %s336, 1
      %p340 = scmp.eq.s32.totalorder %s40, 1
      %p341 = scmp.ne.s32.totalorder %s336, %s338
      %p342 = scmp.eq.s32.totalorder %s40, 0
      %p343 = por %p341, %p342
      %p344 = scmp.ne.s32.totalorder %s336, %s338
      %p345 = scmp.eq.s32.totalorder %s45, 1
      %p346 = por %p344, %p345
      %p347 = scmp.ne.s32.totalorder %s338, %s339
      %p348 = scmp.eq.s32.totalorder %s45, 0
      %p349 = por %p347, %p348
      %p350 = scmp.ne.s32.totalorder %s338, %s339
      %p351 = scmp.eq.s32.totalorder %s46, 1
      %p352 = por %p350, %p351
      %p354 = scmp.ne.s32.totalorder %s339, %s353
      %p355 = scmp.eq.s32.totalorder %s46, 0
      %p356 = por %p354, %p355
      %s358 = sadd.s32 %s357, 1
      %p361 = scmp.eq.s32.totalorder %s40, 1
      %p362 = scmp.ne.s32.totalorder %s357, %s359
      %p363 = scmp.eq.s32.totalorder %s40, 0
      %p364 = por %p362, %p363
      %p365 = scmp.ne.s32.totalorder %s357, %s359
      %p366 = scmp.eq.s32.totalorder %s45, 1
      %p367 = por %p365, %p366
      %p368 = scmp.ne.s32.totalorder %s359, %s360
      %p369 = scmp.eq.s32.totalorder %s45, 0
      %p370 = por %p368, %p369
      %p371 = scmp.ne.s32.totalorder %s359, %s360
      %p372 = scmp.eq.s32.totalorder %s46, 1
      %p373 = por %p371, %p372
      %p375 = scmp.ne.s32.totalorder %s360, %s374
      %p376 = scmp.eq.s32.totalorder %s46, 0
      %p377 = por %p375, %p376
      %s379 = sadd.s32 %s378, 1
      %p382 = scmp.eq.s32.totalorder %s40, 1
      %p383 = scmp.ne.s32.totalorder %s378, %s380
      %p384 = scmp.eq.s32.totalorder %s40, 0
      %p385 = por %p383, %p384
      %p386 = scmp.ne.s32.totalorder %s378, %s380
      %p387 = scmp.eq.s32.totalorder %s45, 1
      %p388 = por %p386, %p387
      %p389 = scmp.ne.s32.totalorder %s380, %s381
      %p390 = scmp.eq.s32.totalorder %s45, 0
      %p391 = por %p389, %p390
      %p392 = scmp.ne.s32.totalorder %s380, %s381
      %p393 = scmp.eq.s32.totalorder %s46, 1
      %p394 = por %p392, %p393
      %p396 = scmp.ne.s32.totalorder %s381, %s395
      %p397 = scmp.eq.s32.totalorder %s46, 0
      %p398 = por %p396, %p397
      %s400 = sadd.s32 %s399, 1
      %p403 = scmp.eq.s32.totalorder %s40, 1
      %p404 = scmp.ne.s32.totalorder %s399, %s401
      %p405 = scmp.eq.s32.totalorder %s40, 0
      %p406 = por %p404, %p405
      %p407 = scmp.ne.s32.totalorder %s399, %s401
      %p408 = scmp.eq.s32.totalorder %s45, 1
      %p409 = por %p407, %p408
      %p410 = scmp.ne.s32.totalorder %s401, %s402
      %p411 = scmp.eq.s32.totalorder %s45, 0
      %p412 = por %p410, %p411
      %p413 = scmp.ne.s32.totalorder %s401, %s402
      %p414 = scmp.eq.s32.totalorder %s46, 1
      %p415 = por %p413, %p414
      %p417 = scmp.ne.s32.totalorder %s402, %s416
      %p418 = scmp.eq.s32.totalorder %s46, 0
      %p419 = por %p417, %p418
      %s421 = sadd.s32 %s420, 1
      %p424 = scmp.eq.s32.totalorder %s40, 1
      %p425 = scmp.ne.s32.totalorder %s420, %s422
      %p426 = scmp.eq.s32.totalorder %s40, 0
      %p427 = por %p425, %p426
      %p428 = scmp.ne.s32.totalorder %s420, %s422
      %p429 = scmp.eq.s32.totalorder %s45, 1
      %p430 = por %p428, %p429
      %p431 = scmp.ne.s32.totalorder %s422, %s423
      %p432 = scmp.eq.s32.totalorder %s45, 0
      %p433 = por %p431, %p432
      %p434 = scmp.ne.s32.totalorder %s422, %s423
      %p435 = scmp.eq.s32.totalorder %s46, 1
      %p436 = por %p434, %p435
      %p438 = scmp.ne.s32.totalorder %s423, %s437
      %p439 = scmp.eq.s32.totalorder %s46, 0
      %p440 = por %p438, %p439
      %s442 = sadd.s32 %s441, 1
      %p445 = scmp.eq.s32.totalorder %s40, 1
      %p446 = scmp.ne.s32.totalorder %s441, %s443
      %p447 = scmp.eq.s32.totalorder %s40, 0
      %p448 = por %p446, %p447
      %p449 = scmp.ne.s32.totalorder %s441, %s443
      %p450 = scmp.eq.s32.totalorder %s45, 1
      %p451 = por %p449, %p450
      %p452 = scmp.ne.s32.totalorder %s443, %s444
      %p453 = scmp.eq.s32.totalorder %s45, 0
      %p454 = por %p452, %p453
      %p455 = scmp.ne.s32.totalorder %s443, %s444
      %p456 = scmp.eq.s32.totalorder %s46, 1
      %p457 = por %p455, %p456
      %p459 = scmp.ne.s32.totalorder %s444, %s458
      %p460 = scmp.eq.s32.totalorder %s46, 0
      %p461 = por %p459, %p460
      %s463 = sadd.s32 %s462, 1
      %p466 = scmp.eq.s32.totalorder %s40, 1
      %p467 = scmp.ne.s32.totalorder %s462, %s464
      %p468 = scmp.eq.s32.totalorder %s40, 0
      %p469 = por %p467, %p468
      %p470 = scmp.ne.s32.totalorder %s462, %s464
      %p471 = scmp.eq.s32.totalorder %s45, 1
      %p472 = por %p470, %p471
      %p473 = scmp.ne.s32.totalorder %s464, %s465
      %p474 = scmp.eq.s32.totalorder %s45, 0
      %p475 = por %p473, %p474
      %p476 = scmp.ne.s32.totalorder %s464, %s465
      %p477 = scmp.eq.s32.totalorder %s46, 1
      %p478 = por %p476, %p477
      %p480 = scmp.ne.s32.totalorder %s465, %s479
      %p481 = scmp.eq.s32.totalorder %s46, 0
      %p482 = por %p480, %p481
      %s484 = sadd.s32 %s483, 1
      %p487 = scmp.eq.s32.totalorder %s40, 1
      %p488 = scmp.ne.s32.totalorder %s483, %s485
      %p489 = scmp.eq.s32.totalorder %s40, 0
      %p490 = por %p488, %p489
      %p491 = scmp.ne.s32.totalorder %s483, %s485
      %p492 = scmp.eq.s32.totalorder %s45, 1
      %p493 = por %p491, %p492
      %p494 = scmp.ne.s32.totalorder %s485, %s486
      %p495 = scmp.eq.s32.totalorder %s45, 0
      %p496 = por %p494, %p495
      %p497 = scmp.ne.s32.totalorder %s485, %s486
      %p498 = scmp.eq.s32.totalorder %s46, 1
      %p499 = por %p497, %p498
      %p501 = scmp.ne.s32.totalorder %s486, %s500
      %p502 = scmp.eq.s32.totalorder %s46, 0
      %p503 = por %p501, %p502
      %s505 = sadd.s32 %s504, 1
      %p508 = scmp.eq.s32.totalorder %s40, 1
      %p509 = scmp.ne.s32.totalorder %s504, %s506
      %p510 = scmp.eq.s32.totalorder %s40, 0
      %p511 = por %p509, %p510
      %p512 = scmp.ne.s32.totalorder %s504, %s506
      %p513 = scmp.eq.s32.totalorder %s45, 1
      %p514 = por %p512, %p513
      %p515 = scmp.ne.s32.totalorder %s506, %s507
      %p516 = scmp.eq.s32.totalorder %s45, 0
      %p517 = por %p515, %p516
      %p518 = scmp.ne.s32.totalorder %s506, %s507
      %p519 = scmp.eq.s32.totalorder %s46, 1
      %p520 = por %p518, %p519
      %p522 = scmp.ne.s32.totalorder %s507, %s521
      %p523 = scmp.eq.s32.totalorder %s46, 0
      %p524 = por %p522, %p523
      %s526 = sadd.s32 %s525, 1
      %p529 = scmp.eq.s32.totalorder %s40, 1
      %p530 = scmp.ne.s32.totalorder %s525, %s527
      %p531 = scmp.eq.s32.totalorder %s40, 0
      %p532 = por %p530, %p531
      %p533 = scmp.ne.s32.totalorder %s525, %s527
      %p534 = scmp.eq.s32.totalorder %s45, 1
      %p535 = por %p533, %p534
      %p536 = scmp.ne.s32.totalorder %s527, %s528
      %p537 = scmp.eq.s32.totalorder %s45, 0
      %p538 = por %p536, %p537
      %p539 = scmp.ne.s32.totalorder %s527, %s528
      %p540 = scmp.eq.s32.totalorder %s46, 1
      %p541 = por %p539, %p540
      %p543 = scmp.ne.s32.totalorder %s528, %s542
      %p544 = scmp.eq.s32.totalorder %s46, 0
      %p545 = por %p543, %p544
      %s547 = sadd.s32 %s546, 1
      %p550 = scmp.eq.s32.totalorder %s40, 1
      %p551 = scmp.ne.s32.totalorder %s546, %s548
      %p552 = scmp.eq.s32.totalorder %s40, 0
      %p553 = por %p551, %p552
      %p554 = scmp.ne.s32.totalorder %s546, %s548
      %p555 = scmp.eq.s32.totalorder %s45, 1
      %p556 = por %p554, %p555
      %p557 = scmp.ne.s32.totalorder %s548, %s549
      %p558 = scmp.eq.s32.totalorder %s45, 0
      %p559 = por %p557, %p558
      %p560 = scmp.ne.s32.totalorder %s548, %s549
      %p561 = scmp.eq.s32.totalorder %s46, 1
      %p562 = por %p560, %p561
      %p564 = scmp.ne.s32.totalorder %s549, %s563
      %p565 = scmp.eq.s32.totalorder %s46, 0
      %p566 = por %p564, %p565
      %s568 = sadd.s32 %s567, 1
      %p571 = scmp.eq.s32.totalorder %s40, 1
      %p572 = scmp.ne.s32.totalorder %s567, %s569
      %p573 = scmp.eq.s32.totalorder %s40, 0
      %p574 = por %p572, %p573
      %p575 = scmp.ne.s32.totalorder %s567, %s569
      %p576 = scmp.eq.s32.totalorder %s45, 1
      %p577 = por %p575, %p576
      %p578 = scmp.ne.s32.totalorder %s569, %s570
      %p579 = scmp.eq.s32.totalorder %s45, 0
      %p580 = por %p578, %p579
      %p581 = scmp.ne.s32.totalorder %s569, %s570
      %p582 = scmp.eq.s32.totalorder %s46, 1
      %p583 = por %p581, %p582
      %p585 = scmp.ne.s32.totalorder %s570, %s584
      %p586 = scmp.eq.s32.totalorder %s46, 0
      %p587 = por %p585, %p586
      %s589 = sadd.s32 %s588, 1
      %p592 = scmp.eq.s32.totalorder %s40, 1
      %p593 = scmp.ne.s32.totalorder %s588, %s590
      %p594 = scmp.eq.s32.totalorder %s40, 0
      %p595 = por %p593, %p594
      %p596 = scmp.ne.s32.totalorder %s588, %s590
      %p597 = scmp.eq.s32.totalorder %s45, 1
      %p598 = por %p596, %p597
      %p599 = scmp.ne.s32.totalorder %s590, %s591
      %p600 = scmp.eq.s32.totalorder %s45, 0
      %p601 = por %p599, %p600
      %p602 = scmp.ne.s32.totalorder %s590, %s591
      %p603 = scmp.eq.s32.totalorder %s46, 1
      %p604 = por %p602, %p603
      %p606 = scmp.ne.s32.totalorder %s591, %s605
      %p607 = scmp.eq.s32.totalorder %s46, 0
      %p608 = por %p606, %p607
      %s610 = sadd.s32 %s609, 1
      %p613 = scmp.eq.s32.totalorder %s40, 1
      %p614 = scmp.ne.s32.totalorder %s609, %s611
      %p615 = scmp.eq.s32.totalorder %s40, 0
      %p616 = por %p614, %p615
      %p617 = scmp.ne.s32.totalorder %s609, %s611
      %p618 = scmp.eq.s32.totalorder %s45, 1
      %p619 = por %p617, %p618
      %p620 = scmp.ne.s32.totalorder %s611, %s612
      %p621 = scmp.eq.s32.totalorder %s45, 0
      %p622 = por %p620, %p621
      %p623 = scmp.ne.s32.totalorder %s611, %s612
      %p624 = scmp.eq.s32.totalorder %s46, 1
      %p625 = por %p623, %p624
      %p627 = scmp.ne.s32.totalorder %s612, %s626
      %p628 = scmp.eq.s32.totalorder %s46, 0
      %p629 = por %p627, %p628
      %s630 = ssub.s32 %s40, %s47
      %p631 = scmp.eq.s32.totalorder %s630, 0
      %s633 = sadd.s32 %s632, 1
      %s634 = scalar_select %p631, %s632, %s633
      %p637 = pneg %p631
      %p638 = scmp.eq.s32.totalorder %s40, 1
      %p639 = por %p637, %p638
      %p640 = scmp.ne.s32.totalorder %s632, %s635
      %p641 = scmp.eq.s32.totalorder %s40, 0
      %p642 = por %p640, %p641
      %p643 = scmp.ne.s32.totalorder %s632, %s635
      %p644 = scmp.eq.s32.totalorder %s45, 1
      %p645 = por %p643, %p644
      %p646 = scmp.ne.s32.totalorder %s635, %s636
      %p647 = scmp.eq.s32.totalorder %s45, 0
      %p648 = por %p646, %p647
      %p649 = scmp.ne.s32.totalorder %s635, %s636
      %p650 = scmp.eq.s32.totalorder %s46, 1
      %p651 = por %p649, %p650
      %p653 = scmp.ne.s32.totalorder %s636, %s652
      %p654 = scmp.eq.s32.totalorder %s46, 0
      %p655 = por %p653, %p654
      %p656 = scmp.le.s32.totalorder 1, %s40
      %p657 = scmp.lt.s32.totalorder %s40, 3
      %p658 = pnand %p656, %p657
      %p659 = pneg %p658
      // Predicated region
      $region9: #{static_model_forward.1} parent=5 // pred_check
        _
      $region10: #{static_model_forward.1} parent=5 // pred_check_branch
        %661 = sbr.rel (%p658) target = $region12
      $region11: #{static_model_forward.1} parent=5 // pred_region
        %s662 = ssub.s32 %s40, 1
        // Predicated region
        $region13: #{static_model_forward.1} parent=11 // pred_check
          %p663 = pneg %p139
        $region14: #{static_model_forward.1} parent=11 // pred_check_branch
          %665 = sbr.rel (%p663) target = $region16
        $region15: #{static_model_forward.1} parent=11 // pred_region
          _
        $region16: #{static_model_forward.1} parent=11 // pred_fallthru
          _
        // Predicated region
        $region17: #{static_model_forward.1} parent=11 // pred_check
          %p666 = pneg %p160
        $region18: #{static_model_forward.1} parent=11 // pred_check_branch
          %668 = sbr.rel (%p666) target = $region20
        $region19: #{static_model_forward.1} parent=11 // pred_region
          _
        $region20: #{static_model_forward.1} parent=11 // pred_fallthru
          _
        // Predicated region
        $region21: #{static_model_forward.1} parent=11 // pred_check
          %p669 = pneg %p181
        $region22: #{static_model_forward.1} parent=11 // pred_check_branch
          %671 = sbr.rel (%p669) target = $region24
        $region23: #{static_model_forward.1} parent=11 // pred_region
          %s673 = ssub.s32 16384, 16384
          %674 = vsyncadd [#allocation3], %s673
          %s675 = sshll.u32 [#allocation2], 4
          %s676 = int_to_ptr.vmem [resolvable:$true] %s675
          %681 = dma.hbm_to_vmem [thread:$0]  %s5, 16384, %s676, [#allocation3], 256, 256, 16
        $region24: #{static_model_forward.1} parent=11 // pred_fallthru
          _
        // Predicated region
        $region25: #{static_model_forward.1} parent=11 // pred_check
          %p682 = pneg %p202
        $region26: #{static_model_forward.1} parent=11 // pred_check_branch
          %684 = sbr.rel (%p682) target = $region28
        $region27: #{static_model_forward.1} parent=11 // pred_region
          _
        $region28: #{static_model_forward.1} parent=11 // pred_fallthru
          _
        // Predicated region
        $region29: #{static_model_forward.1} parent=11 // pred_check
          %p685 = pneg %p223
        $region30: #{static_model_forward.1} parent=11 // pred_check_branch
          %687 = sbr.rel (%p685) target = $region32
        $region31: #{static_model_forward.1} parent=11 // pred_region
          %s689 = ssub.s32 49152, 49152
          %690 = vsyncadd [#allocation6], %s689
          %s691 = sshll.u32 [#allocation5], 4
          %s692 = int_to_ptr.vmem [resolvable:$true] %s691
          %697 = dma.hbm_to_vmem [thread:$0]  %s7, 49152, %s692, [#allocation6], 512, 512, 32
        $region32: #{static_model_forward.1} parent=11 // pred_fallthru
          _
        // Predicated region
        $region33: #{static_model_forward.1} parent=11 // pred_check
          %p698 = pneg %p244
        $region34: #{static_model_forward.1} parent=11 // pred_check_branch
          %700 = sbr.rel (%p698) target = $region36
        $region35: #{static_model_forward.1} parent=11 // pred_region
          _
        $region36: #{static_model_forward.1} parent=11 // pred_fallthru
          _
        // Predicated region
        $region37: #{static_model_forward.1} parent=11 // pred_check
          %p701 = pneg %p265
        $region38: #{static_model_forward.1} parent=11 // pred_check_branch
          %703 = sbr.rel (%p701) target = $region40
        $region39: #{static_model_forward.1} parent=11 // pred_region
          %s705 = ssub.s32 16384, 16384
          %706 = vsyncadd [#allocation6], %s705
          %s707 = sshll.u32 [#allocation7], 4
          %s708 = int_to_ptr.vmem [resolvable:$true] %s707
          %713 = dma.hbm_to_vmem [thread:$0]  %s9, 16384, %s708, [#allocation6], 256, 256, 16
        $region40: #{static_model_forward.1} parent=11 // pred_fallthru
          _
        // Predicated region
        $region41: #{static_model_forward.1} parent=11 // pred_check
          %p714 = pneg %p286
        $region42: #{static_model_forward.1} parent=11 // pred_check_branch
          %716 = sbr.rel (%p714) target = $region44
        $region43: #{static_model_forward.1} parent=11 // pred_region
          _
        $region44: #{static_model_forward.1} parent=11 // pred_fallthru
          _
        // Predicated region
        $region45: #{static_model_forward.1} parent=11 // pred_check
          %p717 = pneg %p307
        $region46: #{static_model_forward.1} parent=11 // pred_check_branch
          %719 = sbr.rel (%p717) target = $region48
        $region47: #{static_model_forward.1} parent=11 // pred_region
          %s721 = ssub.s32 16384, 16384
          %722 = vsyncadd [#allocation9], %s721
          %s723 = sshll.u32 [#allocation8], 4
          %s724 = int_to_ptr.vmem [resolvable:$true] %s723
          %729 = dma.hbm_to_vmem [thread:$0]  %s11, 16384, %s724, [#allocation9], 512, 512, 32
        $region48: #{static_model_forward.1} parent=11 // pred_fallthru
          _
        // Predicated region
        $region49: #{static_model_forward.1} parent=11 // pred_check
          %p730 = pneg %p328
        $region50: #{static_model_forward.1} parent=11 // pred_check_branch
          %732 = sbr.rel (%p730) target = $region52
        $region51: #{static_model_forward.1} parent=11 // pred_region
          _
        $region52: #{static_model_forward.1} parent=11 // pred_fallthru
          _
        // Predicated region
        $region53: #{static_model_forward.1} parent=11 // pred_check
          %p733 = pneg %p349
        $region54: #{static_model_forward.1} parent=11 // pred_check_branch
          %735 = sbr.rel (%p733) target = $region56
        $region55: #{static_model_forward.1} parent=11 // pred_region
          %s737 = ssub.s32 16384, 16384
          %738 = vsyncadd [#allocation9], %s737
          %s739 = sshll.u32 [#allocation10], 4
          %s740 = int_to_ptr.vmem [resolvable:$true] %s739
          %745 = dma.hbm_to_vmem [thread:$0]  %s13, 16384, %s740, [#allocation9], 256, 256, 16
        $region56: #{static_model_forward.1} parent=11 // pred_fallthru
          _
        // Predicated region
        $region57: #{static_model_forward.1} parent=11 // pred_check
          %p746 = pneg %p370
        $region58: #{static_model_forward.1} parent=11 // pred_check_branch
          %748 = sbr.rel (%p746) target = $region60
        $region59: #{static_model_forward.1} parent=11 // pred_region
          _
        $region60: #{static_model_forward.1} parent=11 // pred_fallthru
          _
        // Predicated region
        $region61: #{static_model_forward.1} parent=11 // pred_check
          %p749 = pneg %p391
        $region62: #{static_model_forward.1} parent=11 // pred_check_branch
          %751 = sbr.rel (%p749) target = $region64
        $region63: #{static_model_forward.1} parent=11 // pred_region
          _
        $region64: #{static_model_forward.1} parent=11 // pred_fallthru
          _
        // Predicated region
        $region65: #{static_model_forward.1} parent=11 // pred_check
          %p752 = pneg %p412
        $region66: #{static_model_forward.1} parent=11 // pred_check_branch
          %754 = sbr.rel (%p752) target = $region68
        $region67: #{static_model_forward.1} parent=11 // pred_region
          _
        $region68: #{static_model_forward.1} parent=11 // pred_fallthru
          _
        // Predicated region
        $region69: #{static_model_forward.1} parent=11 // pred_check
          %p755 = pneg %p433
        $region70: #{static_model_forward.1} parent=11 // pred_check_branch
          %757 = sbr.rel (%p755) target = $region72
        $region71: #{static_model_forward.1} parent=11 // pred_region
          _
        $region72: #{static_model_forward.1} parent=11 // pred_fallthru
          _
        // Predicated region
        $region73: #{static_model_forward.1} parent=11 // pred_check
          %p758 = pneg %p454
        $region74: #{static_model_forward.1} parent=11 // pred_check_branch
          %760 = sbr.rel (%p758) target = $region76
        $region75: #{static_model_forward.1} parent=11 // pred_region
          _
        $region76: #{static_model_forward.1} parent=11 // pred_fallthru
          _
        // Predicated region
        $region77: #{static_model_forward.1} parent=11 // pred_check
          %p761 = pneg %p475
        $region78: #{static_model_forward.1} parent=11 // pred_check_branch
          %763 = sbr.rel (%p761) target = $region80
        $region79: #{static_model_forward.1} parent=11 // pred_region
          _
        $region80: #{static_model_forward.1} parent=11 // pred_fallthru
          _
        // Predicated region
        $region81: #{static_model_forward.1} parent=11 // pred_check
          %p764 = pneg %p496
        $region82: #{static_model_forward.1} parent=11 // pred_check_branch
          %766 = sbr.rel (%p764) target = $region84
        $region83: #{static_model_forward.1} parent=11 // pred_region
          _
        $region84: #{static_model_forward.1} parent=11 // pred_fallthru
          _
        // Predicated region
        $region85: #{static_model_forward.1} parent=11 // pred_check
          %p767 = pneg %p517
        $region86: #{static_model_forward.1} parent=11 // pred_check_branch
          %769 = sbr.rel (%p767) target = $region88
        $region87: #{static_model_forward.1} parent=11 // pred_region
          %s771 = ssub.s32 5120, 5120
          %772 = vsyncadd [#allocation12], %s771
          %s773 = sshll.u32 [#allocation11], 4
          %s774 = int_to_ptr.vmem [resolvable:$true] %s773
          %779 = dma.hbm_to_vmem [thread:$0]  %s21, 5120, %s774, [#allocation12], 128, 128, 8
        $region88: #{static_model_forward.1} parent=11 // pred_fallthru
          _
        // Predicated region
        $region89: #{static_model_forward.1} parent=11 // pred_check
          %p780 = pneg %p538
        $region90: #{static_model_forward.1} parent=11 // pred_check_branch
          %782 = sbr.rel (%p780) target = $region92
        $region91: #{static_model_forward.1} parent=11 // pred_region
          _
        $region92: #{static_model_forward.1} parent=11 // pred_fallthru
          _
        // Predicated region
        $region93: #{static_model_forward.1} parent=11 // pred_check
          %p783 = pneg %p559
        $region94: #{static_model_forward.1} parent=11 // pred_check_branch
          %785 = sbr.rel (%p783) target = $region96
        $region95: #{static_model_forward.1} parent=11 // pred_region
          _
        $region96: #{static_model_forward.1} parent=11 // pred_fallthru
          _
        // Predicated region
        $region97: #{static_model_forward.1} parent=11 // pred_check
          %p786 = pneg %p580
        $region98: #{static_model_forward.1} parent=11 // pred_check_branch
          %788 = sbr.rel (%p786) target = $region100
        $region99: #{static_model_forward.1} parent=11 // pred_region
          _
        $region100: #{static_model_forward.1} parent=11 // pred_fallthru
          _
        // Predicated region
        $region101: #{static_model_forward.1} parent=11 // pred_check
          %p789 = pneg %p601
        $region102: #{static_model_forward.1} parent=11 // pred_check_branch
          %791 = sbr.rel (%p789) target = $region104
        $region103: #{static_model_forward.1} parent=11 // pred_region
          _
        $region104: #{static_model_forward.1} parent=11 // pred_fallthru
          _
        // Predicated region
        $region105: #{static_model_forward.1} parent=11 // pred_check
          %p792 = pneg %p622
        $region106: #{static_model_forward.1} parent=11 // pred_check_branch
          %794 = sbr.rel (%p792) target = $region108
        $region107: #{static_model_forward.1} parent=11 // pred_region
          _
        $region108: #{static_model_forward.1} parent=11 // pred_fallthru
          _
      $region12: #{static_model_forward.1} parent=5 // pred_fallthru
        _
      %p795 = scmp.lt.s32.totalorder %s40, 2
      // Predicated region
      $region109: #{static_model_forward.1} parent=5 // pred_check
        %p796 = pneg %p795
      $region110: #{static_model_forward.1} parent=5 // pred_check_branch
        %798 = sbr.rel (%p796) target = $region112
      $region111: #{static_model_forward.1} parent=5 // pred_region
        // Predicated region
        $region113: #{static_model_forward.1} parent=111 // pred_check
          %p799 = pneg %p60
        $region114: #{static_model_forward.1} parent=111 // pred_check_branch
          %801 = sbr.rel (%p799) target = $region116
        $region115: #{static_model_forward.1} parent=111 // pred_region
          %p802 = scmp.lt.s32.totalorder %s40, 1
          %s803 = scalar_select %p802, %s40, 1
          %s804 = smul.addr %s803, 6
          %s805 = smul.addr %s804, 2
          %s806 = scalar_lea.vmem %s0, %s805
        $region116: #{static_model_forward.1} parent=111 // pred_fallthru
          _
        // Predicated region
        $region117: #{static_model_forward.1} parent=111 // pred_check
          %p807 = pneg %p86
        $region118: #{static_model_forward.1} parent=111 // pred_check_branch
          %809 = sbr.rel (%p807) target = $region120
        $region119: #{static_model_forward.1} parent=111 // pred_region
          %p810 = scmp.lt.s32.totalorder %s40, 1
          %s811 = scalar_select %p810, %s40, 1
          %s812 = smul.addr %s811, 6
          %s813 = scalar_lea.vmem %s1, %s812
        $region120: #{static_model_forward.1} parent=111 // pred_fallthru
          _
        // Predicated region
        $region121: #{static_model_forward.1} parent=111 // pred_check
          %p814 = pneg %p112
        $region122: #{static_model_forward.1} parent=111 // pred_check_branch
          %816 = sbr.rel (%p814) target = $region124
        $region123: #{static_model_forward.1} parent=111 // pred_region
          %p817 = scmp.lt.s32.totalorder %s40, 1
          %s818 = scalar_select %p817, %s40, 1
          %s819 = smul.addr %s818, 2
          %s820 = scalar_lea.vmem %s2, %s819
        $region124: #{static_model_forward.1} parent=111 // pred_fallthru
          _
      $region112: #{static_model_forward.1} parent=5 // pred_fallthru
        _
      %p821 = scmp.le.s32.totalorder 1, %s40
      %p822 = scmp.lt.s32.totalorder %s40, 3
      %p823 = pnand %p821, %p822
      %p824 = pneg %p823
      // Predicated region
      $region125: #{static_model_forward.1} parent=5 // pred_check
        _
      $region126: #{static_model_forward.1} parent=5 // pred_check_branch
        %826 = sbr.rel (%p823) target = $region128
      $region127: #{static_model_forward.1} parent=5 // pred_region
        %s827 = ssub.s32 %s40, 1
        // Predicated region
        $region129: #{static_model_forward.1} parent=127 // pred_check
          %p828 = pneg %p181
        $region130: #{static_model_forward.1} parent=127 // pred_check_branch
          %830 = sbr.rel (%p828) target = $region132
        $region131: #{static_model_forward.1} parent=127 // pred_region
          %831 = dma.done [#allocation3], 16384
        $region132: #{static_model_forward.1} parent=127 // pred_fallthru
          _
        // Predicated region
        $region133: #{static_model_forward.1} parent=127 // pred_check
          %p832 = pneg %p223
        $region134: #{static_model_forward.1} parent=127 // pred_check_branch
          %834 = sbr.rel (%p832) target = $region136
        $region135: #{static_model_forward.1} parent=127 // pred_region
          %835 = dma.done [#allocation6], 49152
        $region136: #{static_model_forward.1} parent=127 // pred_fallthru
          _
        // Predicated region
        $region137: #{static_model_forward.1} parent=127 // pred_check
          %p836 = pneg %p265
        $region138: #{static_model_forward.1} parent=127 // pred_check_branch
          %838 = sbr.rel (%p836) target = $region140
        $region139: #{static_model_forward.1} parent=127 // pred_region
          %839 = dma.done [#allocation6], 16384
        $region140: #{static_model_forward.1} parent=127 // pred_fallthru
          _
        // Predicated region
        $region141: #{static_model_forward.1} parent=127 // pred_check
          %p840 = pneg %p307
        $region142: #{static_model_forward.1} parent=127 // pred_check_branch
          %842 = sbr.rel (%p840) target = $region144
        $region143: #{static_model_forward.1} parent=127 // pred_region
          %843 = dma.done [#allocation9], 16384
        $region144: #{static_model_forward.1} parent=127 // pred_fallthru
          _
        // Predicated region
        $region145: #{static_model_forward.1} parent=127 // pred_check
          %p844 = pneg %p349
        $region146: #{static_model_forward.1} parent=127 // pred_check_branch
          %846 = sbr.rel (%p844) target = $region148
        $region147: #{static_model_forward.1} parent=127 // pred_region
          %847 = dma.done [#allocation9], 16384
        $region148: #{static_model_forward.1} parent=127 // pred_fallthru
          _
        // Predicated region
        $region149: #{static_model_forward.1} parent=127 // pred_check
          %p848 = pneg %p517
        $region150: #{static_model_forward.1} parent=127 // pred_check_branch
          %850 = sbr.rel (%p848) target = $region152
        $region151: #{static_model_forward.1} parent=127 // pred_region
          %851 = dma.done [#allocation12], 5120
        $region152: #{static_model_forward.1} parent=127 // pred_fallthru
          _
        %p852 = scmp.lt.s32.totalorder %s45, 1
        %s853 = scalar_select %p852, %s45, 1
        %s854 = smul.addr %s853, 6
        %s855 = smul.addr %s854, 2
        %s856 = scalar_lea.vmem %s0, %s855
        %p857 = pneg %p66
        %p858 = pneg %p63
        %p859 = scmp.lt.s32.totalorder %s45, 1
        %s860 = scalar_select %p859, %s45, 1
        %s861 = smul.addr %s860, 6
        %s862 = scalar_lea.vmem %s1, %s861
        %p863 = pneg %p92
        %p864 = pneg %p89
        %p865 = scmp.lt.s32.totalorder %s45, 1
        %s866 = scalar_select %p865, %s45, 1
        %s867 = smul.addr %s866, 2
        %s868 = scalar_lea.vmem %s2, %s867
        %p869 = pneg %p118
        %p870 = pneg %p115
        %p871 = pneg %p139
        %p872 = pneg %p136
        %p873 = pneg %p160
        %p874 = pneg %p157
        %p875 = pneg %p181
        %p876 = pneg %p178
        %p877 = pneg %p202
        %p878 = pneg %p199
        %p879 = pneg %p223
        %p880 = pneg %p220
        %p881 = pneg %p244
        %p882 = pneg %p241
        %p883 = pneg %p265
        %p884 = pneg %p262
        %p885 = pneg %p286
        %p886 = pneg %p283
        %p887 = pneg %p307
        %p888 = pneg %p304
        %p889 = pneg %p328
        %p890 = pneg %p325
        %p891 = pneg %p349
        %p892 = pneg %p346
        %p893 = pneg %p370
        %p894 = pneg %p367
        %p895 = pneg %p391
        %p896 = pneg %p388
        %p897 = pneg %p412
        %p898 = pneg %p409
        %p899 = pneg %p433
        %p900 = pneg %p430
        %p901 = pneg %p454
        %p902 = pneg %p451
        %p903 = pneg %p475
        %p904 = pneg %p472
        %p905 = pneg %p496
        %p906 = pneg %p493
        %p907 = pneg %p517
        %p908 = pneg %p514
        %p909 = pneg %p538
        %p910 = pneg %p535
        %p911 = pneg %p559
        %p912 = pneg %p556
        %p913 = pneg %p580
        %p914 = pneg %p577
        %p915 = pneg %p601
        %p916 = pneg %p598
        %p917 = pneg %p622
        %p918 = pneg %p619
        %p919 = pneg %p648
        %p920 = pneg %p645
        %s921 = sand.u32 %s635, 1
        %s922 = scalar_lea.sflag [#allocation4], %s921
        %s923 = sand.u32 %s635, 1
        %s924 = scalar_lea.vmem [#allocation13], %s923
        %p925 = scmp.lt.s32.totalorder %s45, 1
        %s926 = scalar_select %p925, %s45, 1
        %s927 = smul.addr %s926, 6
        %s928 = smul.addr %s927, 2
        %s929 = scalar_lea.vmem %s0, %s928
        %p930 = scmp.lt.s32.totalorder %s45, 1
        %s931 = scalar_select %p930, %s45, 1
        %s932 = smul.addr %s931, 6
        %s933 = scalar_lea.vmem %s1, %s932
        %p934 = scmp.lt.s32.totalorder %s45, 1
        %s935 = scalar_select %p934, %s45, 1
        %s936 = smul.addr %s935, 2
        %s937 = scalar_lea.vmem %s2, %s936
        %v938 = vld [vmem:[%s929] sm:$0xff]
        %v939 = vld [vmem:[%s929 + $0x8] sm:$0xf]
        %v940 = vld [vmem:[%s3] sm:$0xff]
        %v941 = vld [vmem:[%s3 + $0x8] sm:$0xff]
        %v942 = vld [vmem:[%s3 + $0x10] sm:$0xff]
        %v943 = vld [vmem:[%s3 + $0x18] sm:$0xff]
        %v944 = vld [vmem:[%s3 + $0x20] sm:$0xff]
        %v945 = vld [vmem:[%s3 + $0x28] sm:$0xff]
        %v946 = vld [vmem:[%s3 + $0x30] sm:$0xff]
        %v947 = vld [vmem:[%s3 + $0x38] sm:$0xff]
        %v948 = vld [vmem:[%s3 + $0x40] sm:$0xff]
        %v949 = vld [vmem:[%s3 + $0x48] sm:$0xff]
        %v950 = vld [vmem:[%s3 + $0x50] sm:$0xff]
        %v951 = vld [vmem:[%s3 + $0x58] sm:$0xff]
        %v952 = vld [vmem:[%s3 + $0x60] sm:$0xff]
        %v953 = vld [vmem:[%s3 + $0x68] sm:$0xff]
        %v954 = vld [vmem:[%s3 + $0x70] sm:$0xff]
        %v955 = vld [vmem:[%s3 + $0x78] sm:$0xff]
        %v956 = vld [vmem:[%s3 + $0x80] sm:$0xff]
        %v957 = vld [vmem:[%s3 + $0x88] sm:$0xff]
        %v958 = vld [vmem:[%s3 + $0x90] sm:$0xff]
        %v959 = vld [vmem:[%s3 + $0x98] sm:$0xff]
        %v960 = vld [vmem:[%s3 + $0xa0] sm:$0xff]
        %v961 = vld [vmem:[%s3 + $0xa8] sm:$0xff]
        %v962 = vld [vmem:[%s3 + $0xb0] sm:$0xff]
        %v963 = vld [vmem:[%s3 + $0xb8] sm:$0xff]
        %v964 = vld [vmem:[%s3 + $0xc0] sm:$0xff]
        %v965 = vld [vmem:[%s3 + $0xc8] sm:$0xff]
        %v966 = vld [vmem:[%s3 + $0xd0] sm:$0xff]
        %v967 = vld [vmem:[%s3 + $0xd8] sm:$0xff]
        %v968 = vld [vmem:[%s3 + $0xe0] sm:$0xff]
        %v969 = vld [vmem:[%s3 + $0xe8] sm:$0xff]
        %v970 = vld [vmem:[%s3 + $0xf0] sm:$0xff]
        %v971 = vld [vmem:[%s3 + $0xf8] sm:$0xff]
        %v972 = vld [vmem:[%s3 + $0x100] sm:$0xff]
        %v973 = vld [vmem:[%s3 + $0x108] sm:$0xff]
        %v974 = vld [vmem:[%s3 + $0x110] sm:$0xff]
        %v975 = vld [vmem:[%s3 + $0x118] sm:$0xff]
        %v976 = vld [vmem:[%s3 + $0x120] sm:$0xff]
        %v977 = vld [vmem:[%s3 + $0x128] sm:$0xff]
        %v978 = vld [vmem:[%s3 + $0x130] sm:$0xff]
        %v979 = vld [vmem:[%s3 + $0x138] sm:$0xff]
        %v980 = vld [vmem:[%s3 + $0x140] sm:$0xff]
        %v981 = vld [vmem:[%s3 + $0x148] sm:$0xff]
        %v982 = vld [vmem:[%s3 + $0x150] sm:$0xff]
        %v983 = vld [vmem:[%s3 + $0x158] sm:$0xff]
        %v984 = vld [vmem:[%s3 + $0x160] sm:$0xff]
        %v985 = vld [vmem:[%s3 + $0x168] sm:$0xff]
        %v986 = vld [vmem:[%s3 + $0x170] sm:$0xff]
        %v987 = vld [vmem:[%s3 + $0x178] sm:$0xff]
        %v988 = vld [vmem:[%s3 + $0x180] sm:$0xff]
        %v989 = vld [vmem:[%s3 + $0x188] sm:$0xff]
        %v990 = vld [vmem:[%s3 + $0x190] sm:$0xff]
        %v991 = vld [vmem:[%s3 + $0x198] sm:$0xff]
        %v992 = vld [vmem:[%s3 + $0x1a0] sm:$0xff]
        %v993 = vld [vmem:[%s3 + $0x1a8] sm:$0xff]
        %v994 = vld [vmem:[%s3 + $0x1b0] sm:$0xff]
        %v995 = vld [vmem:[%s3 + $0x1b8] sm:$0xff]
        %v996 = vld [vmem:[%s3 + $0x1c0] sm:$0xff]
        %v997 = vld [vmem:[%s3 + $0x1c8] sm:$0xff]
        %v998 = vld [vmem:[%s3 + $0x1d0] sm:$0xff]
        %v999 = vld [vmem:[%s3 + $0x1d8] sm:$0xff]
        %v1000 = vld [vmem:[%s3 + $0x1e0] sm:$0xff]
        %v1001 = vld [vmem:[%s3 + $0x1e8] sm:$0xff]
        %v1002 = vld [vmem:[%s3 + $0x1f0] sm:$0xff]
        %v1003 = vld [vmem:[%s3 + $0x1f8] sm:$0xff]
        %v1004 = vld [vmem:[%s3 + $0x200] sm:$0xff]
        %v1005 = vld [vmem:[%s3 + $0x208] sm:$0xff]
        %v1006 = vld [vmem:[%s3 + $0x210] sm:$0xff]
        %v1007 = vld [vmem:[%s3 + $0x218] sm:$0xff]
        %v1008 = vld [vmem:[%s3 + $0x220] sm:$0xff]
        %v1009 = vld [vmem:[%s3 + $0x228] sm:$0xff]
        %v1010 = vld [vmem:[%s3 + $0x230] sm:$0xff]
        %v1011 = vld [vmem:[%s3 + $0x238] sm:$0xff]
        %v1012 = vld [vmem:[%s3 + $0x240] sm:$0xff]
        %v1013 = vld [vmem:[%s3 + $0x248] sm:$0xff]
        %v1014 = vld [vmem:[%s3 + $0x250] sm:$0xff]
        %v1015 = vld [vmem:[%s3 + $0x258] sm:$0xff]
        %v1016 = vld [vmem:[%s3 + $0x260] sm:$0xff]
        %v1017 = vld [vmem:[%s3 + $0x268] sm:$0xff]
        %v1018 = vld [vmem:[%s3 + $0x270] sm:$0xff]
        %v1019 = vld [vmem:[%s3 + $0x278] sm:$0xff]
        %v1020 = vld [vmem:[%s3 + $0x280] sm:$0xff]
        %v1021 = vld [vmem:[%s3 + $0x288] sm:$0xff]
        %v1022 = vld [vmem:[%s3 + $0x290] sm:$0xff]
        %v1023 = vld [vmem:[%s3 + $0x298] sm:$0xff]
        %v1024 = vld [vmem:[%s3 + $0x2a0] sm:$0xff]
        %v1025 = vld [vmem:[%s3 + $0x2a8] sm:$0xff]
        %v1026 = vld [vmem:[%s3 + $0x2b0] sm:$0xff]
        %v1027 = vld [vmem:[%s3 + $0x2b8] sm:$0xff]
        %v1028 = vld [vmem:[%s3 + $0x2c0] sm:$0xff]
        %v1029 = vld [vmem:[%s3 + $0x2c8] sm:$0xff]
        %v1030 = vld [vmem:[%s3 + $0x2d0] sm:$0xff]
        %v1031 = vld [vmem:[%s3 + $0x2d8] sm:$0xff]
        %v1032 = vld [vmem:[%s3 + $0x2e0] sm:$0xff]
        %v1033 = vld [vmem:[%s3 + $0x2e8] sm:$0xff]
        %v1034 = vld [vmem:[%s3 + $0x2f0] sm:$0xff]
        %v1035 = vld [vmem:[%s3 + $0x2f8] sm:$0xff]
        %v1036 = vld [vmem:[%s3 + $0x300] sm:$0xff]
        %v1037 = vld [vmem:[%s3 + $0x308] sm:$0xff]
        %v1038 = vld [vmem:[%s3 + $0x310] sm:$0xff]
        %v1039 = vld [vmem:[%s3 + $0x318] sm:$0xff]
        %v1040 = vld [vmem:[%s3 + $0x320] sm:$0xff]
        %v1041 = vld [vmem:[%s3 + $0x328] sm:$0xff]
        %v1042 = vld [vmem:[%s3 + $0x330] sm:$0xff]
        %v1043 = vld [vmem:[%s3 + $0x338] sm:$0xff]
        %v1044 = vld [vmem:[%s3 + $0x340] sm:$0xff]
        %v1045 = vld [vmem:[%s3 + $0x348] sm:$0xff]
        %v1046 = vld [vmem:[%s3 + $0x350] sm:$0xff]
        %v1047 = vld [vmem:[%s3 + $0x358] sm:$0xff]
        %v1048 = vld [vmem:[%s3 + $0x360] sm:$0xff]
        %v1049 = vld [vmem:[%s3 + $0x368] sm:$0xff]
        %v1050 = vld [vmem:[%s3 + $0x370] sm:$0xff]
        %v1051 = vld [vmem:[%s3 + $0x378] sm:$0xff]
        %v1052 = vld [vmem:[%s3 + $0x380] sm:$0xff]
        %v1053 = vld [vmem:[%s3 + $0x388] sm:$0xff]
        %v1054 = vld [vmem:[%s3 + $0x390] sm:$0xff]
        %v1055 = vld [vmem:[%s3 + $0x398] sm:$0xff]
        %v1056 = vld [vmem:[%s3 + $0x3a0] sm:$0xff]
        %v1057 = vld [vmem:[%s3 + $0x3a8] sm:$0xff]
        %v1058 = vld [vmem:[%s3 + $0x3b0] sm:$0xff]
        %v1059 = vld [vmem:[%s3 + $0x3b8] sm:$0xff]
        %v1060 = vld [vmem:[%s3 + $0x3c0] sm:$0xff]
        %v1061 = vld [vmem:[%s3 + $0x3c8] sm:$0xff]
        %v1062 = vld [vmem:[%s3 + $0x3d0] sm:$0xff]
        %v1063 = vld [vmem:[%s3 + $0x3d8] sm:$0xff]
        %v1064 = vld [vmem:[%s3 + $0x3e0] sm:$0xff]
        %v1065 = vld [vmem:[%s3 + $0x3e8] sm:$0xff]
        %v1066 = vld [vmem:[%s3 + $0x3f0] sm:$0xff]
        %v1067 = vld [vmem:[%s3 + $0x3f8] sm:$0xff]
        %v1068 = vld [vmem:[%s3 + $0x400] sm:$0xff]
        %v1069 = vld [vmem:[%s3 + $0x408] sm:$0xff]
        %v1070 = vld [vmem:[%s3 + $0x410] sm:$0xff]
        %v1071 = vld [vmem:[%s3 + $0x418] sm:$0xff]
        %v1072 = vld [vmem:[%s3 + $0x420] sm:$0xff]
        %v1073 = vld [vmem:[%s3 + $0x428] sm:$0xff]
        %v1074 = vld [vmem:[%s3 + $0x430] sm:$0xff]
        %v1075 = vld [vmem:[%s3 + $0x438] sm:$0xff]
        %v1076 = vld [vmem:[%s3 + $0x440] sm:$0xff]
        %v1077 = vld [vmem:[%s3 + $0x448] sm:$0xff]
        %v1078 = vld [vmem:[%s3 + $0x450] sm:$0xff]
        %v1079 = vld [vmem:[%s3 + $0x458] sm:$0xff]
        %v1080 = vld [vmem:[%s3 + $0x460] sm:$0xff]
        %v1081 = vld [vmem:[%s3 + $0x468] sm:$0xff]
        %v1082 = vld [vmem:[%s3 + $0x470] sm:$0xff]
        %v1083 = vld [vmem:[%s3 + $0x478] sm:$0xff]
        %v1084 = vld [vmem:[%s3 + $0x480] sm:$0xff]
        %v1085 = vld [vmem:[%s3 + $0x488] sm:$0xff]
        %v1086 = vld [vmem:[%s3 + $0x490] sm:$0xff]
        %v1087 = vld [vmem:[%s3 + $0x498] sm:$0xff]
        %v1088 = vld [vmem:[%s3 + $0x4a0] sm:$0xff]
        %v1089 = vld [vmem:[%s3 + $0x4a8] sm:$0xff]
        %v1090 = vld [vmem:[%s3 + $0x4b0] sm:$0xff]
        %v1091 = vld [vmem:[%s3 + $0x4b8] sm:$0xff]
        %v1092 = vld [vmem:[%s3 + $0x4c0] sm:$0xff]
        %v1093 = vld [vmem:[%s3 + $0x4c8] sm:$0xff]
        %v1094 = vld [vmem:[%s3 + $0x4d0] sm:$0xff]
        %v1095 = vld [vmem:[%s3 + $0x4d8] sm:$0xff]
        %v1096 = vld [vmem:[%s3 + $0x4e0] sm:$0xff]
        %v1097 = vld [vmem:[%s3 + $0x4e8] sm:$0xff]
        %v1098 = vld [vmem:[%s3 + $0x4f0] sm:$0xff]
        %v1099 = vld [vmem:[%s3 + $0x4f8] sm:$0xff]
        %v1100 = vld [vmem:[%s3 + $0x500] sm:$0xff]
        %v1101 = vld [vmem:[%s3 + $0x508] sm:$0xff]
        %v1102 = vld [vmem:[%s3 + $0x510] sm:$0xff]
        %v1103 = vld [vmem:[%s3 + $0x518] sm:$0xff]
        %v1104 = vld [vmem:[%s3 + $0x520] sm:$0xff]
        %v1105 = vld [vmem:[%s3 + $0x528] sm:$0xff]
        %v1106 = vld [vmem:[%s3 + $0x530] sm:$0xff]
        %v1107 = vld [vmem:[%s3 + $0x538] sm:$0xff]
        %v1108 = vld [vmem:[%s3 + $0x540] sm:$0xff]
        %v1109 = vld [vmem:[%s3 + $0x548] sm:$0xff]
        %v1110 = vld [vmem:[%s3 + $0x550] sm:$0xff]
        %v1111 = vld [vmem:[%s3 + $0x558] sm:$0xff]
        %v1112 = vld [vmem:[%s3 + $0x560] sm:$0xff]
        %v1113 = vld [vmem:[%s3 + $0x568] sm:$0xff]
        %v1114 = vld [vmem:[%s3 + $0x570] sm:$0xff]
        %v1115 = vld [vmem:[%s3 + $0x578] sm:$0xff]
        %v1116 = vld [vmem:[%s3 + $0x580] sm:$0xff]
        %v1117 = vld [vmem:[%s3 + $0x588] sm:$0xff]
        %v1118 = vld [vmem:[%s3 + $0x590] sm:$0xff]
        %v1119 = vld [vmem:[%s3 + $0x598] sm:$0xff]
        %v1120 = vld [vmem:[%s3 + $0x5a0] sm:$0xff]
        %v1121 = vld [vmem:[%s3 + $0x5a8] sm:$0xff]
        %v1122 = vld [vmem:[%s3 + $0x5b0] sm:$0xff]
        %v1123 = vld [vmem:[%s3 + $0x5b8] sm:$0xff]
        %v1124 = vld [vmem:[%s3 + $0x5c0] sm:$0xff]
        %v1125 = vld [vmem:[%s3 + $0x5c8] sm:$0xff]
        %v1126 = vld [vmem:[%s3 + $0x5d0] sm:$0xff]
        %v1127 = vld [vmem:[%s3 + $0x5d8] sm:$0xff]
        %v1128 = vld [vmem:[%s3 + $0x5e0] sm:$0xff]
        %v1129 = vld [vmem:[%s3 + $0x5e8] sm:$0xff]
        %v1130 = vld [vmem:[%s3 + $0x5f0] sm:$0xff]
        %v1131 = vld [vmem:[%s3 + $0x5f8] sm:$0xff]
        %v1132 = vld [vmem:[%s3 + $0x600] sm:$0xff]
        %v1133 = vld [vmem:[%s3 + $0x608] sm:$0xff]
        %v1134 = vld [vmem:[%s3 + $0x610] sm:$0xff]
        %v1135 = vld [vmem:[%s3 + $0x618] sm:$0xff]
        %v1136 = vld [vmem:[%s3 + $0x620] sm:$0xff]
        %v1137 = vld [vmem:[%s3 + $0x628] sm:$0xff]
        %v1138 = vld [vmem:[%s3 + $0x630] sm:$0xff]
        %v1139 = vld [vmem:[%s3 + $0x638] sm:$0xff]
        %v1140 = vld [vmem:[%s3 + $0x640] sm:$0xff]
        %v1141 = vld [vmem:[%s3 + $0x648] sm:$0xff]
        %v1142 = vld [vmem:[%s3 + $0x650] sm:$0xff]
        %v1143 = vld [vmem:[%s3 + $0x658] sm:$0xff]
        %v1144 = vld [vmem:[%s3 + $0x660] sm:$0xff]
        %v1145 = vld [vmem:[%s3 + $0x668] sm:$0xff]
        %v1146 = vld [vmem:[%s3 + $0x670] sm:$0xff]
        %v1147 = vld [vmem:[%s3 + $0x678] sm:$0xff]
        %v1148 = vld [vmem:[%s3 + $0x680] sm:$0xff]
        %v1149 = vld [vmem:[%s3 + $0x688] sm:$0xff]
        %v1150 = vld [vmem:[%s3 + $0x690] sm:$0xff]
        %v1151 = vld [vmem:[%s3 + $0x698] sm:$0xff]
        %v1152 = vld [vmem:[%s3 + $0x6a0] sm:$0xff]
        %v1153 = vld [vmem:[%s3 + $0x6a8] sm:$0xff]
        %v1154 = vld [vmem:[%s3 + $0x6b0] sm:$0xff]
        %v1155 = vld [vmem:[%s3 + $0x6b8] sm:$0xff]
        %v1156 = vld [vmem:[%s3 + $0x6c0] sm:$0xff]
        %v1157 = vld [vmem:[%s3 + $0x6c8] sm:$0xff]
        %v1158 = vld [vmem:[%s3 + $0x6d0] sm:$0xff]
        %v1159 = vld [vmem:[%s3 + $0x6d8] sm:$0xff]
        %v1160 = vld [vmem:[%s3 + $0x6e0] sm:$0xff]
        %v1161 = vld [vmem:[%s3 + $0x6e8] sm:$0xff]
        %v1162 = vld [vmem:[%s3 + $0x6f0] sm:$0xff]
        %v1163 = vld [vmem:[%s3 + $0x6f8] sm:$0xff]
        %v1164 = vld [vmem:[%s3 + $0x700] sm:$0xff]
        %v1165 = vld [vmem:[%s3 + $0x708] sm:$0xff]
        %v1166 = vld [vmem:[%s3 + $0x710] sm:$0xff]
        %v1167 = vld [vmem:[%s3 + $0x718] sm:$0xff]
        %v1168 = vld [vmem:[%s3 + $0x720] sm:$0xff]
        %v1169 = vld [vmem:[%s3 + $0x728] sm:$0xff]
        %v1170 = vld [vmem:[%s3 + $0x730] sm:$0xff]
        %v1171 = vld [vmem:[%s3 + $0x738] sm:$0xff]
        %v1172 = vld [vmem:[%s3 + $0x740] sm:$0xff]
        %v1173 = vld [vmem:[%s3 + $0x748] sm:$0xff]
        %v1174 = vld [vmem:[%s3 + $0x750] sm:$0xff]
        %v1175 = vld [vmem:[%s3 + $0x758] sm:$0xff]
        %v1176 = vld [vmem:[%s3 + $0x760] sm:$0xff]
        %v1177 = vld [vmem:[%s3 + $0x768] sm:$0xff]
        %v1178 = vld [vmem:[%s3 + $0x770] sm:$0xff]
        %v1179 = vld [vmem:[%s3 + $0x778] sm:$0xff]
        %v1180 = vld [vmem:[%s3 + $0x780] sm:$0xff]
        %v1181 = vld [vmem:[%s3 + $0x788] sm:$0xff]
        %v1182 = vld [vmem:[%s3 + $0x790] sm:$0xff]
        %v1183 = vld [vmem:[%s3 + $0x798] sm:$0xff]
        %v1184 = vld [vmem:[%s3 + $0x7a0] sm:$0xff]
        %v1185 = vld [vmem:[%s3 + $0x7a8] sm:$0xff]
        %v1186 = vld [vmem:[%s3 + $0x7b0] sm:$0xff]
        %v1187 = vld [vmem:[%s3 + $0x7b8] sm:$0xff]
        %v1188 = vld [vmem:[%s3 + $0x7c0] sm:$0xff]
        %v1189 = vld [vmem:[%s3 + $0x7c8] sm:$0xff]
        %v1190 = vld [vmem:[%s3 + $0x7d0] sm:$0xff]
        %v1191 = vld [vmem:[%s3 + $0x7d8] sm:$0xff]
        %v1192 = vld [vmem:[%s3 + $0x7e0] sm:$0xff]
        %v1193 = vld [vmem:[%s3 + $0x7e8] sm:$0xff]
        %v1194 = vld [vmem:[%s3 + $0x7f0] sm:$0xff]
        %v1195 = vld [vmem:[%s3 + $0x7f8] sm:$0xff]
        %v1196 = vld [vmem:[%s3 + $0x800] sm:$0xff]
        %v1197 = vld [vmem:[%s3 + $0x808] sm:$0xff]
        %v1198 = vld [vmem:[%s3 + $0x810] sm:$0xff]
        %v1199 = vld [vmem:[%s3 + $0x818] sm:$0xff]
        %v1200 = vld [vmem:[%s3 + $0x820] sm:$0xff]
        %v1201 = vld [vmem:[%s3 + $0x828] sm:$0xff]
        %v1202 = vld [vmem:[%s3 + $0x830] sm:$0xff]
        %v1203 = vld [vmem:[%s3 + $0x838] sm:$0xff]
        %v1204 = vld [vmem:[%s3 + $0x840] sm:$0xff]
        %v1205 = vld [vmem:[%s3 + $0x848] sm:$0xff]
        %v1206 = vld [vmem:[%s3 + $0x850] sm:$0xff]
        %v1207 = vld [vmem:[%s3 + $0x858] sm:$0xff]
        %v1208 = vld [vmem:[%s3 + $0x860] sm:$0xff]
        %v1209 = vld [vmem:[%s3 + $0x868] sm:$0xff]
        %v1210 = vld [vmem:[%s3 + $0x870] sm:$0xff]
        %v1211 = vld [vmem:[%s3 + $0x878] sm:$0xff]
        %v1212 = vld [vmem:[%s3 + $0x880] sm:$0xff]
        %v1213 = vld [vmem:[%s3 + $0x888] sm:$0xff]
        %v1214 = vld [vmem:[%s3 + $0x890] sm:$0xff]
        %v1215 = vld [vmem:[%s3 + $0x898] sm:$0xff]
        %v1216 = vld [vmem:[%s3 + $0x8a0] sm:$0xff]
        %v1217 = vld [vmem:[%s3 + $0x8a8] sm:$0xff]
        %v1218 = vld [vmem:[%s3 + $0x8b0] sm:$0xff]
        %v1219 = vld [vmem:[%s3 + $0x8b8] sm:$0xff]
        %v1220 = vld [vmem:[%s3 + $0x8c0] sm:$0xff]
        %v1221 = vld [vmem:[%s3 + $0x8c8] sm:$0xff]
        %v1222 = vld [vmem:[%s3 + $0x8d0] sm:$0xff]
        %v1223 = vld [vmem:[%s3 + $0x8d8] sm:$0xff]
        %v1224 = vld [vmem:[%s3 + $0x8e0] sm:$0xff]
        %v1225 = vld [vmem:[%s3 + $0x8e8] sm:$0xff]
        %v1226 = vld [vmem:[%s3 + $0x8f0] sm:$0xff]
        %v1227 = vld [vmem:[%s3 + $0x8f8] sm:$0xff]
        %v1228 = vld [vmem:[%s3 + $0x900] sm:$0xff]
        %v1229 = vld [vmem:[%s3 + $0x908] sm:$0xff]
        %v1230 = vld [vmem:[%s3 + $0x910] sm:$0xff]
        %v1231 = vld [vmem:[%s3 + $0x918] sm:$0xff]
        %v1232 = vld [vmem:[%s3 + $0x920] sm:$0xff]
        %v1233 = vld [vmem:[%s3 + $0x928] sm:$0xff]
        %v1234 = vld [vmem:[%s3 + $0x930] sm:$0xff]
        %v1235 = vld [vmem:[%s3 + $0x938] sm:$0xff]
        %v1236 = vld [vmem:[%s3 + $0x940] sm:$0xff]
        %v1237 = vld [vmem:[%s3 + $0x948] sm:$0xff]
        %v1238 = vld [vmem:[%s3 + $0x950] sm:$0xff]
        %v1239 = vld [vmem:[%s3 + $0x958] sm:$0xff]
        %v1240 = vld [vmem:[%s3 + $0x960] sm:$0xff]
        %v1241 = vld [vmem:[%s3 + $0x968] sm:$0xff]
        %v1242 = vld [vmem:[%s3 + $0x970] sm:$0xff]
        %v1243 = vld [vmem:[%s3 + $0x978] sm:$0xff]
        %v1244 = vld [vmem:[%s3 + $0x980] sm:$0xff]
        %v1245 = vld [vmem:[%s3 + $0x988] sm:$0xff]
        %v1246 = vld [vmem:[%s3 + $0x990] sm:$0xff]
        %v1247 = vld [vmem:[%s3 + $0x998] sm:$0xff]
        %v1248 = vld [vmem:[%s3 + $0x9a0] sm:$0xff]
        %v1249 = vld [vmem:[%s3 + $0x9a8] sm:$0xff]
        %v1250 = vld [vmem:[%s3 + $0x9b0] sm:$0xff]
        %v1251 = vld [vmem:[%s3 + $0x9b8] sm:$0xff]
        %v1252 = vld [vmem:[%s3 + $0x9c0] sm:$0xff]
        %v1253 = vld [vmem:[%s3 + $0x9c8] sm:$0xff]
        %v1254 = vld [vmem:[%s3 + $0x9d0] sm:$0xff]
        %v1255 = vld [vmem:[%s3 + $0x9d8] sm:$0xff]
        %v1256 = vld [vmem:[%s3 + $0x9e0] sm:$0xff]
        %v1257 = vld [vmem:[%s3 + $0x9e8] sm:$0xff]
        %v1258 = vld [vmem:[%s3 + $0x9f0] sm:$0xff]
        %v1259 = vld [vmem:[%s3 + $0x9f8] sm:$0xff]
        %v1260 = vld [vmem:[%s3 + $0xa00] sm:$0xff]
        %v1261 = vld [vmem:[%s3 + $0xa08] sm:$0xff]
        %v1262 = vld [vmem:[%s3 + $0xa10] sm:$0xff]
        %v1263 = vld [vmem:[%s3 + $0xa18] sm:$0xff]
        %v1264 = vld [vmem:[%s3 + $0xa20] sm:$0xff]
        %v1265 = vld [vmem:[%s3 + $0xa28] sm:$0xff]
        %v1266 = vld [vmem:[%s3 + $0xa30] sm:$0xff]
        %v1267 = vld [vmem:[%s3 + $0xa38] sm:$0xff]
        %v1268 = vld [vmem:[%s3 + $0xa40] sm:$0xff]
        %v1269 = vld [vmem:[%s3 + $0xa48] sm:$0xff]
        %v1270 = vld [vmem:[%s3 + $0xa50] sm:$0xff]
        %v1271 = vld [vmem:[%s3 + $0xa58] sm:$0xff]
        %v1272 = vld [vmem:[%s3 + $0xa60] sm:$0xff]
        %v1273 = vld [vmem:[%s3 + $0xa68] sm:$0xff]
        %v1274 = vld [vmem:[%s3 + $0xa70] sm:$0xff]
        %v1275 = vld [vmem:[%s3 + $0xa78] sm:$0xff]
        %v1276 = vld [vmem:[%s3 + $0xa80] sm:$0xff]
        %v1277 = vld [vmem:[%s3 + $0xa88] sm:$0xff]
        %v1278 = vld [vmem:[%s3 + $0xa90] sm:$0xff]
        %v1279 = vld [vmem:[%s3 + $0xa98] sm:$0xff]
        %v1280 = vld [vmem:[%s3 + $0xaa0] sm:$0xff]
        %v1281 = vld [vmem:[%s3 + $0xaa8] sm:$0xff]
        %v1282 = vld [vmem:[%s3 + $0xab0] sm:$0xff]
        %v1283 = vld [vmem:[%s3 + $0xab8] sm:$0xff]
        %v1284 = vld [vmem:[%s3 + $0xac0] sm:$0xff]
        %v1285 = vld [vmem:[%s3 + $0xac8] sm:$0xff]
        %v1286 = vld [vmem:[%s3 + $0xad0] sm:$0xff]
        %v1287 = vld [vmem:[%s3 + $0xad8] sm:$0xff]
        %v1288 = vld [vmem:[%s3 + $0xae0] sm:$0xff]
        %v1289 = vld [vmem:[%s3 + $0xae8] sm:$0xff]
        %v1290 = vld [vmem:[%s3 + $0xaf0] sm:$0xff]
        %v1291 = vld [vmem:[%s3 + $0xaf8] sm:$0xff]
        %v1292 = vld [vmem:[%s3 + $0xb00] sm:$0xff]
        %v1293 = vld [vmem:[%s3 + $0xb08] sm:$0xff]
        %v1294 = vld [vmem:[%s3 + $0xb10] sm:$0xff]
        %v1295 = vld [vmem:[%s3 + $0xb18] sm:$0xff]
        %v1296 = vld [vmem:[%s3 + $0xb20] sm:$0xff]
        %v1297 = vld [vmem:[%s3 + $0xb28] sm:$0xff]
        %v1298 = vld [vmem:[%s3 + $0xb30] sm:$0xff]
        %v1299 = vld [vmem:[%s3 + $0xb38] sm:$0xff]
        %v1300 = vld [vmem:[%s3 + $0xb40] sm:$0xff]
        %v1301 = vld [vmem:[%s3 + $0xb48] sm:$0xff]
        %v1302 = vld [vmem:[%s3 + $0xb50] sm:$0xff]
        %v1303 = vld [vmem:[%s3 + $0xb58] sm:$0xff]
        %v1304 = vld [vmem:[%s3 + $0xb60] sm:$0xff]
        %v1305 = vld [vmem:[%s3 + $0xb68] sm:$0xff]
        %v1306 = vld [vmem:[%s3 + $0xb70] sm:$0xff]
        %v1307 = vld [vmem:[%s3 + $0xb78] sm:$0xff]
        %v1308 = vld [vmem:[%s3 + $0xb80] sm:$0xff]
        %v1309 = vld [vmem:[%s3 + $0xb88] sm:$0xff]
        %v1310 = vld [vmem:[%s3 + $0xb90] sm:$0xff]
        %v1311 = vld [vmem:[%s3 + $0xb98] sm:$0xff]
        %v1312 = vld [vmem:[%s3 + $0xba0] sm:$0xff]
        %v1313 = vld [vmem:[%s3 + $0xba8] sm:$0xff]
        %v1314 = vld [vmem:[%s3 + $0xbb0] sm:$0xff]
        %v1315 = vld [vmem:[%s3 + $0xbb8] sm:$0xff]
        %v1316 = vld [vmem:[%s3 + $0xbc0] sm:$0xff]
        %v1317 = vld [vmem:[%s3 + $0xbc8] sm:$0xff]
        %v1318 = vld [vmem:[%s3 + $0xbd0] sm:$0xff]
        %v1319 = vld [vmem:[%s3 + $0xbd8] sm:$0xff]
        %v1320 = vld [vmem:[%s3 + $0xbe0] sm:$0xff]
        %v1321 = vld [vmem:[%s3 + $0xbe8] sm:$0xff]
        %v1322 = vld [vmem:[%s3 + $0xbf0] sm:$0xff]
        %v1323 = vld [vmem:[%s3 + $0xbf8] sm:$0xff]
        %v1324 = vld [vmem:[%s4] sm:$0xf]
        %v1326 = vlaneseq
        %v1327 = vshrl.u32 %v1326, 7
        %v1328 = vsub.s32 0, %v1327
        %v1329 = vrot.slane %v1324, %v1328
        %v1330 = vlaneseq
        %v1331 = vshrl.u32 %v1330, 7
        %v1332 = vsub.s32 1, %v1331
        %v1333 = vrot.slane %v1324, %v1332
        %v1334 = vlaneseq
        %v1335 = vshrl.u32 %v1334, 7
        %v1336 = vsub.s32 2, %v1335
        %v1337 = vrot.slane %v1324, %v1336
        %v1338 = vlaneseq
        %v1339 = vshrl.u32 %v1338, 7
        %v1340 = vsub.s32 3, %v1339
        %v1341 = vrot.slane %v1324, %v1340
        %v1348 = vcombine.high %v938, %v938
        %v1350 = vunpack.c.l.s4 1983009808
        %v1351 = vunpack.c.0.s8 %v1350
        %v1352 = vlaneseq
        %v1353 = vshrl.u32 %v1352, 7
        %v1354 = vsub.s32 %v1351, %v1353
        %v1355 = vrot.slane %v938, %v1354
        %v1357 = vunpack.c.l.s4 1983009808
        %v1358 = vunpack.c.0.s8 %v1357
        %v1359 = vlaneseq
        %v1360 = vshrl.u32 %v1359, 7
        %v1361 = vsub.s32 %v1358, %v1360
        %v1362 = vrot.slane %v1348, %v1361
        %v1363 = vcombine.high %v1355, %v1355
        %v1364 = vcombine.high %v1362, %v1362
        %v1366 = vunpack.c.l.s4 1983009808
        %v1367 = vunpack.c.0.s8 %v1366
        %v1368 = vlaneseq
        %v1369 = vshrl.u32 %v1368, 7
        %v1370 = vsub.s32 %v1367, %v1369
        %v1371 = vrot.slane %v939, %v1370
        %v1372 = vcombine.high %v1371, %v1371
        %1379 = vmatprep.subr.mxu0 %v941
        %1380 = vmatpush1.msra.mxu0 %v940
        %1381 = vmatprep.subr.mxu0 %v945
        %1382 = vmatpush1.msra.mxu0 %v944
        %1383 = vmatprep.subr.mxu0 %v949
        %1384 = vmatpush1.msra.mxu0 %v948
        %1385 = vmatprep.subr.mxu0 %v953
        %1386 = vmatpush1.msra.mxu0 %v952
        %1387 = vmatprep.subr.mxu0 %v957
        %1388 = vmatpush1.msra.mxu0 %v956
        %1389 = vmatprep.subr.mxu0 %v961
        %1390 = vmatpush1.msra.mxu0 %v960
        %1391 = vmatprep.subr.mxu0 %v965
        %1392 = vmatpush1.msra.mxu0 %v964
        %1393 = vmatprep.subr.mxu0 %v969
        %1394 = vmatpush1.msra.mxu0 %v968
        %1395 = vmatprep.subr.mxu0 %v973
        %1396 = vmatpush1.msra.mxu0 %v972
        %1397 = vmatprep.subr.mxu0 %v977
        %1398 = vmatpush1.msra.mxu0 %v976
        %1399 = vmatprep.subr.mxu0 %v981
        %1400 = vmatpush1.msra.mxu0 %v980
        %1401 = vmatprep.subr.mxu0 %v985
        %1402 = vmatpush1.msra.mxu0 %v984
        %1403 = vmatprep.subr.mxu0 %v989
        %1404 = vmatpush1.msra.mxu0 %v988
        %1405 = vmatprep.subr.mxu0 %v993
        %1406 = vmatpush1.msra.mxu0 %v992
        %1407 = vmatprep.subr.mxu0 %v997
        %1408 = vmatpush1.msra.mxu0 %v996
        %1409 = vmatprep.subr.mxu0 %v1001
        %1410 = vmatpush1.msra.mxu0 %v1000
        %1411 = vmatprep.subr.mxu0 %v1005
        %1412 = vmatpush1.msra.mxu0 %v1004
        %1413 = vmatprep.subr.mxu0 %v1009
        %1414 = vmatpush1.msra.mxu0 %v1008
        %1415 = vmatprep.subr.mxu0 %v1013
        %1416 = vmatpush1.msra.mxu0 %v1012
        %1417 = vmatprep.subr.mxu0 %v1017
        %1418 = vmatpush1.msra.mxu0 %v1016
        %1419 = vmatprep.subr.mxu0 %v1021
        %1420 = vmatpush1.msra.mxu0 %v1020
        %1421 = vmatprep.subr.mxu0 %v1025
        %1422 = vmatpush1.msra.mxu0 %v1024
        %1423 = vmatprep.subr.mxu0 %v1029
        %1424 = vmatpush1.msra.mxu0 %v1028
        %1425 = vmatprep.subr.mxu0 %v1033
        %1426 = vmatpush1.msra.mxu0 %v1032
        %1427 = vmatprep.subr.mxu0 %v1037
        %1428 = vmatpush1.msra.mxu0 %v1036
        %1429 = vmatprep.subr.mxu0 %v1041
        %1430 = vmatpush1.msra.mxu0 %v1040
        %1431 = vmatprep.subr.mxu0 %v1045
        %1432 = vmatpush1.msra.mxu0 %v1044
        %1433 = vmatprep.subr.mxu0 %v1049
        %1434 = vmatpush1.msra.mxu0 %v1048
        %1435 = vmatprep.subr.mxu0 %v1053
        %1436 = vmatpush1.msra.mxu0 %v1052
        %1437 = vmatprep.subr.mxu0 %v1057
        %1438 = vmatpush1.msra.mxu0 %v1056
        %1439 = vmatprep.subr.mxu0 %v1061
        %1440 = vmatpush1.msra.mxu0 %v1060
        %1441 = vmatprep.subr.mxu0 %v1065
        %1442 = vmatpush1.msra.mxu0 %v1064
        %1443 = vmatprep.mubr.f32.mxu0 %v1363
        %1444 = vmatmul.mubr.f32.gmra.mrb[0].mxu0 %v1355
        %v1445 = vpop.f32.mrb[0].mxu0
        %v1446 = vadd.f32 %v1329, %v1445
        %v1447 = vpop.f32.mrb[0].mxu0
        %v1448 = vadd.f32 %v1333, %v1447
        %1449 = vdwg.mxu0
        %1450 = vmatprep.subr.mxu0 %v1069
        %1451 = vmatpush1.msra.mxu0 %v1068
        %1452 = vmatprep.subr.mxu0 %v1073
        %1453 = vmatpush1.msra.mxu0 %v1072
        %1454 = vmatprep.subr.mxu0 %v1077
        %1455 = vmatpush1.msra.mxu0 %v1076
        %1456 = vmatprep.subr.mxu0 %v1081
        %1457 = vmatpush1.msra.mxu0 %v1080
        %1458 = vmatprep.subr.mxu0 %v1085
        %1459 = vmatpush1.msra.mxu0 %v1084
        %1460 = vmatprep.subr.mxu0 %v1089
        %1461 = vmatpush1.msra.mxu0 %v1088
        %1462 = vmatprep.subr.mxu0 %v1093
        %1463 = vmatpush1.msra.mxu0 %v1092
        %1464 = vmatprep.subr.mxu0 %v1097
        %1465 = vmatpush1.msra.mxu0 %v1096
        %1466 = vmatprep.subr.mxu0 %v1101
        %1467 = vmatpush1.msra.mxu0 %v1100
        %1468 = vmatprep.subr.mxu0 %v1105
        %1469 = vmatpush1.msra.mxu0 %v1104
        %1470 = vmatprep.subr.mxu0 %v1109
        %1471 = vmatpush1.msra.mxu0 %v1108
        %1472 = vmatprep.subr.mxu0 %v1113
        %1473 = vmatpush1.msra.mxu0 %v1112
        %1474 = vmatprep.subr.mxu0 %v1117
        %1475 = vmatpush1.msra.mxu0 %v1116
        %1476 = vmatprep.subr.mxu0 %v1121
        %1477 = vmatpush1.msra.mxu0 %v1120
        %1478 = vmatprep.subr.mxu0 %v1125
        %1479 = vmatpush1.msra.mxu0 %v1124
        %1480 = vmatprep.subr.mxu0 %v1129
        %1481 = vmatpush1.msra.mxu0 %v1128
        %1482 = vmatprep.subr.mxu0 %v1133
        %1483 = vmatpush1.msra.mxu0 %v1132
        %1484 = vmatprep.subr.mxu0 %v1137
        %1485 = vmatpush1.msra.mxu0 %v1136
        %1486 = vmatprep.subr.mxu0 %v1141
        %1487 = vmatpush1.msra.mxu0 %v1140
        %1488 = vmatprep.subr.mxu0 %v1145
        %1489 = vmatpush1.msra.mxu0 %v1144
        %1490 = vmatprep.subr.mxu0 %v1149
        %1491 = vmatpush1.msra.mxu0 %v1148
        %1492 = vmatprep.subr.mxu0 %v1153
        %1493 = vmatpush1.msra.mxu0 %v1152
        %1494 = vmatprep.subr.mxu0 %v1157
        %1495 = vmatpush1.msra.mxu0 %v1156
        %1496 = vmatprep.subr.mxu0 %v1161
        %1497 = vmatpush1.msra.mxu0 %v1160
        %1498 = vmatprep.subr.mxu0 %v1165
        %1499 = vmatpush1.msra.mxu0 %v1164
        %1500 = vmatprep.subr.mxu0 %v1169
        %1501 = vmatpush1.msra.mxu0 %v1168
        %1502 = vmatprep.subr.mxu0 %v1173
        %1503 = vmatpush1.msra.mxu0 %v1172
        %1504 = vmatprep.subr.mxu0 %v1177
        %1505 = vmatpush1.msra.mxu0 %v1176
        %1506 = vmatprep.subr.mxu0 %v1181
        %1507 = vmatpush1.msra.mxu0 %v1180
        %1508 = vmatprep.subr.mxu0 %v1185
        %1509 = vmatpush1.msra.mxu0 %v1184
        %1510 = vmatprep.subr.mxu0 %v1189
        %1511 = vmatpush1.msra.mxu0 %v1188
        %1512 = vmatprep.subr.mxu0 %v1193
        %1513 = vmatpush1.msra.mxu0 %v1192
        %1514 = vmatprep.mubr.f32.mxu0 %v1364
        %1515 = vmatmul.mubr.f32.gmra.mrb[0].mxu0 %v1362
        %v1516 = vpop.f32.mrb[0].mxu0
        %v1517 = vadd.f32 %v1446, %v1516
        %v1518 = vpop.f32.mrb[0].mxu0
        %v1519 = vadd.f32 %v1448, %v1518
        %1520 = vdwg.mxu0
        %1521 = vmatprep.subr.mxu0 %v1197
        %1522 = vmatpush1.msra.mxu0 %v1196
        %1523 = vmatprep.subr.mxu0 %v1201
        %1524 = vmatpush1.msra.mxu0 %v1200
        %1525 = vmatprep.subr.mxu0 %v1205
        %1526 = vmatpush1.msra.mxu0 %v1204
        %1527 = vmatprep.subr.mxu0 %v1209
        %1528 = vmatpush1.msra.mxu0 %v1208
        %1529 = vmatprep.subr.mxu0 %v1213
        %1530 = vmatpush1.msra.mxu0 %v1212
        %1531 = vmatprep.subr.mxu0 %v1217
        %1532 = vmatpush1.msra.mxu0 %v1216
        %1533 = vmatprep.subr.mxu0 %v1221
        %1534 = vmatpush1.msra.mxu0 %v1220
        %1535 = vmatprep.subr.mxu0 %v1225
        %1536 = vmatpush1.msra.mxu0 %v1224
        %1537 = vmatprep.subr.mxu0 %v1229
        %1538 = vmatpush1.msra.mxu0 %v1228
        %1539 = vmatprep.subr.mxu0 %v1233
        %1540 = vmatpush1.msra.mxu0 %v1232
        %1541 = vmatprep.subr.mxu0 %v1237
        %1542 = vmatpush1.msra.mxu0 %v1236
        %1543 = vmatprep.subr.mxu0 %v1241
        %1544 = vmatpush1.msra.mxu0 %v1240
        %1545 = vmatprep.subr.mxu0 %v1245
        %1546 = vmatpush1.msra.mxu0 %v1244
        %1547 = vmatprep.subr.mxu0 %v1249
        %1548 = vmatpush1.msra.mxu0 %v1248
        %1549 = vmatprep.subr.mxu0 %v1253
        %1550 = vmatpush1.msra.mxu0 %v1252
        %1551 = vmatprep.subr.mxu0 %v1257
        %1552 = vmatpush1.msra.mxu0 %v1256
        %1553 = vmatprep.subr.mxu0 %v1261
        %1554 = vmatpush1.msra.mxu0 %v1260
        %1555 = vmatprep.subr.mxu0 %v1265
        %1556 = vmatpush1.msra.mxu0 %v1264
        %1557 = vmatprep.subr.mxu0 %v1269
        %1558 = vmatpush1.msra.mxu0 %v1268
        %1559 = vmatprep.subr.mxu0 %v1273
        %1560 = vmatpush1.msra.mxu0 %v1272
        %1561 = vmatprep.subr.mxu0 %v1277
        %1562 = vmatpush1.msra.mxu0 %v1276
        %1563 = vmatprep.subr.mxu0 %v1281
        %1564 = vmatpush1.msra.mxu0 %v1280
        %1565 = vmatprep.subr.mxu0 %v1285
        %1566 = vmatpush1.msra.mxu0 %v1284
        %1567 = vmatprep.subr.mxu0 %v1289
        %1568 = vmatpush1.msra.mxu0 %v1288
        %1569 = vmatprep.subr.mxu0 %v1293
        %1570 = vmatpush1.msra.mxu0 %v1292
        %1571 = vmatprep.subr.mxu0 %v1297
        %1572 = vmatpush1.msra.mxu0 %v1296
        %1573 = vmatprep.subr.mxu0 %v1301
        %1574 = vmatpush1.msra.mxu0 %v1300
        %1575 = vmatprep.subr.mxu0 %v1305
        %1576 = vmatpush1.msra.mxu0 %v1304
        %1577 = vmatprep.subr.mxu0 %v1309
        %1578 = vmatpush1.msra.mxu0 %v1308
        %1579 = vmatprep.subr.mxu0 %v1313
        %1580 = vmatpush1.msra.mxu0 %v1312
        %1581 = vmatprep.subr.mxu0 %v1317
        %1582 = vmatpush1.msra.mxu0 %v1316
        %1583 = vmatprep.subr.mxu0 %v1321
        %1584 = vmatpush1.msra.mxu0 %v1320
        %1585 = vmatprep.mubr.f32.mxu0 %v1372
        %1586 = vmatmul.mubr.f32.gmra.mrb[0].mxu0 %v1371
        %v1587 = vpop.f32.mrb[0].mxu0
        %v1588 = vadd.f32 %v1517, %v1587
        %v1589 = vpop.f32.mrb[0].mxu0
        %v1590 = vadd.f32 %v1519, %v1589
        %1591 = vdwg.mxu0
        %1592 = vmatprep.subr.mxu0 %v943
        %1593 = vmatpush1.msra.mxu0 %v942
        %1594 = vmatprep.subr.mxu0 %v947
        %1595 = vmatpush1.msra.mxu0 %v946
        %1596 = vmatprep.subr.mxu0 %v951
        %1597 = vmatpush1.msra.mxu0 %v950
        %1598 = vmatprep.subr.mxu0 %v955
        %1599 = vmatpush1.msra.mxu0 %v954
        %1600 = vmatprep.subr.mxu0 %v959
        %1601 = vmatpush1.msra.mxu0 %v958
        %1602 = vmatprep.subr.mxu0 %v963
        %1603 = vmatpush1.msra.mxu0 %v962
        %1604 = vmatprep.subr.mxu0 %v967
        %1605 = vmatpush1.msra.mxu0 %v966
        %1606 = vmatprep.subr.mxu0 %v971
        %1607 = vmatpush1.msra.mxu0 %v970
        %1608 = vmatprep.subr.mxu0 %v975
        %1609 = vmatpush1.msra.mxu0 %v974
        %1610 = vmatprep.subr.mxu0 %v979
        %1611 = vmatpush1.msra.mxu0 %v978
        %1612 = vmatprep.subr.mxu0 %v983
        %1613 = vmatpush1.msra.mxu0 %v982
        %1614 = vmatprep.subr.mxu0 %v987
        %1615 = vmatpush1.msra.mxu0 %v986
        %1616 = vmatprep.subr.mxu0 %v991
        %1617 = vmatpush1.msra.mxu0 %v990
        %1618 = vmatprep.subr.mxu0 %v995
        %1619 = vmatpush1.msra.mxu0 %v994
        %1620 = vmatprep.subr.mxu0 %v999
        %1621 = vmatpush1.msra.mxu0 %v998
        %1622 = vmatprep.subr.mxu0 %v1003
        %1623 = vmatpush1.msra.mxu0 %v1002
        %1624 = vmatprep.subr.mxu0 %v1007
        %1625 = vmatpush1.msra.mxu0 %v1006
        %1626 = vmatprep.subr.mxu0 %v1011
        %1627 = vmatpush1.msra.mxu0 %v1010
        %1628 = vmatprep.subr.mxu0 %v1015
        %1629 = vmatpush1.msra.mxu0 %v1014
        %1630 = vmatprep.subr.mxu0 %v1019
        %1631 = vmatpush1.msra.mxu0 %v1018
        %1632 = vmatprep.subr.mxu0 %v1023
        %1633 = vmatpush1.msra.mxu0 %v1022
        %1634 = vmatprep.subr.mxu0 %v1027
        %1635 = vmatpush1.msra.mxu0 %v1026
        %1636 = vmatprep.subr.mxu0 %v1031
        %1637 = vmatpush1.msra.mxu0 %v1030
        %1638 = vmatprep.subr.mxu0 %v1035
        %1639 = vmatpush1.msra.mxu0 %v1034
        %1640 = vmatprep.subr.mxu0 %v1039
        %1641 = vmatpush1.msra.mxu0 %v1038
        %1642 = vmatprep.subr.mxu0 %v1043
        %1643 = vmatpush1.msra.mxu0 %v1042
        %1644 = vmatprep.subr.mxu0 %v1047
        %1645 = vmatpush1.msra.mxu0 %v1046
        %1646 = vmatprep.subr.mxu0 %v1051
        %1647 = vmatpush1.msra.mxu0 %v1050
        %1648 = vmatprep.subr.mxu0 %v1055
        %1649 = vmatpush1.msra.mxu0 %v1054
        %1650 = vmatprep.subr.mxu0 %v1059
        %1651 = vmatpush1.msra.mxu0 %v1058
        %1652 = vmatprep.subr.mxu0 %v1063
        %1653 = vmatpush1.msra.mxu0 %v1062
        %1654 = vmatprep.subr.mxu0 %v1067
        %1655 = vmatpush1.msra.mxu0 %v1066
        %1656 = vmatprep.mubr.f32.mxu0 %v1363
        %1657 = vmatmul.mubr.f32.gmra.mrb[0].mxu0 %v1355
        %v1658 = vpop.f32.mrb[0].mxu0
        %v1659 = vadd.f32 %v1337, %v1658
        %v1660 = vpop.f32.mrb[0].mxu0
        %v1661 = vadd.f32 %v1341, %v1660
        %1662 = vdwg.mxu0
        %1663 = vmatprep.subr.mxu0 %v1071
        %1664 = vmatpush1.msra.mxu0 %v1070
        %1665 = vmatprep.subr.mxu0 %v1075
        %1666 = vmatpush1.msra.mxu0 %v1074
        %1667 = vmatprep.subr.mxu0 %v1079
        %1668 = vmatpush1.msra.mxu0 %v1078
        %1669 = vmatprep.subr.mxu0 %v1083
        %1670 = vmatpush1.msra.mxu0 %v1082
        %1671 = vmatprep.subr.mxu0 %v1087
        %1672 = vmatpush1.msra.mxu0 %v1086
        %1673 = vmatprep.subr.mxu0 %v1091
        %1674 = vmatpush1.msra.mxu0 %v1090
        %1675 = vmatprep.subr.mxu0 %v1095
        %1676 = vmatpush1.msra.mxu0 %v1094
        %1677 = vmatprep.subr.mxu0 %v1099
        %1678 = vmatpush1.msra.mxu0 %v1098
        %1679 = vmatprep.subr.mxu0 %v1103
        %1680 = vmatpush1.msra.mxu0 %v1102
        %1681 = vmatprep.subr.mxu0 %v1107
        %1682 = vmatpush1.msra.mxu0 %v1106
        %1683 = vmatprep.subr.mxu0 %v1111
        %1684 = vmatpush1.msra.mxu0 %v1110
        %1685 = vmatprep.subr.mxu0 %v1115
        %1686 = vmatpush1.msra.mxu0 %v1114
        %1687 = vmatprep.subr.mxu0 %v1119
        %1688 = vmatpush1.msra.mxu0 %v1118
        %1689 = vmatprep.subr.mxu0 %v1123
        %1690 = vmatpush1.msra.mxu0 %v1122
        %1691 = vmatprep.subr.mxu0 %v1127
        %1692 = vmatpush1.msra.mxu0 %v1126
        %1693 = vmatprep.subr.mxu0 %v1131
        %1694 = vmatpush1.msra.mxu0 %v1130
        %1695 = vmatprep.subr.mxu0 %v1135
        %1696 = vmatpush1.msra.mxu0 %v1134
        %1697 = vmatprep.subr.mxu0 %v1139
        %1698 = vmatpush1.msra.mxu0 %v1138
        %1699 = vmatprep.subr.mxu0 %v1143
        %1700 = vmatpush1.msra.mxu0 %v1142
        %1701 = vmatprep.subr.mxu0 %v1147
        %1702 = vmatpush1.msra.mxu0 %v1146
        %1703 = vmatprep.subr.mxu0 %v1151
        %1704 = vmatpush1.msra.mxu0 %v1150
        %1705 = vmatprep.subr.mxu0 %v1155
        %1706 = vmatpush1.msra.mxu0 %v1154
        %1707 = vmatprep.subr.mxu0 %v1159
        %1708 = vmatpush1.msra.mxu0 %v1158
        %1709 = vmatprep.subr.mxu0 %v1163
        %1710 = vmatpush1.msra.mxu0 %v1162
        %1711 = vmatprep.subr.mxu0 %v1167
        %1712 = vmatpush1.msra.mxu0 %v1166
        %1713 = vmatprep.subr.mxu0 %v1171
        %1714 = vmatpush1.msra.mxu0 %v1170
        %1715 = vmatprep.subr.mxu0 %v1175
        %1716 = vmatpush1.msra.mxu0 %v1174
        %1717 = vmatprep.subr.mxu0 %v1179
        %1718 = vmatpush1.msra.mxu0 %v1178
        %1719 = vmatprep.subr.mxu0 %v1183
        %1720 = vmatpush1.msra.mxu0 %v1182
        %1721 = vmatprep.subr.mxu0 %v1187
        %1722 = vmatpush1.msra.mxu0 %v1186
        %1723 = vmatprep.subr.mxu0 %v1191
        %1724 = vmatpush1.msra.mxu0 %v1190
        %1725 = vmatprep.subr.mxu0 %v1195
        %1726 = vmatpush1.msra.mxu0 %v1194
        %1727 = vmatprep.mubr.f32.mxu0 %v1364
        %1728 = vmatmul.mubr.f32.gmra.mrb[0].mxu0 %v1362
        %v1729 = vpop.f32.mrb[0].mxu0
        %v1730 = vadd.f32 %v1659, %v1729
        %v1731 = vpop.f32.mrb[0].mxu0
        %v1732 = vadd.f32 %v1661, %v1731
        %1733 = vdwg.mxu0
        %1734 = vmatprep.subr.mxu0 %v1199
        %1735 = vmatpush1.msra.mxu0 %v1198
        %1736 = vmatprep.subr.mxu0 %v1203
        %1737 = vmatpush1.msra.mxu0 %v1202
        %1738 = vmatprep.subr.mxu0 %v1207
        %1739 = vmatpush1.msra.mxu0 %v1206
        %1740 = vmatprep.subr.mxu0 %v1211
        %1741 = vmatpush1.msra.mxu0 %v1210
        %1742 = vmatprep.subr.mxu0 %v1215
        %1743 = vmatpush1.msra.mxu0 %v1214
        %1744 = vmatprep.subr.mxu0 %v1219
        %1745 = vmatpush1.msra.mxu0 %v1218
        %1746 = vmatprep.subr.mxu0 %v1223
        %1747 = vmatpush1.msra.mxu0 %v1222
        %1748 = vmatprep.subr.mxu0 %v1227
        %1749 = vmatpush1.msra.mxu0 %v1226
        %1750 = vmatprep.subr.mxu0 %v1231
        %1751 = vmatpush1.msra.mxu0 %v1230
        %1752 = vmatprep.subr.mxu0 %v1235
        %1753 = vmatpush1.msra.mxu0 %v1234
        %1754 = vmatprep.subr.mxu0 %v1239
        %1755 = vmatpush1.msra.mxu0 %v1238
        %1756 = vmatprep.subr.mxu0 %v1243
        %1757 = vmatpush1.msra.mxu0 %v1242
        %1758 = vmatprep.subr.mxu0 %v1247
        %1759 = vmatpush1.msra.mxu0 %v1246
        %1760 = vmatprep.subr.mxu0 %v1251
        %1761 = vmatpush1.msra.mxu0 %v1250
        %1762 = vmatprep.subr.mxu0 %v1255
        %1763 = vmatpush1.msra.mxu0 %v1254
        %1764 = vmatprep.subr.mxu0 %v1259
        %1765 = vmatpush1.msra.mxu0 %v1258
        %1766 = vmatprep.subr.mxu0 %v1263
        %1767 = vmatpush1.msra.mxu0 %v1262
        %1768 = vmatprep.subr.mxu0 %v1267
        %1769 = vmatpush1.msra.mxu0 %v1266
        %1770 = vmatprep.subr.mxu0 %v1271
        %1771 = vmatpush1.msra.mxu0 %v1270
        %1772 = vmatprep.subr.mxu0 %v1275
        %1773 = vmatpush1.msra.mxu0 %v1274
        %1774 = vmatprep.subr.mxu0 %v1279
        %1775 = vmatpush1.msra.mxu0 %v1278
        %1776 = vmatprep.subr.mxu0 %v1283
        %1777 = vmatpush1.msra.mxu0 %v1282
        %1778 = vmatprep.subr.mxu0 %v1287
        %1779 = vmatpush1.msra.mxu0 %v1286
        %1780 = vmatprep.subr.mxu0 %v1291
        %1781 = vmatpush1.msra.mxu0 %v1290
        %1782 = vmatprep.subr.mxu0 %v1295
        %1783 = vmatpush1.msra.mxu0 %v1294
        %1784 = vmatprep.subr.mxu0 %v1299
        %1785 = vmatpush1.msra.mxu0 %v1298
        %1786 = vmatprep.subr.mxu0 %v1303
        %1787 = vmatpush1.msra.mxu0 %v1302
        %1788 = vmatprep.subr.mxu0 %v1307
        %1789 = vmatpush1.msra.mxu0 %v1306
        %1790 = vmatprep.subr.mxu0 %v1311
        %1791 = vmatpush1.msra.mxu0 %v1310
        %1792 = vmatprep.subr.mxu0 %v1315
        %1793 = vmatpush1.msra.mxu0 %v1314
        %1794 = vmatprep.subr.mxu0 %v1319
        %1795 = vmatpush1.msra.mxu0 %v1318
        %1796 = vmatprep.subr.mxu0 %v1323
        %1797 = vmatpush1.msra.mxu0 %v1322
        %1798 = vmatprep.mubr.f32.mxu0 %v1372
        %1799 = vmatmul.mubr.f32.gmra.mrb[0].mxu0 %v1371
        %v1800 = vpop.f32.mrb[0].mxu0
        %v1801 = vadd.f32 %v1730, %v1800
        %v1802 = vpop.f32.mrb[0].mxu0
        %v1803 = vadd.f32 %v1732, %v1802
        %1804 = vdwg.mxu0
        %v1805 = vmax.f32 %v1588, 0.0
        %v1806 = vmax.f32 %v1590, 0.0
        %v1807 = vmax.f32 %v1801, 0.0
        %v1808 = vmax.f32 %v1803, 0.0
        %v1809 = vld [vmem:[#allocation2] sm:$0xff]
        %v1810 = vld [vmem:[#allocation2 + $0x8] sm:$0xff]
        %v1811 = vld [vmem:[#allocation2 + $0x10] sm:$0xff]
        %v1812 = vld [vmem:[#allocation2 + $0x18] sm:$0xff]
        %v1813 = vld [vmem:[#allocation2 + $0x20] sm:$0xff]
        %v1814 = vld [vmem:[#allocation2 + $0x28] sm:$0xff]
        %v1815 = vld [vmem:[#allocation2 + $0x30] sm:$0xff]
        %v1816 = vld [vmem:[#allocation2 + $0x38] sm:$0xff]
        %v1817 = vld [vmem:[#allocation2 + $0x40] sm:$0xff]
        %v1818 = vld [vmem:[#allocation2 + $0x48] sm:$0xff]
        %v1819 = vld [vmem:[#allocation2 + $0x50] sm:$0xff]
        %v1820 = vld [vmem:[#allocation2 + $0x58] sm:$0xff]
        %v1821 = vld [vmem:[#allocation2 + $0x60] sm:$0xff]
        %v1822 = vld [vmem:[#allocation2 + $0x68] sm:$0xff]
        %v1823 = vld [vmem:[#allocation2 + $0x70] sm:$0xff]
        %v1824 = vld [vmem:[#allocation2 + $0x78] sm:$0xff]
        %v1825 = vld [vmem:[#allocation2 + $0x80] sm:$0xff]
        %v1826 = vld [vmem:[#allocation2 + $0x88] sm:$0xff]
        %v1827 = vld [vmem:[#allocation2 + $0x90] sm:$0xff]
        %v1828 = vld [vmem:[#allocation2 + $0x98] sm:$0xff]
        %v1829 = vld [vmem:[#allocation2 + $0xa0] sm:$0xff]
        %v1830 = vld [vmem:[#allocation2 + $0xa8] sm:$0xff]
        %v1831 = vld [vmem:[#allocation2 + $0xb0] sm:$0xff]
        %v1832 = vld [vmem:[#allocation2 + $0xb8] sm:$0xff]
        %v1833 = vld [vmem:[#allocation2 + $0xc0] sm:$0xff]
        %v1834 = vld [vmem:[#allocation2 + $0xc8] sm:$0xff]
        %v1835 = vld [vmem:[#allocation2 + $0xd0] sm:$0xff]
        %v1836 = vld [vmem:[#allocation2 + $0xd8] sm:$0xff]
        %v1837 = vld [vmem:[#allocation2 + $0xe0] sm:$0xff]
        %v1838 = vld [vmem:[#allocation2 + $0xe8] sm:$0xff]
        %v1839 = vld [vmem:[#allocation2 + $0xf0] sm:$0xff]
        %v1840 = vld [vmem:[#allocation2 + $0xf8] sm:$0xff]
        %v1841 = vld [vmem:[#allocation2 + $0x100] sm:$0xff]
        %v1842 = vld [vmem:[#allocation2 + $0x108] sm:$0xff]
        %v1843 = vld [vmem:[#allocation2 + $0x110] sm:$0xff]
        %v1844 = vld [vmem:[#allocation2 + $0x118] sm:$0xff]
        %v1845 = vld [vmem:[#allocation2 + $0x120] sm:$0xff]
        %v1846 = vld [vmem:[#allocation2 + $0x128] sm:$0xff]
        %v1847 = vld [vmem:[#allocation2 + $0x130] sm:$0xff]
        %v1848 = vld [vmem:[#allocation2 + $0x138] sm:$0xff]
        %v1849 = vld [vmem:[#allocation2 + $0x140] sm:$0xff]
        %v1850 = vld [vmem:[#allocation2 + $0x148] sm:$0xff]
        %v1851 = vld [vmem:[#allocation2 + $0x150] sm:$0xff]
        %v1852 = vld [vmem:[#allocation2 + $0x158] sm:$0xff]
        %v1853 = vld [vmem:[#allocation2 + $0x160] sm:$0xff]
        %v1854 = vld [vmem:[#allocation2 + $0x168] sm:$0xff]
        %v1855 = vld [vmem:[#allocation2 + $0x170] sm:$0xff]
        %v1856 = vld [vmem:[#allocation2 + $0x178] sm:$0xff]
        %v1857 = vld [vmem:[#allocation2 + $0x180] sm:$0xff]
        %v1858 = vld [vmem:[#allocation2 + $0x188] sm:$0xff]
        %v1859 = vld [vmem:[#allocation2 + $0x190] sm:$0xff]
        %v1860 = vld [vmem:[#allocation2 + $0x198] sm:$0xff]
        %v1861 = vld [vmem:[#allocation2 + $0x1a0] sm:$0xff]
        %v1862 = vld [vmem:[#allocation2 + $0x1a8] sm:$0xff]
        %v1863 = vld [vmem:[#allocation2 + $0x1b0] sm:$0xff]
        %v1864 = vld [vmem:[#allocation2 + $0x1b8] sm:$0xff]
        %v1865 = vld [vmem:[#allocation2 + $0x1c0] sm:$0xff]
        %v1866 = vld [vmem:[#allocation2 + $0x1c8] sm:$0xff]
        %v1867 = vld [vmem:[#allocation2 + $0x1d0] sm:$0xff]
        %v1868 = vld [vmem:[#allocation2 + $0x1d8] sm:$0xff]
        %v1869 = vld [vmem:[#allocation2 + $0x1e0] sm:$0xff]
        %v1870 = vld [vmem:[#allocation2 + $0x1e8] sm:$0xff]
        %v1871 = vld [vmem:[#allocation2 + $0x1f0] sm:$0xff]
        %v1872 = vld [vmem:[#allocation2 + $0x1f8] sm:$0xff]
        %v1873 = vld [vmem:[#allocation2 + $0x200] sm:$0xff]
        %v1874 = vld [vmem:[#allocation2 + $0x208] sm:$0xff]
        %v1875 = vld [vmem:[#allocation2 + $0x210] sm:$0xff]
        %v1876 = vld [vmem:[#allocation2 + $0x218] sm:$0xff]
        %v1877 = vld [vmem:[#allocation2 + $0x220] sm:$0xff]
        %v1878 = vld [vmem:[#allocation2 + $0x228] sm:$0xff]
        %v1879 = vld [vmem:[#allocation2 + $0x230] sm:$0xff]
        %v1880 = vld [vmem:[#allocation2 + $0x238] sm:$0xff]
        %v1881 = vld [vmem:[#allocation2 + $0x240] sm:$0xff]
        %v1882 = vld [vmem:[#allocation2 + $0x248] sm:$0xff]
        %v1883 = vld [vmem:[#allocation2 + $0x250] sm:$0xff]
        %v1884 = vld [vmem:[#allocation2 + $0x258] sm:$0xff]
        %v1885 = vld [vmem:[#allocation2 + $0x260] sm:$0xff]
        %v1886 = vld [vmem:[#allocation2 + $0x268] sm:$0xff]
        %v1887 = vld [vmem:[#allocation2 + $0x270] sm:$0xff]
        %v1888 = vld [vmem:[#allocation2 + $0x278] sm:$0xff]
        %v1889 = vld [vmem:[#allocation2 + $0x280] sm:$0xff]
        %v1890 = vld [vmem:[#allocation2 + $0x288] sm:$0xff]
        %v1891 = vld [vmem:[#allocation2 + $0x290] sm:$0xff]
        %v1892 = vld [vmem:[#allocation2 + $0x298] sm:$0xff]
        %v1893 = vld [vmem:[#allocation2 + $0x2a0] sm:$0xff]
        %v1894 = vld [vmem:[#allocation2 + $0x2a8] sm:$0xff]
        %v1895 = vld [vmem:[#allocation2 + $0x2b0] sm:$0xff]
        %v1896 = vld [vmem:[#allocation2 + $0x2b8] sm:$0xff]
        %v1897 = vld [vmem:[#allocation2 + $0x2c0] sm:$0xff]
        %v1898 = vld [vmem:[#allocation2 + $0x2c8] sm:$0xff]
        %v1899 = vld [vmem:[#allocation2 + $0x2d0] sm:$0xff]
        %v1900 = vld [vmem:[#allocation2 + $0x2d8] sm:$0xff]
        %v1901 = vld [vmem:[#allocation2 + $0x2e0] sm:$0xff]
        %v1902 = vld [vmem:[#allocation2 + $0x2e8] sm:$0xff]
        %v1903 = vld [vmem:[#allocation2 + $0x2f0] sm:$0xff]
        %v1904 = vld [vmem:[#allocation2 + $0x2f8] sm:$0xff]
        %v1905 = vld [vmem:[#allocation2 + $0x300] sm:$0xff]
        %v1906 = vld [vmem:[#allocation2 + $0x308] sm:$0xff]
        %v1907 = vld [vmem:[#allocation2 + $0x310] sm:$0xff]
        %v1908 = vld [vmem:[#allocation2 + $0x318] sm:$0xff]
        %v1909 = vld [vmem:[#allocation2 + $0x320] sm:$0xff]
        %v1910 = vld [vmem:[#allocation2 + $0x328] sm:$0xff]
        %v1911 = vld [vmem:[#allocation2 + $0x330] sm:$0xff]
        %v1912 = vld [vmem:[#allocation2 + $0x338] sm:$0xff]
        %v1913 = vld [vmem:[#allocation2 + $0x340] sm:$0xff]
        %v1914 = vld [vmem:[#allocation2 + $0x348] sm:$0xff]
        %v1915 = vld [vmem:[#allocation2 + $0x350] sm:$0xff]
        %v1916 = vld [vmem:[#allocation2 + $0x358] sm:$0xff]
        %v1917 = vld [vmem:[#allocation2 + $0x360] sm:$0xff]
        %v1918 = vld [vmem:[#allocation2 + $0x368] sm:$0xff]
        %v1919 = vld [vmem:[#allocation2 + $0x370] sm:$0xff]
        %v1920 = vld [vmem:[#allocation2 + $0x378] sm:$0xff]
        %v1921 = vld [vmem:[#allocation2 + $0x380] sm:$0xff]
        %v1922 = vld [vmem:[#allocation2 + $0x388] sm:$0xff]
        %v1923 = vld [vmem:[#allocation2 + $0x390] sm:$0xff]
        %v1924 = vld [vmem:[#allocation2 + $0x398] sm:$0xff]
        %v1925 = vld [vmem:[#allocation2 + $0x3a0] sm:$0xff]
        %v1926 = vld [vmem:[#allocation2 + $0x3a8] sm:$0xff]
        %v1927 = vld [vmem:[#allocation2 + $0x3b0] sm:$0xff]
        %v1928 = vld [vmem:[#allocation2 + $0x3b8] sm:$0xff]
        %v1929 = vld [vmem:[#allocation2 + $0x3c0] sm:$0xff]
        %v1930 = vld [vmem:[#allocation2 + $0x3c8] sm:$0xff]
        %v1931 = vld [vmem:[#allocation2 + $0x3d0] sm:$0xff]
        %v1932 = vld [vmem:[#allocation2 + $0x3d8] sm:$0xff]
        %v1933 = vld [vmem:[#allocation2 + $0x3e0] sm:$0xff]
        %v1934 = vld [vmem:[#allocation2 + $0x3e8] sm:$0xff]
        %v1935 = vld [vmem:[#allocation2 + $0x3f0] sm:$0xff]
        %v1936 = vld [vmem:[#allocation2 + $0x3f8] sm:$0xff]
        %v1937 = vld [vmem:[%s6] sm:$0x3]
        %v1939 = vlaneseq
        %v1940 = vshrl.u32 %v1939, 7
        %v1941 = vsub.s32 0, %v1940
        %v1942 = vrot.slane %v1937, %v1941
        %v1943 = vlaneseq
        %v1944 = vshrl.u32 %v1943, 7
        %v1945 = vsub.s32 1, %v1944
        %v1946 = vrot.slane %v1937, %v1945
        %1949 = vmatprep.subr.mxu0 %v1810
        %1950 = vmatpush1.msra.mxu0 %v1809
        %1951 = vmatprep.subr.mxu0 %v1812
        %1952 = vmatpush1.msra.mxu0 %v1811
        %1953 = vmatprep.subr.mxu0 %v1814
        %1954 = vmatpush1.msra.mxu0 %v1813
        %1955 = vmatprep.subr.mxu0 %v1816
        %1956 = vmatpush1.msra.mxu0 %v1815
        %1957 = vmatprep.subr.mxu0 %v1818
        %1958 = vmatpush1.msra.mxu0 %v1817
        %1959 = vmatprep.subr.mxu0 %v1820
        %1960 = vmatpush1.msra.mxu0 %v1819
        %1961 = vmatprep.subr.mxu0 %v1822
        %1962 = vmatpush1.msra.mxu0 %v1821
        %1963 = vmatprep.subr.mxu0 %v1824
        %1964 = vmatpush1.msra.mxu0 %v1823
        %1965 = vmatprep.subr.mxu0 %v1826
        %1966 = vmatpush1.msra.mxu0 %v1825
        %1967 = vmatprep.subr.mxu0 %v1828
        %1968 = vmatpush1.msra.mxu0 %v1827
        %1969 = vmatprep.subr.mxu0 %v1830
        %1970 = vmatpush1.msra.mxu0 %v1829
        %1971 = vmatprep.subr.mxu0 %v1832
        %1972 = vmatpush1.msra.mxu0 %v1831
        %1973 = vmatprep.subr.mxu0 %v1834
        %1974 = vmatpush1.msra.mxu0 %v1833
        %1975 = vmatprep.subr.mxu0 %v1836
        %1976 = vmatpush1.msra.mxu0 %v1835
        %1977 = vmatprep.subr.mxu0 %v1838
        %1978 = vmatpush1.msra.mxu0 %v1837
        %1979 = vmatprep.subr.mxu0 %v1840
        %1980 = vmatpush1.msra.mxu0 %v1839
        %1981 = vmatprep.subr.mxu0 %v1842
        %1982 = vmatpush1.msra.mxu0 %v1841
        %1983 = vmatprep.subr.mxu0 %v1844
        %1984 = vmatpush1.msra.mxu0 %v1843
        %1985 = vmatprep.subr.mxu0 %v1846
        %1986 = vmatpush1.msra.mxu0 %v1845
        %1987 = vmatprep.subr.mxu0 %v1848
        %1988 = vmatpush1.msra.mxu0 %v1847
        %1989 = vmatprep.subr.mxu0 %v1850
        %1990 = vmatpush1.msra.mxu0 %v1849
        %1991 = vmatprep.subr.mxu0 %v1852
        %1992 = vmatpush1.msra.mxu0 %v1851
        %1993 = vmatprep.subr.mxu0 %v1854
        %1994 = vmatpush1.msra.mxu0 %v1853
        %1995 = vmatprep.subr.mxu0 %v1856
        %1996 = vmatpush1.msra.mxu0 %v1855
        %1997 = vmatprep.subr.mxu0 %v1858
        %1998 = vmatpush1.msra.mxu0 %v1857
        %1999 = vmatprep.subr.mxu0 %v1860
        %2000 = vmatpush1.msra.mxu0 %v1859
        %2001 = vmatprep.subr.mxu0 %v1862
        %2002 = vmatpush1.msra.mxu0 %v1861
        %2003 = vmatprep.subr.mxu0 %v1864
        %2004 = vmatpush1.msra.mxu0 %v1863
        %2005 = vmatprep.subr.mxu0 %v1866
        %2006 = vmatpush1.msra.mxu0 %v1865
        %2007 = vmatprep.subr.mxu0 %v1868
        %2008 = vmatpush1.msra.mxu0 %v1867
        %2009 = vmatprep.subr.mxu0 %v1870
        %2010 = vmatpush1.msra.mxu0 %v1869
        %2011 = vmatprep.subr.mxu0 %v1872
        %2012 = vmatpush1.msra.mxu0 %v1871
        %2013 = vmatprep.mubr.f32.mxu0 %v1806
        %2014 = vmatmul.mubr.f32.gmra.mrb[0].mxu0 %v1805
        %v2015 = vpop.f32.mrb[0].mxu0
        %v2016 = vadd.f32 %v1942, %v2015
        %v2017 = vpop.f32.mrb[0].mxu0
        %v2018 = vadd.f32 %v1946, %v2017
        %2019 = vdwg.mxu0
        %2020 = vmatprep.subr.mxu0 %v1874
        %2021 = vmatpush1.msra.mxu0 %v1873
        %2022 = vmatprep.subr.mxu0 %v1876
        %2023 = vmatpush1.msra.mxu0 %v1875
        %2024 = vmatprep.subr.mxu0 %v1878
        %2025 = vmatpush1.msra.mxu0 %v1877
        %2026 = vmatprep.subr.mxu0 %v1880
        %2027 = vmatpush1.msra.mxu0 %v1879
        %2028 = vmatprep.subr.mxu0 %v1882
        %2029 = vmatpush1.msra.mxu0 %v1881
        %2030 = vmatprep.subr.mxu0 %v1884
        %2031 = vmatpush1.msra.mxu0 %v1883
        %2032 = vmatprep.subr.mxu0 %v1886
        %2033 = vmatpush1.msra.mxu0 %v1885
        %2034 = vmatprep.subr.mxu0 %v1888
        %2035 = vmatpush1.msra.mxu0 %v1887
        %2036 = vmatprep.subr.mxu0 %v1890
        %2037 = vmatpush1.msra.mxu0 %v1889
        %2038 = vmatprep.subr.mxu0 %v1892
        %2039 = vmatpush1.msra.mxu0 %v1891
        %2040 = vmatprep.subr.mxu0 %v1894
        %2041 = vmatpush1.msra.mxu0 %v1893
        %2042 = vmatprep.subr.mxu0 %v1896
        %2043 = vmatpush1.msra.mxu0 %v1895
        %2044 = vmatprep.subr.mxu0 %v1898
        %2045 = vmatpush1.msra.mxu0 %v1897
        %2046 = vmatprep.subr.mxu0 %v1900
        %2047 = vmatpush1.msra.mxu0 %v1899
        %2048 = vmatprep.subr.mxu0 %v1902
        %2049 = vmatpush1.msra.mxu0 %v1901
        %2050 = vmatprep.subr.mxu0 %v1904
        %2051 = vmatpush1.msra.mxu0 %v1903
        %2052 = vmatprep.subr.mxu0 %v1906
        %2053 = vmatpush1.msra.mxu0 %v1905
        %2054 = vmatprep.subr.mxu0 %v1908
        %2055 = vmatpush1.msra.mxu0 %v1907
        %2056 = vmatprep.subr.mxu0 %v1910
        %2057 = vmatpush1.msra.mxu0 %v1909
        %2058 = vmatprep.subr.mxu0 %v1912
        %2059 = vmatpush1.msra.mxu0 %v1911
        %2060 = vmatprep.subr.mxu0 %v1914
        %2061 = vmatpush1.msra.mxu0 %v1913
        %2062 = vmatprep.subr.mxu0 %v1916
        %2063 = vmatpush1.msra.mxu0 %v1915
        %2064 = vmatprep.subr.mxu0 %v1918
        %2065 = vmatpush1.msra.mxu0 %v1917
        %2066 = vmatprep.subr.mxu0 %v1920
        %2067 = vmatpush1.msra.mxu0 %v1919
        %2068 = vmatprep.subr.mxu0 %v1922
        %2069 = vmatpush1.msra.mxu0 %v1921
        %2070 = vmatprep.subr.mxu0 %v1924
        %2071 = vmatpush1.msra.mxu0 %v1923
        %2072 = vmatprep.subr.mxu0 %v1926
        %2073 = vmatpush1.msra.mxu0 %v1925
        %2074 = vmatprep.subr.mxu0 %v1928
        %2075 = vmatpush1.msra.mxu0 %v1927
        %2076 = vmatprep.subr.mxu0 %v1930
        %2077 = vmatpush1.msra.mxu0 %v1929
        %2078 = vmatprep.subr.mxu0 %v1932
        %2079 = vmatpush1.msra.mxu0 %v1931
        %2080 = vmatprep.subr.mxu0 %v1934
        %2081 = vmatpush1.msra.mxu0 %v1933
        %2082 = vmatprep.subr.mxu0 %v1936
        %2083 = vmatpush1.msra.mxu0 %v1935
        %2084 = vmatprep.mubr.f32.mxu0 %v1808
        %2085 = vmatmul.mubr.f32.gmra.mrb[0].mxu0 %v1807
        %v2086 = vpop.f32.mrb[0].mxu0
        %v2087 = vadd.f32 %v2016, %v2086
        %v2088 = vpop.f32.mrb[0].mxu0
        %v2089 = vadd.f32 %v2018, %v2088
        %2090 = vdwg.mxu0
        %v2091 = vmax.f32 %v2087, 0.0
        %v2092 = vmax.f32 %v2089, 0.0
        %2094 = vrot.lane.b32.xlu0 %v2091, 112
        %v2095 = vpop.permute.xlu0 %2094
        %v2097 = vmax.f32 %v2091, %v2095
        %v2098 = vadd.f32 %v2091, %v2095
        %2099 = vrot.lane.b32.xlu0 %v2091, 96
        %v2100 = vpop.permute.xlu0 %2099
        %v2102 = vmax.f32 %v2097, %v2100
        %v2103 = vadd.f32 %v2098, %v2100
        %2104 = vrot.lane.b32.xlu0 %v2091, 80
        %v2105 = vpop.permute.xlu0 %2104
        %v2107 = vmax.f32 %v2102, %v2105
        %v2108 = vadd.f32 %v2103, %v2105
        %2109 = vrot.lane.b32.xlu0 %v2091, 64
        %v2110 = vpop.permute.xlu0 %2109
        %v2112 = vmax.f32 %v2107, %v2110
        %v2113 = vadd.f32 %v2108, %v2110
        %2114 = vrot.lane.b32.xlu0 %v2091, 48
        %v2115 = vpop.permute.xlu0 %2114
        %v2117 = vmax.f32 %v2112, %v2115
        %v2118 = vadd.f32 %v2113, %v2115
        %2119 = vrot.lane.b32.xlu0 %v2091, 32
        %v2120 = vpop.permute.xlu0 %2119
        %v2122 = vmax.f32 %v2117, %v2120
        %v2123 = vadd.f32 %v2118, %v2120
        %2124 = vrot.lane.b32.xlu0 %v2091, 16
        %v2125 = vpop.permute.xlu0 %2124
        %v2127 = vmax.f32 %v2122, %v2125
        %v2128 = vadd.f32 %v2123, %v2125
        %v2129 = vmax.f32 %v2127, %v2092
        %v2130 = vadd.f32 %v2128, %v2092
        %2132 = vrot.lane.b32.xlu0 %v2092, 112
        %v2133 = vpop.permute.xlu0 %2132
        %v2135 = vmax.f32 %v2129, %v2133
        %v2136 = vadd.f32 %v2130, %v2133
        %2137 = vrot.lane.b32.xlu0 %v2092, 96
        %v2138 = vpop.permute.xlu0 %2137
        %v2140 = vmax.f32 %v2135, %v2138
        %v2141 = vadd.f32 %v2136, %v2138
        %2142 = vrot.lane.b32.xlu0 %v2092, 80
        %v2143 = vpop.permute.xlu0 %2142
        %v2145 = vmax.f32 %v2140, %v2143
        %v2146 = vadd.f32 %v2141, %v2143
        %2147 = vrot.lane.b32.xlu0 %v2092, 64
        %v2148 = vpop.permute.xlu0 %2147
        %v2150 = vmax.f32 %v2145, %v2148
        %v2151 = vadd.f32 %v2146, %v2148
        %2152 = vrot.lane.b32.xlu0 %v2092, 48
        %v2153 = vpop.permute.xlu0 %2152
        %v2155 = vmax.f32 %v2150, %v2153
        %v2156 = vadd.f32 %v2151, %v2153
        %2157 = vrot.lane.b32.xlu0 %v2092, 32
        %v2158 = vpop.permute.xlu0 %2157
        %v2160 = vmax.f32 %v2155, %v2158
        %v2161 = vadd.f32 %v2156, %v2158
        %2162 = vrot.lane.b32.xlu0 %v2092, 16
        %v2163 = vpop.permute.xlu0 %2162
        %v2165 = vmax.f32 %v2160, %v2163
        %v2166 = vadd.f32 %v2161, %v2163
        %v2167 = vmul.f32 %v2166, 0.0625
        %v2168 = vld [vmem:[%s15] sm:$0xff]
        %v2169 = vld [vmem:[%s15 + $0x8] sm:$0xff]
        %v2170 = vld [vmem:[%s15 + $0x10] sm:$0xff]
        %v2171 = vld [vmem:[%s15 + $0x18] sm:$0xff]
        %v2172 = vld [vmem:[%s15 + $0x20] sm:$0xff]
        %v2173 = vld [vmem:[%s15 + $0x28] sm:$0xff]
        %v2174 = vld [vmem:[%s15 + $0x30] sm:$0xff]
        %v2175 = vld [vmem:[%s15 + $0x38] sm:$0xff]
        %v2176 = vld [vmem:[%s15 + $0x40] sm:$0xff]
        %v2177 = vld [vmem:[%s15 + $0x48] sm:$0xff]
        %v2178 = vld [vmem:[%s15 + $0x50] sm:$0xff]
        %v2179 = vld [vmem:[%s15 + $0x58] sm:$0xff]
        %v2180 = vld [vmem:[%s15 + $0x60] sm:$0xff]
        %v2181 = vld [vmem:[%s15 + $0x68] sm:$0xff]
        %v2182 = vld [vmem:[%s15 + $0x70] sm:$0xff]
        %v2183 = vld [vmem:[%s15 + $0x78] sm:$0xff]
        %v2184 = vld [vmem:[%s16] sm:$0x3]
        %vm2185 = vcmask 130048
        %v2187 = vsel %vm2185, %v2165, 0
        %2189 = vmatprep.subr.mxu0 %v2169
        %2190 = vmatpush1.msra.mxu0 %v2168
        %2191 = vmatprep.subr.mxu0 %v2171
        %2192 = vmatpush1.msra.mxu0 %v2170
        %2193 = vmatprep.subr.mxu0 0.0
        %2194 = vmatpush1.msra.mxu0 0.0
        %2195 = vmatprep.subr.mxu0 0.0
        %2196 = vmatpush1.msra.mxu0 0.0
        %2197 = vmatprep.subr.mxu0 0.0
        %2198 = vmatpush1.msra.mxu0 0.0
        %2199 = vmatprep.subr.mxu0 0.0
        %2200 = vmatpush1.msra.mxu0 0.0
        %2201 = vmatprep.subr.mxu0 0.0
        %2202 = vmatpush1.msra.mxu0 0.0
        %2203 = vmatprep.subr.mxu0 0.0
        %2204 = vmatpush1.msra.mxu0 0.0
        %2205 = vmatprep.subr.mxu0 0.0
        %2206 = vmatpush1.msra.mxu0 0.0
        %2207 = vmatprep.subr.mxu0 0.0
        %2208 = vmatpush1.msra.mxu0 0.0
        %2209 = vmatprep.subr.mxu0 0.0
        %2210 = vmatpush1.msra.mxu0 0.0
        %2211 = vmatprep.subr.mxu0 0.0
        %2212 = vmatpush1.msra.mxu0 0.0
        %2213 = vmatprep.subr.mxu0 0.0
        %2214 = vmatpush1.msra.mxu0 0.0
        %2215 = vmatprep.subr.mxu0 0.0
        %2216 = vmatpush1.msra.mxu0 0.0
        %2217 = vmatprep.subr.mxu0 0.0
        %2218 = vmatpush1.msra.mxu0 0.0
        %2219 = vmatprep.subr.mxu0 0.0
        %2220 = vmatpush1.msra.mxu0 0.0
        %2221 = vmatprep.subr.mxu0 0.0
        %2222 = vmatpush1.msra.mxu0 0.0
        %2223 = vmatprep.subr.mxu0 0.0
        %2224 = vmatpush1.msra.mxu0 0.0
        %2225 = vmatprep.subr.mxu0 0.0
        %2226 = vmatpush1.msra.mxu0 0.0
        %2227 = vmatprep.subr.mxu0 0.0
        %2228 = vmatpush1.msra.mxu0 0.0
        %2229 = vmatprep.subr.mxu0 0.0
        %2230 = vmatpush1.msra.mxu0 0.0
        %2231 = vmatprep.subr.mxu0 0.0
        %2232 = vmatpush1.msra.mxu0 0.0
        %2233 = vmatprep.subr.mxu0 0.0
        %2234 = vmatpush1.msra.mxu0 0.0
        %2235 = vmatprep.subr.mxu0 0.0
        %2236 = vmatpush1.msra.mxu0 0.0
        %2237 = vmatprep.subr.mxu0 0.0
        %2238 = vmatpush1.msra.mxu0 0.0
        %2239 = vmatprep.subr.mxu0 0.0
        %2240 = vmatpush1.msra.mxu0 0.0
        %2241 = vmatprep.subr.mxu0 0.0
        %2242 = vmatpush1.msra.mxu0 0.0
        %2243 = vmatprep.subr.mxu0 0.0
        %2244 = vmatpush1.msra.mxu0 0.0
        %2245 = vmatprep.subr.mxu0 0.0
        %2246 = vmatpush1.msra.mxu0 0.0
        %2247 = vmatprep.subr.mxu0 0.0
        %2248 = vmatpush1.msra.mxu0 0.0
        %2249 = vmatprep.subr.mxu0 0.0
        %2250 = vmatpush1.msra.mxu0 0.0
        %2251 = vmatprep.subr.mxu0 0.0
        %2252 = vmatpush1.msra.mxu0 0.0
        %2253 = vmatprep.mubr.f32.mxu0 0.0
        %2254 = vmatmul.mubr.f32.gmra.mrb[0].mxu0 %v2187
        %v2255 = vpop.f32.mrb[0].mxu0
        %v2256 = vadd.f32 0.0, %v2255
        %v2257 = vpop.f32.mrb[0].mxu0
        %v2258 = vadd.f32 0.0, %v2257
        %2259 = vdwg.mxu0
        %v2262 = vcombine.low %v2256, %v2258
        %v2264 = vunpack.c.l.s4 1966171168
        %v2265 = vunpack.c.0.s8 %v2264
        %v2266 = vlaneseq
        %v2267 = vshrl.u32 %v2266, 7
        %v2268 = vsub.s32 %v2265, %v2267
        %v2269 = vrot.slane %v2262, %v2268
        %v2271 = vunpack.c.l.s4 1966171168
        %v2272 = vunpack.c.0.s8 %v2271
        %v2273 = vlaneseq
        %v2274 = vshrl.u32 %v2273, 7
        %v2275 = vsub.s32 %v2272, %v2274
        %v2276 = vrot.slane %v2269, %v2275
        %v2278 = vadd.f32 %v2184, %v2276
        %v2280 = vsel %vm2185, %v2167, 0
        %2282 = vmatprep.subr.mxu0 %v2173
        %2283 = vmatpush1.msra.mxu0 %v2172
        %2284 = vmatprep.subr.mxu0 %v2175
        %2285 = vmatpush1.msra.mxu0 %v2174
        %2286 = vmatprep.subr.mxu0 0.0
        %2287 = vmatpush1.msra.mxu0 0.0
        %2288 = vmatprep.subr.mxu0 0.0
        %2289 = vmatpush1.msra.mxu0 0.0
        %2290 = vmatprep.subr.mxu0 0.0
        %2291 = vmatpush1.msra.mxu0 0.0
        %2292 = vmatprep.subr.mxu0 0.0
        %2293 = vmatpush1.msra.mxu0 0.0
        %2294 = vmatprep.subr.mxu0 0.0
        %2295 = vmatpush1.msra.mxu0 0.0
        %2296 = vmatprep.subr.mxu0 0.0
        %2297 = vmatpush1.msra.mxu0 0.0
        %2298 = vmatprep.subr.mxu0 0.0
        %2299 = vmatpush1.msra.mxu0 0.0
        %2300 = vmatprep.subr.mxu0 0.0
        %2301 = vmatpush1.msra.mxu0 0.0
        %2302 = vmatprep.subr.mxu0 0.0
        %2303 = vmatpush1.msra.mxu0 0.0
        %2304 = vmatprep.subr.mxu0 0.0
        %2305 = vmatpush1.msra.mxu0 0.0
        %2306 = vmatprep.subr.mxu0 0.0
        %2307 = vmatpush1.msra.mxu0 0.0
        %2308 = vmatprep.subr.mxu0 0.0
        %2309 = vmatpush1.msra.mxu0 0.0
        %2310 = vmatprep.subr.mxu0 0.0
        %2311 = vmatpush1.msra.mxu0 0.0
        %2312 = vmatprep.subr.mxu0 0.0
        %2313 = vmatpush1.msra.mxu0 0.0
        %2314 = vmatprep.subr.mxu0 0.0
        %2315 = vmatpush1.msra.mxu0 0.0
        %2316 = vmatprep.subr.mxu0 0.0
        %2317 = vmatpush1.msra.mxu0 0.0
        %2318 = vmatprep.subr.mxu0 0.0
        %2319 = vmatpush1.msra.mxu0 0.0
        %2320 = vmatprep.subr.mxu0 0.0
        %2321 = vmatpush1.msra.mxu0 0.0
        %2322 = vmatprep.subr.mxu0 0.0
        %2323 = vmatpush1.msra.mxu0 0.0
        %2324 = vmatprep.subr.mxu0 0.0
        %2325 = vmatpush1.msra.mxu0 0.0
        %2326 = vmatprep.subr.mxu0 0.0
        %2327 = vmatpush1.msra.mxu0 0.0
        %2328 = vmatprep.subr.mxu0 0.0
        %2329 = vmatpush1.msra.mxu0 0.0
        %2330 = vmatprep.subr.mxu0 0.0
        %2331 = vmatpush1.msra.mxu0 0.0
        %2332 = vmatprep.subr.mxu0 0.0
        %2333 = vmatpush1.msra.mxu0 0.0
        %2334 = vmatprep.subr.mxu0 0.0
        %2335 = vmatpush1.msra.mxu0 0.0
        %2336 = vmatprep.subr.mxu0 0.0
        %2337 = vmatpush1.msra.mxu0 0.0
        %2338 = vmatprep.subr.mxu0 0.0
        %2339 = vmatpush1.msra.mxu0 0.0
        %2340 = vmatprep.subr.mxu0 0.0
        %2341 = vmatpush1.msra.mxu0 0.0
        %2342 = vmatprep.subr.mxu0 0.0
        %2343 = vmatpush1.msra.mxu0 0.0
        %2344 = vmatprep.subr.mxu0 0.0
        %2345 = vmatpush1.msra.mxu0 0.0
        %2346 = vmatprep.mubr.f32.mxu0 0.0
        %2347 = vmatmul.mubr.f32.gmra.mrb[0].mxu0 %v2280
        %v2348 = vpop.f32.mrb[0].mxu0
        %v2349 = vadd.f32 0.0, %v2348
        %v2350 = vpop.f32.mrb[0].mxu0
        %v2351 = vadd.f32 0.0, %v2350
        %2352 = vdwg.mxu0
        %v2355 = vcombine.low %v2349, %v2351
        %v2357 = vunpack.c.l.s4 1966171168
        %v2358 = vunpack.c.0.s8 %v2357
        %v2359 = vlaneseq
        %v2360 = vshrl.u32 %v2359, 7
        %v2361 = vsub.s32 %v2358, %v2360
        %v2362 = vrot.slane %v2355, %v2361
        %v2364 = vunpack.c.l.s4 1966171168
        %v2365 = vunpack.c.0.s8 %v2364
        %v2366 = vlaneseq
        %v2367 = vshrl.u32 %v2366, 7
        %v2368 = vsub.s32 %v2365, %v2367
        %v2369 = vrot.slane %v2362, %v2368
        %v2371 = vadd.f32 %v2278, %v2369
        %v2372 = vrot.slane %v2165, 1
        %v2373 = vsel %vm2185, %v2372, 0
        %2375 = vmatprep.subr.mxu0 %v2177
        %2376 = vmatpush1.msra.mxu0 %v2176
        %2377 = vmatprep.subr.mxu0 %v2179
        %2378 = vmatpush1.msra.mxu0 %v2178
        %2379 = vmatprep.subr.mxu0 0.0
        %2380 = vmatpush1.msra.mxu0 0.0
        %2381 = vmatprep.subr.mxu0 0.0
        %2382 = vmatpush1.msra.mxu0 0.0
        %2383 = vmatprep.subr.mxu0 0.0
        %2384 = vmatpush1.msra.mxu0 0.0
        %2385 = vmatprep.subr.mxu0 0.0
        %2386 = vmatpush1.msra.mxu0 0.0
        %2387 = vmatprep.subr.mxu0 0.0
        %2388 = vmatpush1.msra.mxu0 0.0
        %2389 = vmatprep.subr.mxu0 0.0
        %2390 = vmatpush1.msra.mxu0 0.0
        %2391 = vmatprep.subr.mxu0 0.0
        %2392 = vmatpush1.msra.mxu0 0.0
        %2393 = vmatprep.subr.mxu0 0.0
        %2394 = vmatpush1.msra.mxu0 0.0
        %2395 = vmatprep.subr.mxu0 0.0
        %2396 = vmatpush1.msra.mxu0 0.0
        %2397 = vmatprep.subr.mxu0 0.0
        %2398 = vmatpush1.msra.mxu0 0.0
        %2399 = vmatprep.subr.mxu0 0.0
        %2400 = vmatpush1.msra.mxu0 0.0
        %2401 = vmatprep.subr.mxu0 0.0
        %2402 = vmatpush1.msra.mxu0 0.0
        %2403 = vmatprep.subr.mxu0 0.0
        %2404 = vmatpush1.msra.mxu0 0.0
        %2405 = vmatprep.subr.mxu0 0.0
        %2406 = vmatpush1.msra.mxu0 0.0
        %2407 = vmatprep.subr.mxu0 0.0
        %2408 = vmatpush1.msra.mxu0 0.0
        %2409 = vmatprep.subr.mxu0 0.0
        %2410 = vmatpush1.msra.mxu0 0.0
        %2411 = vmatprep.subr.mxu0 0.0
        %2412 = vmatpush1.msra.mxu0 0.0
        %2413 = vmatprep.subr.mxu0 0.0
        %2414 = vmatpush1.msra.mxu0 0.0
        %2415 = vmatprep.subr.mxu0 0.0
        %2416 = vmatpush1.msra.mxu0 0.0
        %2417 = vmatprep.subr.mxu0 0.0
        %2418 = vmatpush1.msra.mxu0 0.0
        %2419 = vmatprep.subr.mxu0 0.0
        %2420 = vmatpush1.msra.mxu0 0.0
        %2421 = vmatprep.subr.mxu0 0.0
        %2422 = vmatpush1.msra.mxu0 0.0
        %2423 = vmatprep.subr.mxu0 0.0
        %2424 = vmatpush1.msra.mxu0 0.0
        %2425 = vmatprep.subr.mxu0 0.0
        %2426 = vmatpush1.msra.mxu0 0.0
        %2427 = vmatprep.subr.mxu0 0.0
        %2428 = vmatpush1.msra.mxu0 0.0
        %2429 = vmatprep.subr.mxu0 0.0
        %2430 = vmatpush1.msra.mxu0 0.0
        %2431 = vmatprep.subr.mxu0 0.0
        %2432 = vmatpush1.msra.mxu0 0.0
        %2433 = vmatprep.subr.mxu0 0.0
        %2434 = vmatpush1.msra.mxu0 0.0
        %2435 = vmatprep.subr.mxu0 0.0
        %2436 = vmatpush1.msra.mxu0 0.0
        %2437 = vmatprep.subr.mxu0 0.0
        %2438 = vmatpush1.msra.mxu0 0.0
        %2439 = vmatprep.mubr.f32.mxu0 0.0
        %2440 = vmatmul.mubr.f32.gmra.mrb[0].mxu0 %v2373
        %v2441 = vpop.f32.mrb[0].mxu0
        %v2442 = vadd.f32 0.0, %v2441
        %v2443 = vpop.f32.mrb[0].mxu0
        %v2444 = vadd.f32 0.0, %v2443
        %2445 = vdwg.mxu0
        %v2448 = vcombine.low %v2442, %v2444
        %v2450 = vunpack.c.l.s4 1966171168
        %v2451 = vunpack.c.0.s8 %v2450
        %v2452 = vlaneseq
        %v2453 = vshrl.u32 %v2452, 7
        %v2454 = vsub.s32 %v2451, %v2453
        %v2455 = vrot.slane %v2448, %v2454
        %v2457 = vunpack.c.l.s4 1966171168
        %v2458 = vunpack.c.0.s8 %v2457
        %v2459 = vlaneseq
        %v2460 = vshrl.u32 %v2459, 7
        %v2461 = vsub.s32 %v2458, %v2460
        %v2462 = vrot.slane %v2455, %v2461
        %v2464 = vadd.f32 %v2371, %v2462
        %v2465 = vrot.slane %v2167, 1
        %v2466 = vsel %vm2185, %v2465, 0
        %2468 = vmatprep.subr.mxu0 %v2181
        %2469 = vmatpush1.msra.mxu0 %v2180
        %2470 = vmatprep.subr.mxu0 %v2183
        %2471 = vmatpush1.msra.mxu0 %v2182
        %2472 = vmatprep.subr.mxu0 0.0
        %2473 = vmatpush1.msra.mxu0 0.0
        %2474 = vmatprep.subr.mxu0 0.0
        %2475 = vmatpush1.msra.mxu0 0.0
        %2476 = vmatprep.subr.mxu0 0.0
        %2477 = vmatpush1.msra.mxu0 0.0
        %2478 = vmatprep.subr.mxu0 0.0
        %2479 = vmatpush1.msra.mxu0 0.0
        %2480 = vmatprep.subr.mxu0 0.0
        %2481 = vmatpush1.msra.mxu0 0.0
        %2482 = vmatprep.subr.mxu0 0.0
        %2483 = vmatpush1.msra.mxu0 0.0
        %2484 = vmatprep.subr.mxu0 0.0
        %2485 = vmatpush1.msra.mxu0 0.0
        %2486 = vmatprep.subr.mxu0 0.0
        %2487 = vmatpush1.msra.mxu0 0.0
        %2488 = vmatprep.subr.mxu0 0.0
        %2489 = vmatpush1.msra.mxu0 0.0
        %2490 = vmatprep.subr.mxu0 0.0
        %2491 = vmatpush1.msra.mxu0 0.0
        %2492 = vmatprep.subr.mxu0 0.0
        %2493 = vmatpush1.msra.mxu0 0.0
        %2494 = vmatprep.subr.mxu0 0.0
        %2495 = vmatpush1.msra.mxu0 0.0
        %2496 = vmatprep.subr.mxu0 0.0
        %2497 = vmatpush1.msra.mxu0 0.0
        %2498 = vmatprep.subr.mxu0 0.0
        %2499 = vmatpush1.msra.mxu0 0.0
        %2500 = vmatprep.subr.mxu0 0.0
        %2501 = vmatpush1.msra.mxu0 0.0
        %2502 = vmatprep.subr.mxu0 0.0
        %2503 = vmatpush1.msra.mxu0 0.0
        %2504 = vmatprep.subr.mxu0 0.0
        %2505 = vmatpush1.msra.mxu0 0.0
        %2506 = vmatprep.subr.mxu0 0.0
        %2507 = vmatpush1.msra.mxu0 0.0
        %2508 = vmatprep.subr.mxu0 0.0
        %2509 = vmatpush1.msra.mxu0 0.0
        %2510 = vmatprep.subr.mxu0 0.0
        %2511 = vmatpush1.msra.mxu0 0.0
        %2512 = vmatprep.subr.mxu0 0.0
        %2513 = vmatpush1.msra.mxu0 0.0
        %2514 = vmatprep.subr.mxu0 0.0
        %2515 = vmatpush1.msra.mxu0 0.0
        %2516 = vmatprep.subr.mxu0 0.0
        %2517 = vmatpush1.msra.mxu0 0.0
        %2518 = vmatprep.subr.mxu0 0.0
        %2519 = vmatpush1.msra.mxu0 0.0
        %2520 = vmatprep.subr.mxu0 0.0
        %2521 = vmatpush1.msra.mxu0 0.0
        %2522 = vmatprep.subr.mxu0 0.0
        %2523 = vmatpush1.msra.mxu0 0.0
        %2524 = vmatprep.subr.mxu0 0.0
        %2525 = vmatpush1.msra.mxu0 0.0
        %2526 = vmatprep.subr.mxu0 0.0
        %2527 = vmatpush1.msra.mxu0 0.0
        %2528 = vmatprep.subr.mxu0 0.0
        %2529 = vmatpush1.msra.mxu0 0.0
        %2530 = vmatprep.subr.mxu0 0.0
        %2531 = vmatpush1.msra.mxu0 0.0
        %2532 = vmatprep.mubr.f32.mxu0 0.0
        %2533 = vmatmul.mubr.f32.gmra.mrb[0].mxu0 %v2466
        %v2534 = vpop.f32.mrb[0].mxu0
        %v2535 = vadd.f32 0.0, %v2534
        %v2536 = vpop.f32.mrb[0].mxu0
        %v2537 = vadd.f32 0.0, %v2536
        %2538 = vdwg.mxu0
        %v2541 = vcombine.low %v2535, %v2537
        %v2543 = vunpack.c.l.s4 1966171168
        %v2544 = vunpack.c.0.s8 %v2543
        %v2545 = vlaneseq
        %v2546 = vshrl.u32 %v2545, 7
        %v2547 = vsub.s32 %v2544, %v2546
        %v2548 = vrot.slane %v2541, %v2547
        %v2550 = vunpack.c.l.s4 1966171168
        %v2551 = vunpack.c.0.s8 %v2550
        %v2552 = vlaneseq
        %v2553 = vshrl.u32 %v2552, 7
        %v2554 = vsub.s32 %v2551, %v2553
        %v2555 = vrot.slane %v2548, %v2554
        %v2557 = vadd.f32 %v2464, %v2555
        %v2558 = vmax.f32 %v2557, 0.0
        %v2559 = vld [vmem:[%s933] sm:$0x3f]
        %v2560 = vld [vmem:[#allocation5] sm:$0xff]
        %v2561 = vld [vmem:[#allocation5 + $0x8] sm:$0xff]
        %v2562 = vld [vmem:[#allocation5 + $0x10] sm:$0xff]
        %v2563 = vld [vmem:[#allocation5 + $0x18] sm:$0xff]
        %v2564 = vld [vmem:[#allocation5 + $0x20] sm:$0xff]
        %v2565 = vld [vmem:[#allocation5 + $0x28] sm:$0xff]
        %v2566 = vld [vmem:[#allocation5 + $0x30] sm:$0xff]
        %v2567 = vld [vmem:[#allocation5 + $0x38] sm:$0xff]
        %v2568 = vld [vmem:[#allocation5 + $0x40] sm:$0xff]
        %v2569 = vld [vmem:[#allocation5 + $0x48] sm:$0xff]
        %v2570 = vld [vmem:[#allocation5 + $0x50] sm:$0xff]
        %v2571 = vld [vmem:[#allocation5 + $0x58] sm:$0xff]
        %v2572 = vld [vmem:[#allocation5 + $0x60] sm:$0xff]
        %v2573 = vld [vmem:[#allocation5 + $0x68] sm:$0xff]
        %v2574 = vld [vmem:[#allocation5 + $0x70] sm:$0xff]
        %v2575 = vld [vmem:[#allocation5 + $0x78] sm:$0xff]
        %v2576 = vld [vmem:[#allocation5 + $0x80] sm:$0xff]
        %v2577 = vld [vmem:[#allocation5 + $0x88] sm:$0xff]
        %v2578 = vld [vmem:[#allocation5 + $0x90] sm:$0xff]
        %v2579 = vld [vmem:[#allocation5 + $0x98] sm:$0xff]
        %v2580 = vld [vmem:[#allocation5 + $0xa0] sm:$0xff]
        %v2581 = vld [vmem:[#allocation5 + $0xa8] sm:$0xff]
        %v2582 = vld [vmem:[#allocation5 + $0xb0] sm:$0xff]
        %v2583 = vld [vmem:[#allocation5 + $0xb8] sm:$0xff]
        %v2584 = vld [vmem:[#allocation5 + $0xc0] sm:$0xff]
        %v2585 = vld [vmem:[#allocation5 + $0xc8] sm:$0xff]
        %v2586 = vld [vmem:[#allocation5 + $0xd0] sm:$0xff]
        %v2587 = vld [vmem:[#allocation5 + $0xd8] sm:$0xff]
        %v2588 = vld [vmem:[#allocation5 + $0xe0] sm:$0xff]
        %v2589 = vld [vmem:[#allocation5 + $0xe8] sm:$0xff]
        %v2590 = vld [vmem:[#allocation5 + $0xf0] sm:$0xff]
        %v2591 = vld [vmem:[#allocation5 + $0xf8] sm:$0xff]
        %v2592 = vld [vmem:[#allocation5 + $0x100] sm:$0xff]
        %v2593 = vld [vmem:[#allocation5 + $0x108] sm:$0xff]
        %v2594 = vld [vmem:[#allocation5 + $0x110] sm:$0xff]
        %v2595 = vld [vmem:[#allocation5 + $0x118] sm:$0xff]
        %v2596 = vld [vmem:[#allocation5 + $0x120] sm:$0xff]
        %v2597 = vld [vmem:[#allocation5 + $0x128] sm:$0xff]
        %v2598 = vld [vmem:[#allocation5 + $0x130] sm:$0xff]
        %v2599 = vld [vmem:[#allocation5 + $0x138] sm:$0xff]
        %v2600 = vld [vmem:[#allocation5 + $0x140] sm:$0xff]
        %v2601 = vld [vmem:[#allocation5 + $0x148] sm:$0xff]
        %v2602 = vld [vmem:[#allocation5 + $0x150] sm:$0xff]
        %v2603 = vld [vmem:[#allocation5 + $0x158] sm:$0xff]
        %v2604 = vld [vmem:[#allocation5 + $0x160] sm:$0xff]
        %v2605 = vld [vmem:[#allocation5 + $0x168] sm:$0xff]
        %v2606 = vld [vmem:[#allocation5 + $0x170] sm:$0xff]
        %v2607 = vld [vmem:[#allocation5 + $0x178] sm:$0xff]
        %v2608 = vld [vmem:[#allocation5 + $0x180] sm:$0xff]
        %v2609 = vld [vmem:[#allocation5 + $0x188] sm:$0xff]
        %v2610 = vld [vmem:[#allocation5 + $0x190] sm:$0xff]
        %v2611 = vld [vmem:[#allocation5 + $0x198] sm:$0xff]
        %v2612 = vld [vmem:[#allocation5 + $0x1a0] sm:$0xff]
        %v2613 = vld [vmem:[#allocation5 + $0x1a8] sm:$0xff]
        %v2614 = vld [vmem:[#allocation5 + $0x1b0] sm:$0xff]
        %v2615 = vld [vmem:[#allocation5 + $0x1b8] sm:$0xff]
        %v2616 = vld [vmem:[#allocation5 + $0x1c0] sm:$0xff]
        %v2617 = vld [vmem:[#allocation5 + $0x1c8] sm:$0xff]
        %v2618 = vld [vmem:[#allocation5 + $0x1d0] sm:$0xff]
        %v2619 = vld [vmem:[#allocation5 + $0x1d8] sm:$0xff]
        %v2620 = vld [vmem:[#allocation5 + $0x1e0] sm:$0xff]
        %v2621 = vld [vmem:[#allocation5 + $0x1e8] sm:$0xff]
        %v2622 = vld [vmem:[#allocation5 + $0x1f0] sm:$0xff]
        %v2623 = vld [vmem:[#allocation5 + $0x1f8] sm:$0xff]
        %v2624 = vld [vmem:[#allocation5 + $0x200] sm:$0xff]
        %v2625 = vld [vmem:[#allocation5 + $0x208] sm:$0xff]
        %v2626 = vld [vmem:[#allocation5 + $0x210] sm:$0xff]
        %v2627 = vld [vmem:[#allocation5 + $0x218] sm:$0xff]
        %v2628 = vld [vmem:[#allocation5 + $0x220] sm:$0xff]
        %v2629 = vld [vmem:[#allocation5 + $0x228] sm:$0xff]
        %v2630 = vld [vmem:[#allocation5 + $0x230] sm:$0xff]
        %v2631 = vld [vmem:[#allocation5 + $0x238] sm:$0xff]
        %v2632 = vld [vmem:[#allocation5 + $0x240] sm:$0xff]
        %v2633 = vld [vmem:[#allocation5 + $0x248] sm:$0xff]
        %v2634 = vld [vmem:[#allocation5 + $0x250] sm:$0xff]
        %v2635 = vld [vmem:[#allocation5 + $0x258] sm:$0xff]
        %v2636 = vld [vmem:[#allocation5 + $0x260] sm:$0xff]
        %v2637 = vld [vmem:[#allocation5 + $0x268] sm:$0xff]
        %v2638 = vld [vmem:[#allocation5 + $0x270] sm:$0xff]
        %v2639 = vld [vmem:[#allocation5 + $0x278] sm:$0xff]
        %v2640 = vld [vmem:[#allocation5 + $0x280] sm:$0xff]
        %v2641 = vld [vmem:[#allocation5 + $0x288] sm:$0xff]
        %v2642 = vld [vmem:[#allocation5 + $0x290] sm:$0xff]
        %v2643 = vld [vmem:[#allocation5 + $0x298] sm:$0xff]
        %v2644 = vld [vmem:[#allocation5 + $0x2a0] sm:$0xff]
        %v2645 = vld [vmem:[#allocation5 + $0x2a8] sm:$0xff]
        %v2646 = vld [vmem:[#allocation5 + $0x2b0] sm:$0xff]
        %v2647 = vld [vmem:[#allocation5 + $0x2b8] sm:$0xff]
        %v2648 = vld [vmem:[#allocation5 + $0x2c0] sm:$0xff]
        %v2649 = vld [vmem:[#allocation5 + $0x2c8] sm:$0xff]
        %v2650 = vld [vmem:[#allocation5 + $0x2d0] sm:$0xff]
        %v2651 = vld [vmem:[#allocation5 + $0x2d8] sm:$0xff]
        %v2652 = vld [vmem:[#allocation5 + $0x2e0] sm:$0xff]
        %v2653 = vld [vmem:[#allocation5 + $0x2e8] sm:$0xff]
        %v2654 = vld [vmem:[#allocation5 + $0x2f0] sm:$0xff]
        %v2655 = vld [vmem:[#allocation5 + $0x2f8] sm:$0xff]
        %v2656 = vld [vmem:[#allocation5 + $0x300] sm:$0xff]
        %v2657 = vld [vmem:[#allocation5 + $0x308] sm:$0xff]
        %v2658 = vld [vmem:[#allocation5 + $0x310] sm:$0xff]
        %v2659 = vld [vmem:[#allocation5 + $0x318] sm:$0xff]
        %v2660 = vld [vmem:[#allocation5 + $0x320] sm:$0xff]
        %v2661 = vld [vmem:[#allocation5 + $0x328] sm:$0xff]
        %v2662 = vld [vmem:[#allocation5 + $0x330] sm:$0xff]
        %v2663 = vld [vmem:[#allocation5 + $0x338] sm:$0xff]
        %v2664 = vld [vmem:[#allocation5 + $0x340] sm:$0xff]
        %v2665 = vld [vmem:[#allocation5 + $0x348] sm:$0xff]
        %v2666 = vld [vmem:[#allocation5 + $0x350] sm:$0xff]
        %v2667 = vld [vmem:[#allocation5 + $0x358] sm:$0xff]
        %v2668 = vld [vmem:[#allocation5 + $0x360] sm:$0xff]
        %v2669 = vld [vmem:[#allocation5 + $0x368] sm:$0xff]
        %v2670 = vld [vmem:[#allocation5 + $0x370] sm:$0xff]
        %v2671 = vld [vmem:[#allocation5 + $0x378] sm:$0xff]
        %v2672 = vld [vmem:[#allocation5 + $0x380] sm:$0xff]
        %v2673 = vld [vmem:[#allocation5 + $0x388] sm:$0xff]
        %v2674 = vld [vmem:[#allocation5 + $0x390] sm:$0xff]
        %v2675 = vld [vmem:[#allocation5 + $0x398] sm:$0xff]
        %v2676 = vld [vmem:[#allocation5 + $0x3a0] sm:$0xff]
        %v2677 = vld [vmem:[#allocation5 + $0x3a8] sm:$0xff]
        %v2678 = vld [vmem:[#allocation5 + $0x3b0] sm:$0xff]
        %v2679 = vld [vmem:[#allocation5 + $0x3b8] sm:$0xff]
        %v2680 = vld [vmem:[#allocation5 + $0x3c0] sm:$0xff]
        %v2681 = vld [vmem:[#allocation5 + $0x3c8] sm:$0xff]
        %v2682 = vld [vmem:[#allocation5 + $0x3d0] sm:$0xff]
        %v2683 = vld [vmem:[#allocation5 + $0x3d8] sm:$0xff]
        %v2684 = vld [vmem:[#allocation5 + $0x3e0] sm:$0xff]
        %v2685 = vld [vmem:[#allocation5 + $0x3e8] sm:$0xff]
        %v2686 = vld [vmem:[#allocation5 + $0x3f0] sm:$0xff]
        %v2687 = vld [vmem:[#allocation5 + $0x3f8] sm:$0xff]
        %v2688 = vld [vmem:[#allocation5 + $0x400] sm:$0xff]
        %v2689 = vld [vmem:[#allocation5 + $0x408] sm:$0xff]
        %v2690 = vld [vmem:[#allocation5 + $0x410] sm:$0xff]
        %v2691 = vld [vmem:[#allocation5 + $0x418] sm:$0xff]
        %v2692 = vld [vmem:[#allocation5 + $0x420] sm:$0xff]
        %v2693 = vld [vmem:[#allocation5 + $0x428] sm:$0xff]
        %v2694 = vld [vmem:[#allocation5 + $0x430] sm:$0xff]
        %v2695 = vld [vmem:[#allocation5 + $0x438] sm:$0xff]
        %v2696 = vld [vmem:[#allocation5 + $0x440] sm:$0xff]
        %v2697 = vld [vmem:[#allocation5 + $0x448] sm:$0xff]
        %v2698 = vld [vmem:[#allocation5 + $0x450] sm:$0xff]
        %v2699 = vld [vmem:[#allocation5 + $0x458] sm:$0xff]
        %v2700 = vld [vmem:[#allocation5 + $0x460] sm:$0xff]
        %v2701 = vld [vmem:[#allocation5 + $0x468] sm:$0xff]
        %v2702 = vld [vmem:[#allocation5 + $0x470] sm:$0xff]
        %v2703 = vld [vmem:[#allocation5 + $0x478] sm:$0xff]
        %v2704 = vld [vmem:[#allocation5 + $0x480] sm:$0xff]
        %v2705 = vld [vmem:[#allocation5 + $0x488] sm:$0xff]
        %v2706 = vld [vmem:[#allocation5 + $0x490] sm:$0xff]
        %v2707 = vld [vmem:[#allocation5 + $0x498] sm:$0xff]
        %v2708 = vld [vmem:[#allocation5 + $0x4a0] sm:$0xff]
        %v2709 = vld [vmem:[#allocation5 + $0x4a8] sm:$0xff]
        %v2710 = vld [vmem:[#allocation5 + $0x4b0] sm:$0xff]
        %v2711 = vld [vmem:[#allocation5 + $0x4b8] sm:$0xff]
        %v2712 = vld [vmem:[#allocation5 + $0x4c0] sm:$0xff]
        %v2713 = vld [vmem:[#allocation5 + $0x4c8] sm:$0xff]
        %v2714 = vld [vmem:[#allocation5 + $0x4d0] sm:$0xff]
        %v2715 = vld [vmem:[#allocation5 + $0x4d8] sm:$0xff]
        %v2716 = vld [vmem:[#allocation5 + $0x4e0] sm:$0xff]
        %v2717 = vld [vmem:[#allocation5 + $0x4e8] sm:$0xff]
        %v2718 = vld [vmem:[#allocation5 + $0x4f0] sm:$0xff]
        %v2719 = vld [vmem:[#allocation5 + $0x4f8] sm:$0xff]
        %v2720 = vld [vmem:[#allocation5 + $0x500] sm:$0xff]
        %v2721 = vld [vmem:[#allocation5 + $0x508] sm:$0xff]
        %v2722 = vld [vmem:[#allocation5 + $0x510] sm:$0xff]
        %v2723 = vld [vmem:[#allocation5 + $0x518] sm:$0xff]
        %v2724 = vld [vmem:[#allocation5 + $0x520] sm:$0xff]
        %v2725 = vld [vmem:[#allocation5 + $0x528] sm:$0xff]
        %v2726 = vld [vmem:[#allocation5 + $0x530] sm:$0xff]
        %v2727 = vld [vmem:[#allocation5 + $0x538] sm:$0xff]
        %v2728 = vld [vmem:[#allocation5 + $0x540] sm:$0xff]
        %v2729 = vld [vmem:[#allocation5 + $0x548] sm:$0xff]
        %v2730 = vld [vmem:[#allocation5 + $0x550] sm:$0xff]
        %v2731 = vld [vmem:[#allocation5 + $0x558] sm:$0xff]
        %v2732 = vld [vmem:[#allocation5 + $0x560] sm:$0xff]
        %v2733 = vld [vmem:[#allocation5 + $0x568] sm:$0xff]
        %v2734 = vld [vmem:[#allocation5 + $0x570] sm:$0xff]
        %v2735 = vld [vmem:[#allocation5 + $0x578] sm:$0xff]
        %v2736 = vld [vmem:[#allocation5 + $0x580] sm:$0xff]
        %v2737 = vld [vmem:[#allocation5 + $0x588] sm:$0xff]
        %v2738 = vld [vmem:[#allocation5 + $0x590] sm:$0xff]
        %v2739 = vld [vmem:[#allocation5 + $0x598] sm:$0xff]
        %v2740 = vld [vmem:[#allocation5 + $0x5a0] sm:$0xff]
        %v2741 = vld [vmem:[#allocation5 + $0x5a8] sm:$0xff]
        %v2742 = vld [vmem:[#allocation5 + $0x5b0] sm:$0xff]
        %v2743 = vld [vmem:[#allocation5 + $0x5b8] sm:$0xff]
        %v2744 = vld [vmem:[#allocation5 + $0x5c0] sm:$0xff]
        %v2745 = vld [vmem:[#allocation5 + $0x5c8] sm:$0xff]
        %v2746 = vld [vmem:[#allocation5 + $0x5d0] sm:$0xff]
        %v2747 = vld [vmem:[#allocation5 + $0x5d8] sm:$0xff]
        %v2748 = vld [vmem:[#allocation5 + $0x5e0] sm:$0xff]
        %v2749 = vld [vmem:[#allocation5 + $0x5e8] sm:$0xff]
        %v2750 = vld [vmem:[#allocation5 + $0x5f0] sm:$0xff]
        %v2751 = vld [vmem:[#allocation5 + $0x5f8] sm:$0xff]
        %v2752 = vld [vmem:[#allocation5 + $0x600] sm:$0xff]
        %v2753 = vld [vmem:[#allocation5 + $0x608] sm:$0xff]
        %v2754 = vld [vmem:[#allocation5 + $0x610] sm:$0xff]
        %v2755 = vld [vmem:[#allocation5 + $0x618] sm:$0xff]
        %v2756 = vld [vmem:[#allocation5 + $0x620] sm:$0xff]
        %v2757 = vld [vmem:[#allocation5 + $0x628] sm:$0xff]
        %v2758 = vld [vmem:[#allocation5 + $0x630] sm:$0xff]
        %v2759 = vld [vmem:[#allocation5 + $0x638] sm:$0xff]
        %v2760 = vld [vmem:[#allocation5 + $0x640] sm:$0xff]
        %v2761 = vld [vmem:[#allocation5 + $0x648] sm:$0xff]
        %v2762 = vld [vmem:[#allocation5 + $0x650] sm:$0xff]
        %v2763 = vld [vmem:[#allocation5 + $0x658] sm:$0xff]
        %v2764 = vld [vmem:[#allocation5 + $0x660] sm:$0xff]
        %v2765 = vld [vmem:[#allocation5 + $0x668] sm:$0xff]
        %v2766 = vld [vmem:[#allocation5 + $0x670] sm:$0xff]
        %v2767 = vld [vmem:[#allocation5 + $0x678] sm:$0xff]
        %v2768 = vld [vmem:[#allocation5 + $0x680] sm:$0xff]
        %v2769 = vld [vmem:[#allocation5 + $0x688] sm:$0xff]
        %v2770 = vld [vmem:[#allocation5 + $0x690] sm:$0xff]
        %v2771 = vld [vmem:[#allocation5 + $0x698] sm:$0xff]
        %v2772 = vld [vmem:[#allocation5 + $0x6a0] sm:$0xff]
        %v2773 = vld [vmem:[#allocation5 + $0x6a8] sm:$0xff]
        %v2774 = vld [vmem:[#allocation5 + $0x6b0] sm:$0xff]
        %v2775 = vld [vmem:[#allocation5 + $0x6b8] sm:$0xff]
        %v2776 = vld [vmem:[#allocation5 + $0x6c0] sm:$0xff]
        %v2777 = vld [vmem:[#allocation5 + $0x6c8] sm:$0xff]
        %v2778 = vld [vmem:[#allocation5 + $0x6d0] sm:$0xff]
        %v2779 = vld [vmem:[#allocation5 + $0x6d8] sm:$0xff]
        %v2780 = vld [vmem:[#allocation5 + $0x6e0] sm:$0xff]
        %v2781 = vld [vmem:[#allocation5 + $0x6e8] sm:$0xff]
        %v2782 = vld [vmem:[#allocation5 + $0x6f0] sm:$0xff]
        %v2783 = vld [vmem:[#allocation5 + $0x6f8] sm:$0xff]
        %v2784 = vld [vmem:[#allocation5 + $0x700] sm:$0xff]
        %v2785 = vld [vmem:[#allocation5 + $0x708] sm:$0xff]
        %v2786 = vld [vmem:[#allocation5 + $0x710] sm:$0xff]
        %v2787 = vld [vmem:[#allocation5 + $0x718] sm:$0xff]
        %v2788 = vld [vmem:[#allocation5 + $0x720] sm:$0xff]
        %v2789 = vld [vmem:[#allocation5 + $0x728] sm:$0xff]
        %v2790 = vld [vmem:[#allocation5 + $0x730] sm:$0xff]
        %v2791 = vld [vmem:[#allocation5 + $0x738] sm:$0xff]
        %v2792 = vld [vmem:[#allocation5 + $0x740] sm:$0xff]
        %v2793 = vld [vmem:[#allocation5 + $0x748] sm:$0xff]
        %v2794 = vld [vmem:[#allocation5 + $0x750] sm:$0xff]
        %v2795 = vld [vmem:[#allocation5 + $0x758] sm:$0xff]
        %v2796 = vld [vmem:[#allocation5 + $0x760] sm:$0xff]
        %v2797 = vld [vmem:[#allocation5 + $0x768] sm:$0xff]
        %v2798 = vld [vmem:[#allocation5 + $0x770] sm:$0xff]
        %v2799 = vld [vmem:[#allocation5 + $0x778] sm:$0xff]
        %v2800 = vld [vmem:[#allocation5 + $0x780] sm:$0xff]
        %v2801 = vld [vmem:[#allocation5 + $0x788] sm:$0xff]
        %v2802 = vld [vmem:[#allocation5 + $0x790] sm:$0xff]
        %v2803 = vld [vmem:[#allocation5 + $0x798] sm:$0xff]
        %v2804 = vld [vmem:[#allocation5 + $0x7a0] sm:$0xff]
        %v2805 = vld [vmem:[#allocation5 + $0x7a8] sm:$0xff]
        %v2806 = vld [vmem:[#allocation5 + $0x7b0] sm:$0xff]
        %v2807 = vld [vmem:[#allocation5 + $0x7b8] sm:$0xff]
        %v2808 = vld [vmem:[#allocation5 + $0x7c0] sm:$0xff]
        %v2809 = vld [vmem:[#allocation5 + $0x7c8] sm:$0xff]
        %v2810 = vld [vmem:[#allocation5 + $0x7d0] sm:$0xff]
        %v2811 = vld [vmem:[#allocation5 + $0x7d8] sm:$0xff]
        %v2812 = vld [vmem:[#allocation5 + $0x7e0] sm:$0xff]
        %v2813 = vld [vmem:[#allocation5 + $0x7e8] sm:$0xff]
        %v2814 = vld [vmem:[#allocation5 + $0x7f0] sm:$0xff]
        %v2815 = vld [vmem:[#allocation5 + $0x7f8] sm:$0xff]
        %v2816 = vld [vmem:[#allocation5 + $0x800] sm:$0xff]
        %v2817 = vld [vmem:[#allocation5 + $0x808] sm:$0xff]
        %v2818 = vld [vmem:[#allocation5 + $0x810] sm:$0xff]
        %v2819 = vld [vmem:[#allocation5 + $0x818] sm:$0xff]
        %v2820 = vld [vmem:[#allocation5 + $0x820] sm:$0xff]
        %v2821 = vld [vmem:[#allocation5 + $0x828] sm:$0xff]
        %v2822 = vld [vmem:[#allocation5 + $0x830] sm:$0xff]
        %v2823 = vld [vmem:[#allocation5 + $0x838] sm:$0xff]
        %v2824 = vld [vmem:[#allocation5 + $0x840] sm:$0xff]
        %v2825 = vld [vmem:[#allocation5 + $0x848] sm:$0xff]
        %v2826 = vld [vmem:[#allocation5 + $0x850] sm:$0xff]
        %v2827 = vld [vmem:[#allocation5 + $0x858] sm:$0xff]
        %v2828 = vld [vmem:[#allocation5 + $0x860] sm:$0xff]
        %v2829 = vld [vmem:[#allocation5 + $0x868] sm:$0xff]
        %v2830 = vld [vmem:[#allocation5 + $0x870] sm:$0xff]
        %v2831 = vld [vmem:[#allocation5 + $0x878] sm:$0xff]
        %v2832 = vld [vmem:[#allocation5 + $0x880] sm:$0xff]
        %v2833 = vld [vmem:[#allocation5 + $0x888] sm:$0xff]
        %v2834 = vld [vmem:[#allocation5 + $0x890] sm:$0xff]
        %v2835 = vld [vmem:[#allocation5 + $0x898] sm:$0xff]
        %v2836 = vld [vmem:[#allocation5 + $0x8a0] sm:$0xff]
        %v2837 = vld [vmem:[#allocation5 + $0x8a8] sm:$0xff]
        %v2838 = vld [vmem:[#allocation5 + $0x8b0] sm:$0xff]
        %v2839 = vld [vmem:[#allocation5 + $0x8b8] sm:$0xff]
        %v2840 = vld [vmem:[#allocation5 + $0x8c0] sm:$0xff]
        %v2841 = vld [vmem:[#allocation5 + $0x8c8] sm:$0xff]
        %v2842 = vld [vmem:[#allocation5 + $0x8d0] sm:$0xff]
        %v2843 = vld [vmem:[#allocation5 + $0x8d8] sm:$0xff]
        %v2844 = vld [vmem:[#allocation5 + $0x8e0] sm:$0xff]
        %v2845 = vld [vmem:[#allocation5 + $0x8e8] sm:$0xff]
        %v2846 = vld [vmem:[#allocation5 + $0x8f0] sm:$0xff]
        %v2847 = vld [vmem:[#allocation5 + $0x8f8] sm:$0xff]
        %v2848 = vld [vmem:[#allocation5 + $0x900] sm:$0xff]
        %v2849 = vld [vmem:[#allocation5 + $0x908] sm:$0xff]
        %v2850 = vld [vmem:[#allocation5 + $0x910] sm:$0xff]
        %v2851 = vld [vmem:[#allocation5 + $0x918] sm:$0xff]
        %v2852 = vld [vmem:[#allocation5 + $0x920] sm:$0xff]
        %v2853 = vld [vmem:[#allocation5 + $0x928] sm:$0xff]
        %v2854 = vld [vmem:[#allocation5 + $0x930] sm:$0xff]
        %v2855 = vld [vmem:[#allocation5 + $0x938] sm:$0xff]
        %v2856 = vld [vmem:[#allocation5 + $0x940] sm:$0xff]
        %v2857 = vld [vmem:[#allocation5 + $0x948] sm:$0xff]
        %v2858 = vld [vmem:[#allocation5 + $0x950] sm:$0xff]
        %v2859 = vld [vmem:[#allocation5 + $0x958] sm:$0xff]
        %v2860 = vld [vmem:[#allocation5 + $0x960] sm:$0xff]
        %v2861 = vld [vmem:[#allocation5 + $0x968] sm:$0xff]
        %v2862 = vld [vmem:[#allocation5 + $0x970] sm:$0xff]
        %v2863 = vld [vmem:[#allocation5 + $0x978] sm:$0xff]
        %v2864 = vld [vmem:[#allocation5 + $0x980] sm:$0xff]
        %v2865 = vld [vmem:[#allocation5 + $0x988] sm:$0xff]
        %v2866 = vld [vmem:[#allocation5 + $0x990] sm:$0xff]
        %v2867 = vld [vmem:[#allocation5 + $0x998] sm:$0xff]
        %v2868 = vld [vmem:[#allocation5 + $0x9a0] sm:$0xff]
        %v2869 = vld [vmem:[#allocation5 + $0x9a8] sm:$0xff]
        %v2870 = vld [vmem:[#allocation5 + $0x9b0] sm:$0xff]
        %v2871 = vld [vmem:[#allocation5 + $0x9b8] sm:$0xff]
        %v2872 = vld [vmem:[#allocation5 + $0x9c0] sm:$0xff]
        %v2873 = vld [vmem:[#allocation5 + $0x9c8] sm:$0xff]
        %v2874 = vld [vmem:[#allocation5 + $0x9d0] sm:$0xff]
        %v2875 = vld [vmem:[#allocation5 + $0x9d8] sm:$0xff]
        %v2876 = vld [vmem:[#allocation5 + $0x9e0] sm:$0xff]
        %v2877 = vld [vmem:[#allocation5 + $0x9e8] sm:$0xff]
        %v2878 = vld [vmem:[#allocation5 + $0x9f0] sm:$0xff]
        %v2879 = vld [vmem:[#allocation5 + $0x9f8] sm:$0xff]
        %v2880 = vld [vmem:[#allocation5 + $0xa00] sm:$0xff]
        %v2881 = vld [vmem:[#allocation5 + $0xa08] sm:$0xff]
        %v2882 = vld [vmem:[#allocation5 + $0xa10] sm:$0xff]
        %v2883 = vld [vmem:[#allocation5 + $0xa18] sm:$0xff]
        %v2884 = vld [vmem:[#allocation5 + $0xa20] sm:$0xff]
        %v2885 = vld [vmem:[#allocation5 + $0xa28] sm:$0xff]
        %v2886 = vld [vmem:[#allocation5 + $0xa30] sm:$0xff]
        %v2887 = vld [vmem:[#allocation5 + $0xa38] sm:$0xff]
        %v2888 = vld [vmem:[#allocation5 + $0xa40] sm:$0xff]
        %v2889 = vld [vmem:[#allocation5 + $0xa48] sm:$0xff]
        %v2890 = vld [vmem:[#allocation5 + $0xa50] sm:$0xff]
        %v2891 = vld [vmem:[#allocation5 + $0xa58] sm:$0xff]
        %v2892 = vld [vmem:[#allocation5 + $0xa60] sm:$0xff]
        %v2893 = vld [vmem:[#allocation5 + $0xa68] sm:$0xff]
        %v2894 = vld [vmem:[#allocation5 + $0xa70] sm:$0xff]
        %v2895 = vld [vmem:[#allocation5 + $0xa78] sm:$0xff]
        %v2896 = vld [vmem:[#allocation5 + $0xa80] sm:$0xff]
        %v2897 = vld [vmem:[#allocation5 + $0xa88] sm:$0xff]
        %v2898 = vld [vmem:[#allocation5 + $0xa90] sm:$0xff]
        %v2899 = vld [vmem:[#allocation5 + $0xa98] sm:$0xff]
        %v2900 = vld [vmem:[#allocation5 + $0xaa0] sm:$0xff]
        %v2901 = vld [vmem:[#allocation5 + $0xaa8] sm:$0xff]
        %v2902 = vld [vmem:[#allocation5 + $0xab0] sm:$0xff]
        %v2903 = vld [vmem:[#allocation5 + $0xab8] sm:$0xff]
        %v2904 = vld [vmem:[#allocation5 + $0xac0] sm:$0xff]
        %v2905 = vld [vmem:[#allocation5 + $0xac8] sm:$0xff]
        %v2906 = vld [vmem:[#allocation5 + $0xad0] sm:$0xff]
        %v2907 = vld [vmem:[#allocation5 + $0xad8] sm:$0xff]
        %v2908 = vld [vmem:[#allocation5 + $0xae0] sm:$0xff]
        %v2909 = vld [vmem:[#allocation5 + $0xae8] sm:$0xff]
        %v2910 = vld [vmem:[#allocation5 + $0xaf0] sm:$0xff]
        %v2911 = vld [vmem:[#allocation5 + $0xaf8] sm:$0xff]
        %v2912 = vld [vmem:[#allocation5 + $0xb00] sm:$0xff]
        %v2913 = vld [vmem:[#allocation5 + $0xb08] sm:$0xff]
        %v2914 = vld [vmem:[#allocation5 + $0xb10] sm:$0xff]
        %v2915 = vld [vmem:[#allocation5 + $0xb18] sm:$0xff]
        %v2916 = vld [vmem:[#allocation5 + $0xb20] sm:$0xff]
        %v2917 = vld [vmem:[#allocation5 + $0xb28] sm:$0xff]
        %v2918 = vld [vmem:[#allocation5 + $0xb30] sm:$0xff]
        %v2919 = vld [vmem:[#allocation5 + $0xb38] sm:$0xff]
        %v2920 = vld [vmem:[#allocation5 + $0xb40] sm:$0xff]
        %v2921 = vld [vmem:[#allocation5 + $0xb48] sm:$0xff]
        %v2922 = vld [vmem:[#allocation5 + $0xb50] sm:$0xff]
        %v2923 = vld [vmem:[#allocation5 + $0xb58] sm:$0xff]
        %v2924 = vld [vmem:[#allocation5 + $0xb60] sm:$0xff]
        %v2925 = vld [vmem:[#allocation5 + $0xb68] sm:$0xff]
        %v2926 = vld [vmem:[#allocation5 + $0xb70] sm:$0xff]
        %v2927 = vld [vmem:[#allocation5 + $0xb78] sm:$0xff]
        %v2928 = vld [vmem:[#allocation5 + $0xb80] sm:$0xff]
        %v2929 = vld [vmem:[#allocation5 + $0xb88] sm:$0xff]
        %v2930 = vld [vmem:[#allocation5 + $0xb90] sm:$0xff]
        %v2931 = vld [vmem:[#allocation5 + $0xb98] sm:$0xff]
        %v2932 = vld [vmem:[#allocation5 + $0xba0] sm:$0xff]
        %v2933 = vld [vmem:[#allocation5 + $0xba8] sm:$0xff]
        %v2934 = vld [vmem:[#allocation5 + $0xbb0] sm:$0xff]
        %v2935 = vld [vmem:[#allocation5 + $0xbb8] sm:$0xff]
        %v2936 = vld [vmem:[#allocation5 + $0xbc0] sm:$0xff]
        %v2937 = vld [vmem:[#allocation5 + $0xbc8] sm:$0xff]
        %v2938 = vld [vmem:[#allocation5 + $0xbd0] sm:$0xff]
        %v2939 = vld [vmem:[#allocation5 + $0xbd8] sm:$0xff]
        %v2940 = vld [vmem:[#allocation5 + $0xbe0] sm:$0xff]
        %v2941 = vld [vmem:[#allocation5 + $0xbe8] sm:$0xff]
        %v2942 = vld [vmem:[#allocation5 + $0xbf0] sm:$0xff]
        %v2943 = vld [vmem:[#allocation5 + $0xbf8] sm:$0xff]
        %v2944 = vld [vmem:[%s8] sm:$0xf]
        %v2946 = vlaneseq
        %v2947 = vshrl.u32 %v2946, 7
        %v2948 = vsub.s32 0, %v2947
        %v2949 = vrot.slane %v2559, %v2948
        %v2950 = vlaneseq
        %v2951 = vshrl.u32 %v2950, 7
        %v2952 = vsub.s32 1, %v2951
        %v2953 = vrot.slane %v2559, %v2952
        %v2954 = vlaneseq
        %v2955 = vshrl.u32 %v2954, 7
        %v2956 = vsub.s32 2, %v2955
        %v2957 = vrot.slane %v2559, %v2956
        %v2958 = vlaneseq
        %v2959 = vshrl.u32 %v2958, 7
        %v2960 = vsub.s32 3, %v2959
        %v2961 = vrot.slane %v2559, %v2960
        %v2962 = vlaneseq
        %v2963 = vshrl.u32 %v2962, 7
        %v2964 = vsub.s32 4, %v2963
        %v2965 = vrot.slane %v2559, %v2964
        %v2966 = vlaneseq
        %v2967 = vshrl.u32 %v2966, 7
        %v2968 = vsub.s32 5, %v2967
        %v2969 = vrot.slane %v2559, %v2968
        %v2977 = vlaneseq
        %v2978 = vshrl.u32 %v2977, 7
        %v2979 = vsub.s32 0, %v2978
        %v2980 = vrot.slane %v2944, %v2979
        %v2981 = vlaneseq
        %v2982 = vshrl.u32 %v2981, 7
        %v2983 = vsub.s32 1, %v2982
        %v2984 = vrot.slane %v2944, %v2983
        %v2985 = vlaneseq
        %v2986 = vshrl.u32 %v2985, 7
        %v2987 = vsub.s32 2, %v2986
        %v2988 = vrot.slane %v2944, %v2987
        %v2989 = vlaneseq
        %v2990 = vshrl.u32 %v2989, 7
        %v2991 = vsub.s32 3, %v2990
        %v2992 = vrot.slane %v2944, %v2991
        %2997 = vmatprep.subr.mxu0 %v2561
        %2998 = vmatpush1.msra.mxu0 %v2560
        %2999 = vmatprep.subr.mxu0 %v2565
        %3000 = vmatpush1.msra.mxu0 %v2564
        %3001 = vmatprep.subr.mxu0 %v2569
        %3002 = vmatpush1.msra.mxu0 %v2568
        %3003 = vmatprep.subr.mxu0 %v2573
        %3004 = vmatpush1.msra.mxu0 %v2572
        %3005 = vmatprep.subr.mxu0 %v2577
        %3006 = vmatpush1.msra.mxu0 %v2576
        %3007 = vmatprep.subr.mxu0 %v2581
        %3008 = vmatpush1.msra.mxu0 %v2580
        %3009 = vmatprep.subr.mxu0 %v2585
        %3010 = vmatpush1.msra.mxu0 %v2584
        %3011 = vmatprep.subr.mxu0 %v2589
        %3012 = vmatpush1.msra.mxu0 %v2588
        %3013 = vmatprep.subr.mxu0 %v2593
        %3014 = vmatpush1.msra.mxu0 %v2592
        %3015 = vmatprep.subr.mxu0 %v2597
        %3016 = vmatpush1.msra.mxu0 %v2596
        %3017 = vmatprep.subr.mxu0 %v2601
        %3018 = vmatpush1.msra.mxu0 %v2600
        %3019 = vmatprep.subr.mxu0 %v2605
        %3020 = vmatpush1.msra.mxu0 %v2604
        %3021 = vmatprep.subr.mxu0 %v2609
        %3022 = vmatpush1.msra.mxu0 %v2608
        %3023 = vmatprep.subr.mxu0 %v2613
        %3024 = vmatpush1.msra.mxu0 %v2612
        %3025 = vmatprep.subr.mxu0 %v2617
        %3026 = vmatpush1.msra.mxu0 %v2616
        %3027 = vmatprep.subr.mxu0 %v2621
        %3028 = vmatpush1.msra.mxu0 %v2620
        %3029 = vmatprep.subr.mxu0 %v2625
        %3030 = vmatpush1.msra.mxu0 %v2624
        %3031 = vmatprep.subr.mxu0 %v2629
        %3032 = vmatpush1.msra.mxu0 %v2628
        %3033 = vmatprep.subr.mxu0 %v2633
        %3034 = vmatpush1.msra.mxu0 %v2632
        %3035 = vmatprep.subr.mxu0 %v2637
        %3036 = vmatpush1.msra.mxu0 %v2636
        %3037 = vmatprep.subr.mxu0 %v2641
        %3038 = vmatpush1.msra.mxu0 %v2640
        %3039 = vmatprep.subr.mxu0 %v2645
        %3040 = vmatpush1.msra.mxu0 %v2644
        %3041 = vmatprep.subr.mxu0 %v2649
        %3042 = vmatpush1.msra.mxu0 %v2648
        %3043 = vmatprep.subr.mxu0 %v2653
        %3044 = vmatpush1.msra.mxu0 %v2652
        %3045 = vmatprep.subr.mxu0 %v2657
        %3046 = vmatpush1.msra.mxu0 %v2656
        %3047 = vmatprep.subr.mxu0 %v2661
        %3048 = vmatpush1.msra.mxu0 %v2660
        %3049 = vmatprep.subr.mxu0 %v2665
        %3050 = vmatpush1.msra.mxu0 %v2664
        %3051 = vmatprep.subr.mxu0 %v2669
        %3052 = vmatpush1.msra.mxu0 %v2668
        %3053 = vmatprep.subr.mxu0 %v2673
        %3054 = vmatpush1.msra.mxu0 %v2672
        %3055 = vmatprep.subr.mxu0 %v2677
        %3056 = vmatpush1.msra.mxu0 %v2676
        %3057 = vmatprep.subr.mxu0 %v2681
        %3058 = vmatpush1.msra.mxu0 %v2680
        %3059 = vmatprep.subr.mxu0 %v2685
        %3060 = vmatpush1.msra.mxu0 %v2684
        %3061 = vmatprep.mubr.f32.mxu0 %v2953
        %3062 = vmatmul.mubr.f32.gmra.mrb[0].mxu0 %v2949
        %v3063 = vpop.f32.mrb[0].mxu0
        %v3064 = vadd.f32 %v2980, %v3063
        %v3065 = vpop.f32.mrb[0].mxu0
        %v3066 = vadd.f32 %v2984, %v3065
        %3067 = vdwg.mxu0
        %3068 = vmatprep.subr.mxu0 %v2689
        %3069 = vmatpush1.msra.mxu0 %v2688
        %3070 = vmatprep.subr.mxu0 %v2693
        %3071 = vmatpush1.msra.mxu0 %v2692
        %3072 = vmatprep.subr.mxu0 %v2697
        %3073 = vmatpush1.msra.mxu0 %v2696
        %3074 = vmatprep.subr.mxu0 %v2701
        %3075 = vmatpush1.msra.mxu0 %v2700
        %3076 = vmatprep.subr.mxu0 %v2705
        %3077 = vmatpush1.msra.mxu0 %v2704
        %3078 = vmatprep.subr.mxu0 %v2709
        %3079 = vmatpush1.msra.mxu0 %v2708
        %3080 = vmatprep.subr.mxu0 %v2713
        %3081 = vmatpush1.msra.mxu0 %v2712
        %3082 = vmatprep.subr.mxu0 %v2717
        %3083 = vmatpush1.msra.mxu0 %v2716
        %3084 = vmatprep.subr.mxu0 %v2721
        %3085 = vmatpush1.msra.mxu0 %v2720
        %3086 = vmatprep.subr.mxu0 %v2725
        %3087 = vmatpush1.msra.mxu0 %v2724
        %3088 = vmatprep.subr.mxu0 %v2729
        %3089 = vmatpush1.msra.mxu0 %v2728
        %3090 = vmatprep.subr.mxu0 %v2733
        %3091 = vmatpush1.msra.mxu0 %v2732
        %3092 = vmatprep.subr.mxu0 %v2737
        %3093 = vmatpush1.msra.mxu0 %v2736
        %3094 = vmatprep.subr.mxu0 %v2741
        %3095 = vmatpush1.msra.mxu0 %v2740
        %3096 = vmatprep.subr.mxu0 %v2745
        %3097 = vmatpush1.msra.mxu0 %v2744
        %3098 = vmatprep.subr.mxu0 %v2749
        %3099 = vmatpush1.msra.mxu0 %v2748
        %3100 = vmatprep.subr.mxu0 %v2753
        %3101 = vmatpush1.msra.mxu0 %v2752
        %3102 = vmatprep.subr.mxu0 %v2757
        %3103 = vmatpush1.msra.mxu0 %v2756
        %3104 = vmatprep.subr.mxu0 %v2761
        %3105 = vmatpush1.msra.mxu0 %v2760
        %3106 = vmatprep.subr.mxu0 %v2765
        %3107 = vmatpush1.msra.mxu0 %v2764
        %3108 = vmatprep.subr.mxu0 %v2769
        %3109 = vmatpush1.msra.mxu0 %v2768
        %3110 = vmatprep.subr.mxu0 %v2773
        %3111 = vmatpush1.msra.mxu0 %v2772
        %3112 = vmatprep.subr.mxu0 %v2777
        %3113 = vmatpush1.msra.mxu0 %v2776
        %3114 = vmatprep.subr.mxu0 %v2781
        %3115 = vmatpush1.msra.mxu0 %v2780
        %3116 = vmatprep.subr.mxu0 %v2785
        %3117 = vmatpush1.msra.mxu0 %v2784
        %3118 = vmatprep.subr.mxu0 %v2789
        %3119 = vmatpush1.msra.mxu0 %v2788
        %3120 = vmatprep.subr.mxu0 %v2793
        %3121 = vmatpush1.msra.mxu0 %v2792
        %3122 = vmatprep.subr.mxu0 %v2797
        %3123 = vmatpush1.msra.mxu0 %v2796
        %3124 = vmatprep.subr.mxu0 %v2801
        %3125 = vmatpush1.msra.mxu0 %v2800
        %3126 = vmatprep.subr.mxu0 %v2805
        %3127 = vmatpush1.msra.mxu0 %v2804
        %3128 = vmatprep.subr.mxu0 %v2809
        %3129 = vmatpush1.msra.mxu0 %v2808
        %3130 = vmatprep.subr.mxu0 %v2813
        %3131 = vmatpush1.msra.mxu0 %v2812
        %3132 = vmatprep.mubr.f32.mxu0 %v2961
        %3133 = vmatmul.mubr.f32.gmra.mrb[0].mxu0 %v2957
        %v3134 = vpop.f32.mrb[0].mxu0
        %v3135 = vadd.f32 %v3064, %v3134
        %v3136 = vpop.f32.mrb[0].mxu0
        %v3137 = vadd.f32 %v3066, %v3136
        %3138 = vdwg.mxu0
        %3139 = vmatprep.subr.mxu0 %v2817
        %3140 = vmatpush1.msra.mxu0 %v2816
        %3141 = vmatprep.subr.mxu0 %v2821
        %3142 = vmatpush1.msra.mxu0 %v2820
        %3143 = vmatprep.subr.mxu0 %v2825
        %3144 = vmatpush1.msra.mxu0 %v2824
        %3145 = vmatprep.subr.mxu0 %v2829
        %3146 = vmatpush1.msra.mxu0 %v2828
        %3147 = vmatprep.subr.mxu0 %v2833
        %3148 = vmatpush1.msra.mxu0 %v2832
        %3149 = vmatprep.subr.mxu0 %v2837
        %3150 = vmatpush1.msra.mxu0 %v2836
        %3151 = vmatprep.subr.mxu0 %v2841
        %3152 = vmatpush1.msra.mxu0 %v2840
        %3153 = vmatprep.subr.mxu0 %v2845
        %3154 = vmatpush1.msra.mxu0 %v2844
        %3155 = vmatprep.subr.mxu0 %v2849
        %3156 = vmatpush1.msra.mxu0 %v2848
        %3157 = vmatprep.subr.mxu0 %v2853
        %3158 = vmatpush1.msra.mxu0 %v2852
        %3159 = vmatprep.subr.mxu0 %v2857
        %3160 = vmatpush1.msra.mxu0 %v2856
        %3161 = vmatprep.subr.mxu0 %v2861
        %3162 = vmatpush1.msra.mxu0 %v2860
        %3163 = vmatprep.subr.mxu0 %v2865
        %3164 = vmatpush1.msra.mxu0 %v2864
        %3165 = vmatprep.subr.mxu0 %v2869
        %3166 = vmatpush1.msra.mxu0 %v2868
        %3167 = vmatprep.subr.mxu0 %v2873
        %3168 = vmatpush1.msra.mxu0 %v2872
        %3169 = vmatprep.subr.mxu0 %v2877
        %3170 = vmatpush1.msra.mxu0 %v2876
        %3171 = vmatprep.subr.mxu0 %v2881
        %3172 = vmatpush1.msra.mxu0 %v2880
        %3173 = vmatprep.subr.mxu0 %v2885
        %3174 = vmatpush1.msra.mxu0 %v2884
        %3175 = vmatprep.subr.mxu0 %v2889
        %3176 = vmatpush1.msra.mxu0 %v2888
        %3177 = vmatprep.subr.mxu0 %v2893
        %3178 = vmatpush1.msra.mxu0 %v2892
        %3179 = vmatprep.subr.mxu0 %v2897
        %3180 = vmatpush1.msra.mxu0 %v2896
        %3181 = vmatprep.subr.mxu0 %v2901
        %3182 = vmatpush1.msra.mxu0 %v2900
        %3183 = vmatprep.subr.mxu0 %v2905
        %3184 = vmatpush1.msra.mxu0 %v2904
        %3185 = vmatprep.subr.mxu0 %v2909
        %3186 = vmatpush1.msra.mxu0 %v2908
        %3187 = vmatprep.subr.mxu0 %v2913
        %3188 = vmatpush1.msra.mxu0 %v2912
        %3189 = vmatprep.subr.mxu0 %v2917
        %3190 = vmatpush1.msra.mxu0 %v2916
        %3191 = vmatprep.subr.mxu0 %v2921
        %3192 = vmatpush1.msra.mxu0 %v2920
        %3193 = vmatprep.subr.mxu0 %v2925
        %3194 = vmatpush1.msra.mxu0 %v2924
        %3195 = vmatprep.subr.mxu0 %v2929
        %3196 = vmatpush1.msra.mxu0 %v2928
        %3197 = vmatprep.subr.mxu0 %v2933
        %3198 = vmatpush1.msra.mxu0 %v2932
        %3199 = vmatprep.subr.mxu0 %v2937
        %3200 = vmatpush1.msra.mxu0 %v2936
        %3201 = vmatprep.subr.mxu0 %v2941
        %3202 = vmatpush1.msra.mxu0 %v2940
        %3203 = vmatprep.mubr.f32.mxu0 %v2969
        %3204 = vmatmul.mubr.f32.gmra.mrb[0].mxu0 %v2965
        %v3205 = vpop.f32.mrb[0].mxu0
        %v3206 = vadd.f32 %v3135, %v3205
        %v3207 = vpop.f32.mrb[0].mxu0
        %v3208 = vadd.f32 %v3137, %v3207
        %3209 = vdwg.mxu0
        %3210 = vmatprep.subr.mxu0 %v2563
        %3211 = vmatpush1.msra.mxu0 %v2562
        %3212 = vmatprep.subr.mxu0 %v2567
        %3213 = vmatpush1.msra.mxu0 %v2566
        %3214 = vmatprep.subr.mxu0 %v2571
        %3215 = vmatpush1.msra.mxu0 %v2570
        %3216 = vmatprep.subr.mxu0 %v2575
        %3217 = vmatpush1.msra.mxu0 %v2574
        %3218 = vmatprep.subr.mxu0 %v2579
        %3219 = vmatpush1.msra.mxu0 %v2578
        %3220 = vmatprep.subr.mxu0 %v2583
        %3221 = vmatpush1.msra.mxu0 %v2582
        %3222 = vmatprep.subr.mxu0 %v2587
        %3223 = vmatpush1.msra.mxu0 %v2586
        %3224 = vmatprep.subr.mxu0 %v2591
        %3225 = vmatpush1.msra.mxu0 %v2590
        %3226 = vmatprep.subr.mxu0 %v2595
        %3227 = vmatpush1.msra.mxu0 %v2594
        %3228 = vmatprep.subr.mxu0 %v2599
        %3229 = vmatpush1.msra.mxu0 %v2598
        %3230 = vmatprep.subr.mxu0 %v2603
        %3231 = vmatpush1.msra.mxu0 %v2602
        %3232 = vmatprep.subr.mxu0 %v2607
        %3233 = vmatpush1.msra.mxu0 %v2606
        %3234 = vmatprep.subr.mxu0 %v2611
        %3235 = vmatpush1.msra.mxu0 %v2610
        %3236 = vmatprep.subr.mxu0 %v2615
        %3237 = vmatpush1.msra.mxu0 %v2614
        %3238 = vmatprep.subr.mxu0 %v2619
        %3239 = vmatpush1.msra.mxu0 %v2618
        %3240 = vmatprep.subr.mxu0 %v2623
        %3241 = vmatpush1.msra.mxu0 %v2622
        %3242 = vmatprep.subr.mxu0 %v2627
        %3243 = vmatpush1.msra.mxu0 %v2626
        %3244 = vmatprep.subr.mxu0 %v2631
        %3245 = vmatpush1.msra.mxu0 %v2630
        %3246 = vmatprep.subr.mxu0 %v2635
        %3247 = vmatpush1.msra.mxu0 %v2634
        %3248 = vmatprep.subr.mxu0 %v2639
        %3249 = vmatpush1.msra.mxu0 %v2638
        %3250 = vmatprep.subr.mxu0 %v2643
        %3251 = vmatpush1.msra.mxu0 %v2642
        %3252 = vmatprep.subr.mxu0 %v2647
        %3253 = vmatpush1.msra.mxu0 %v2646
        %3254 = vmatprep.subr.mxu0 %v2651
        %3255 = vmatpush1.msra.mxu0 %v2650
        %3256 = vmatprep.subr.mxu0 %v2655
        %3257 = vmatpush1.msra.mxu0 %v2654
        %3258 = vmatprep.subr.mxu0 %v2659
        %3259 = vmatpush1.msra.mxu0 %v2658
        %3260 = vmatprep.subr.mxu0 %v2663
        %3261 = vmatpush1.msra.mxu0 %v2662
        %3262 = vmatprep.subr.mxu0 %v2667
        %3263 = vmatpush1.msra.mxu0 %v2666
        %3264 = vmatprep.subr.mxu0 %v2671
        %3265 = vmatpush1.msra.mxu0 %v2670
        %3266 = vmatprep.subr.mxu0 %v2675
        %3267 = vmatpush1.msra.mxu0 %v2674
        %3268 = vmatprep.subr.mxu0 %v2679
        %3269 = vmatpush1.msra.mxu0 %v2678
        %3270 = vmatprep.subr.mxu0 %v2683
        %3271 = vmatpush1.msra.mxu0 %v2682
        %3272 = vmatprep.subr.mxu0 %v2687
        %3273 = vmatpush1.msra.mxu0 %v2686
        %3274 = vmatprep.mubr.f32.mxu0 %v2953
        %3275 = vmatmul.mubr.f32.gmra.mrb[0].mxu0 %v2949
        %v3276 = vpop.f32.mrb[0].mxu0
        %v3277 = vadd.f32 %v2988, %v3276
        %v3278 = vpop.f32.mrb[0].mxu0
        %v3279 = vadd.f32 %v2992, %v3278
        %3280 = vdwg.mxu0
        %3281 = vmatprep.subr.mxu0 %v2691
        %3282 = vmatpush1.msra.mxu0 %v2690
        %3283 = vmatprep.subr.mxu0 %v2695
        %3284 = vmatpush1.msra.mxu0 %v2694
        %3285 = vmatprep.subr.mxu0 %v2699
        %3286 = vmatpush1.msra.mxu0 %v2698
        %3287 = vmatprep.subr.mxu0 %v2703
        %3288 = vmatpush1.msra.mxu0 %v2702
        %3289 = vmatprep.subr.mxu0 %v2707
        %3290 = vmatpush1.msra.mxu0 %v2706
        %3291 = vmatprep.subr.mxu0 %v2711
        %3292 = vmatpush1.msra.mxu0 %v2710
        %3293 = vmatprep.subr.mxu0 %v2715
        %3294 = vmatpush1.msra.mxu0 %v2714
        %3295 = vmatprep.subr.mxu0 %v2719
        %3296 = vmatpush1.msra.mxu0 %v2718
        %3297 = vmatprep.subr.mxu0 %v2723
        %3298 = vmatpush1.msra.mxu0 %v2722
        %3299 = vmatprep.subr.mxu0 %v2727
        %3300 = vmatpush1.msra.mxu0 %v2726
        %3301 = vmatprep.subr.mxu0 %v2731
        %3302 = vmatpush1.msra.mxu0 %v2730
        %3303 = vmatprep.subr.mxu0 %v2735
        %3304 = vmatpush1.msra.mxu0 %v2734
        %3305 = vmatprep.subr.mxu0 %v2739
        %3306 = vmatpush1.msra.mxu0 %v2738
        %3307 = vmatprep.subr.mxu0 %v2743
        %3308 = vmatpush1.msra.mxu0 %v2742
        %3309 = vmatprep.subr.mxu0 %v2747
        %3310 = vmatpush1.msra.mxu0 %v2746
        %3311 = vmatprep.subr.mxu0 %v2751
        %3312 = vmatpush1.msra.mxu0 %v2750
        %3313 = vmatprep.subr.mxu0 %v2755
        %3314 = vmatpush1.msra.mxu0 %v2754
        %3315 = vmatprep.subr.mxu0 %v2759
        %3316 = vmatpush1.msra.mxu0 %v2758
        %3317 = vmatprep.subr.mxu0 %v2763
        %3318 = vmatpush1.msra.mxu0 %v2762
        %3319 = vmatprep.subr.mxu0 %v2767
        %3320 = vmatpush1.msra.mxu0 %v2766
        %3321 = vmatprep.subr.mxu0 %v2771
        %3322 = vmatpush1.msra.mxu0 %v2770
        %3323 = vmatprep.subr.mxu0 %v2775
        %3324 = vmatpush1.msra.mxu0 %v2774
        %3325 = vmatprep.subr.mxu0 %v2779
        %3326 = vmatpush1.msra.mxu0 %v2778
        %3327 = vmatprep.subr.mxu0 %v2783
        %3328 = vmatpush1.msra.mxu0 %v2782
        %3329 = vmatprep.subr.mxu0 %v2787
        %3330 = vmatpush1.msra.mxu0 %v2786
        %3331 = vmatprep.subr.mxu0 %v2791
        %3332 = vmatpush1.msra.mxu0 %v2790
        %3333 = vmatprep.subr.mxu0 %v2795
        %3334 = vmatpush1.msra.mxu0 %v2794
        %3335 = vmatprep.subr.mxu0 %v2799
        %3336 = vmatpush1.msra.mxu0 %v2798
        %3337 = vmatprep.subr.mxu0 %v2803
        %3338 = vmatpush1.msra.mxu0 %v2802
        %3339 = vmatprep.subr.mxu0 %v2807
        %3340 = vmatpush1.msra.mxu0 %v2806
        %3341 = vmatprep.subr.mxu0 %v2811
        %3342 = vmatpush1.msra.mxu0 %v2810
        %3343 = vmatprep.subr.mxu0 %v2815
        %3344 = vmatpush1.msra.mxu0 %v2814
        %3345 = vmatprep.mubr.f32.mxu0 %v2961
        %3346 = vmatmul.mubr.f32.gmra.mrb[0].mxu0 %v2957
        %v3347 = vpop.f32.mrb[0].mxu0
        %v3348 = vadd.f32 %v3277, %v3347
        %v3349 = vpop.f32.mrb[0].mxu0
        %v3350 = vadd.f32 %v3279, %v3349
        %3351 = vdwg.mxu0
        %3352 = vmatprep.subr.mxu0 %v2819
        %3353 = vmatpush1.msra.mxu0 %v2818
        %3354 = vmatprep.subr.mxu0 %v2823
        %3355 = vmatpush1.msra.mxu0 %v2822
        %3356 = vmatprep.subr.mxu0 %v2827
        %3357 = vmatpush1.msra.mxu0 %v2826
        %3358 = vmatprep.subr.mxu0 %v2831
        %3359 = vmatpush1.msra.mxu0 %v2830
        %3360 = vmatprep.subr.mxu0 %v2835
        %3361 = vmatpush1.msra.mxu0 %v2834
        %3362 = vmatprep.subr.mxu0 %v2839
        %3363 = vmatpush1.msra.mxu0 %v2838
        %3364 = vmatprep.subr.mxu0 %v2843
        %3365 = vmatpush1.msra.mxu0 %v2842
        %3366 = vmatprep.subr.mxu0 %v2847
        %3367 = vmatpush1.msra.mxu0 %v2846
        %3368 = vmatprep.subr.mxu0 %v2851
        %3369 = vmatpush1.msra.mxu0 %v2850
        %3370 = vmatprep.subr.mxu0 %v2855
        %3371 = vmatpush1.msra.mxu0 %v2854
        %3372 = vmatprep.subr.mxu0 %v2859
        %3373 = vmatpush1.msra.mxu0 %v2858
        %3374 = vmatprep.subr.mxu0 %v2863
        %3375 = vmatpush1.msra.mxu0 %v2862
        %3376 = vmatprep.subr.mxu0 %v2867
        %3377 = vmatpush1.msra.mxu0 %v2866
        %3378 = vmatprep.subr.mxu0 %v2871
        %3379 = vmatpush1.msra.mxu0 %v2870
        %3380 = vmatprep.subr.mxu0 %v2875
        %3381 = vmatpush1.msra.mxu0 %v2874
        %3382 = vmatprep.subr.mxu0 %v2879
        %3383 = vmatpush1.msra.mxu0 %v2878
        %3384 = vmatprep.subr.mxu0 %v2883
        %3385 = vmatpush1.msra.mxu0 %v2882
        %3386 = vmatprep.subr.mxu0 %v2887
        %3387 = vmatpush1.msra.mxu0 %v2886
        %3388 = vmatprep.subr.mxu0 %v2891
        %3389 = vmatpush1.msra.mxu0 %v2890
        %3390 = vmatprep.subr.mxu0 %v2895
        %3391 = vmatpush1.msra.mxu0 %v2894
        %3392 = vmatprep.subr.mxu0 %v2899
        %3393 = vmatpush1.msra.mxu0 %v2898
        %3394 = vmatprep.subr.mxu0 %v2903
        %3395 = vmatpush1.msra.mxu0 %v2902
        %3396 = vmatprep.subr.mxu0 %v2907
        %3397 = vmatpush1.msra.mxu0 %v2906
        %3398 = vmatprep.subr.mxu0 %v2911
        %3399 = vmatpush1.msra.mxu0 %v2910
        %3400 = vmatprep.subr.mxu0 %v2915
        %3401 = vmatpush1.msra.mxu0 %v2914
        %3402 = vmatprep.subr.mxu0 %v2919
        %3403 = vmatpush1.msra.mxu0 %v2918
        %3404 = vmatprep.subr.mxu0 %v2923
        %3405 = vmatpush1.msra.mxu0 %v2922
        %3406 = vmatprep.subr.mxu0 %v2927
        %3407 = vmatpush1.msra.mxu0 %v2926
        %3408 = vmatprep.subr.mxu0 %v2931
        %3409 = vmatpush1.msra.mxu0 %v2930
        %3410 = vmatprep.subr.mxu0 %v2935
        %3411 = vmatpush1.msra.mxu0 %v2934
        %3412 = vmatprep.subr.mxu0 %v2939
        %3413 = vmatpush1.msra.mxu0 %v2938
        %3414 = vmatprep.subr.mxu0 %v2943
        %3415 = vmatpush1.msra.mxu0 %v2942
        %3416 = vmatprep.mubr.f32.mxu0 %v2969
        %3417 = vmatmul.mubr.f32.gmra.mrb[0].mxu0 %v2965
        %v3418 = vpop.f32.mrb[0].mxu0
        %v3419 = vadd.f32 %v3348, %v3418
        %v3420 = vpop.f32.mrb[0].mxu0
        %v3421 = vadd.f32 %v3350, %v3420
        %3422 = vdwg.mxu0
        %v3423 = vmax.f32 %v3206, 0.0
        %v3424 = vmax.f32 %v3208, 0.0
        %v3425 = vmax.f32 %v3419, 0.0
        %v3426 = vmax.f32 %v3421, 0.0
        %v3427 = vld [vmem:[#allocation7] sm:$0xff]
        %v3428 = vld [vmem:[#allocation7 + $0x8] sm:$0xff]
        %v3429 = vld [vmem:[#allocation7 + $0x10] sm:$0xff]
        %v3430 = vld [vmem:[#allocation7 + $0x18] sm:$0xff]
        %v3431 = vld [vmem:[#allocation7 + $0x20] sm:$0xff]
        %v3432 = vld [vmem:[#allocation7 + $0x28] sm:$0xff]
        %v3433 = vld [vmem:[#allocation7 + $0x30] sm:$0xff]
        %v3434 = vld [vmem:[#allocation7 + $0x38] sm:$0xff]
        %v3435 = vld [vmem:[#allocation7 + $0x40] sm:$0xff]
        %v3436 = vld [vmem:[#allocation7 + $0x48] sm:$0xff]
        %v3437 = vld [vmem:[#allocation7 + $0x50] sm:$0xff]
        %v3438 = vld [vmem:[#allocation7 + $0x58] sm:$0xff]
        %v3439 = vld [vmem:[#allocation7 + $0x60] sm:$0xff]
        %v3440 = vld [vmem:[#allocation7 + $0x68] sm:$0xff]
        %v3441 = vld [vmem:[#allocation7 + $0x70] sm:$0xff]
        %v3442 = vld [vmem:[#allocation7 + $0x78] sm:$0xff]
        %v3443 = vld [vmem:[#allocation7 + $0x80] sm:$0xff]
        %v3444 = vld [vmem:[#allocation7 + $0x88] sm:$0xff]
        %v3445 = vld [vmem:[#allocation7 + $0x90] sm:$0xff]
        %v3446 = vld [vmem:[#allocation7 + $0x98] sm:$0xff]
        %v3447 = vld [vmem:[#allocation7 + $0xa0] sm:$0xff]
        %v3448 = vld [vmem:[#allocation7 + $0xa8] sm:$0xff]
        %v3449 = vld [vmem:[#allocation7 + $0xb0] sm:$0xff]
        %v3450 = vld [vmem:[#allocation7 + $0xb8] sm:$0xff]
        %v3451 = vld [vmem:[#allocation7 + $0xc0] sm:$0xff]
        %v3452 = vld [vmem:[#allocation7 + $0xc8] sm:$0xff]
        %v3453 = vld [vmem:[#allocation7 + $0xd0] sm:$0xff]
        %v3454 = vld [vmem:[#allocation7 + $0xd8] sm:$0xff]
        %v3455 = vld [vmem:[#allocation7 + $0xe0] sm:$0xff]
        %v3456 = vld [vmem:[#allocation7 + $0xe8] sm:$0xff]
        %v3457 = vld [vmem:[#allocation7 + $0xf0] sm:$0xff]
        %v3458 = vld [vmem:[#allocation7 + $0xf8] sm:$0xff]
        %v3459 = vld [vmem:[#allocation7 + $0x100] sm:$0xff]
        %v3460 = vld [vmem:[#allocation7 + $0x108] sm:$0xff]
        %v3461 = vld [vmem:[#allocation7 + $0x110] sm:$0xff]
        %v3462 = vld [vmem:[#allocation7 + $0x118] sm:$0xff]
        %v3463 = vld [vmem:[#allocation7 + $0x120] sm:$0xff]
        %v3464 = vld [vmem:[#allocation7 + $0x128] sm:$0xff]
        %v3465 = vld [vmem:[#allocation7 + $0x130] sm:$0xff]
        %v3466 = vld [vmem:[#allocation7 + $0x138] sm:$0xff]
        %v3467 = vld [vmem:[#allocation7 + $0x140] sm:$0xff]
        %v3468 = vld [vmem:[#allocation7 + $0x148] sm:$0xff]
        %v3469 = vld [vmem:[#allocation7 + $0x150] sm:$0xff]
        %v3470 = vld [vmem:[#allocation7 + $0x158] sm:$0xff]
        %v3471 = vld [vmem:[#allocation7 + $0x160] sm:$0xff]
        %v3472 = vld [vmem:[#allocation7 + $0x168] sm:$0xff]
        %v3473 = vld [vmem:[#allocation7 + $0x170] sm:$0xff]
        %v3474 = vld [vmem:[#allocation7 + $0x178] sm:$0xff]
        %v3475 = vld [vmem:[#allocation7 + $0x180] sm:$0xff]
        %v3476 = vld [vmem:[#allocation7 + $0x188] sm:$0xff]
        %v3477 = vld [vmem:[#allocation7 + $0x190] sm:$0xff]
        %v3478 = vld [vmem:[#allocation7 + $0x198] sm:$0xff]
        %v3479 = vld [vmem:[#allocation7 + $0x1a0] sm:$0xff]
        %v3480 = vld [vmem:[#allocation7 + $0x1a8] sm:$0xff]
        %v3481 = vld [vmem:[#allocation7 + $0x1b0] sm:$0xff]
        %v3482 = vld [vmem:[#allocation7 + $0x1b8] sm:$0xff]
        %v3483 = vld [vmem:[#allocation7 + $0x1c0] sm:$0xff]
        %v3484 = vld [vmem:[#allocation7 + $0x1c8] sm:$0xff]
        %v3485 = vld [vmem:[#allocation7 + $0x1d0] sm:$0xff]
        %v3486 = vld [vmem:[#allocation7 + $0x1d8] sm:$0xff]
        %v3487 = vld [vmem:[#allocation7 + $0x1e0] sm:$0xff]
        %v3488 = vld [vmem:[#allocation7 + $0x1e8] sm:$0xff]
        %v3489 = vld [vmem:[#allocation7 + $0x1f0] sm:$0xff]
        %v3490 = vld [vmem:[#allocation7 + $0x1f8] sm:$0xff]
        %v3491 = vld [vmem:[#allocation7 + $0x200] sm:$0xff]
        %v3492 = vld [vmem:[#allocation7 + $0x208] sm:$0xff]
        %v3493 = vld [vmem:[#allocation7 + $0x210] sm:$0xff]
        %v3494 = vld [vmem:[#allocation7 + $0x218] sm:$0xff]
        %v3495 = vld [vmem:[#allocation7 + $0x220] sm:$0xff]
        %v3496 = vld [vmem:[#allocation7 + $0x228] sm:$0xff]
        %v3497 = vld [vmem:[#allocation7 + $0x230] sm:$0xff]
        %v3498 = vld [vmem:[#allocation7 + $0x238] sm:$0xff]
        %v3499 = vld [vmem:[#allocation7 + $0x240] sm:$0xff]
        %v3500 = vld [vmem:[#allocation7 + $0x248] sm:$0xff]
        %v3501 = vld [vmem:[#allocation7 + $0x250] sm:$0xff]
        %v3502 = vld [vmem:[#allocation7 + $0x258] sm:$0xff]
        %v3503 = vld [vmem:[#allocation7 + $0x260] sm:$0xff]
        %v3504 = vld [vmem:[#allocation7 + $0x268] sm:$0xff]
        %v3505 = vld [vmem:[#allocation7 + $0x270] sm:$0xff]
        %v3506 = vld [vmem:[#allocation7 + $0x278] sm:$0xff]
        %v3507 = vld [vmem:[#allocation7 + $0x280] sm:$0xff]
        %v3508 = vld [vmem:[#allocation7 + $0x288] sm:$0xff]
        %v3509 = vld [vmem:[#allocation7 + $0x290] sm:$0xff]
        %v3510 = vld [vmem:[#allocation7 + $0x298] sm:$0xff]
        %v3511 = vld [vmem:[#allocation7 + $0x2a0] sm:$0xff]
        %v3512 = vld [vmem:[#allocation7 + $0x2a8] sm:$0xff]
        %v3513 = vld [vmem:[#allocation7 + $0x2b0] sm:$0xff]
        %v3514 = vld [vmem:[#allocation7 + $0x2b8] sm:$0xff]
        %v3515 = vld [vmem:[#allocation7 + $0x2c0] sm:$0xff]
        %v3516 = vld [vmem:[#allocation7 + $0x2c8] sm:$0xff]
        %v3517 = vld [vmem:[#allocation7 + $0x2d0] sm:$0xff]
        %v3518 = vld [vmem:[#allocation7 + $0x2d8] sm:$0xff]
        %v3519 = vld [vmem:[#allocation7 + $0x2e0] sm:$0xff]
        %v3520 = vld [vmem:[#allocation7 + $0x2e8] sm:$0xff]
        %v3521 = vld [vmem:[#allocation7 + $0x2f0] sm:$0xff]
        %v3522 = vld [vmem:[#allocation7 + $0x2f8] sm:$0xff]
        %v3523 = vld [vmem:[#allocation7 + $0x300] sm:$0xff]
        %v3524 = vld [vmem:[#allocation7 + $0x308] sm:$0xff]
        %v3525 = vld [vmem:[#allocation7 + $0x310] sm:$0xff]
        %v3526 = vld [vmem:[#allocation7 + $0x318] sm:$0xff]
        %v3527 = vld [vmem:[#allocation7 + $0x320] sm:$0xff]
        %v3528 = vld [vmem:[#allocation7 + $0x328] sm:$0xff]
        %v3529 = vld [vmem:[#allocation7 + $0x330] sm:$0xff]
        %v3530 = vld [vmem:[#allocation7 + $0x338] sm:$0xff]
        %v3531 = vld [vmem:[#allocation7 + $0x340] sm:$0xff]
        %v3532 = vld [vmem:[#allocation7 + $0x348] sm:$0xff]
        %v3533 = vld [vmem:[#allocation7 + $0x350] sm:$0xff]
        %v3534 = vld [vmem:[#allocation7 + $0x358] sm:$0xff]
        %v3535 = vld [vmem:[#allocation7 + $0x360] sm:$0xff]
        %v3536 = vld [vmem:[#allocation7 + $0x368] sm:$0xff]
        %v3537 = vld [vmem:[#allocation7 + $0x370] sm:$0xff]
        %v3538 = vld [vmem:[#allocation7 + $0x378] sm:$0xff]
        %v3539 = vld [vmem:[#allocation7 + $0x380] sm:$0xff]
        %v3540 = vld [vmem:[#allocation7 + $0x388] sm:$0xff]
        %v3541 = vld [vmem:[#allocation7 + $0x390] sm:$0xff]
        %v3542 = vld [vmem:[#allocation7 + $0x398] sm:$0xff]
        %v3543 = vld [vmem:[#allocation7 + $0x3a0] sm:$0xff]
        %v3544 = vld [vmem:[#allocation7 + $0x3a8] sm:$0xff]
        %v3545 = vld [vmem:[#allocation7 + $0x3b0] sm:$0xff]
        %v3546 = vld [vmem:[#allocation7 + $0x3b8] sm:$0xff]
        %v3547 = vld [vmem:[#allocation7 + $0x3c0] sm:$0xff]
        %v3548 = vld [vmem:[#allocation7 + $0x3c8] sm:$0xff]
        %v3549 = vld [vmem:[#allocation7 + $0x3d0] sm:$0xff]
        %v3550 = vld [vmem:[#allocation7 + $0x3d8] sm:$0xff]
        %v3551 = vld [vmem:[#allocation7 + $0x3e0] sm:$0xff]
        %v3552 = vld [vmem:[#allocation7 + $0x3e8] sm:$0xff]
        %v3553 = vld [vmem:[#allocation7 + $0x3f0] sm:$0xff]
        %v3554 = vld [vmem:[#allocation7 + $0x3f8] sm:$0xff]
        %v3555 = vld [vmem:[%s10] sm:$0x3]
        %v3557 = vlaneseq
        %v3558 = vshrl.u32 %v3557, 7
        %v3559 = vsub.s32 0, %v3558
        %v3560 = vrot.slane %v3555, %v3559
        %v3561 = vlaneseq
        %v3562 = vshrl.u32 %v3561, 7
        %v3563 = vsub.s32 1, %v3562
        %v3564 = vrot.slane %v3555, %v3563
        %3567 = vmatprep.subr.mxu0 %v3428
        %3568 = vmatpush1.msra.mxu0 %v3427
        %3569 = vmatprep.subr.mxu0 %v3430
        %3570 = vmatpush1.msra.mxu0 %v3429
        %3571 = vmatprep.subr.mxu0 %v3432
        %3572 = vmatpush1.msra.mxu0 %v3431
        %3573 = vmatprep.subr.mxu0 %v3434
        %3574 = vmatpush1.msra.mxu0 %v3433
        %3575 = vmatprep.subr.mxu0 %v3436
        %3576 = vmatpush1.msra.mxu0 %v3435
        %3577 = vmatprep.subr.mxu0 %v3438
        %3578 = vmatpush1.msra.mxu0 %v3437
        %3579 = vmatprep.subr.mxu0 %v3440
        %3580 = vmatpush1.msra.mxu0 %v3439
        %3581 = vmatprep.subr.mxu0 %v3442
        %3582 = vmatpush1.msra.mxu0 %v3441
        %3583 = vmatprep.subr.mxu0 %v3444
        %3584 = vmatpush1.msra.mxu0 %v3443
        %3585 = vmatprep.subr.mxu0 %v3446
        %3586 = vmatpush1.msra.mxu0 %v3445
        %3587 = vmatprep.subr.mxu0 %v3448
        %3588 = vmatpush1.msra.mxu0 %v3447
        %3589 = vmatprep.subr.mxu0 %v3450
        %3590 = vmatpush1.msra.mxu0 %v3449
        %3591 = vmatprep.subr.mxu0 %v3452
        %3592 = vmatpush1.msra.mxu0 %v3451
        %3593 = vmatprep.subr.mxu0 %v3454
        %3594 = vmatpush1.msra.mxu0 %v3453
        %3595 = vmatprep.subr.mxu0 %v3456
        %3596 = vmatpush1.msra.mxu0 %v3455
        %3597 = vmatprep.subr.mxu0 %v3458
        %3598 = vmatpush1.msra.mxu0 %v3457
        %3599 = vmatprep.subr.mxu0 %v3460
        %3600 = vmatpush1.msra.mxu0 %v3459
        %3601 = vmatprep.subr.mxu0 %v3462
        %3602 = vmatpush1.msra.mxu0 %v3461
        %3603 = vmatprep.subr.mxu0 %v3464
        %3604 = vmatpush1.msra.mxu0 %v3463
        %3605 = vmatprep.subr.mxu0 %v3466
        %3606 = vmatpush1.msra.mxu0 %v3465
        %3607 = vmatprep.subr.mxu0 %v3468
        %3608 = vmatpush1.msra.mxu0 %v3467
        %3609 = vmatprep.subr.mxu0 %v3470
        %3610 = vmatpush1.msra.mxu0 %v3469
        %3611 = vmatprep.subr.mxu0 %v3472
        %3612 = vmatpush1.msra.mxu0 %v3471
        %3613 = vmatprep.subr.mxu0 %v3474
        %3614 = vmatpush1.msra.mxu0 %v3473
        %3615 = vmatprep.subr.mxu0 %v3476
        %3616 = vmatpush1.msra.mxu0 %v3475
        %3617 = vmatprep.subr.mxu0 %v3478
        %3618 = vmatpush1.msra.mxu0 %v3477
        %3619 = vmatprep.subr.mxu0 %v3480
        %3620 = vmatpush1.msra.mxu0 %v3479
        %3621 = vmatprep.subr.mxu0 %v3482
        %3622 = vmatpush1.msra.mxu0 %v3481
        %3623 = vmatprep.subr.mxu0 %v3484
        %3624 = vmatpush1.msra.mxu0 %v3483
        %3625 = vmatprep.subr.mxu0 %v3486
        %3626 = vmatpush1.msra.mxu0 %v3485
        %3627 = vmatprep.subr.mxu0 %v3488
        %3628 = vmatpush1.msra.mxu0 %v3487
        %3629 = vmatprep.subr.mxu0 %v3490
        %3630 = vmatpush1.msra.mxu0 %v3489
        %3631 = vmatprep.mubr.f32.mxu0 %v3424
        %3632 = vmatmul.mubr.f32.gmra.mrb[0].mxu0 %v3423
        %v3633 = vpop.f32.mrb[0].mxu0
        %v3634 = vadd.f32 %v3560, %v3633
        %v3635 = vpop.f32.mrb[0].mxu0
        %v3636 = vadd.f32 %v3564, %v3635
        %3637 = vdwg.mxu0
        %3638 = vmatprep.subr.mxu0 %v3492
        %3639 = vmatpush1.msra.mxu0 %v3491
        %3640 = vmatprep.subr.mxu0 %v3494
        %3641 = vmatpush1.msra.mxu0 %v3493
        %3642 = vmatprep.subr.mxu0 %v3496
        %3643 = vmatpush1.msra.mxu0 %v3495
        %3644 = vmatprep.subr.mxu0 %v3498
        %3645 = vmatpush1.msra.mxu0 %v3497
        %3646 = vmatprep.subr.mxu0 %v3500
        %3647 = vmatpush1.msra.mxu0 %v3499
        %3648 = vmatprep.subr.mxu0 %v3502
        %3649 = vmatpush1.msra.mxu0 %v3501
        %3650 = vmatprep.subr.mxu0 %v3504
        %3651 = vmatpush1.msra.mxu0 %v3503
        %3652 = vmatprep.subr.mxu0 %v3506
        %3653 = vmatpush1.msra.mxu0 %v3505
        %3654 = vmatprep.subr.mxu0 %v3508
        %3655 = vmatpush1.msra.mxu0 %v3507
        %3656 = vmatprep.subr.mxu0 %v3510
        %3657 = vmatpush1.msra.mxu0 %v3509
        %3658 = vmatprep.subr.mxu0 %v3512
        %3659 = vmatpush1.msra.mxu0 %v3511
        %3660 = vmatprep.subr.mxu0 %v3514
        %3661 = vmatpush1.msra.mxu0 %v3513
        %3662 = vmatprep.subr.mxu0 %v3516
        %3663 = vmatpush1.msra.mxu0 %v3515
        %3664 = vmatprep.subr.mxu0 %v3518
        %3665 = vmatpush1.msra.mxu0 %v3517
        %3666 = vmatprep.subr.mxu0 %v3520
        %3667 = vmatpush1.msra.mxu0 %v3519
        %3668 = vmatprep.subr.mxu0 %v3522
        %3669 = vmatpush1.msra.mxu0 %v3521
        %3670 = vmatprep.subr.mxu0 %v3524
        %3671 = vmatpush1.msra.mxu0 %v3523
        %3672 = vmatprep.subr.mxu0 %v3526
        %3673 = vmatpush1.msra.mxu0 %v3525
        %3674 = vmatprep.subr.mxu0 %v3528
        %3675 = vmatpush1.msra.mxu0 %v3527
        %3676 = vmatprep.subr.mxu0 %v3530
        %3677 = vmatpush1.msra.mxu0 %v3529
        %3678 = vmatprep.subr.mxu0 %v3532
        %3679 = vmatpush1.msra.mxu0 %v3531
        %3680 = vmatprep.subr.mxu0 %v3534
        %3681 = vmatpush1.msra.mxu0 %v3533
        %3682 = vmatprep.subr.mxu0 %v3536
        %3683 = vmatpush1.msra.mxu0 %v3535
        %3684 = vmatprep.subr.mxu0 %v3538
        %3685 = vmatpush1.msra.mxu0 %v3537
        %3686 = vmatprep.subr.mxu0 %v3540
        %3687 = vmatpush1.msra.mxu0 %v3539
        %3688 = vmatprep.subr.mxu0 %v3542
        %3689 = vmatpush1.msra.mxu0 %v3541
        %3690 = vmatprep.subr.mxu0 %v3544
        %3691 = vmatpush1.msra.mxu0 %v3543
        %3692 = vmatprep.subr.mxu0 %v3546
        %3693 = vmatpush1.msra.mxu0 %v3545
        %3694 = vmatprep.subr.mxu0 %v3548
        %3695 = vmatpush1.msra.mxu0 %v3547
        %3696 = vmatprep.subr.mxu0 %v3550
        %3697 = vmatpush1.msra.mxu0 %v3549
        %3698 = vmatprep.subr.mxu0 %v3552
        %3699 = vmatpush1.msra.mxu0 %v3551
        %3700 = vmatprep.subr.mxu0 %v3554
        %3701 = vmatpush1.msra.mxu0 %v3553
        %3702 = vmatprep.mubr.f32.mxu0 %v3426
        %3703 = vmatmul.mubr.f32.gmra.mrb[0].mxu0 %v3425
        %v3704 = vpop.f32.mrb[0].mxu0
        %v3705 = vadd.f32 %v3634, %v3704
        %v3706 = vpop.f32.mrb[0].mxu0
        %v3707 = vadd.f32 %v3636, %v3706
        %3708 = vdwg.mxu0
        %v3709 = vmax.f32 %v3705, 0.0
        %v3710 = vmax.f32 %v3707, 0.0
        %3712 = vrot.lane.b32.xlu0 %v3709, 112
        %v3713 = vpop.permute.xlu0 %3712
        %v3715 = vmax.f32 %v3709, %v3713
        %v3716 = vadd.f32 %v3709, %v3713
        %3717 = vrot.lane.b32.xlu0 %v3709, 96
        %v3718 = vpop.permute.xlu0 %3717
        %v3720 = vmax.f32 %v3715, %v3718
        %v3721 = vadd.f32 %v3716, %v3718
        %3722 = vrot.lane.b32.xlu0 %v3709, 80
        %v3723 = vpop.permute.xlu0 %3722
        %v3725 = vmax.f32 %v3720, %v3723
        %v3726 = vadd.f32 %v3721, %v3723
        %3727 = vrot.lane.b32.xlu0 %v3709, 64
        %v3728 = vpop.permute.xlu0 %3727
        %v3730 = vmax.f32 %v3725, %v3728
        %v3731 = vadd.f32 %v3726, %v3728
        %3732 = vrot.lane.b32.xlu0 %v3709, 48
        %v3733 = vpop.permute.xlu0 %3732
        %v3735 = vmax.f32 %v3730, %v3733
        %v3736 = vadd.f32 %v3731, %v3733
        %3737 = vrot.lane.b32.xlu0 %v3709, 32
        %v3738 = vpop.permute.xlu0 %3737
        %v3740 = vmax.f32 %v3735, %v3738
        %v3741 = vadd.f32 %v3736, %v3738
        %3742 = vrot.lane.b32.xlu0 %v3709, 16
        %v3743 = vpop.permute.xlu0 %3742
        %v3745 = vmax.f32 %v3740, %v3743
        %v3746 = vadd.f32 %v3741, %v3743
        %v3747 = vmax.f32 %v3745, %v3710
        %v3748 = vadd.f32 %v3746, %v3710
        %3750 = vrot.lane.b32.xlu0 %v3710, 112
        %v3751 = vpop.permute.xlu0 %3750
        %v3753 = vmax.f32 %v3747, %v3751
        %v3754 = vadd.f32 %v3748, %v3751
        %3755 = vrot.lane.b32.xlu0 %v3710, 96
        %v3756 = vpop.permute.xlu0 %3755
        %v3758 = vmax.f32 %v3753, %v3756
        %v3759 = vadd.f32 %v3754, %v3756
        %3760 = vrot.lane.b32.xlu0 %v3710, 80
        %v3761 = vpop.permute.xlu0 %3760
        %v3763 = vmax.f32 %v3758, %v3761
        %v3764 = vadd.f32 %v3759, %v3761
        %3765 = vrot.lane.b32.xlu0 %v3710, 64
        %v3766 = vpop.permute.xlu0 %3765
        %v3768 = vmax.f32 %v3763, %v3766
        %v3769 = vadd.f32 %v3764, %v3766
        %3770 = vrot.lane.b32.xlu0 %v3710, 48
        %v3771 = vpop.permute.xlu0 %3770
        %v3773 = vmax.f32 %v3768, %v3771
        %v3774 = vadd.f32 %v3769, %v3771
        %3775 = vrot.lane.b32.xlu0 %v3710, 32
        %v3776 = vpop.permute.xlu0 %3775
        %v3778 = vmax.f32 %v3773, %v3776
        %v3779 = vadd.f32 %v3774, %v3776
        %3780 = vrot.lane.b32.xlu0 %v3710, 16
        %v3781 = vpop.permute.xlu0 %3780
        %v3783 = vmax.f32 %v3778, %v3781
        %v3784 = vadd.f32 %v3779, %v3781
        %v3785 = vmul.f32 %v3784, 0.0625
        %v3786 = vld [vmem:[%s17] sm:$0xff]
        %v3787 = vld [vmem:[%s17 + $0x8] sm:$0xff]
        %v3788 = vld [vmem:[%s17 + $0x10] sm:$0xff]
        %v3789 = vld [vmem:[%s17 + $0x18] sm:$0xff]
        %v3790 = vld [vmem:[%s17 + $0x20] sm:$0xff]
        %v3791 = vld [vmem:[%s17 + $0x28] sm:$0xff]
        %v3792 = vld [vmem:[%s17 + $0x30] sm:$0xff]
        %v3793 = vld [vmem:[%s17 + $0x38] sm:$0xff]
        %v3794 = vld [vmem:[%s18] sm:$0x3]
        %v3796 = vsel %vm2185, %v3783, 0
        %3798 = vmatprep.subr.mxu0 %v3787
        %3799 = vmatpush1.msra.mxu0 %v3786
        %3800 = vmatprep.subr.mxu0 %v3789
        %3801 = vmatpush1.msra.mxu0 %v3788
        %3802 = vmatprep.subr.mxu0 0.0
        %3803 = vmatpush1.msra.mxu0 0.0
        %3804 = vmatprep.subr.mxu0 0.0
        %3805 = vmatpush1.msra.mxu0 0.0
        %3806 = vmatprep.subr.mxu0 0.0
        %3807 = vmatpush1.msra.mxu0 0.0
        %3808 = vmatprep.subr.mxu0 0.0
        %3809 = vmatpush1.msra.mxu0 0.0
        %3810 = vmatprep.subr.mxu0 0.0
        %3811 = vmatpush1.msra.mxu0 0.0
        %3812 = vmatprep.subr.mxu0 0.0
        %3813 = vmatpush1.msra.mxu0 0.0
        %3814 = vmatprep.subr.mxu0 0.0
        %3815 = vmatpush1.msra.mxu0 0.0
        %3816 = vmatprep.subr.mxu0 0.0
        %3817 = vmatpush1.msra.mxu0 0.0
        %3818 = vmatprep.subr.mxu0 0.0
        %3819 = vmatpush1.msra.mxu0 0.0
        %3820 = vmatprep.subr.mxu0 0.0
        %3821 = vmatpush1.msra.mxu0 0.0
        %3822 = vmatprep.subr.mxu0 0.0
        %3823 = vmatpush1.msra.mxu0 0.0
        %3824 = vmatprep.subr.mxu0 0.0
        %3825 = vmatpush1.msra.mxu0 0.0
        %3826 = vmatprep.subr.mxu0 0.0
        %3827 = vmatpush1.msra.mxu0 0.0
        %3828 = vmatprep.subr.mxu0 0.0
        %3829 = vmatpush1.msra.mxu0 0.0
        %3830 = vmatprep.subr.mxu0 0.0
        %3831 = vmatpush1.msra.mxu0 0.0
        %3832 = vmatprep.subr.mxu0 0.0
        %3833 = vmatpush1.msra.mxu0 0.0
        %3834 = vmatprep.subr.mxu0 0.0
        %3835 = vmatpush1.msra.mxu0 0.0
        %3836 = vmatprep.subr.mxu0 0.0
        %3837 = vmatpush1.msra.mxu0 0.0
        %3838 = vmatprep.subr.mxu0 0.0
        %3839 = vmatpush1.msra.mxu0 0.0
        %3840 = vmatprep.subr.mxu0 0.0
        %3841 = vmatpush1.msra.mxu0 0.0
        %3842 = vmatprep.subr.mxu0 0.0
        %3843 = vmatpush1.msra.mxu0 0.0
        %3844 = vmatprep.subr.mxu0 0.0
        %3845 = vmatpush1.msra.mxu0 0.0
        %3846 = vmatprep.subr.mxu0 0.0
        %3847 = vmatpush1.msra.mxu0 0.0
        %3848 = vmatprep.subr.mxu0 0.0
        %3849 = vmatpush1.msra.mxu0 0.0
        %3850 = vmatprep.subr.mxu0 0.0
        %3851 = vmatpush1.msra.mxu0 0.0
        %3852 = vmatprep.subr.mxu0 0.0
        %3853 = vmatpush1.msra.mxu0 0.0
        %3854 = vmatprep.subr.mxu0 0.0
        %3855 = vmatpush1.msra.mxu0 0.0
        %3856 = vmatprep.subr.mxu0 0.0
        %3857 = vmatpush1.msra.mxu0 0.0
        %3858 = vmatprep.subr.mxu0 0.0
        %3859 = vmatpush1.msra.mxu0 0.0
        %3860 = vmatprep.subr.mxu0 0.0
        %3861 = vmatpush1.msra.mxu0 0.0
        %3862 = vmatprep.mubr.f32.mxu0 0.0
        %3863 = vmatmul.mubr.f32.gmra.mrb[0].mxu0 %v3796
        %v3864 = vpop.f32.mrb[0].mxu0
        %v3865 = vadd.f32 0.0, %v3864
        %v3866 = vpop.f32.mrb[0].mxu0
        %v3867 = vadd.f32 0.0, %v3866
        %3868 = vdwg.mxu0
        %v3871 = vcombine.low %v3865, %v3867
        %v3873 = vunpack.c.l.s4 1966171168
        %v3874 = vunpack.c.0.s8 %v3873
        %v3875 = vlaneseq
        %v3876 = vshrl.u32 %v3875, 7
        %v3877 = vsub.s32 %v3874, %v3876
        %v3878 = vrot.slane %v3871, %v3877
        %v3880 = vunpack.c.l.s4 1966171168
        %v3881 = vunpack.c.0.s8 %v3880
        %v3882 = vlaneseq
        %v3883 = vshrl.u32 %v3882, 7
        %v3884 = vsub.s32 %v3881, %v3883
        %v3885 = vrot.slane %v3878, %v3884
        %v3887 = vadd.f32 %v3794, %v3885
        %v3889 = vsel %vm2185, %v3785, 0
        %3891 = vmatprep.subr.mxu0 %v3791
        %3892 = vmatpush1.msra.mxu0 %v3790
        %3893 = vmatprep.subr.mxu0 %v3793
        %3894 = vmatpush1.msra.mxu0 %v3792
        %3895 = vmatprep.subr.mxu0 0.0
        %3896 = vmatpush1.msra.mxu0 0.0
        %3897 = vmatprep.subr.mxu0 0.0
        %3898 = vmatpush1.msra.mxu0 0.0
        %3899 = vmatprep.subr.mxu0 0.0
        %3900 = vmatpush1.msra.mxu0 0.0
        %3901 = vmatprep.subr.mxu0 0.0
        %3902 = vmatpush1.msra.mxu0 0.0
        %3903 = vmatprep.subr.mxu0 0.0
        %3904 = vmatpush1.msra.mxu0 0.0
        %3905 = vmatprep.subr.mxu0 0.0
        %3906 = vmatpush1.msra.mxu0 0.0
        %3907 = vmatprep.subr.mxu0 0.0
        %3908 = vmatpush1.msra.mxu0 0.0
        %3909 = vmatprep.subr.mxu0 0.0
        %3910 = vmatpush1.msra.mxu0 0.0
        %3911 = vmatprep.subr.mxu0 0.0
        %3912 = vmatpush1.msra.mxu0 0.0
        %3913 = vmatprep.subr.mxu0 0.0
        %3914 = vmatpush1.msra.mxu0 0.0
        %3915 = vmatprep.subr.mxu0 0.0
        %3916 = vmatpush1.msra.mxu0 0.0
        %3917 = vmatprep.subr.mxu0 0.0
        %3918 = vmatpush1.msra.mxu0 0.0
        %3919 = vmatprep.subr.mxu0 0.0
        %3920 = vmatpush1.msra.mxu0 0.0
        %3921 = vmatprep.subr.mxu0 0.0
        %3922 = vmatpush1.msra.mxu0 0.0
        %3923 = vmatprep.subr.mxu0 0.0
        %3924 = vmatpush1.msra.mxu0 0.0
        %3925 = vmatprep.subr.mxu0 0.0
        %3926 = vmatpush1.msra.mxu0 0.0
        %3927 = vmatprep.subr.mxu0 0.0
        %3928 = vmatpush1.msra.mxu0 0.0
        %3929 = vmatprep.subr.mxu0 0.0
        %3930 = vmatpush1.msra.mxu0 0.0
        %3931 = vmatprep.subr.mxu0 0.0
        %3932 = vmatpush1.msra.mxu0 0.0
        %3933 = vmatprep.subr.mxu0 0.0
        %3934 = vmatpush1.msra.mxu0 0.0
        %3935 = vmatprep.subr.mxu0 0.0
        %3936 = vmatpush1.msra.mxu0 0.0
        %3937 = vmatprep.subr.mxu0 0.0
        %3938 = vmatpush1.msra.mxu0 0.0
        %3939 = vmatprep.subr.mxu0 0.0
        %3940 = vmatpush1.msra.mxu0 0.0
        %3941 = vmatprep.subr.mxu0 0.0
        %3942 = vmatpush1.msra.mxu0 0.0
        %3943 = vmatprep.subr.mxu0 0.0
        %3944 = vmatpush1.msra.mxu0 0.0
        %3945 = vmatprep.subr.mxu0 0.0
        %3946 = vmatpush1.msra.mxu0 0.0
        %3947 = vmatprep.subr.mxu0 0.0
        %3948 = vmatpush1.msra.mxu0 0.0
        %3949 = vmatprep.subr.mxu0 0.0
        %3950 = vmatpush1.msra.mxu0 0.0
        %3951 = vmatprep.subr.mxu0 0.0
        %3952 = vmatpush1.msra.mxu0 0.0
        %3953 = vmatprep.subr.mxu0 0.0
        %3954 = vmatpush1.msra.mxu0 0.0
        %3955 = vmatprep.mubr.f32.mxu0 0.0
        %3956 = vmatmul.mubr.f32.gmra.mrb[0].mxu0 %v3889
        %v3957 = vpop.f32.mrb[0].mxu0
        %v3958 = vadd.f32 0.0, %v3957
        %v3959 = vpop.f32.mrb[0].mxu0
        %v3960 = vadd.f32 0.0, %v3959
        %3961 = vdwg.mxu0
        %v3964 = vcombine.low %v3958, %v3960
        %v3966 = vunpack.c.l.s4 1966171168
        %v3967 = vunpack.c.0.s8 %v3966
        %v3968 = vlaneseq
        %v3969 = vshrl.u32 %v3968, 7
        %v3970 = vsub.s32 %v3967, %v3969
        %v3971 = vrot.slane %v3964, %v3970
        %v3973 = vunpack.c.l.s4 1966171168
        %v3974 = vunpack.c.0.s8 %v3973
        %v3975 = vlaneseq
        %v3976 = vshrl.u32 %v3975, 7
        %v3977 = vsub.s32 %v3974, %v3976
        %v3978 = vrot.slane %v3971, %v3977
        %v3980 = vadd.f32 %v3887, %v3978
        %v3981 = vmax.f32 %v3980, 0.0
        %v3982 = vld [vmem:[%s937] sm:$0x3]
        %v3983 = vld [vmem:[#allocation8] sm:$0xff]
        %v3984 = vld [vmem:[#allocation8 + $0x8] sm:$0xff]
        %v3985 = vld [vmem:[#allocation8 + $0x10] sm:$0xff]
        %v3986 = vld [vmem:[#allocation8 + $0x18] sm:$0xff]
        %v3987 = vld [vmem:[#allocation8 + $0x20] sm:$0xff]
        %v3988 = vld [vmem:[#allocation8 + $0x28] sm:$0xff]
        %v3989 = vld [vmem:[#allocation8 + $0x30] sm:$0xff]
        %v3990 = vld [vmem:[#allocation8 + $0x38] sm:$0xff]
        %v3991 = vld [vmem:[#allocation8 + $0x40] sm:$0xff]
        %v3992 = vld [vmem:[#allocation8 + $0x48] sm:$0xff]
        %v3993 = vld [vmem:[#allocation8 + $0x50] sm:$0xff]
        %v3994 = vld [vmem:[#allocation8 + $0x58] sm:$0xff]
        %v3995 = vld [vmem:[#allocation8 + $0x60] sm:$0xff]
        %v3996 = vld [vmem:[#allocation8 + $0x68] sm:$0xff]
        %v3997 = vld [vmem:[#allocation8 + $0x70] sm:$0xff]
        %v3998 = vld [vmem:[#allocation8 + $0x78] sm:$0xff]
        %v3999 = vld [vmem:[#allocation8 + $0x80] sm:$0xff]
        %v4000 = vld [vmem:[#allocation8 + $0x88] sm:$0xff]
        %v4001 = vld [vmem:[#allocation8 + $0x90] sm:$0xff]
        %v4002 = vld [vmem:[#allocation8 + $0x98] sm:$0xff]
        %v4003 = vld [vmem:[#allocation8 + $0xa0] sm:$0xff]
        %v4004 = vld [vmem:[#allocation8 + $0xa8] sm:$0xff]
        %v4005 = vld [vmem:[#allocation8 + $0xb0] sm:$0xff]
        %v4006 = vld [vmem:[#allocation8 + $0xb8] sm:$0xff]
        %v4007 = vld [vmem:[#allocation8 + $0xc0] sm:$0xff]
        %v4008 = vld [vmem:[#allocation8 + $0xc8] sm:$0xff]
        %v4009 = vld [vmem:[#allocation8 + $0xd0] sm:$0xff]
        %v4010 = vld [vmem:[#allocation8 + $0xd8] sm:$0xff]
        %v4011 = vld [vmem:[#allocation8 + $0xe0] sm:$0xff]
        %v4012 = vld [vmem:[#allocation8 + $0xe8] sm:$0xff]
        %v4013 = vld [vmem:[#allocation8 + $0xf0] sm:$0xff]
        %v4014 = vld [vmem:[#allocation8 + $0xf8] sm:$0xff]
        %v4015 = vld [vmem:[#allocation8 + $0x100] sm:$0xff]
        %v4016 = vld [vmem:[#allocation8 + $0x108] sm:$0xff]
        %v4017 = vld [vmem:[#allocation8 + $0x110] sm:$0xff]
        %v4018 = vld [vmem:[#allocation8 + $0x118] sm:$0xff]
        %v4019 = vld [vmem:[#allocation8 + $0x120] sm:$0xff]
        %v4020 = vld [vmem:[#allocation8 + $0x128] sm:$0xff]
        %v4021 = vld [vmem:[#allocation8 + $0x130] sm:$0xff]
        %v4022 = vld [vmem:[#allocation8 + $0x138] sm:$0xff]
        %v4023 = vld [vmem:[#allocation8 + $0x140] sm:$0xff]
        %v4024 = vld [vmem:[#allocation8 + $0x148] sm:$0xff]
        %v4025 = vld [vmem:[#allocation8 + $0x150] sm:$0xff]
        %v4026 = vld [vmem:[#allocation8 + $0x158] sm:$0xff]
        %v4027 = vld [vmem:[#allocation8 + $0x160] sm:$0xff]
        %v4028 = vld [vmem:[#allocation8 + $0x168] sm:$0xff]
        %v4029 = vld [vmem:[#allocation8 + $0x170] sm:$0xff]
        %v4030 = vld [vmem:[#allocation8 + $0x178] sm:$0xff]
        %v4031 = vld [vmem:[#allocation8 + $0x180] sm:$0xff]
        %v4032 = vld [vmem:[#allocation8 + $0x188] sm:$0xff]
        %v4033 = vld [vmem:[#allocation8 + $0x190] sm:$0xff]
        %v4034 = vld [vmem:[#allocation8 + $0x198] sm:$0xff]
        %v4035 = vld [vmem:[#allocation8 + $0x1a0] sm:$0xff]
        %v4036 = vld [vmem:[#allocation8 + $0x1a8] sm:$0xff]
        %v4037 = vld [vmem:[#allocation8 + $0x1b0] sm:$0xff]
        %v4038 = vld [vmem:[#allocation8 + $0x1b8] sm:$0xff]
        %v4039 = vld [vmem:[#allocation8 + $0x1c0] sm:$0xff]
        %v4040 = vld [vmem:[#allocation8 + $0x1c8] sm:$0xff]
        %v4041 = vld [vmem:[#allocation8 + $0x1d0] sm:$0xff]
        %v4042 = vld [vmem:[#allocation8 + $0x1d8] sm:$0xff]
        %v4043 = vld [vmem:[#allocation8 + $0x1e0] sm:$0xff]
        %v4044 = vld [vmem:[#allocation8 + $0x1e8] sm:$0xff]
        %v4045 = vld [vmem:[#allocation8 + $0x1f0] sm:$0xff]
        %v4046 = vld [vmem:[#allocation8 + $0x1f8] sm:$0xff]
        %v4047 = vld [vmem:[#allocation8 + $0x200] sm:$0xff]
        %v4048 = vld [vmem:[#allocation8 + $0x208] sm:$0xff]
        %v4049 = vld [vmem:[#allocation8 + $0x210] sm:$0xff]
        %v4050 = vld [vmem:[#allocation8 + $0x218] sm:$0xff]
        %v4051 = vld [vmem:[#allocation8 + $0x220] sm:$0xff]
        %v4052 = vld [vmem:[#allocation8 + $0x228] sm:$0xff]
        %v4053 = vld [vmem:[#allocation8 + $0x230] sm:$0xff]
        %v4054 = vld [vmem:[#allocation8 + $0x238] sm:$0xff]
        %v4055 = vld [vmem:[#allocation8 + $0x240] sm:$0xff]
        %v4056 = vld [vmem:[#allocation8 + $0x248] sm:$0xff]
        %v4057 = vld [vmem:[#allocation8 + $0x250] sm:$0xff]
        %v4058 = vld [vmem:[#allocation8 + $0x258] sm:$0xff]
        %v4059 = vld [vmem:[#allocation8 + $0x260] sm:$0xff]
        %v4060 = vld [vmem:[#allocation8 + $0x268] sm:$0xff]
        %v4061 = vld [vmem:[#allocation8 + $0x270] sm:$0xff]
        %v4062 = vld [vmem:[#allocation8 + $0x278] sm:$0xff]
        %v4063 = vld [vmem:[#allocation8 + $0x280] sm:$0xff]
        %v4064 = vld [vmem:[#allocation8 + $0x288] sm:$0xff]
        %v4065 = vld [vmem:[#allocation8 + $0x290] sm:$0xff]
        %v4066 = vld [vmem:[#allocation8 + $0x298] sm:$0xff]
        %v4067 = vld [vmem:[#allocation8 + $0x2a0] sm:$0xff]
        %v4068 = vld [vmem:[#allocation8 + $0x2a8] sm:$0xff]
        %v4069 = vld [vmem:[#allocation8 + $0x2b0] sm:$0xff]
        %v4070 = vld [vmem:[#allocation8 + $0x2b8] sm:$0xff]
        %v4071 = vld [vmem:[#allocation8 + $0x2c0] sm:$0xff]
        %v4072 = vld [vmem:[#allocation8 + $0x2c8] sm:$0xff]
        %v4073 = vld [vmem:[#allocation8 + $0x2d0] sm:$0xff]
        %v4074 = vld [vmem:[#allocation8 + $0x2d8] sm:$0xff]
        %v4075 = vld [vmem:[#allocation8 + $0x2e0] sm:$0xff]
        %v4076 = vld [vmem:[#allocation8 + $0x2e8] sm:$0xff]
        %v4077 = vld [vmem:[#allocation8 + $0x2f0] sm:$0xff]
        %v4078 = vld [vmem:[#allocation8 + $0x2f8] sm:$0xff]
        %v4079 = vld [vmem:[#allocation8 + $0x300] sm:$0xff]
        %v4080 = vld [vmem:[#allocation8 + $0x308] sm:$0xff]
        %v4081 = vld [vmem:[#allocation8 + $0x310] sm:$0xff]
        %v4082 = vld [vmem:[#allocation8 + $0x318] sm:$0xff]
        %v4083 = vld [vmem:[#allocation8 + $0x320] sm:$0xff]
        %v4084 = vld [vmem:[#allocation8 + $0x328] sm:$0xff]
        %v4085 = vld [vmem:[#allocation8 + $0x330] sm:$0xff]
        %v4086 = vld [vmem:[#allocation8 + $0x338] sm:$0xff]
        %v4087 = vld [vmem:[#allocation8 + $0x340] sm:$0xff]
        %v4088 = vld [vmem:[#allocation8 + $0x348] sm:$0xff]
        %v4089 = vld [vmem:[#allocation8 + $0x350] sm:$0xff]
        %v4090 = vld [vmem:[#allocation8 + $0x358] sm:$0xff]
        %v4091 = vld [vmem:[#allocation8 + $0x360] sm:$0xff]
        %v4092 = vld [vmem:[#allocation8 + $0x368] sm:$0xff]
        %v4093 = vld [vmem:[#allocation8 + $0x370] sm:$0xff]
        %v4094 = vld [vmem:[#allocation8 + $0x378] sm:$0xff]
        %v4095 = vld [vmem:[#allocation8 + $0x380] sm:$0xff]
        %v4096 = vld [vmem:[#allocation8 + $0x388] sm:$0xff]
        %v4097 = vld [vmem:[#allocation8 + $0x390] sm:$0xff]
        %v4098 = vld [vmem:[#allocation8 + $0x398] sm:$0xff]
        %v4099 = vld [vmem:[#allocation8 + $0x3a0] sm:$0xff]
        %v4100 = vld [vmem:[#allocation8 + $0x3a8] sm:$0xff]
        %v4101 = vld [vmem:[#allocation8 + $0x3b0] sm:$0xff]
        %v4102 = vld [vmem:[#allocation8 + $0x3b8] sm:$0xff]
        %v4103 = vld [vmem:[#allocation8 + $0x3c0] sm:$0xff]
        %v4104 = vld [vmem:[#allocation8 + $0x3c8] sm:$0xff]
        %v4105 = vld [vmem:[#allocation8 + $0x3d0] sm:$0xff]
        %v4106 = vld [vmem:[#allocation8 + $0x3d8] sm:$0xff]
        %v4107 = vld [vmem:[#allocation8 + $0x3e0] sm:$0xff]
        %v4108 = vld [vmem:[#allocation8 + $0x3e8] sm:$0xff]
        %v4109 = vld [vmem:[#allocation8 + $0x3f0] sm:$0xff]
        %v4110 = vld [vmem:[#allocation8 + $0x3f8] sm:$0xff]
        %v4111 = vld [vmem:[%s12] sm:$0xf]
        %v4113 = vlaneseq
        %v4114 = vshrl.u32 %v4113, 7
        %v4115 = vsub.s32 0, %v4114
        %v4116 = vrot.slane %v3982, %v4115
        %v4117 = vlaneseq
        %v4118 = vshrl.u32 %v4117, 7
        %v4119 = vsub.s32 1, %v4118
        %v4120 = vrot.slane %v3982, %v4119
        %v4124 = vlaneseq
        %v4125 = vshrl.u32 %v4124, 7
        %v4126 = vsub.s32 0, %v4125
        %v4127 = vrot.slane %v4111, %v4126
        %v4128 = vlaneseq
        %v4129 = vshrl.u32 %v4128, 7
        %v4130 = vsub.s32 1, %v4129
        %v4131 = vrot.slane %v4111, %v4130
        %v4132 = vlaneseq
        %v4133 = vshrl.u32 %v4132, 7
        %v4134 = vsub.s32 2, %v4133
        %v4135 = vrot.slane %v4111, %v4134
        %v4136 = vlaneseq
        %v4137 = vshrl.u32 %v4136, 7
        %v4138 = vsub.s32 3, %v4137
        %v4139 = vrot.slane %v4111, %v4138
        %4144 = vmatprep.subr.mxu0 %v3984
        %4145 = vmatpush1.msra.mxu0 %v3983
        %4146 = vmatprep.subr.mxu0 %v3988
        %4147 = vmatpush1.msra.mxu0 %v3987
        %4148 = vmatprep.subr.mxu0 %v3992
        %4149 = vmatpush1.msra.mxu0 %v3991
        %4150 = vmatprep.subr.mxu0 %v3996
        %4151 = vmatpush1.msra.mxu0 %v3995
        %4152 = vmatprep.subr.mxu0 %v4000
        %4153 = vmatpush1.msra.mxu0 %v3999
        %4154 = vmatprep.subr.mxu0 %v4004
        %4155 = vmatpush1.msra.mxu0 %v4003
        %4156 = vmatprep.subr.mxu0 %v4008
        %4157 = vmatpush1.msra.mxu0 %v4007
        %4158 = vmatprep.subr.mxu0 %v4012
        %4159 = vmatpush1.msra.mxu0 %v4011
        %4160 = vmatprep.subr.mxu0 %v4016
        %4161 = vmatpush1.msra.mxu0 %v4015
        %4162 = vmatprep.subr.mxu0 %v4020
        %4163 = vmatpush1.msra.mxu0 %v4019
        %4164 = vmatprep.subr.mxu0 %v4024
        %4165 = vmatpush1.msra.mxu0 %v4023
        %4166 = vmatprep.subr.mxu0 %v4028
        %4167 = vmatpush1.msra.mxu0 %v4027
        %4168 = vmatprep.subr.mxu0 %v4032
        %4169 = vmatpush1.msra.mxu0 %v4031
        %4170 = vmatprep.subr.mxu0 %v4036
        %4171 = vmatpush1.msra.mxu0 %v4035
        %4172 = vmatprep.subr.mxu0 %v4040
        %4173 = vmatpush1.msra.mxu0 %v4039
        %4174 = vmatprep.subr.mxu0 %v4044
        %4175 = vmatpush1.msra.mxu0 %v4043
        %4176 = vmatprep.subr.mxu0 %v4048
        %4177 = vmatpush1.msra.mxu0 %v4047
        %4178 = vmatprep.subr.mxu0 %v4052
        %4179 = vmatpush1.msra.mxu0 %v4051
        %4180 = vmatprep.subr.mxu0 %v4056
        %4181 = vmatpush1.msra.mxu0 %v4055
        %4182 = vmatprep.subr.mxu0 %v4060
        %4183 = vmatpush1.msra.mxu0 %v4059
        %4184 = vmatprep.subr.mxu0 %v4064
        %4185 = vmatpush1.msra.mxu0 %v4063
        %4186 = vmatprep.subr.mxu0 %v4068
        %4187 = vmatpush1.msra.mxu0 %v4067
        %4188 = vmatprep.subr.mxu0 %v4072
        %4189 = vmatpush1.msra.mxu0 %v4071
        %4190 = vmatprep.subr.mxu0 %v4076
        %4191 = vmatpush1.msra.mxu0 %v4075
        %4192 = vmatprep.subr.mxu0 %v4080
        %4193 = vmatpush1.msra.mxu0 %v4079
        %4194 = vmatprep.subr.mxu0 %v4084
        %4195 = vmatpush1.msra.mxu0 %v4083
        %4196 = vmatprep.subr.mxu0 %v4088
        %4197 = vmatpush1.msra.mxu0 %v4087
        %4198 = vmatprep.subr.mxu0 %v4092
        %4199 = vmatpush1.msra.mxu0 %v4091
        %4200 = vmatprep.subr.mxu0 %v4096
        %4201 = vmatpush1.msra.mxu0 %v4095
        %4202 = vmatprep.subr.mxu0 %v4100
        %4203 = vmatpush1.msra.mxu0 %v4099
        %4204 = vmatprep.subr.mxu0 %v4104
        %4205 = vmatpush1.msra.mxu0 %v4103
        %4206 = vmatprep.subr.mxu0 %v4108
        %4207 = vmatpush1.msra.mxu0 %v4107
        %4208 = vmatprep.mubr.f32.mxu0 %v4120
        %4209 = vmatmul.mubr.f32.gmra.mrb[0].mxu0 %v4116
        %v4210 = vpop.f32.mrb[0].mxu0
        %v4211 = vadd.f32 %v4127, %v4210
        %v4212 = vpop.f32.mrb[0].mxu0
        %v4213 = vadd.f32 %v4131, %v4212
        %4214 = vdwg.mxu0
        %4215 = vmatprep.subr.mxu0 %v3986
        %4216 = vmatpush1.msra.mxu0 %v3985
        %4217 = vmatprep.subr.mxu0 %v3990
        %4218 = vmatpush1.msra.mxu0 %v3989
        %4219 = vmatprep.subr.mxu0 %v3994
        %4220 = vmatpush1.msra.mxu0 %v3993
        %4221 = vmatprep.subr.mxu0 %v3998
        %4222 = vmatpush1.msra.mxu0 %v3997
        %4223 = vmatprep.subr.mxu0 %v4002
        %4224 = vmatpush1.msra.mxu0 %v4001
        %4225 = vmatprep.subr.mxu0 %v4006
        %4226 = vmatpush1.msra.mxu0 %v4005
        %4227 = vmatprep.subr.mxu0 %v4010
        %4228 = vmatpush1.msra.mxu0 %v4009
        %4229 = vmatprep.subr.mxu0 %v4014
        %4230 = vmatpush1.msra.mxu0 %v4013
        %4231 = vmatprep.subr.mxu0 %v4018
        %4232 = vmatpush1.msra.mxu0 %v4017
        %4233 = vmatprep.subr.mxu0 %v4022
        %4234 = vmatpush1.msra.mxu0 %v4021
        %4235 = vmatprep.subr.mxu0 %v4026
        %4236 = vmatpush1.msra.mxu0 %v4025
        %4237 = vmatprep.subr.mxu0 %v4030
        %4238 = vmatpush1.msra.mxu0 %v4029
        %4239 = vmatprep.subr.mxu0 %v4034
        %4240 = vmatpush1.msra.mxu0 %v4033
        %4241 = vmatprep.subr.mxu0 %v4038
        %4242 = vmatpush1.msra.mxu0 %v4037
        %4243 = vmatprep.subr.mxu0 %v4042
        %4244 = vmatpush1.msra.mxu0 %v4041
        %4245 = vmatprep.subr.mxu0 %v4046
        %4246 = vmatpush1.msra.mxu0 %v4045
        %4247 = vmatprep.subr.mxu0 %v4050
        %4248 = vmatpush1.msra.mxu0 %v4049
        %4249 = vmatprep.subr.mxu0 %v4054
        %4250 = vmatpush1.msra.mxu0 %v4053
        %4251 = vmatprep.subr.mxu0 %v4058
        %4252 = vmatpush1.msra.mxu0 %v4057
        %4253 = vmatprep.subr.mxu0 %v4062
        %4254 = vmatpush1.msra.mxu0 %v4061
        %4255 = vmatprep.subr.mxu0 %v4066
        %4256 = vmatpush1.msra.mxu0 %v4065
        %4257 = vmatprep.subr.mxu0 %v4070
        %4258 = vmatpush1.msra.mxu0 %v4069
        %4259 = vmatprep.subr.mxu0 %v4074
        %4260 = vmatpush1.msra.mxu0 %v4073
        %4261 = vmatprep.subr.mxu0 %v4078
        %4262 = vmatpush1.msra.mxu0 %v4077
        %4263 = vmatprep.subr.mxu0 %v4082
        %4264 = vmatpush1.msra.mxu0 %v4081
        %4265 = vmatprep.subr.mxu0 %v4086
        %4266 = vmatpush1.msra.mxu0 %v4085
        %4267 = vmatprep.subr.mxu0 %v4090
        %4268 = vmatpush1.msra.mxu0 %v4089
        %4269 = vmatprep.subr.mxu0 %v4094
        %4270 = vmatpush1.msra.mxu0 %v4093
        %4271 = vmatprep.subr.mxu0 %v4098
        %4272 = vmatpush1.msra.mxu0 %v4097
        %4273 = vmatprep.subr.mxu0 %v4102
        %4274 = vmatpush1.msra.mxu0 %v4101
        %4275 = vmatprep.subr.mxu0 %v4106
        %4276 = vmatpush1.msra.mxu0 %v4105
        %4277 = vmatprep.subr.mxu0 %v4110
        %4278 = vmatpush1.msra.mxu0 %v4109
        %4279 = vmatprep.mubr.f32.mxu0 %v4120
        %4280 = vmatmul.mubr.f32.gmra.mrb[0].mxu0 %v4116
        %v4281 = vpop.f32.mrb[0].mxu0
        %v4282 = vadd.f32 %v4135, %v4281
        %v4283 = vpop.f32.mrb[0].mxu0
        %v4284 = vadd.f32 %v4139, %v4283
        %4285 = vdwg.mxu0
        %v4286 = vmax.f32 %v4211, 0.0
        %v4287 = vmax.f32 %v4213, 0.0
        %v4288 = vmax.f32 %v4282, 0.0
        %v4289 = vmax.f32 %v4284, 0.0
        %v4290 = vld [vmem:[#allocation10] sm:$0xff]
        %v4291 = vld [vmem:[#allocation10 + $0x8] sm:$0xff]
        %v4292 = vld [vmem:[#allocation10 + $0x10] sm:$0xff]
        %v4293 = vld [vmem:[#allocation10 + $0x18] sm:$0xff]
        %v4294 = vld [vmem:[#allocation10 + $0x20] sm:$0xff]
        %v4295 = vld [vmem:[#allocation10 + $0x28] sm:$0xff]
        %v4296 = vld [vmem:[#allocation10 + $0x30] sm:$0xff]
        %v4297 = vld [vmem:[#allocation10 + $0x38] sm:$0xff]
        %v4298 = vld [vmem:[#allocation10 + $0x40] sm:$0xff]
        %v4299 = vld [vmem:[#allocation10 + $0x48] sm:$0xff]
        %v4300 = vld [vmem:[#allocation10 + $0x50] sm:$0xff]
        %v4301 = vld [vmem:[#allocation10 + $0x58] sm:$0xff]
        %v4302 = vld [vmem:[#allocation10 + $0x60] sm:$0xff]
        %v4303 = vld [vmem:[#allocation10 + $0x68] sm:$0xff]
        %v4304 = vld [vmem:[#allocation10 + $0x70] sm:$0xff]
        %v4305 = vld [vmem:[#allocation10 + $0x78] sm:$0xff]
        %v4306 = vld [vmem:[#allocation10 + $0x80] sm:$0xff]
        %v4307 = vld [vmem:[#allocation10 + $0x88] sm:$0xff]
        %v4308 = vld [vmem:[#allocation10 + $0x90] sm:$0xff]
        %v4309 = vld [vmem:[#allocation10 + $0x98] sm:$0xff]
        %v4310 = vld [vmem:[#allocation10 + $0xa0] sm:$0xff]
        %v4311 = vld [vmem:[#allocation10 + $0xa8] sm:$0xff]
        %v4312 = vld [vmem:[#allocation10 + $0xb0] sm:$0xff]
        %v4313 = vld [vmem:[#allocation10 + $0xb8] sm:$0xff]
        %v4314 = vld [vmem:[#allocation10 + $0xc0] sm:$0xff]
        %v4315 = vld [vmem:[#allocation10 + $0xc8] sm:$0xff]
        %v4316 = vld [vmem:[#allocation10 + $0xd0] sm:$0xff]
        %v4317 = vld [vmem:[#allocation10 + $0xd8] sm:$0xff]
        %v4318 = vld [vmem:[#allocation10 + $0xe0] sm:$0xff]
        %v4319 = vld [vmem:[#allocation10 + $0xe8] sm:$0xff]
        %v4320 = vld [vmem:[#allocation10 + $0xf0] sm:$0xff]
        %v4321 = vld [vmem:[#allocation10 + $0xf8] sm:$0xff]
        %v4322 = vld [vmem:[#allocation10 + $0x100] sm:$0xff]
        %v4323 = vld [vmem:[#allocation10 + $0x108] sm:$0xff]
        %v4324 = vld [vmem:[#allocation10 + $0x110] sm:$0xff]
        %v4325 = vld [vmem:[#allocation10 + $0x118] sm:$0xff]
        %v4326 = vld [vmem:[#allocation10 + $0x120] sm:$0xff]
        %v4327 = vld [vmem:[#allocation10 + $0x128] sm:$0xff]
        %v4328 = vld [vmem:[#allocation10 + $0x130] sm:$0xff]
        %v4329 = vld [vmem:[#allocation10 + $0x138] sm:$0xff]
        %v4330 = vld [vmem:[#allocation10 + $0x140] sm:$0xff]
        %v4331 = vld [vmem:[#allocation10 + $0x148] sm:$0xff]
        %v4332 = vld [vmem:[#allocation10 + $0x150] sm:$0xff]
        %v4333 = vld [vmem:[#allocation10 + $0x158] sm:$0xff]
        %v4334 = vld [vmem:[#allocation10 + $0x160] sm:$0xff]
        %v4335 = vld [vmem:[#allocation10 + $0x168] sm:$0xff]
        %v4336 = vld [vmem:[#allocation10 + $0x170] sm:$0xff]
        %v4337 = vld [vmem:[#allocation10 + $0x178] sm:$0xff]
        %v4338 = vld [vmem:[#allocation10 + $0x180] sm:$0xff]
        %v4339 = vld [vmem:[#allocation10 + $0x188] sm:$0xff]
        %v4340 = vld [vmem:[#allocation10 + $0x190] sm:$0xff]
        %v4341 = vld [vmem:[#allocation10 + $0x198] sm:$0xff]
        %v4342 = vld [vmem:[#allocation10 + $0x1a0] sm:$0xff]
        %v4343 = vld [vmem:[#allocation10 + $0x1a8] sm:$0xff]
        %v4344 = vld [vmem:[#allocation10 + $0x1b0] sm:$0xff]
        %v4345 = vld [vmem:[#allocation10 + $0x1b8] sm:$0xff]
        %v4346 = vld [vmem:[#allocation10 + $0x1c0] sm:$0xff]
        %v4347 = vld [vmem:[#allocation10 + $0x1c8] sm:$0xff]
        %v4348 = vld [vmem:[#allocation10 + $0x1d0] sm:$0xff]
        %v4349 = vld [vmem:[#allocation10 + $0x1d8] sm:$0xff]
        %v4350 = vld [vmem:[#allocation10 + $0x1e0] sm:$0xff]
        %v4351 = vld [vmem:[#allocation10 + $0x1e8] sm:$0xff]
        %v4352 = vld [vmem:[#allocation10 + $0x1f0] sm:$0xff]
        %v4353 = vld [vmem:[#allocation10 + $0x1f8] sm:$0xff]
        %v4354 = vld [vmem:[#allocation10 + $0x200] sm:$0xff]
        %v4355 = vld [vmem:[#allocation10 + $0x208] sm:$0xff]
        %v4356 = vld [vmem:[#allocation10 + $0x210] sm:$0xff]
        %v4357 = vld [vmem:[#allocation10 + $0x218] sm:$0xff]
        %v4358 = vld [vmem:[#allocation10 + $0x220] sm:$0xff]
        %v4359 = vld [vmem:[#allocation10 + $0x228] sm:$0xff]
        %v4360 = vld [vmem:[#allocation10 + $0x230] sm:$0xff]
        %v4361 = vld [vmem:[#allocation10 + $0x238] sm:$0xff]
        %v4362 = vld [vmem:[#allocation10 + $0x240] sm:$0xff]
        %v4363 = vld [vmem:[#allocation10 + $0x248] sm:$0xff]
        %v4364 = vld [vmem:[#allocation10 + $0x250] sm:$0xff]
        %v4365 = vld [vmem:[#allocation10 + $0x258] sm:$0xff]
        %v4366 = vld [vmem:[#allocation10 + $0x260] sm:$0xff]
        %v4367 = vld [vmem:[#allocation10 + $0x268] sm:$0xff]
        %v4368 = vld [vmem:[#allocation10 + $0x270] sm:$0xff]
        %v4369 = vld [vmem:[#allocation10 + $0x278] sm:$0xff]
        %v4370 = vld [vmem:[#allocation10 + $0x280] sm:$0xff]
        %v4371 = vld [vmem:[#allocation10 + $0x288] sm:$0xff]
        %v4372 = vld [vmem:[#allocation10 + $0x290] sm:$0xff]
        %v4373 = vld [vmem:[#allocation10 + $0x298] sm:$0xff]
        %v4374 = vld [vmem:[#allocation10 + $0x2a0] sm:$0xff]
        %v4375 = vld [vmem:[#allocation10 + $0x2a8] sm:$0xff]
        %v4376 = vld [vmem:[#allocation10 + $0x2b0] sm:$0xff]
        %v4377 = vld [vmem:[#allocation10 + $0x2b8] sm:$0xff]
        %v4378 = vld [vmem:[#allocation10 + $0x2c0] sm:$0xff]
        %v4379 = vld [vmem:[#allocation10 + $0x2c8] sm:$0xff]
        %v4380 = vld [vmem:[#allocation10 + $0x2d0] sm:$0xff]
        %v4381 = vld [vmem:[#allocation10 + $0x2d8] sm:$0xff]
        %v4382 = vld [vmem:[#allocation10 + $0x2e0] sm:$0xff]
        %v4383 = vld [vmem:[#allocation10 + $0x2e8] sm:$0xff]
        %v4384 = vld [vmem:[#allocation10 + $0x2f0] sm:$0xff]
        %v4385 = vld [vmem:[#allocation10 + $0x2f8] sm:$0xff]
        %v4386 = vld [vmem:[#allocation10 + $0x300] sm:$0xff]
        %v4387 = vld [vmem:[#allocation10 + $0x308] sm:$0xff]
        %v4388 = vld [vmem:[#allocation10 + $0x310] sm:$0xff]
        %v4389 = vld [vmem:[#allocation10 + $0x318] sm:$0xff]
        %v4390 = vld [vmem:[#allocation10 + $0x320] sm:$0xff]
        %v4391 = vld [vmem:[#allocation10 + $0x328] sm:$0xff]
        %v4392 = vld [vmem:[#allocation10 + $0x330] sm:$0xff]
        %v4393 = vld [vmem:[#allocation10 + $0x338] sm:$0xff]
        %v4394 = vld [vmem:[#allocation10 + $0x340] sm:$0xff]
        %v4395 = vld [vmem:[#allocation10 + $0x348] sm:$0xff]
        %v4396 = vld [vmem:[#allocation10 + $0x350] sm:$0xff]
        %v4397 = vld [vmem:[#allocation10 + $0x358] sm:$0xff]
        %v4398 = vld [vmem:[#allocation10 + $0x360] sm:$0xff]
        %v4399 = vld [vmem:[#allocation10 + $0x368] sm:$0xff]
        %v4400 = vld [vmem:[#allocation10 + $0x370] sm:$0xff]
        %v4401 = vld [vmem:[#allocation10 + $0x378] sm:$0xff]
        %v4402 = vld [vmem:[#allocation10 + $0x380] sm:$0xff]
        %v4403 = vld [vmem:[#allocation10 + $0x388] sm:$0xff]
        %v4404 = vld [vmem:[#allocation10 + $0x390] sm:$0xff]
        %v4405 = vld [vmem:[#allocation10 + $0x398] sm:$0xff]
        %v4406 = vld [vmem:[#allocation10 + $0x3a0] sm:$0xff]
        %v4407 = vld [vmem:[#allocation10 + $0x3a8] sm:$0xff]
        %v4408 = vld [vmem:[#allocation10 + $0x3b0] sm:$0xff]
        %v4409 = vld [vmem:[#allocation10 + $0x3b8] sm:$0xff]
        %v4410 = vld [vmem:[#allocation10 + $0x3c0] sm:$0xff]
        %v4411 = vld [vmem:[#allocation10 + $0x3c8] sm:$0xff]
        %v4412 = vld [vmem:[#allocation10 + $0x3d0] sm:$0xff]
        %v4413 = vld [vmem:[#allocation10 + $0x3d8] sm:$0xff]
        %v4414 = vld [vmem:[#allocation10 + $0x3e0] sm:$0xff]
        %v4415 = vld [vmem:[#allocation10 + $0x3e8] sm:$0xff]
        %v4416 = vld [vmem:[#allocation10 + $0x3f0] sm:$0xff]
        %v4417 = vld [vmem:[#allocation10 + $0x3f8] sm:$0xff]
        %v4418 = vld [vmem:[%s14] sm:$0x3]
        %v4420 = vlaneseq
        %v4421 = vshrl.u32 %v4420, 7
        %v4422 = vsub.s32 0, %v4421
        %v4423 = vrot.slane %v4418, %v4422
        %v4424 = vlaneseq
        %v4425 = vshrl.u32 %v4424, 7
        %v4426 = vsub.s32 1, %v4425
        %v4427 = vrot.slane %v4418, %v4426
        %4430 = vmatprep.subr.mxu0 %v4291
        %4431 = vmatpush1.msra.mxu0 %v4290
        %4432 = vmatprep.subr.mxu0 %v4293
        %4433 = vmatpush1.msra.mxu0 %v4292
        %4434 = vmatprep.subr.mxu0 %v4295
        %4435 = vmatpush1.msra.mxu0 %v4294
        %4436 = vmatprep.subr.mxu0 %v4297
        %4437 = vmatpush1.msra.mxu0 %v4296
        %4438 = vmatprep.subr.mxu0 %v4299
        %4439 = vmatpush1.msra.mxu0 %v4298
        %4440 = vmatprep.subr.mxu0 %v4301
        %4441 = vmatpush1.msra.mxu0 %v4300
        %4442 = vmatprep.subr.mxu0 %v4303
        %4443 = vmatpush1.msra.mxu0 %v4302
        %4444 = vmatprep.subr.mxu0 %v4305
        %4445 = vmatpush1.msra.mxu0 %v4304
        %4446 = vmatprep.subr.mxu0 %v4307
        %4447 = vmatpush1.msra.mxu0 %v4306
        %4448 = vmatprep.subr.mxu0 %v4309
        %4449 = vmatpush1.msra.mxu0 %v4308
        %4450 = vmatprep.subr.mxu0 %v4311
        %4451 = vmatpush1.msra.mxu0 %v4310
        %4452 = vmatprep.subr.mxu0 %v4313
        %4453 = vmatpush1.msra.mxu0 %v4312
        %4454 = vmatprep.subr.mxu0 %v4315
        %4455 = vmatpush1.msra.mxu0 %v4314
        %4456 = vmatprep.subr.mxu0 %v4317
        %4457 = vmatpush1.msra.mxu0 %v4316
        %4458 = vmatprep.subr.mxu0 %v4319
        %4459 = vmatpush1.msra.mxu0 %v4318
        %4460 = vmatprep.subr.mxu0 %v4321
        %4461 = vmatpush1.msra.mxu0 %v4320
        %4462 = vmatprep.subr.mxu0 %v4323
        %4463 = vmatpush1.msra.mxu0 %v4322
        %4464 = vmatprep.subr.mxu0 %v4325
        %4465 = vmatpush1.msra.mxu0 %v4324
        %4466 = vmatprep.subr.mxu0 %v4327
        %4467 = vmatpush1.msra.mxu0 %v4326
        %4468 = vmatprep.subr.mxu0 %v4329
        %4469 = vmatpush1.msra.mxu0 %v4328
        %4470 = vmatprep.subr.mxu0 %v4331
        %4471 = vmatpush1.msra.mxu0 %v4330
        %4472 = vmatprep.subr.mxu0 %v4333
        %4473 = vmatpush1.msra.mxu0 %v4332
        %4474 = vmatprep.subr.mxu0 %v4335
        %4475 = vmatpush1.msra.mxu0 %v4334
        %4476 = vmatprep.subr.mxu0 %v4337
        %4477 = vmatpush1.msra.mxu0 %v4336
        %4478 = vmatprep.subr.mxu0 %v4339
        %4479 = vmatpush1.msra.mxu0 %v4338
        %4480 = vmatprep.subr.mxu0 %v4341
        %4481 = vmatpush1.msra.mxu0 %v4340
        %4482 = vmatprep.subr.mxu0 %v4343
        %4483 = vmatpush1.msra.mxu0 %v4342
        %4484 = vmatprep.subr.mxu0 %v4345
        %4485 = vmatpush1.msra.mxu0 %v4344
        %4486 = vmatprep.subr.mxu0 %v4347
        %4487 = vmatpush1.msra.mxu0 %v4346
        %4488 = vmatprep.subr.mxu0 %v4349
        %4489 = vmatpush1.msra.mxu0 %v4348
        %4490 = vmatprep.subr.mxu0 %v4351
        %4491 = vmatpush1.msra.mxu0 %v4350
        %4492 = vmatprep.subr.mxu0 %v4353
        %4493 = vmatpush1.msra.mxu0 %v4352
        %4494 = vmatprep.mubr.f32.mxu0 %v4287
        %4495 = vmatmul.mubr.f32.gmra.mrb[0].mxu0 %v4286
        %v4496 = vpop.f32.mrb[0].mxu0
        %v4497 = vadd.f32 %v4423, %v4496
        %v4498 = vpop.f32.mrb[0].mxu0
        %v4499 = vadd.f32 %v4427, %v4498
        %4500 = vdwg.mxu0
        %4501 = vmatprep.subr.mxu0 %v4355
        %4502 = vmatpush1.msra.mxu0 %v4354
        %4503 = vmatprep.subr.mxu0 %v4357
        %4504 = vmatpush1.msra.mxu0 %v4356
        %4505 = vmatprep.subr.mxu0 %v4359
        %4506 = vmatpush1.msra.mxu0 %v4358
        %4507 = vmatprep.subr.mxu0 %v4361
        %4508 = vmatpush1.msra.mxu0 %v4360
        %4509 = vmatprep.subr.mxu0 %v4363
        %4510 = vmatpush1.msra.mxu0 %v4362
        %4511 = vmatprep.subr.mxu0 %v4365
        %4512 = vmatpush1.msra.mxu0 %v4364
        %4513 = vmatprep.subr.mxu0 %v4367
        %4514 = vmatpush1.msra.mxu0 %v4366
        %4515 = vmatprep.subr.mxu0 %v4369
        %4516 = vmatpush1.msra.mxu0 %v4368
        %4517 = vmatprep.subr.mxu0 %v4371
        %4518 = vmatpush1.msra.mxu0 %v4370
        %4519 = vmatprep.subr.mxu0 %v4373
        %4520 = vmatpush1.msra.mxu0 %v4372
        %4521 = vmatprep.subr.mxu0 %v4375
        %4522 = vmatpush1.msra.mxu0 %v4374
        %4523 = vmatprep.subr.mxu0 %v4377
        %4524 = vmatpush1.msra.mxu0 %v4376
        %4525 = vmatprep.subr.mxu0 %v4379
        %4526 = vmatpush1.msra.mxu0 %v4378
        %4527 = vmatprep.subr.mxu0 %v4381
        %4528 = vmatpush1.msra.mxu0 %v4380
        %4529 = vmatprep.subr.mxu0 %v4383
        %4530 = vmatpush1.msra.mxu0 %v4382
        %4531 = vmatprep.subr.mxu0 %v4385
        %4532 = vmatpush1.msra.mxu0 %v4384
        %4533 = vmatprep.subr.mxu0 %v4387
        %4534 = vmatpush1.msra.mxu0 %v4386
        %4535 = vmatprep.subr.mxu0 %v4389
        %4536 = vmatpush1.msra.mxu0 %v4388
        %4537 = vmatprep.subr.mxu0 %v4391
        %4538 = vmatpush1.msra.mxu0 %v4390
        %4539 = vmatprep.subr.mxu0 %v4393
        %4540 = vmatpush1.msra.mxu0 %v4392
        %4541 = vmatprep.subr.mxu0 %v4395
        %4542 = vmatpush1.msra.mxu0 %v4394
        %4543 = vmatprep.subr.mxu0 %v4397
        %4544 = vmatpush1.msra.mxu0 %v4396
        %4545 = vmatprep.subr.mxu0 %v4399
        %4546 = vmatpush1.msra.mxu0 %v4398
        %4547 = vmatprep.subr.mxu0 %v4401
        %4548 = vmatpush1.msra.mxu0 %v4400
        %4549 = vmatprep.subr.mxu0 %v4403
        %4550 = vmatpush1.msra.mxu0 %v4402
        %4551 = vmatprep.subr.mxu0 %v4405
        %4552 = vmatpush1.msra.mxu0 %v4404
        %4553 = vmatprep.subr.mxu0 %v4407
        %4554 = vmatpush1.msra.mxu0 %v4406
        %4555 = vmatprep.subr.mxu0 %v4409
        %4556 = vmatpush1.msra.mxu0 %v4408
        %4557 = vmatprep.subr.mxu0 %v4411
        %4558 = vmatpush1.msra.mxu0 %v4410
        %4559 = vmatprep.subr.mxu0 %v4413
        %4560 = vmatpush1.msra.mxu0 %v4412
        %4561 = vmatprep.subr.mxu0 %v4415
        %4562 = vmatpush1.msra.mxu0 %v4414
        %4563 = vmatprep.subr.mxu0 %v4417
        %4564 = vmatpush1.msra.mxu0 %v4416
        %4565 = vmatprep.mubr.f32.mxu0 %v4289
        %4566 = vmatmul.mubr.f32.gmra.mrb[0].mxu0 %v4288
        %v4567 = vpop.f32.mrb[0].mxu0
        %v4568 = vadd.f32 %v4497, %v4567
        %v4569 = vpop.f32.mrb[0].mxu0
        %v4570 = vadd.f32 %v4499, %v4569
        %4571 = vdwg.mxu0
        %v4572 = vmax.f32 %v4568, 0.0
        %v4573 = vmax.f32 %v4570, 0.0
        %4575 = vrot.lane.b32.xlu0 %v4572, 112
        %v4576 = vpop.permute.xlu0 %4575
        %v4578 = vmax.f32 %v4572, %v4576
        %v4579 = vadd.f32 %v4572, %v4576
        %4580 = vrot.lane.b32.xlu0 %v4572, 96
        %v4581 = vpop.permute.xlu0 %4580
        %v4583 = vmax.f32 %v4578, %v4581
        %v4584 = vadd.f32 %v4579, %v4581
        %4585 = vrot.lane.b32.xlu0 %v4572, 80
        %v4586 = vpop.permute.xlu0 %4585
        %v4588 = vmax.f32 %v4583, %v4586
        %v4589 = vadd.f32 %v4584, %v4586
        %4590 = vrot.lane.b32.xlu0 %v4572, 64
        %v4591 = vpop.permute.xlu0 %4590
        %v4593 = vmax.f32 %v4588, %v4591
        %v4594 = vadd.f32 %v4589, %v4591
        %4595 = vrot.lane.b32.xlu0 %v4572, 48
        %v4596 = vpop.permute.xlu0 %4595
        %v4598 = vmax.f32 %v4593, %v4596
        %v4599 = vadd.f32 %v4594, %v4596
        %4600 = vrot.lane.b32.xlu0 %v4572, 32
        %v4601 = vpop.permute.xlu0 %4600
        %v4603 = vmax.f32 %v4598, %v4601
        %v4604 = vadd.f32 %v4599, %v4601
        %4605 = vrot.lane.b32.xlu0 %v4572, 16
        %v4606 = vpop.permute.xlu0 %4605
        %v4608 = vmax.f32 %v4603, %v4606
        %v4609 = vadd.f32 %v4604, %v4606
        %v4610 = vmax.f32 %v4608, %v4573
        %v4611 = vadd.f32 %v4609, %v4573
        %4613 = vrot.lane.b32.xlu0 %v4573, 112
        %v4614 = vpop.permute.xlu0 %4613
        %v4616 = vmax.f32 %v4610, %v4614
        %v4617 = vadd.f32 %v4611, %v4614
        %4618 = vrot.lane.b32.xlu0 %v4573, 96
        %v4619 = vpop.permute.xlu0 %4618
        %v4621 = vmax.f32 %v4616, %v4619
        %v4622 = vadd.f32 %v4617, %v4619
        %4623 = vrot.lane.b32.xlu0 %v4573, 80
        %v4624 = vpop.permute.xlu0 %4623
        %v4626 = vmax.f32 %v4621, %v4624
        %v4627 = vadd.f32 %v4622, %v4624
        %4628 = vrot.lane.b32.xlu0 %v4573, 64
        %v4629 = vpop.permute.xlu0 %4628
        %v4631 = vmax.f32 %v4626, %v4629
        %v4632 = vadd.f32 %v4627, %v4629
        %4633 = vrot.lane.b32.xlu0 %v4573, 48
        %v4634 = vpop.permute.xlu0 %4633
        %v4636 = vmax.f32 %v4631, %v4634
        %v4637 = vadd.f32 %v4632, %v4634
        %4638 = vrot.lane.b32.xlu0 %v4573, 32
        %v4639 = vpop.permute.xlu0 %4638
        %v4641 = vmax.f32 %v4636, %v4639
        %v4642 = vadd.f32 %v4637, %v4639
        %4643 = vrot.lane.b32.xlu0 %v4573, 16
        %v4644 = vpop.permute.xlu0 %4643
        %v4646 = vmax.f32 %v4641, %v4644
        %v4647 = vadd.f32 %v4642, %v4644
        %v4648 = vmul.f32 %v4647, 0.0625
        %v4649 = vld [vmem:[%s19] sm:$0xff]
        %v4650 = vld [vmem:[%s19 + $0x8] sm:$0xff]
        %v4651 = vld [vmem:[%s19 + $0x10] sm:$0xff]
        %v4652 = vld [vmem:[%s19 + $0x18] sm:$0xff]
        %v4653 = vld [vmem:[%s20] sm:$0x1]
        %v4655 = vsel %vm2185, %v4646, 0
        %4657 = vmatprep.subr.mxu0 0.0
        %4658 = vmatpush1.msra.mxu0 %v4649
        %4659 = vmatprep.subr.mxu0 0.0
        %4660 = vmatpush1.msra.mxu0 %v4650
        %4661 = vmatprep.subr.mxu0 0.0
        %4662 = vmatpush1.msra.mxu0 0.0
        %4663 = vmatprep.subr.mxu0 0.0
        %4664 = vmatpush1.msra.mxu0 0.0
        %4665 = vmatprep.subr.mxu0 0.0
        %4666 = vmatpush1.msra.mxu0 0.0
        %4667 = vmatprep.subr.mxu0 0.0
        %4668 = vmatpush1.msra.mxu0 0.0
        %4669 = vmatprep.subr.mxu0 0.0
        %4670 = vmatpush1.msra.mxu0 0.0
        %4671 = vmatprep.subr.mxu0 0.0
        %4672 = vmatpush1.msra.mxu0 0.0
        %4673 = vmatprep.subr.mxu0 0.0
        %4674 = vmatpush1.msra.mxu0 0.0
        %4675 = vmatprep.subr.mxu0 0.0
        %4676 = vmatpush1.msra.mxu0 0.0
        %4677 = vmatprep.subr.mxu0 0.0
        %4678 = vmatpush1.msra.mxu0 0.0
        %4679 = vmatprep.subr.mxu0 0.0
        %4680 = vmatpush1.msra.mxu0 0.0
        %4681 = vmatprep.subr.mxu0 0.0
        %4682 = vmatpush1.msra.mxu0 0.0
        %4683 = vmatprep.subr.mxu0 0.0
        %4684 = vmatpush1.msra.mxu0 0.0
        %4685 = vmatprep.subr.mxu0 0.0
        %4686 = vmatpush1.msra.mxu0 0.0
        %4687 = vmatprep.subr.mxu0 0.0
        %4688 = vmatpush1.msra.mxu0 0.0
        %4689 = vmatprep.subr.mxu0 0.0
        %4690 = vmatpush1.msra.mxu0 0.0
        %4691 = vmatprep.subr.mxu0 0.0
        %4692 = vmatpush1.msra.mxu0 0.0
        %4693 = vmatprep.subr.mxu0 0.0
        %4694 = vmatpush1.msra.mxu0 0.0
        %4695 = vmatprep.subr.mxu0 0.0
        %4696 = vmatpush1.msra.mxu0 0.0
        %4697 = vmatprep.subr.mxu0 0.0
        %4698 = vmatpush1.msra.mxu0 0.0
        %4699 = vmatprep.subr.mxu0 0.0
        %4700 = vmatpush1.msra.mxu0 0.0
        %4701 = vmatprep.subr.mxu0 0.0
        %4702 = vmatpush1.msra.mxu0 0.0
        %4703 = vmatprep.subr.mxu0 0.0
        %4704 = vmatpush1.msra.mxu0 0.0
        %4705 = vmatprep.subr.mxu0 0.0
        %4706 = vmatpush1.msra.mxu0 0.0
        %4707 = vmatprep.subr.mxu0 0.0
        %4708 = vmatpush1.msra.mxu0 0.0
        %4709 = vmatprep.subr.mxu0 0.0
        %4710 = vmatpush1.msra.mxu0 0.0
        %4711 = vmatprep.subr.mxu0 0.0
        %4712 = vmatpush1.msra.mxu0 0.0
        %4713 = vmatprep.subr.mxu0 0.0
        %4714 = vmatpush1.msra.mxu0 0.0
        %4715 = vmatprep.subr.mxu0 0.0
        %4716 = vmatpush1.msra.mxu0 0.0
        %4717 = vmatprep.subr.mxu0 0.0
        %4718 = vmatpush1.msra.mxu0 0.0
        %4719 = vmatprep.subr.mxu0 0.0
        %4720 = vmatpush1.msra.mxu0 0.0
        %4721 = vmatprep.mubr.f32.mxu0 0.0
        %4722 = vmatmul.mubr.f32.gmra.mrb[0].mxu0 %v4655
        %v4723 = vpop.f32.mrb[0].mxu0
        %v4724 = vadd.f32 0.0, %v4723
        %v4725 = vpop.f32.mrb[0].mxu0
        %4726 = vdwg.mxu0
        %v4727 = vadd.f32 %v4653, %v4724
        %v4729 = vsel %vm2185, %v4648, 0
        %4731 = vmatprep.subr.mxu0 0.0
        %4732 = vmatpush1.msra.mxu0 %v4651
        %4733 = vmatprep.subr.mxu0 0.0
        %4734 = vmatpush1.msra.mxu0 %v4652
        %4735 = vmatprep.subr.mxu0 0.0
        %4736 = vmatpush1.msra.mxu0 0.0
        %4737 = vmatprep.subr.mxu0 0.0
        %4738 = vmatpush1.msra.mxu0 0.0
        %4739 = vmatprep.subr.mxu0 0.0
        %4740 = vmatpush1.msra.mxu0 0.0
        %4741 = vmatprep.subr.mxu0 0.0
        %4742 = vmatpush1.msra.mxu0 0.0
        %4743 = vmatprep.subr.mxu0 0.0
        %4744 = vmatpush1.msra.mxu0 0.0
        %4745 = vmatprep.subr.mxu0 0.0
        %4746 = vmatpush1.msra.mxu0 0.0
        %4747 = vmatprep.subr.mxu0 0.0
        %4748 = vmatpush1.msra.mxu0 0.0
        %4749 = vmatprep.subr.mxu0 0.0
        %4750 = vmatpush1.msra.mxu0 0.0
        %4751 = vmatprep.subr.mxu0 0.0
        %4752 = vmatpush1.msra.mxu0 0.0
        %4753 = vmatprep.subr.mxu0 0.0
        %4754 = vmatpush1.msra.mxu0 0.0
        %4755 = vmatprep.subr.mxu0 0.0
        %4756 = vmatpush1.msra.mxu0 0.0
        %4757 = vmatprep.subr.mxu0 0.0
        %4758 = vmatpush1.msra.mxu0 0.0
        %4759 = vmatprep.subr.mxu0 0.0
        %4760 = vmatpush1.msra.mxu0 0.0
        %4761 = vmatprep.subr.mxu0 0.0
        %4762 = vmatpush1.msra.mxu0 0.0
        %4763 = vmatprep.subr.mxu0 0.0
        %4764 = vmatpush1.msra.mxu0 0.0
        %4765 = vmatprep.subr.mxu0 0.0
        %4766 = vmatpush1.msra.mxu0 0.0
        %4767 = vmatprep.subr.mxu0 0.0
        %4768 = vmatpush1.msra.mxu0 0.0
        %4769 = vmatprep.subr.mxu0 0.0
        %4770 = vmatpush1.msra.mxu0 0.0
        %4771 = vmatprep.subr.mxu0 0.0
        %4772 = vmatpush1.msra.mxu0 0.0
        %4773 = vmatprep.subr.mxu0 0.0
        %4774 = vmatpush1.msra.mxu0 0.0
        %4775 = vmatprep.subr.mxu0 0.0
        %4776 = vmatpush1.msra.mxu0 0.0
        %4777 = vmatprep.subr.mxu0 0.0
        %4778 = vmatpush1.msra.mxu0 0.0
        %4779 = vmatprep.subr.mxu0 0.0
        %4780 = vmatpush1.msra.mxu0 0.0
        %4781 = vmatprep.subr.mxu0 0.0
        %4782 = vmatpush1.msra.mxu0 0.0
        %4783 = vmatprep.subr.mxu0 0.0
        %4784 = vmatpush1.msra.mxu0 0.0
        %4785 = vmatprep.subr.mxu0 0.0
        %4786 = vmatpush1.msra.mxu0 0.0
        %4787 = vmatprep.subr.mxu0 0.0
        %4788 = vmatpush1.msra.mxu0 0.0
        %4789 = vmatprep.subr.mxu0 0.0
        %4790 = vmatpush1.msra.mxu0 0.0
        %4791 = vmatprep.subr.mxu0 0.0
        %4792 = vmatpush1.msra.mxu0 0.0
        %4793 = vmatprep.subr.mxu0 0.0
        %4794 = vmatpush1.msra.mxu0 0.0
        %4795 = vmatprep.mubr.f32.mxu0 0.0
        %4796 = vmatmul.mubr.f32.gmra.mrb[0].mxu0 %v4729
        %v4797 = vpop.f32.mrb[0].mxu0
        %v4798 = vadd.f32 0.0, %v4797
        %v4799 = vpop.f32.mrb[0].mxu0
        %4800 = vdwg.mxu0
        %v4801 = vadd.f32 %v4727, %v4798
        %v4802 = vmax.f32 %v4801, 0.0
        %v4803 = vld [vmem:[#allocation11] sm:$0xff]
        %v4804 = vld [vmem:[#allocation11 + $0x8] sm:$0xff]
        %v4805 = vld [vmem:[#allocation11 + $0x10] sm:$0xff]
        %v4806 = vld [vmem:[#allocation11 + $0x18] sm:$0xff]
        %v4807 = vld [vmem:[#allocation11 + $0x20] sm:$0xff]
        %v4808 = vld [vmem:[#allocation11 + $0x28] sm:$0xff]
        %v4809 = vld [vmem:[#allocation11 + $0x30] sm:$0xff]
        %v4810 = vld [vmem:[#allocation11 + $0x38] sm:$0xff]
        %v4811 = vld [vmem:[#allocation11 + $0x40] sm:$0xff]
        %v4812 = vld [vmem:[#allocation11 + $0x48] sm:$0xff]
        %v4813 = vld [vmem:[#allocation11 + $0x50] sm:$0xff]
        %v4814 = vld [vmem:[#allocation11 + $0x58] sm:$0xff]
        %v4815 = vld [vmem:[#allocation11 + $0x60] sm:$0xff]
        %v4816 = vld [vmem:[#allocation11 + $0x68] sm:$0xff]
        %v4817 = vld [vmem:[#allocation11 + $0x70] sm:$0xff]
        %v4818 = vld [vmem:[#allocation11 + $0x78] sm:$0xff]
        %v4819 = vld [vmem:[#allocation11 + $0x80] sm:$0xff]
        %v4820 = vld [vmem:[#allocation11 + $0x88] sm:$0xff]
        %v4821 = vld [vmem:[#allocation11 + $0x90] sm:$0xff]
        %v4822 = vld [vmem:[#allocation11 + $0x98] sm:$0xff]
        %v4823 = vld [vmem:[#allocation11 + $0xa0] sm:$0xff]
        %v4824 = vld [vmem:[#allocation11 + $0xa8] sm:$0xff]
        %v4825 = vld [vmem:[#allocation11 + $0xb0] sm:$0xff]
        %v4826 = vld [vmem:[#allocation11 + $0xb8] sm:$0xff]
        %v4827 = vld [vmem:[#allocation11 + $0xc0] sm:$0xff]
        %v4828 = vld [vmem:[#allocation11 + $0xc8] sm:$0xff]
        %v4829 = vld [vmem:[#allocation11 + $0xd0] sm:$0xff]
        %v4830 = vld [vmem:[#allocation11 + $0xd8] sm:$0xff]
        %v4831 = vld [vmem:[#allocation11 + $0xe0] sm:$0xff]
        %v4832 = vld [vmem:[#allocation11 + $0xe8] sm:$0xff]
        %v4833 = vld [vmem:[#allocation11 + $0xf0] sm:$0xff]
        %v4834 = vld [vmem:[#allocation11 + $0xf8] sm:$0xff]
        %v4835 = vld [vmem:[#allocation11 + $0x100] sm:$0xff]
        %v4836 = vld [vmem:[#allocation11 + $0x108] sm:$0xff]
        %v4837 = vld [vmem:[#allocation11 + $0x110] sm:$0xff]
        %v4838 = vld [vmem:[#allocation11 + $0x118] sm:$0xff]
        %v4839 = vld [vmem:[#allocation11 + $0x120] sm:$0xff]
        %v4840 = vld [vmem:[#allocation11 + $0x128] sm:$0xff]
        %v4841 = vld [vmem:[#allocation11 + $0x130] sm:$0xff]
        %v4842 = vld [vmem:[#allocation11 + $0x138] sm:$0xff]
        %v4843 = vld [vmem:[%s22] sm:$0x1]
        %v4845 = vlaneseq
        %v4846 = vshrl.u32 %v4845, 7
        %v4847 = vsub.s32 0, %v4846
        %v4848 = vrot.slane %v3981, %v4847
        %v4849 = vlaneseq
        %v4850 = vshrl.u32 %v4849, 7
        %v4851 = vsub.s32 1, %v4850
        %v4852 = vrot.slane %v3981, %v4851
        %4855 = vmatprep.subr.mxu0 0.0
        %4856 = vmatpush1.msra.mxu0 %v4803
        %4857 = vmatprep.subr.mxu0 0.0
        %4858 = vmatpush1.msra.mxu0 %v4804
        %4859 = vmatprep.subr.mxu0 0.0
        %4860 = vmatpush1.msra.mxu0 %v4805
        %4861 = vmatprep.subr.mxu0 0.0
        %4862 = vmatpush1.msra.mxu0 %v4806
        %4863 = vmatprep.subr.mxu0 0.0
        %4864 = vmatpush1.msra.mxu0 %v4807
        %4865 = vmatprep.subr.mxu0 0.0
        %4866 = vmatpush1.msra.mxu0 %v4808
        %4867 = vmatprep.subr.mxu0 0.0
        %4868 = vmatpush1.msra.mxu0 %v4809
        %4869 = vmatprep.subr.mxu0 0.0
        %4870 = vmatpush1.msra.mxu0 %v4810
        %4871 = vmatprep.subr.mxu0 0.0
        %4872 = vmatpush1.msra.mxu0 %v4811
        %4873 = vmatprep.subr.mxu0 0.0
        %4874 = vmatpush1.msra.mxu0 %v4812
        %4875 = vmatprep.subr.mxu0 0.0
        %4876 = vmatpush1.msra.mxu0 %v4813
        %4877 = vmatprep.subr.mxu0 0.0
        %4878 = vmatpush1.msra.mxu0 %v4814
        %4879 = vmatprep.subr.mxu0 0.0
        %4880 = vmatpush1.msra.mxu0 %v4815
        %4881 = vmatprep.subr.mxu0 0.0
        %4882 = vmatpush1.msra.mxu0 %v4816
        %4883 = vmatprep.subr.mxu0 0.0
        %4884 = vmatpush1.msra.mxu0 %v4817
        %4885 = vmatprep.subr.mxu0 0.0
        %4886 = vmatpush1.msra.mxu0 %v4818
        %4887 = vmatprep.subr.mxu0 0.0
        %4888 = vmatpush1.msra.mxu0 %v4819
        %4889 = vmatprep.subr.mxu0 0.0
        %4890 = vmatpush1.msra.mxu0 %v4820
        %4891 = vmatprep.subr.mxu0 0.0
        %4892 = vmatpush1.msra.mxu0 %v4821
        %4893 = vmatprep.subr.mxu0 0.0
        %4894 = vmatpush1.msra.mxu0 %v4822
        %4895 = vmatprep.subr.mxu0 0.0
        %4896 = vmatpush1.msra.mxu0 %v4823
        %4897 = vmatprep.subr.mxu0 0.0
        %4898 = vmatpush1.msra.mxu0 %v4824
        %4899 = vmatprep.subr.mxu0 0.0
        %4900 = vmatpush1.msra.mxu0 %v4825
        %4901 = vmatprep.subr.mxu0 0.0
        %4902 = vmatpush1.msra.mxu0 %v4826
        %4903 = vmatprep.subr.mxu0 0.0
        %4904 = vmatpush1.msra.mxu0 %v4827
        %4905 = vmatprep.subr.mxu0 0.0
        %4906 = vmatpush1.msra.mxu0 %v4828
        %4907 = vmatprep.subr.mxu0 0.0
        %4908 = vmatpush1.msra.mxu0 %v4829
        %4909 = vmatprep.subr.mxu0 0.0
        %4910 = vmatpush1.msra.mxu0 %v4830
        %4911 = vmatprep.subr.mxu0 0.0
        %4912 = vmatpush1.msra.mxu0 %v4831
        %4913 = vmatprep.subr.mxu0 0.0
        %4914 = vmatpush1.msra.mxu0 %v4832
        %4915 = vmatprep.subr.mxu0 0.0
        %4916 = vmatpush1.msra.mxu0 %v4833
        %4917 = vmatprep.subr.mxu0 0.0
        %4918 = vmatpush1.msra.mxu0 %v4834
        %4919 = vmatprep.mubr.f32.mxu0 %v4852
        %4920 = vmatmul.mubr.f32.gmra.mrb[0].mxu0 %v4848
        %v4921 = vpop.f32.mrb[0].mxu0
        %v4922 = vadd.f32 0.0, %v4921
        %v4923 = vpop.f32.mrb[0].mxu0
        %4924 = vdwg.mxu0
        %v4925 = vadd.f32 %v4843, %v4922
        %vm4926 = vcmask 523264
        %v4928 = vsel %vm4926, %v4802, 0
        %4930 = vmatprep.subr.mxu0 0.0
        %4931 = vmatpush1.msra.mxu0 %v4835
        %4932 = vmatprep.subr.mxu0 0.0
        %4933 = vmatpush1.msra.mxu0 %v4836
        %4934 = vmatprep.subr.mxu0 0.0
        %4935 = vmatpush1.msra.mxu0 %v4837
        %4936 = vmatprep.subr.mxu0 0.0
        %4937 = vmatpush1.msra.mxu0 %v4838
        %4938 = vmatprep.subr.mxu0 0.0
        %4939 = vmatpush1.msra.mxu0 %v4839
        %4940 = vmatprep.subr.mxu0 0.0
        %4941 = vmatpush1.msra.mxu0 %v4840
        %4942 = vmatprep.subr.mxu0 0.0
        %4943 = vmatpush1.msra.mxu0 %v4841
        %4944 = vmatprep.subr.mxu0 0.0
        %4945 = vmatpush1.msra.mxu0 %v4842
        %4946 = vmatprep.subr.mxu0 0.0
        %4947 = vmatpush1.msra.mxu0 0.0
        %4948 = vmatprep.subr.mxu0 0.0
        %4949 = vmatpush1.msra.mxu0 0.0
        %4950 = vmatprep.subr.mxu0 0.0
        %4951 = vmatpush1.msra.mxu0 0.0
        %4952 = vmatprep.subr.mxu0 0.0
        %4953 = vmatpush1.msra.mxu0 0.0
        %4954 = vmatprep.subr.mxu0 0.0
        %4955 = vmatpush1.msra.mxu0 0.0
        %4956 = vmatprep.subr.mxu0 0.0
        %4957 = vmatpush1.msra.mxu0 0.0
        %4958 = vmatprep.subr.mxu0 0.0
        %4959 = vmatpush1.msra.mxu0 0.0
        %4960 = vmatprep.subr.mxu0 0.0
        %4961 = vmatpush1.msra.mxu0 0.0
        %4962 = vmatprep.subr.mxu0 0.0
        %4963 = vmatpush1.msra.mxu0 0.0
        %4964 = vmatprep.subr.mxu0 0.0
        %4965 = vmatpush1.msra.mxu0 0.0
        %4966 = vmatprep.subr.mxu0 0.0
        %4967 = vmatpush1.msra.mxu0 0.0
        %4968 = vmatprep.subr.mxu0 0.0
        %4969 = vmatpush1.msra.mxu0 0.0
        %4970 = vmatprep.subr.mxu0 0.0
        %4971 = vmatpush1.msra.mxu0 0.0
        %4972 = vmatprep.subr.mxu0 0.0
        %4973 = vmatpush1.msra.mxu0 0.0
        %4974 = vmatprep.subr.mxu0 0.0
        %4975 = vmatpush1.msra.mxu0 0.0
        %4976 = vmatprep.subr.mxu0 0.0
        %4977 = vmatpush1.msra.mxu0 0.0
        %4978 = vmatprep.subr.mxu0 0.0
        %4979 = vmatpush1.msra.mxu0 0.0
        %4980 = vmatprep.subr.mxu0 0.0
        %4981 = vmatpush1.msra.mxu0 0.0
        %4982 = vmatprep.subr.mxu0 0.0
        %4983 = vmatpush1.msra.mxu0 0.0
        %4984 = vmatprep.subr.mxu0 0.0
        %4985 = vmatpush1.msra.mxu0 0.0
        %4986 = vmatprep.subr.mxu0 0.0
        %4987 = vmatpush1.msra.mxu0 0.0
        %4988 = vmatprep.subr.mxu0 0.0
        %4989 = vmatpush1.msra.mxu0 0.0
        %4990 = vmatprep.subr.mxu0 0.0
        %4991 = vmatpush1.msra.mxu0 0.0
        %4992 = vmatprep.subr.mxu0 0.0
        %4993 = vmatpush1.msra.mxu0 0.0
        %4994 = vmatprep.mubr.f32.mxu0 0.0
        %4995 = vmatmul.mubr.f32.gmra.mrb[0].mxu0 %v4928
        %v4996 = vpop.f32.mrb[0].mxu0
        %v4997 = vadd.f32 0.0, %v4996
        %v4998 = vpop.f32.mrb[0].mxu0
        %4999 = vdwg.mxu0
        %v5000 = vadd.f32 %v4925, %v4997
        %v5001 = vmax.f32 %v5000, 0.0
        %v5002 = vld [vmem:[%s23] sm:$0xff]
        %v5003 = vld [vmem:[%s23 + $0x8] sm:$0xff]
        %v5004 = vld [vmem:[%s23 + $0x10] sm:$0xff]
        %v5005 = vld [vmem:[%s23 + $0x18] sm:$0xff]
        %v5006 = vld [vmem:[%s23 + $0x20] sm:$0xff]
        %v5007 = vld [vmem:[%s23 + $0x28] sm:$0xff]
        %v5008 = vld [vmem:[%s23 + $0x30] sm:$0xff]
        %v5009 = vld [vmem:[%s23 + $0x38] sm:$0xff]
        %v5010 = vld [vmem:[%s23 + $0x40] sm:$0xff]
        %v5011 = vld [vmem:[%s23 + $0x48] sm:$0xff]
        %v5012 = vld [vmem:[%s23 + $0x50] sm:$0xff]
        %v5013 = vld [vmem:[%s23 + $0x58] sm:$0xff]
        %v5014 = vld [vmem:[%s23 + $0x60] sm:$0xff]
        %v5015 = vld [vmem:[%s23 + $0x68] sm:$0xff]
        %v5016 = vld [vmem:[%s23 + $0x70] sm:$0xff]
        %v5017 = vld [vmem:[%s23 + $0x78] sm:$0xff]
        %v5018 = vld [vmem:[%s23 + $0x80] sm:$0xff]
        %v5019 = vld [vmem:[%s23 + $0x88] sm:$0xff]
        %v5020 = vld [vmem:[%s23 + $0x90] sm:$0xff]
        %v5021 = vld [vmem:[%s23 + $0x98] sm:$0xff]
        %v5022 = vld [vmem:[%s23 + $0xa0] sm:$0xff]
        %v5023 = vld [vmem:[%s23 + $0xa8] sm:$0xff]
        %v5024 = vld [vmem:[%s23 + $0xb0] sm:$0xff]
        %v5025 = vld [vmem:[%s23 + $0xb8] sm:$0xff]
        %v5026 = vld [vmem:[%s23 + $0xc0] sm:$0xff]
        %v5027 = vld [vmem:[%s23 + $0xc8] sm:$0xff]
        %v5028 = vld [vmem:[%s23 + $0xd0] sm:$0xff]
        %v5029 = vld [vmem:[%s23 + $0xd8] sm:$0xff]
        %v5030 = vld [vmem:[%s23 + $0xe0] sm:$0xff]
        %v5031 = vld [vmem:[%s23 + $0xe8] sm:$0xff]
        %v5032 = vld [vmem:[%s23 + $0xf0] sm:$0xff]
        %v5033 = vld [vmem:[%s23 + $0xf8] sm:$0xff]
        %v5034 = vld [vmem:[%s23 + $0x100] sm:$0xff]
        %v5035 = vld [vmem:[%s23 + $0x108] sm:$0xff]
        %v5036 = vld [vmem:[%s23 + $0x110] sm:$0xff]
        %v5037 = vld [vmem:[%s23 + $0x118] sm:$0xff]
        %v5038 = vld [vmem:[%s23 + $0x120] sm:$0xff]
        %v5039 = vld [vmem:[%s23 + $0x128] sm:$0xff]
        %v5040 = vld [vmem:[%s23 + $0x130] sm:$0xff]
        %v5041 = vld [vmem:[%s23 + $0x138] sm:$0xff]
        %v5042 = vld [vmem:[%s23 + $0x140] sm:$0xff]
        %v5043 = vld [vmem:[%s23 + $0x148] sm:$0xff]
        %v5044 = vld [vmem:[%s23 + $0x150] sm:$0xff]
        %v5045 = vld [vmem:[%s23 + $0x158] sm:$0xff]
        %v5046 = vld [vmem:[%s23 + $0x160] sm:$0xff]
        %v5047 = vld [vmem:[%s23 + $0x168] sm:$0xff]
        %v5048 = vld [vmem:[%s23 + $0x170] sm:$0xff]
        %v5049 = vld [vmem:[%s23 + $0x178] sm:$0xff]
        %v5050 = vld [vmem:[%s24] sm:$0x1]
        %v5052 = vlaneseq
        %v5053 = vshrl.u32 %v5052, 7
        %v5054 = vsub.s32 0, %v5053
        %v5055 = vrot.slane %v2558, %v5054
        %v5056 = vlaneseq
        %v5057 = vshrl.u32 %v5056, 7
        %v5058 = vsub.s32 1, %v5057
        %v5059 = vrot.slane %v2558, %v5058
        %5062 = vmatprep.subr.mxu0 0.0
        %5063 = vmatpush1.msra.mxu0 %v5002
        %5064 = vmatprep.subr.mxu0 0.0
        %5065 = vmatpush1.msra.mxu0 %v5003
        %5066 = vmatprep.subr.mxu0 0.0
        %5067 = vmatpush1.msra.mxu0 %v5004
        %5068 = vmatprep.subr.mxu0 0.0
        %5069 = vmatpush1.msra.mxu0 %v5005
        %5070 = vmatprep.subr.mxu0 0.0
        %5071 = vmatpush1.msra.mxu0 %v5006
        %5072 = vmatprep.subr.mxu0 0.0
        %5073 = vmatpush1.msra.mxu0 %v5007
        %5074 = vmatprep.subr.mxu0 0.0
        %5075 = vmatpush1.msra.mxu0 %v5008
        %5076 = vmatprep.subr.mxu0 0.0
        %5077 = vmatpush1.msra.mxu0 %v5009
        %5078 = vmatprep.subr.mxu0 0.0
        %5079 = vmatpush1.msra.mxu0 %v5010
        %5080 = vmatprep.subr.mxu0 0.0
        %5081 = vmatpush1.msra.mxu0 %v5011
        %5082 = vmatprep.subr.mxu0 0.0
        %5083 = vmatpush1.msra.mxu0 %v5012
        %5084 = vmatprep.subr.mxu0 0.0
        %5085 = vmatpush1.msra.mxu0 %v5013
        %5086 = vmatprep.subr.mxu0 0.0
        %5087 = vmatpush1.msra.mxu0 %v5014
        %5088 = vmatprep.subr.mxu0 0.0
        %5089 = vmatpush1.msra.mxu0 %v5015
        %5090 = vmatprep.subr.mxu0 0.0
        %5091 = vmatpush1.msra.mxu0 %v5016
        %5092 = vmatprep.subr.mxu0 0.0
        %5093 = vmatpush1.msra.mxu0 %v5017
        %5094 = vmatprep.subr.mxu0 0.0
        %5095 = vmatpush1.msra.mxu0 %v5018
        %5096 = vmatprep.subr.mxu0 0.0
        %5097 = vmatpush1.msra.mxu0 %v5019
        %5098 = vmatprep.subr.mxu0 0.0
        %5099 = vmatpush1.msra.mxu0 %v5020
        %5100 = vmatprep.subr.mxu0 0.0
        %5101 = vmatpush1.msra.mxu0 %v5021
        %5102 = vmatprep.subr.mxu0 0.0
        %5103 = vmatpush1.msra.mxu0 %v5022
        %5104 = vmatprep.subr.mxu0 0.0
        %5105 = vmatpush1.msra.mxu0 %v5023
        %5106 = vmatprep.subr.mxu0 0.0
        %5107 = vmatpush1.msra.mxu0 %v5024
        %5108 = vmatprep.subr.mxu0 0.0
        %5109 = vmatpush1.msra.mxu0 %v5025
        %5110 = vmatprep.subr.mxu0 0.0
        %5111 = vmatpush1.msra.mxu0 %v5026
        %5112 = vmatprep.subr.mxu0 0.0
        %5113 = vmatpush1.msra.mxu0 %v5027
        %5114 = vmatprep.subr.mxu0 0.0
        %5115 = vmatpush1.msra.mxu0 %v5028
        %5116 = vmatprep.subr.mxu0 0.0
        %5117 = vmatpush1.msra.mxu0 %v5029
        %5118 = vmatprep.subr.mxu0 0.0
        %5119 = vmatpush1.msra.mxu0 %v5030
        %5120 = vmatprep.subr.mxu0 0.0
        %5121 = vmatpush1.msra.mxu0 %v5031
        %5122 = vmatprep.subr.mxu0 0.0
        %5123 = vmatpush1.msra.mxu0 %v5032
        %5124 = vmatprep.subr.mxu0 0.0
        %5125 = vmatpush1.msra.mxu0 %v5033
        %5126 = vmatprep.mubr.f32.mxu0 %v5059
        %5127 = vmatmul.mubr.f32.gmra.mrb[0].mxu0 %v5055
        %v5128 = vpop.f32.mrb[0].mxu0
        %v5129 = vadd.f32 0.0, %v5128
        %v5130 = vpop.f32.mrb[0].mxu0
        %5131 = vdwg.mxu0
        %v5132 = vadd.f32 %v5050, %v5129
        %5133 = vmatprep.subr.mxu0 0.0
        %5134 = vmatpush1.msra.mxu0 %v5034
        %5135 = vmatprep.subr.mxu0 0.0
        %5136 = vmatpush1.msra.mxu0 %v5035
        %5137 = vmatprep.subr.mxu0 0.0
        %5138 = vmatpush1.msra.mxu0 %v5036
        %5139 = vmatprep.subr.mxu0 0.0
        %5140 = vmatpush1.msra.mxu0 %v5037
        %5141 = vmatprep.subr.mxu0 0.0
        %5142 = vmatpush1.msra.mxu0 %v5038
        %5143 = vmatprep.subr.mxu0 0.0
        %5144 = vmatpush1.msra.mxu0 %v5039
        %5145 = vmatprep.subr.mxu0 0.0
        %5146 = vmatpush1.msra.mxu0 %v5040
        %5147 = vmatprep.subr.mxu0 0.0
        %5148 = vmatpush1.msra.mxu0 %v5041
        %5149 = vmatprep.subr.mxu0 0.0
        %5150 = vmatpush1.msra.mxu0 %v5042
        %5151 = vmatprep.subr.mxu0 0.0
        %5152 = vmatpush1.msra.mxu0 %v5043
        %5153 = vmatprep.subr.mxu0 0.0
        %5154 = vmatpush1.msra.mxu0 %v5044
        %5155 = vmatprep.subr.mxu0 0.0
        %5156 = vmatpush1.msra.mxu0 %v5045
        %5157 = vmatprep.subr.mxu0 0.0
        %5158 = vmatpush1.msra.mxu0 %v5046
        %5159 = vmatprep.subr.mxu0 0.0
        %5160 = vmatpush1.msra.mxu0 %v5047
        %5161 = vmatprep.subr.mxu0 0.0
        %5162 = vmatpush1.msra.mxu0 %v5048
        %5163 = vmatprep.subr.mxu0 0.0
        %5164 = vmatpush1.msra.mxu0 %v5049
        %5165 = vmatprep.subr.mxu0 0.0
        %5166 = vmatpush1.msra.mxu0 0.0
        %5167 = vmatprep.subr.mxu0 0.0
        %5168 = vmatpush1.msra.mxu0 0.0
        %5169 = vmatprep.subr.mxu0 0.0
        %5170 = vmatpush1.msra.mxu0 0.0
        %5171 = vmatprep.subr.mxu0 0.0
        %5172 = vmatpush1.msra.mxu0 0.0
        %5173 = vmatprep.subr.mxu0 0.0
        %5174 = vmatpush1.msra.mxu0 0.0
        %5175 = vmatprep.subr.mxu0 0.0
        %5176 = vmatpush1.msra.mxu0 0.0
        %5177 = vmatprep.subr.mxu0 0.0
        %5178 = vmatpush1.msra.mxu0 0.0
        %5179 = vmatprep.subr.mxu0 0.0
        %5180 = vmatpush1.msra.mxu0 0.0
        %5181 = vmatprep.subr.mxu0 0.0
        %5182 = vmatpush1.msra.mxu0 0.0
        %5183 = vmatprep.subr.mxu0 0.0
        %5184 = vmatpush1.msra.mxu0 0.0
        %5185 = vmatprep.subr.mxu0 0.0
        %5186 = vmatpush1.msra.mxu0 0.0
        %5187 = vmatprep.subr.mxu0 0.0
        %5188 = vmatpush1.msra.mxu0 0.0
        %5189 = vmatprep.subr.mxu0 0.0
        %5190 = vmatpush1.msra.mxu0 0.0
        %5191 = vmatprep.subr.mxu0 0.0
        %5192 = vmatpush1.msra.mxu0 0.0
        %5193 = vmatprep.subr.mxu0 0.0
        %5194 = vmatpush1.msra.mxu0 0.0
        %5195 = vmatprep.subr.mxu0 0.0
        %5196 = vmatpush1.msra.mxu0 0.0
        %5197 = vmatprep.mubr.f32.mxu0 0.0
        %5198 = vmatmul.mubr.f32.gmra.mrb[0].mxu0 %v5001
        %v5199 = vpop.f32.mrb[0].mxu0
        %v5200 = vadd.f32 0.0, %v5199
        %v5201 = vpop.f32.mrb[0].mxu0
        %5202 = vdwg.mxu0
        %v5203 = vadd.f32 %v5132, %v5200
        %v5204 = vmax.f32 %v5203, 0.0
        %v5205 = vld [vmem:[%s25] sm:$0xff]
        %v5206 = vld [vmem:[%s25 + $0x8] sm:$0xff]
        %v5207 = vld [vmem:[%s25 + $0x10] sm:$0xff]
        %v5208 = vld [vmem:[%s25 + $0x18] sm:$0xff]
        %v5209 = vld [vmem:[%s25 + $0x20] sm:$0xff]
        %v5210 = vld [vmem:[%s25 + $0x28] sm:$0xff]
        %v5211 = vld [vmem:[%s25 + $0x30] sm:$0xff]
        %v5212 = vld [vmem:[%s25 + $0x38] sm:$0xff]
        %v5213 = vld [vmem:[%s25 + $0x40] sm:$0xff]
        %v5214 = vld [vmem:[%s25 + $0x48] sm:$0xff]
        %v5215 = vld [vmem:[%s25 + $0x50] sm:$0xff]
        %v5216 = vld [vmem:[%s25 + $0x58] sm:$0xff]
        %v5217 = vld [vmem:[%s25 + $0x60] sm:$0xff]
        %v5218 = vld [vmem:[%s25 + $0x68] sm:$0xff]
        %v5219 = vld [vmem:[%s25 + $0x70] sm:$0xff]
        %v5220 = vld [vmem:[%s25 + $0x78] sm:$0xff]
        %v5221 = vld [vmem:[%s26] sm:$0x1]
        %5222 = vmatprep.subr.mxu0 0.0
        %5223 = vmatpush1.msra.mxu0 %v5205
        %5224 = vmatprep.subr.mxu0 0.0
        %5225 = vmatpush1.msra.mxu0 %v5206
        %5226 = vmatprep.subr.mxu0 0.0
        %5227 = vmatpush1.msra.mxu0 %v5207
        %5228 = vmatprep.subr.mxu0 0.0
        %5229 = vmatpush1.msra.mxu0 %v5208
        %5230 = vmatprep.subr.mxu0 0.0
        %5231 = vmatpush1.msra.mxu0 %v5209
        %5232 = vmatprep.subr.mxu0 0.0
        %5233 = vmatpush1.msra.mxu0 %v5210
        %5234 = vmatprep.subr.mxu0 0.0
        %5235 = vmatpush1.msra.mxu0 %v5211
        %5236 = vmatprep.subr.mxu0 0.0
        %5237 = vmatpush1.msra.mxu0 %v5212
        %5238 = vmatprep.subr.mxu0 0.0
        %5239 = vmatpush1.msra.mxu0 %v5213
        %5240 = vmatprep.subr.mxu0 0.0
        %5241 = vmatpush1.msra.mxu0 %v5214
        %5242 = vmatprep.subr.mxu0 0.0
        %5243 = vmatpush1.msra.mxu0 %v5215
        %5244 = vmatprep.subr.mxu0 0.0
        %5245 = vmatpush1.msra.mxu0 %v5216
        %5246 = vmatprep.subr.mxu0 0.0
        %5247 = vmatpush1.msra.mxu0 %v5217
        %5248 = vmatprep.subr.mxu0 0.0
        %5249 = vmatpush1.msra.mxu0 %v5218
        %5250 = vmatprep.subr.mxu0 0.0
        %5251 = vmatpush1.msra.mxu0 %v5219
        %5252 = vmatprep.subr.mxu0 0.0
        %5253 = vmatpush1.msra.mxu0 %v5220
        %5254 = vmatprep.subr.mxu0 0.0
        %5255 = vmatpush1.msra.mxu0 0.0
        %5256 = vmatprep.subr.mxu0 0.0
        %5257 = vmatpush1.msra.mxu0 0.0
        %5258 = vmatprep.subr.mxu0 0.0
        %5259 = vmatpush1.msra.mxu0 0.0
        %5260 = vmatprep.subr.mxu0 0.0
        %5261 = vmatpush1.msra.mxu0 0.0
        %5262 = vmatprep.subr.mxu0 0.0
        %5263 = vmatpush1.msra.mxu0 0.0
        %5264 = vmatprep.subr.mxu0 0.0
        %5265 = vmatpush1.msra.mxu0 0.0
        %5266 = vmatprep.subr.mxu0 0.0
        %5267 = vmatpush1.msra.mxu0 0.0
        %5268 = vmatprep.subr.mxu0 0.0
        %5269 = vmatpush1.msra.mxu0 0.0
        %5270 = vmatprep.subr.mxu0 0.0
        %5271 = vmatpush1.msra.mxu0 0.0
        %5272 = vmatprep.subr.mxu0 0.0
        %5273 = vmatpush1.msra.mxu0 0.0
        %5274 = vmatprep.subr.mxu0 0.0
        %5275 = vmatpush1.msra.mxu0 0.0
        %5276 = vmatprep.subr.mxu0 0.0
        %5277 = vmatpush1.msra.mxu0 0.0
        %5278 = vmatprep.subr.mxu0 0.0
        %5279 = vmatpush1.msra.mxu0 0.0
        %5280 = vmatprep.subr.mxu0 0.0
        %5281 = vmatpush1.msra.mxu0 0.0
        %5282 = vmatprep.subr.mxu0 0.0
        %5283 = vmatpush1.msra.mxu0 0.0
        %5284 = vmatprep.subr.mxu0 0.0
        %5285 = vmatpush1.msra.mxu0 0.0
        %5286 = vmatprep.mubr.f32.mxu0 0.0
        %5287 = vmatmul.mubr.f32.gmra.mrb[0].mxu0 %v5204
        %v5288 = vpop.f32.mrb[0].mxu0
        %v5289 = vadd.f32 0.0, %v5288
        %v5290 = vpop.f32.mrb[0].mxu0
        %5291 = vdwg.mxu0
        %v5292 = vadd.f32 %v5221, %v5289
        %vm5293 = vcmask 8192
        %5294 = vst.msk [vmem:[%s924] sm:$0x1] %vm5293, %v5292
        %s5295 = sand.u32 %s635, 1
        %s5296 = scalar_lea.sflag [#allocation4], %s5295
        %s5297 = sand.u32 %s635, 1
        %s5298 = scalar_lea.vmem [#allocation13], %s5297
        // Predicated region
        $region153: #{static_model_forward.1} parent=127 // pred_check
          %p5299 = pneg %p645
        $region154: #{static_model_forward.1} parent=127 // pred_check_branch
          %5301 = sbr.rel (%p5299) target = $region156
        $region155: #{static_model_forward.1} parent=127 // pred_region
          %s5303 = ssub.s32 16, 16
          %5304 = vsyncadd %s5296, %s5303
          %s5305 = smul.addr %s45, 16
          %s5306 = scalar_lea.hbm %s27, %s5305
          %s5308 = sshll.u32 %s5298, 4
          %s5309 = int_to_ptr.vmem [resolvable:$true] %s5308
          %5311 = dma.vmem_to_hbm [thread:$0]  %s5309, 16, %s5306, %s5296
        $region156: #{static_model_forward.1} parent=127 // pred_fallthru
          _
      $region128: #{static_model_forward.1} parent=5 // pred_fallthru
        _
      %p5312 = scmp.le.s32.totalorder 2, %s40
      // Predicated region
      $region157: #{static_model_forward.1} parent=5 // pred_check
        %p5313 = pneg %p5312
      $region158: #{static_model_forward.1} parent=5 // pred_check_branch
        %5315 = sbr.rel (%p5313) target = $region160
      $region159: #{static_model_forward.1} parent=5 // pred_region
        %s5316 = ssub.s32 %s40, 2
        // Predicated region
        $region161: #{static_model_forward.1} parent=159 // pred_check
          %p5317 = pneg %p651
        $region162: #{static_model_forward.1} parent=159 // pred_check_branch
          %5319 = sbr.rel (%p5317) target = $region164
        $region163: #{static_model_forward.1} parent=159 // pred_region
          %s5320 = sand.u32 %s636, 1
          %s5321 = scalar_lea.sflag [#allocation4], %s5320
          %s5322 = sand.u32 %s636, 1
          %s5323 = scalar_lea.vmem [#allocation13], %s5322
          %5324 = dma.done %s5321, 16
        $region164: #{static_model_forward.1} parent=159 // pred_fallthru
          _
      $region160: #{static_model_forward.1} parent=5 // pred_fallthru
        _
    $region6: #{static_model_forward.1} parent=1 // loop_footer
      %s44 = sadd.s32 1, %s40
    $region7: #{static_model_forward.1} parent=1 // loop_footer_branch
      %39 = sbr.rel target = $region3
    $region8: #{static_model_forward.1} parent=1 // loop_exit
      _
    %5325 = vsyncpa [#allocation3], 1
    %s5326 = scalar_lea.sflag [#allocation3], 1
    %5327 = vsyncpa %s5326, 1
    %5328 = vsyncpa [#allocation6], 1
    %5329 = vsyncpa [#allocation9], 1
    %5330 = vsyncpa [#allocation12], 1
    %5331 = vsyncpa [#allocation4], 1
    %s5332 = scalar_lea.sflag [#allocation4], 1
    %5333 = vsyncpa %s5332, 1

</llo_original>
